<compile_context>
chip_gen: v6e
topology: v6e:2x2x1
jax: 0.10.0
libtpu: 0.0.40
codegen_flags: <defaults>
</compile_context>

<pallas_src>
import jax
import jax.numpy as jnp
from jax.experimental import pallas as pl
from jax.experimental.pallas import tpu as pltpu


OUTPUT_SIZE = 6
IN_FEATURES = 256 * OUTPUT_SIZE * OUTPUT_SIZE  # 9216
HIDDEN = 1024
PAD_OUT = 128  # layer-3 output (width 1) padded to a lane-dense 128 columns


def _adver_fused_kernel(x_ref, w1_ref, s1_ref, b1_ref, w2_ref, b2_ref,
                        w3_ref, b3_ref, o_ref, h1_acc):
    """Fused 3-layer MLP head.  Grid axis 0 streams x/w1 over K (reduction)."""
    k = pl.program_id(0)

    @pl.when(k == 0)
    def _():
        h1_acc[...] = jnp.zeros_like(h1_acc)

    # Layer 1 partial product.  w1 arrives as int8 (half the bytes of bf16);
    # dequant to bf16 happens here on the VPU (int8 values are exact in bf16,
    # so the per-column scale can be applied once in the epilogue).  The cast
    # + matmul of slab k overlap the DMA of slab k+1.
    x_blk = x_ref[...].astype(jnp.bfloat16)                        # f32 -> bf16
    w_blk = w1_ref[...].astype(jnp.float32).astype(jnp.bfloat16)   # i8 -> bf16
    h1_acc[...] += jnp.dot(x_blk, w_blk, preferred_element_type=jnp.float32)

    @pl.when(k == pl.num_programs(0) - 1)
    def _():
        # Layer 1 epilogue: per-channel dequant scale + bias + LeakyReLU(0.01).
        # Dropout(0.5): eval-mode identity.
        h1 = h1_acc[...] * s1_ref[...] + b1_ref[...]
        h1 = jnp.where(h1 >= 0, h1, 0.01 * h1)

        # Layer 2 (resident bf16 weights): bias + LeakyReLU(0.01). Dropout: id.
        h2 = jnp.dot(h1.astype(jnp.bfloat16), w2_ref[...],
                     preferred_element_type=jnp.float32) + b2_ref[...]
        h2 = jnp.where(h2 >= 0, h2, 0.01 * h2)

        # Layer 3 (padded to 128 lanes) + exact sigmoid (cold epilogue, one
        # (8,128) tile -- no reason to spend accuracy on an approx reciprocal).
        y = jnp.dot(h2.astype(jnp.bfloat16), w3_ref[...],
                    preferred_element_type=jnp.float32) + b3_ref[...]
        o_ref[...] = (1.0 / (1.0 + jnp.exp(-y))).astype(o_ref.dtype)


def adver_forward(params, x, alpha, *, tk=3072):
    """Fused forward pass: sigmoid(L3(lrelu(L2(lrelu(L1(x)))))) -> (B, 1)."""
    del alpha  # ReverseLayerF is the identity in the forward pass.
    B, K = x.shape
    assert K == IN_FEATURES and K % tk == 0, (K, tk)
    n_k = K // tk

    # Advisory cost hint: tiny FLOPs, purely HBM-bound on the weight stream.
    flops = 2 * B * (K * HIDDEN + HIDDEN * HIDDEN + HIDDEN * PAD_OUT)
    bytes_accessed = int(
        params["w1"].size * params["w1"].dtype.itemsize
        + params["w2"].size * 2 + params["w3"].size * 2
        + x.size * 4
        + (params["s1"].size + params["b1"].size + params["b2"].size
           + params["b3"].size) * 4
        + B * PAD_OUT * 4)

    out = pl.pallas_call(
        _adver_fused_kernel,
        out_shape=jax.ShapeDtypeStruct((B, PAD_OUT), jnp.float32),
        grid_spec=pltpu.PrefetchScalarGridSpec(
            num_scalar_prefetch=0,
            grid=(n_k,),
            in_specs=[
                pl.BlockSpec((B, tk), lambda k: (0, k)),            # x f32 (streamed)
                pl.BlockSpec((tk, HIDDEN), lambda k: (k, 0)),       # w1 int8 (streamed)
                pl.BlockSpec((1, HIDDEN), lambda k: (0, 0)),        # s1 (resident)
                pl.BlockSpec((1, HIDDEN), lambda k: (0, 0)),        # b1 (resident)
                pl.BlockSpec((HIDDEN, HIDDEN), lambda k: (0, 0)),   # w2 (resident)
                pl.BlockSpec((1, HIDDEN), lambda k: (0, 0)),        # b2 (resident)
                pl.BlockSpec((HIDDEN, PAD_OUT), lambda k: (0, 0)),  # w3 padded (resident)
                pl.BlockSpec((1, PAD_OUT), lambda k: (0, 0)),       # b3 padded (resident)
            ],
            out_specs=pl.BlockSpec((B, PAD_OUT), lambda k: (0, 0)),
            scratch_shapes=[pltpu.VMEM((B, HIDDEN), jnp.float32)],  # h1 accumulator
        ),
        compiler_params=pltpu.CompilerParams(
            dimension_semantics=("arbitrary",),          # K is a reduction axis
            vmem_limit_bytes=40 * 1024 * 1024,           # worst case ~30 MiB incl. dequant temps
        ),
        cost_estimate=pl.CostEstimate(
            flops=flops,
            transcendentals=B * PAD_OUT,
            bytes_accessed=bytes_accessed,
        ),
    )(x, params["w1"], params["s1"], params["b1"], params["w2"], params["b2"],
      params["w3"], params["b3"])
    return out[:, :1]  # drop the zero-padded lanes -> (B, 1)


def init_adver_params(key, *, quantize_w1=True):
    """Deterministic init matching the PyTorch __init__ (normal std, zero bias).

    Returns (params, f32_weights):
      params      -- kernel-ready params: w1 as int8 + per-output-channel f32
                     scale (or bf16 w1 with unit scale if quantize_w1=False),
                     w2/w3 bf16, w3/b3 pre-padded to 128 lanes, f32 biases.
                     All weights stored transposed (in, out).
      f32_weights -- untouched float32 copies for the full-precision reference.
    """
    k1, k2, k3 = jax.random.split(key, 3)
    # PyTorch stores Linear weight as (out, in); forward is x @ W.T + b.
    w1 = (0.01 * jax.random.normal(k1, (HIDDEN, IN_FEATURES), jnp.float32)).T
    w2 = (0.01 * jax.random.normal(k2, (HIDDEN, HIDDEN), jnp.float32)).T
    w3 = (0.3 * jax.random.normal(k3, (1, HIDDEN), jnp.float32)).T
    b1 = jnp.zeros((1, HIDDEN), jnp.float32)
    b2 = jnp.zeros((1, HIDDEN), jnp.float32)
    b3 = jnp.zeros((1, 1), jnp.float32)

    if quantize_w1:
        # Symmetric per-output-channel int8 quantization of w1.
        s1 = jnp.max(jnp.abs(w1), axis=0, keepdims=True) / 127.0   # (1, HIDDEN)
        w1_q = jnp.clip(jnp.round(w1 / s1), -127, 127).astype(jnp.int8)
    else:
        s1 = jnp.ones((1, HIDDEN), jnp.float32)
        w1_q = w1.astype(jnp.bfloat16)

    w3_pad = jnp.pad(w3, ((0, 0), (0, PAD_OUT - 1)))                # (1024, 128)
    b3_pad = jnp.pad(b3, ((0, 0), (0, PAD_OUT - 1)))                # (1, 128)

    params = {
        "w1": w1_q, "s1": s1, "b1": b1,
        "w2": w2.astype(jnp.bfloat16), "b2": b2,
        "w3": w3_pad.astype(jnp.bfloat16), "b3": b3_pad,
    }
    f32_weights = {"w1": w1, "b1": b1, "w2": w2, "b2": b2, "w3": w3, "b3": b3}
    return params, f32_weights


def adver_reference_matched(params, x, alpha):
    """Plain-JAX reference reproducing the kernel's quantized/bf16 math exactly."""
    del alpha
    w1 = params["w1"].astype(jnp.bfloat16)   # int8 values are exact in bf16
    h1 = jnp.dot(x.astype(jnp.bfloat16), w1,
                 preferred_element_type=jnp.float32) * params["s1"] + params["b1"]
    h1 = jnp.where(h1 >= 0, h1, 0.01 * h1)
    h2 = jnp.dot(h1.astype(jnp.bfloat16), params["w2"],
                 preferred_element_type=jnp.float32) + params["b2"]
    h2 = jnp.where(h2 >= 0, h2, 0.01 * h2)
    y = jnp.dot(h2.astype(jnp.bfloat16), params["w3"],
                preferred_element_type=jnp.float32) + params["b3"]
    return jax.nn.sigmoid(y)[:, :1]


def adver_reference_f32(weights, x, alpha):
    """Full-float32 reference of the original PyTorch module (eval mode)."""
    del alpha
    hp = jax.lax.Precision.HIGHEST
    h1 = jnp.dot(x, weights["w1"], precision=hp) + weights["b1"]
    h1 = jnp.where(h1 >= 0, h1, 0.01 * h1)
    h2 = jnp.dot(h1, weights["w2"], precision=hp) + weights["b2"]
    h2 = jnp.where(h2 >= 0, h2, 0.01 * h2)
    y = jnp.dot(h2, weights["w3"], precision=hp) + weights["b3"]
    return jax.nn.sigmoid(y)


if __name__ == "__main__":
    key = jax.random.PRNGKey(0)
    pkey, xkey = jax.random.split(key)

    params, f32_weights = init_adver_params(pkey)

    # NOTE(perf): this head is HBM-bound on the weight stream; if the caller
    # ever has more rows, batch them into ONE call (B up to ~256 reuses the
    # same weight stream for essentially the same wall time).
    B = 8  # feature dim 9216 is fixed by the module definition
    x = jax.random.normal(xkey, (B, IN_FEATURES), jnp.float32)
    alpha = 1.0

    out = adver_forward(params, x, alpha)
    out = jax.block_until_ready(out)
    assert out.shape == (B, 1), out.shape

    # (a) Kernel correctness: compare against a plain-JAX reference using the
    #     exact same int8/bf16 weights (tight tolerance).
    ref_matched = adver_reference_matched(params, x, alpha)
    err_matched = float(jnp.max(jnp.abs(out - ref_matched)))
    assert err_matched < 2e-3, err_matched

    # (b) Quantization accuracy: compare against the full-f32 original module
    #     (non-circular check bounding int8/bf16 drift).
    ref_f32 = adver_reference_f32(f32_weights, x, alpha)
    err_f32 = float(jnp.max(jnp.abs(out - ref_f32)))
    assert err_f32 < 2e-2, err_f32

    print("KERNEL_OK")
</pallas_src>

<mosaic_0001>
module attributes {stable_mosaic.version = 11 : i64} {
  func.func @_adver_fused_kernel(%arg0: i32, %arg1: memref<8x3072xf32, #tpu.memory_space<vmem>>, %arg2: memref<3072x1024xi8, #tpu.memory_space<vmem>>, %arg3: memref<1x1024xf32, #tpu.memory_space<vmem>>, %arg4: memref<1x1024xf32, #tpu.memory_space<vmem>>, %arg5: memref<1024x1024xbf16, #tpu.memory_space<vmem>>, %arg6: memref<1x1024xf32, #tpu.memory_space<vmem>>, %arg7: memref<1024x128xbf16, #tpu.memory_space<vmem>>, %arg8: memref<1x128xf32, #tpu.memory_space<vmem>>, %arg9: memref<8x128xf32, #tpu.memory_space<vmem>>, %arg10: memref<8x1024xf32, #tpu.memory_space<vmem>>) attributes {dimension_semantics = [#tpu.dimension_semantics<arbitrary>], iteration_bounds = array<i64: 3>, scalar_prefetch = 0 : i64, scratch_operands = 1 : i64, tpu.core_type = #tpu.core_type<tc>, window_params = [{transform_indices = @transform_0, window_bounds = array<i64: 8, 3072>}, {transform_indices = @transform_1, window_bounds = array<i64: 3072, 1024>}, {pipeline_mode = #tpu.pipeline_mode<synchronous>, transform_indices = @transform_2, window_bounds = array<i64: 1, 1024>}, {pipeline_mode = #tpu.pipeline_mode<synchronous>, transform_indices = @transform_3, window_bounds = array<i64: 1, 1024>}, {pipeline_mode = #tpu.pipeline_mode<synchronous>, transform_indices = @transform_4, window_bounds = array<i64: 1024, 1024>}, {pipeline_mode = #tpu.pipeline_mode<synchronous>, transform_indices = @transform_5, window_bounds = array<i64: 1, 1024>}, {pipeline_mode = #tpu.pipeline_mode<synchronous>, transform_indices = @transform_6, window_bounds = array<i64: 1024, 128>}, {pipeline_mode = #tpu.pipeline_mode<synchronous>, transform_indices = @transform_7, window_bounds = array<i64: 1, 128>}, {pipeline_mode = #tpu.pipeline_mode<synchronous>, transform_indices = @transform_8, window_bounds = array<i64: 8, 128>}]} {
    %c0_i32 = arith.constant 0 : i32
    %0 = arith.cmpi eq, %arg0, %c0_i32 : i32
    %1 = arith.extui %0 : i1 to i32
    %c0_i32_0 = arith.constant 0 : i32
    %2 = arith.cmpi ne, %1, %c0_i32_0 : i32
    scf.if %2 {
      %cst_9 = arith.constant 0.000000e+00 : f32
      %15 = vector.broadcast %cst_9 : f32 to vector<8x1024xf32>
      %c0_10 = arith.constant 0 : index
      %c0_11 = arith.constant 0 : index
      %16 = vector.load %arg10[%c0_10, %c0_11] : memref<8x1024xf32, #tpu.memory_space<vmem>>, vector<8x1024xf32>
      tpu.vector_store %arg10[%c0_10, %c0_11], %15 {strides = array<i32>} : memref<8x1024xf32, #tpu.memory_space<vmem>>, vector<8x1024xf32>,
    } else {
    }
    %c0 = arith.constant 0 : index
    %c0_1 = arith.constant 0 : index
    %3 = vector.load %arg1[%c0, %c0_1] : memref<8x3072xf32, #tpu.memory_space<vmem>>, vector<8x3072xf32>
    %4 = arith.truncf %3 : vector<8x3072xf32> to vector<8x3072xbf16>
    %c0_2 = arith.constant 0 : index
    %c0_3 = arith.constant 0 : index
    %5 = vector.load %arg2[%c0_2, %c0_3] : memref<3072x1024xi8, #tpu.memory_space<vmem>>, vector<3072x1024xi8>
    %6 = arith.sitofp %5 : vector<3072x1024xi8> to vector<3072x1024xf32>
    %7 = arith.truncf %6 : vector<3072x1024xf32> to vector<3072x1024xbf16>
    %c0_4 = arith.constant 0 : index
    %c0_5 = arith.constant 0 : index
    %8 = vector.load %arg10[%c0_4, %c0_5] : memref<8x1024xf32, #tpu.memory_space<vmem>>, vector<8x1024xf32>
    %cst = arith.constant dense<0.000000e+00> : vector<8x1024xf32>
    %9 = tpu.matmul %4, %7, %cst {dimension_numbers = #tpu.dot_dimension_numbers<[1], [0], [0], [1], [0, 0, 1, 1], [], []>} : vector<8x3072xbf16>, vector<3072x1024xbf16>, vector<8x1024xf32> -> vector<8x1024xf32>
    %10 = arith.addf %8, %9 : vector<8x1024xf32>
    %c0_6 = arith.constant 0 : index
    %c0_7 = arith.constant 0 : index
    %11 = vector.load %arg10[%c0_6, %c0_7] : memref<8x1024xf32, #tpu.memory_space<vmem>>, vector<8x1024xf32>
    tpu.vector_store %arg10[%c0_6, %c0_7], %10 {strides = array<i32>} : memref<8x1024xf32, #tpu.memory_space<vmem>>, vector<8x1024xf32>,
    %c2_i32 = arith.constant 2 : i32
    %12 = arith.cmpi eq, %arg0, %c2_i32 : i32
    %13 = arith.extui %12 : i1 to i32
    %c0_i32_8 = arith.constant 0 : i32
    %14 = arith.cmpi ne, %13, %c0_i32_8 : i32
    scf.if %14 {
      %c0_9 = arith.constant 0 : index
      %c0_10 = arith.constant 0 : index
      %15 = vector.load %arg10[%c0_9, %c0_10] : memref<8x1024xf32, #tpu.memory_space<vmem>>, vector<8x1024xf32>
      %c0_11 = arith.constant 0 : index
      %c0_12 = arith.constant 0 : index
      %16 = vector.load %arg3[%c0_11, %c0_12] : memref<1x1024xf32, #tpu.memory_space<vmem>>, vector<1x1024xf32>
      %17 = vector.broadcast %16 : vector<1x1024xf32> to vector<8x1024xf32>
      %18 = arith.mulf %15, %17 : vector<8x1024xf32>
      %c0_13 = arith.constant 0 : index
      %c0_14 = arith.constant 0 : index
      %19 = vector.load %arg4[%c0_13, %c0_14] : memref<1x1024xf32, #tpu.memory_space<vmem>>, vector<1x1024xf32>
      %20 = vector.broadcast %19 : vector<1x1024xf32> to vector<8x1024xf32>
      %21 = arith.addf %18, %20 : vector<8x1024xf32>
      %cst_15 = arith.constant 0.000000e+00 : f32
      %22 = vector.broadcast %cst_15 : f32 to vector<8x1024xf32>
      %23 = arith.cmpf oge, %21, %22 : vector<8x1024xf32>
      %cst_16 = arith.constant 0.00999999977 : f32
      %24 = vector.broadcast %cst_16 : f32 to vector<8x1024xf32>
      %25 = arith.mulf %24, %21 : vector<8x1024xf32>
      %26 = arith.select %23, %21, %25 : vector<8x1024xi1>, vector<8x1024xf32>
      %27 = arith.truncf %26 : vector<8x1024xf32> to vector<8x1024xbf16>
      %c0_17 = arith.constant 0 : index
      %c0_18 = arith.constant 0 : index
      %28 = vector.load %arg5[%c0_17, %c0_18] : memref<1024x1024xbf16, #tpu.memory_space<vmem>>, vector<1024x1024xbf16>
      %cst_19 = arith.constant dense<0.000000e+00> : vector<8x1024xf32>
      %29 = tpu.matmul %27, %28, %cst_19 {dimension_numbers = #tpu.dot_dimension_numbers<[1], [0], [0], [1], [0, 0, 1, 1], [], []>} : vector<8x1024xbf16>, vector<1024x1024xbf16>, vector<8x1024xf32> -> vector<8x1024xf32>
      %c0_20 = arith.constant 0 : index
      %c0_21 = arith.constant 0 : index
      %30 = vector.load %arg6[%c0_20, %c0_21] : memref<1x1024xf32, #tpu.memory_space<vmem>>, vector<1x1024xf32>
      %31 = vector.broadcast %30 : vector<1x1024xf32> to vector<8x1024xf32>
      %32 = arith.addf %29, %31 : vector<8x1024xf32>
      %cst_22 = arith.constant 0.000000e+00 : f32
      %33 = vector.broadcast %cst_22 : f32 to vector<8x1024xf32>
      %34 = arith.cmpf oge, %32, %33 : vector<8x1024xf32>
      %cst_23 = arith.constant 0.00999999977 : f32
      %35 = vector.broadcast %cst_23 : f32 to vector<8x1024xf32>
      %36 = arith.mulf %35, %32 : vector<8x1024xf32>
      %37 = arith.select %34, %32, %36 : vector<8x1024xi1>, vector<8x1024xf32>
      %38 = arith.truncf %37 : vector<8x1024xf32> to vector<8x1024xbf16>
      %c0_24 = arith.constant 0 : index
      %c0_25 = arith.constant 0 : index
      %39 = vector.load %arg7[%c0_24, %c0_25] : memref<1024x128xbf16, #tpu.memory_space<vmem>>, vector<1024x128xbf16>
      %cst_26 = arith.constant dense<0.000000e+00> : vector<8x128xf32>
      %40 = tpu.matmul %38, %39, %cst_26 {dimension_numbers = #tpu.dot_dimension_numbers<[1], [0], [0], [1], [0, 0, 1, 1], [], []>} : vector<8x1024xbf16>, vector<1024x128xbf16>, vector<8x128xf32> -> vector<8x128xf32>
      %c0_27 = arith.constant 0 : index
      %c0_28 = arith.constant 0 : index
      %41 = vector.load %arg8[%c0_27, %c0_28] : memref<1x128xf32, #tpu.memory_space<vmem>>, vector<1x128xf32>
      %42 = vector.broadcast %41 : vector<1x128xf32> to vector<8x128xf32>
      %43 = arith.addf %40, %42 : vector<8x128xf32>
      %cst_29 = arith.constant 0.000000e+00 : f32
      %44 = vector.broadcast %cst_29 : f32 to vector<8x128xf32>
      %45 = arith.subf %44, %43 : vector<8x128xf32>
      %46 = math.exp %45 : vector<8x128xf32>
      %cst_30 = arith.constant 1.000000e+00 : f32
      %47 = vector.broadcast %cst_30 : f32 to vector<8x128xf32>
      %48 = arith.addf %47, %46 : vector<8x128xf32>
      %cst_31 = arith.constant 1.000000e+00 : f32
      %49 = vector.broadcast %cst_31 : f32 to vector<8x128xf32>
      %50 = arith.divf %49, %48 : vector<8x128xf32>
      %c0_32 = arith.constant 0 : index
      %c0_33 = arith.constant 0 : index
      %51 = vector.load %arg9[%c0_32, %c0_33] : memref<8x128xf32, #tpu.memory_space<vmem>>, vector<8x128xf32>
      tpu.vector_store %arg9[%c0_32, %c0_33], %50 {strides = array<i32>} : memref<8x128xf32, #tpu.memory_space<vmem>>, vector<8x128xf32>,
    } else {
    }
    return
  }
  func.func @transform_0(%arg0: i32) -> (i32, i32) {
    %c0_i32 = arith.constant 0 : i32
    %c0_i32_0 = arith.constant 0 : i32
    return %c0_i32, %arg0 : i32, i32
  }
  func.func @transform_1(%arg0: i32) -> (i32, i32) {
    %c0_i32 = arith.constant 0 : i32
    %c0_i32_0 = arith.constant 0 : i32
    return %arg0, %c0_i32 : i32, i32
  }
  func.func @transform_2(%arg0: i32) -> (i32, i32) {
    %c0_i32 = arith.constant 0 : i32
    %c0_i32_0 = arith.constant 0 : i32
    %c0_i32_1 = arith.constant 0 : i32
    return %c0_i32, %c0_i32_0 : i32, i32
  }
  func.func @transform_3(%arg0: i32) -> (i32, i32) {
    %c0_i32 = arith.constant 0 : i32
    %c0_i32_0 = arith.constant 0 : i32
    %c0_i32_1 = arith.constant 0 : i32
    return %c0_i32, %c0_i32_0 : i32, i32
  }
  func.func @transform_4(%arg0: i32) -> (i32, i32) {
    %c0_i32 = arith.constant 0 : i32
    %c0_i32_0 = arith.constant 0 : i32
    %c0_i32_1 = arith.constant 0 : i32
    return %c0_i32, %c0_i32_0 : i32, i32
  }
  func.func @transform_5(%arg0: i32) -> (i32, i32) {
    %c0_i32 = arith.constant 0 : i32
    %c0_i32_0 = arith.constant 0 : i32
    %c0_i32_1 = arith.constant 0 : i32
    return %c0_i32, %c0_i32_0 : i32, i32
  }
  func.func @transform_6(%arg0: i32) -> (i32, i32) {
    %c0_i32 = arith.constant 0 : i32
    %c0_i32_0 = arith.constant 0 : i32
    %c0_i32_1 = arith.constant 0 : i32
    return %c0_i32, %c0_i32_0 : i32, i32
  }
  func.func @transform_7(%arg0: i32) -> (i32, i32) {
    %c0_i32 = arith.constant 0 : i32
    %c0_i32_0 = arith.constant 0 : i32
    %c0_i32_1 = arith.constant 0 : i32
    return %c0_i32, %c0_i32_0 : i32, i32
  }
  func.func @transform_8(%arg0: i32) -> (i32, i32) {
    %c0_i32 = arith.constant 0 : i32
    %c0_i32_0 = arith.constant 0 : i32
    %c0_i32_1 = arith.constant 0 : i32
    return %c0_i32, %c0_i32_0 : i32, i32
  }
}

</mosaic_0001>

<llo_original>
// kernel: tpu_custom_call.1
$region0: #{tpu_custom_call.1}
  #allocation0 [shape = 'u32[]', space=smem, size = 0x4, offset = 0x4, fixed_abs, tag = 'smem constant byte address 0x4 - core index']
  #allocation1 [shape = 'u32[144,128]{1,0:T(1,128)}', space=vmem, size = 0x12000, scoped, tag = 'internal scratch']
  #allocation2 [shape = 'f32[8,1024]{1,0:T(8,128)}', space=vmem, size = 0x8000, scoped, tag = 'scratch operand']
  %s0 = inlined_call_operand.hbm [shape: f32[8,9216], index: 0, kind: input, shape index: {}]
  %s1 = inlined_call_operand.hbm [shape: s8[9216,1024], index: 1, kind: input, shape index: {}]
  %s2 = inlined_call_operand.hbm [shape: f32[1,1024], index: 2, kind: input, shape index: {}]
  %s3 = inlined_call_operand.hbm [shape: f32[1,1024], index: 3, kind: input, shape index: {}]
  %s4 = inlined_call_operand.hbm [shape: bf16[1024,1024], index: 4, kind: input, shape index: {}]
  %s5 = inlined_call_operand.hbm [shape: f32[1,1024], index: 5, kind: input, shape index: {}]
  %s6 = inlined_call_operand.hbm [shape: bf16[1024,128], index: 6, kind: input, shape index: {}]
  %s7 = inlined_call_operand.hbm [shape: f32[1,128], index: 7, kind: input, shape index: {}]
  %s8 = inlined_call_operand.hbm [shape: f32[8,128], index: 8, kind: output, shape index: {}]
  %s9 = sld [smem:[#allocation0]]
  $region105: #{tpu_custom_call.1} parent=0
    _
  %s11 = ssub.s32 1, %s9
  %s12 = scalar_select 0, %s11, %s9
  $region1: #{tpu_custom_call.1} parent=0
    #allocation3 [shape = 'u8[196608]{0}', space=vmem, size = 0x30000, scoped, tag = 'input window, operand 0']
    #allocation4 [shape = 's32[2]{0}', space=sflag, size = 0x8, scoped, tag = 'scoped memory for tpu_custom_call.1']
    #allocation5 [shape = 's32[2]{0}', space=sflag, size = 0x8, scoped, tag = 'scoped memory for tpu_custom_call.1']
    #allocation6 [shape = 'u8[6291456]{0}', space=vmem, size = 0x600000, scoped, tag = 'input window, operand 1']
    #allocation7 [shape = 's32[2]{0}', space=sflag, size = 0x8, scoped, tag = 'scoped memory for tpu_custom_call.1']
    #allocation8 [shape = 'u8[4096]{0}', space=vmem, size = 0x1000, scoped, tag = 'input window, operand 2, single buffered']
    #allocation9 [shape = 'u8[4096]{0}', space=vmem, size = 0x1000, scoped, tag = 'input window, operand 3, single buffered']
    #allocation10 [shape = 's32[1]{0}', space=sflag, size = 0x4, scoped, tag = 'scoped memory for tpu_custom_call.1']
    #allocation11 [shape = 'u8[2097152]{0}', space=vmem, size = 0x200000, scoped, tag = 'input window, operand 4, single buffered']
    #allocation12 [shape = 'u8[4096]{0}', space=vmem, size = 0x1000, scoped, tag = 'input window, operand 5, single buffered']
    #allocation13 [shape = 's32[1]{0}', space=sflag, size = 0x4, scoped, tag = 'scoped memory for tpu_custom_call.1']
    #allocation14 [shape = 'u8[262144]{0}', space=vmem, size = 0x40000, scoped, tag = 'input window, operand 6, single buffered']
    #allocation15 [shape = 'u8[512]{0}', space=vmem, size = 0x400, scoped, tag = 'input window, operand 7, single buffered']
    #allocation16 [shape = 's32[1]{0}', space=sflag, size = 0x4, scoped, tag = 'scoped memory for tpu_custom_call.1']
    #allocation17 [shape = 'u8[4096]{0}', space=vmem, size = 0x1000, scoped, tag = 'output window, operand 0, single buffered']
    %13 = vsyncpa [#allocation4], 0
    %s14 = scalar_lea.sflag [#allocation4], 1
    %15 = vsyncpa %s14, 0
    %16 = vsyncpa [#allocation7], 0
    %s17 = scalar_lea.sflag [#allocation7], 1
    %18 = vsyncpa %s17, 0
    %19 = vsyncpa [#allocation10], 0
    %20 = vsyncpa [#allocation13], 0
    %21 = vsyncpa [#allocation16], 0
    %22 = vsyncpa [#allocation5], 0
    loop: start=0, step=1, limit=5
    $region2: #{tpu_custom_call.1} parent=1 // loop_pre_header
      _
    $region3: #{tpu_custom_call.1} parent=1 // loop_header
      %s24 = sphi 0, %s28
      %p25 = scmp.ge.s32.totalorder %s24, 5
      %s34 = sphi 0, %s36
      %s37 = sphi 0, %s34
      %s38 = sphi 0, %s37
      %s54 = sphi 0, %s38
      %s60 = sphi 0, %s62
      %s63 = sphi 0, %s60
      %s64 = sphi 0, %s63
      %s80 = sphi 0, %s64
      %s84 = sphi 0, %s84
      %s86 = sphi 0, %s84
      %s87 = sphi 0, %s86
      %s101 = sphi 0, %s87
      %s105 = sphi 0, %s105
      %s107 = sphi 0, %s105
      %s108 = sphi 0, %s107
      %s122 = sphi 0, %s108
      %s126 = sphi 0, %s126
      %s128 = sphi 0, %s126
      %s129 = sphi 0, %s128
      %s143 = sphi 0, %s129
      %s147 = sphi 0, %s147
      %s149 = sphi 0, %s147
      %s150 = sphi 0, %s149
      %s164 = sphi 0, %s150
      %s168 = sphi 0, %s168
      %s170 = sphi 0, %s168
      %s171 = sphi 0, %s170
      %s185 = sphi 0, %s171
      %s189 = sphi 0, %s189
      %s191 = sphi 0, %s189
      %s192 = sphi 0, %s191
      %s206 = sphi 0, %s192
      %s210 = sphi 0, %s210
      %s212 = sphi 0, %s210
      %s213 = sphi 0, %s212
      %s227 = sphi 0, %s213
    $region4: #{tpu_custom_call.1} parent=1 // loop_header_branch
      %27 = sbr.rel (%p25) target = $region8
    $region5: #{tpu_custom_call.1} parent=1 // loop_body
      %s29 = ssub.s32 %s24, 1
      %s30 = ssub.s32 %s24, 2
      %s31 = sadd.s32 %s24, 1
      %s32 = ssub.s32 %s24, %s31
      %p33 = scmp.eq.s32.totalorder %s32, 0
      %s35 = sadd.s32 %s34, 1
      %s36 = scalar_select %p33, %s34, %s35
      %p39 = pneg %p33
      %p40 = scmp.eq.s32.totalorder %s24, 2
      %p41 = por %p39, %p40
      %p42 = scmp.ne.s32.totalorder %s34, %s37
      %p43 = scmp.eq.s32.totalorder %s24, 0
      %p44 = por %p42, %p43
      %p45 = scmp.ne.s32.totalorder %s34, %s37
      %p46 = scmp.eq.s32.totalorder %s29, 2
      %p47 = por %p45, %p46
      %p48 = scmp.ne.s32.totalorder %s37, %s38
      %p49 = scmp.eq.s32.totalorder %s29, 0
      %p50 = por %p48, %p49
      %p51 = scmp.ne.s32.totalorder %s37, %s38
      %p52 = scmp.eq.s32.totalorder %s30, 2
      %p53 = por %p51, %p52
      %p55 = scmp.ne.s32.totalorder %s38, %s54
      %p56 = scmp.eq.s32.totalorder %s30, 0
      %p57 = por %p55, %p56
      %s58 = ssub.s32 %s24, %s31
      %p59 = scmp.eq.s32.totalorder %s58, 0
      %s61 = sadd.s32 %s60, 1
      %s62 = scalar_select %p59, %s60, %s61
      %p65 = pneg %p59
      %p66 = scmp.eq.s32.totalorder %s24, 2
      %p67 = por %p65, %p66
      %p68 = scmp.ne.s32.totalorder %s60, %s63
      %p69 = scmp.eq.s32.totalorder %s24, 0
      %p70 = por %p68, %p69
      %p71 = scmp.ne.s32.totalorder %s60, %s63
      %p72 = scmp.eq.s32.totalorder %s29, 2
      %p73 = por %p71, %p72
      %p74 = scmp.ne.s32.totalorder %s63, %s64
      %p75 = scmp.eq.s32.totalorder %s29, 0
      %p76 = por %p74, %p75
      %p77 = scmp.ne.s32.totalorder %s63, %s64
      %p78 = scmp.eq.s32.totalorder %s30, 2
      %p79 = por %p77, %p78
      %p81 = scmp.ne.s32.totalorder %s64, %s80
      %p82 = scmp.eq.s32.totalorder %s30, 0
      %p83 = por %p81, %p82
      %s85 = sadd.s32 %s84, 1
      %p88 = scmp.eq.s32.totalorder %s24, 2
      %p89 = scmp.ne.s32.totalorder %s84, %s86
      %p90 = scmp.eq.s32.totalorder %s24, 0
      %p91 = por %p89, %p90
      %p92 = scmp.ne.s32.totalorder %s84, %s86
      %p93 = scmp.eq.s32.totalorder %s29, 2
      %p94 = por %p92, %p93
      %p95 = scmp.ne.s32.totalorder %s86, %s87
      %p96 = scmp.eq.s32.totalorder %s29, 0
      %p97 = por %p95, %p96
      %p98 = scmp.ne.s32.totalorder %s86, %s87
      %p99 = scmp.eq.s32.totalorder %s30, 2
      %p100 = por %p98, %p99
      %p102 = scmp.ne.s32.totalorder %s87, %s101
      %p103 = scmp.eq.s32.totalorder %s30, 0
      %p104 = por %p102, %p103
      %s106 = sadd.s32 %s105, 1
      %p109 = scmp.eq.s32.totalorder %s24, 2
      %p110 = scmp.ne.s32.totalorder %s105, %s107
      %p111 = scmp.eq.s32.totalorder %s24, 0
      %p112 = por %p110, %p111
      %p113 = scmp.ne.s32.totalorder %s105, %s107
      %p114 = scmp.eq.s32.totalorder %s29, 2
      %p115 = por %p113, %p114
      %p116 = scmp.ne.s32.totalorder %s107, %s108
      %p117 = scmp.eq.s32.totalorder %s29, 0
      %p118 = por %p116, %p117
      %p119 = scmp.ne.s32.totalorder %s107, %s108
      %p120 = scmp.eq.s32.totalorder %s30, 2
      %p121 = por %p119, %p120
      %p123 = scmp.ne.s32.totalorder %s108, %s122
      %p124 = scmp.eq.s32.totalorder %s30, 0
      %p125 = por %p123, %p124
      %s127 = sadd.s32 %s126, 1
      %p130 = scmp.eq.s32.totalorder %s24, 2
      %p131 = scmp.ne.s32.totalorder %s126, %s128
      %p132 = scmp.eq.s32.totalorder %s24, 0
      %p133 = por %p131, %p132
      %p134 = scmp.ne.s32.totalorder %s126, %s128
      %p135 = scmp.eq.s32.totalorder %s29, 2
      %p136 = por %p134, %p135
      %p137 = scmp.ne.s32.totalorder %s128, %s129
      %p138 = scmp.eq.s32.totalorder %s29, 0
      %p139 = por %p137, %p138
      %p140 = scmp.ne.s32.totalorder %s128, %s129
      %p141 = scmp.eq.s32.totalorder %s30, 2
      %p142 = por %p140, %p141
      %p144 = scmp.ne.s32.totalorder %s129, %s143
      %p145 = scmp.eq.s32.totalorder %s30, 0
      %p146 = por %p144, %p145
      %s148 = sadd.s32 %s147, 1
      %p151 = scmp.eq.s32.totalorder %s24, 2
      %p152 = scmp.ne.s32.totalorder %s147, %s149
      %p153 = scmp.eq.s32.totalorder %s24, 0
      %p154 = por %p152, %p153
      %p155 = scmp.ne.s32.totalorder %s147, %s149
      %p156 = scmp.eq.s32.totalorder %s29, 2
      %p157 = por %p155, %p156
      %p158 = scmp.ne.s32.totalorder %s149, %s150
      %p159 = scmp.eq.s32.totalorder %s29, 0
      %p160 = por %p158, %p159
      %p161 = scmp.ne.s32.totalorder %s149, %s150
      %p162 = scmp.eq.s32.totalorder %s30, 2
      %p163 = por %p161, %p162
      %p165 = scmp.ne.s32.totalorder %s150, %s164
      %p166 = scmp.eq.s32.totalorder %s30, 0
      %p167 = por %p165, %p166
      %s169 = sadd.s32 %s168, 1
      %p172 = scmp.eq.s32.totalorder %s24, 2
      %p173 = scmp.ne.s32.totalorder %s168, %s170
      %p174 = scmp.eq.s32.totalorder %s24, 0
      %p175 = por %p173, %p174
      %p176 = scmp.ne.s32.totalorder %s168, %s170
      %p177 = scmp.eq.s32.totalorder %s29, 2
      %p178 = por %p176, %p177
      %p179 = scmp.ne.s32.totalorder %s170, %s171
      %p180 = scmp.eq.s32.totalorder %s29, 0
      %p181 = por %p179, %p180
      %p182 = scmp.ne.s32.totalorder %s170, %s171
      %p183 = scmp.eq.s32.totalorder %s30, 2
      %p184 = por %p182, %p183
      %p186 = scmp.ne.s32.totalorder %s171, %s185
      %p187 = scmp.eq.s32.totalorder %s30, 0
      %p188 = por %p186, %p187
      %s190 = sadd.s32 %s189, 1
      %p193 = scmp.eq.s32.totalorder %s24, 2
      %p194 = scmp.ne.s32.totalorder %s189, %s191
      %p195 = scmp.eq.s32.totalorder %s24, 0
      %p196 = por %p194, %p195
      %p197 = scmp.ne.s32.totalorder %s189, %s191
      %p198 = scmp.eq.s32.totalorder %s29, 2
      %p199 = por %p197, %p198
      %p200 = scmp.ne.s32.totalorder %s191, %s192
      %p201 = scmp.eq.s32.totalorder %s29, 0
      %p202 = por %p200, %p201
      %p203 = scmp.ne.s32.totalorder %s191, %s192
      %p204 = scmp.eq.s32.totalorder %s30, 2
      %p205 = por %p203, %p204
      %p207 = scmp.ne.s32.totalorder %s192, %s206
      %p208 = scmp.eq.s32.totalorder %s30, 0
      %p209 = por %p207, %p208
      %s211 = sadd.s32 %s210, 1
      %p214 = scmp.eq.s32.totalorder %s24, 2
      %p215 = scmp.ne.s32.totalorder %s210, %s212
      %p216 = scmp.eq.s32.totalorder %s24, 0
      %p217 = por %p215, %p216
      %p218 = scmp.ne.s32.totalorder %s210, %s212
      %p219 = scmp.eq.s32.totalorder %s29, 2
      %p220 = por %p218, %p219
      %p221 = scmp.ne.s32.totalorder %s212, %s213
      %p222 = scmp.eq.s32.totalorder %s29, 0
      %p223 = por %p221, %p222
      %p224 = scmp.ne.s32.totalorder %s212, %s213
      %p225 = scmp.eq.s32.totalorder %s30, 2
      %p226 = por %p224, %p225
      %p228 = scmp.ne.s32.totalorder %s213, %s227
      %p229 = scmp.eq.s32.totalorder %s30, 0
      %p230 = por %p228, %p229
      %p231 = scmp.le.s32.totalorder 1, %s24
      %p232 = scmp.lt.s32.totalorder %s24, 4
      %p233 = pnand %p231, %p232
      %p234 = pneg %p233
      // Predicated region
      $region9: #{tpu_custom_call.1} parent=5 // pred_check
        _
      $region10: #{tpu_custom_call.1} parent=5 // pred_check_branch
        %236 = sbr.rel (%p233) target = $region12
      $region11: #{tpu_custom_call.1} parent=5 // pred_region
        %s237 = ssub.s32 %s24, 1
        // Predicated region
        $region13: #{tpu_custom_call.1} parent=11 // pred_check
          %p238 = pneg %p97
        $region14: #{tpu_custom_call.1} parent=11 // pred_check_branch
          %240 = sbr.rel (%p238) target = $region16
        $region15: #{tpu_custom_call.1} parent=11 // pred_region
          %s242 = ssub.s32 128, 128
          %243 = vsyncadd [#allocation7], %s242
          %s245 = sshll.u32 [#allocation8], 4
          %s246 = int_to_ptr.vmem [resolvable:$true] %s245
          %248 = dma.hbm_to_vmem [thread:$0]  %s2, 128, %s246, [#allocation7]
        $region16: #{tpu_custom_call.1} parent=11 // pred_fallthru
          _
        // Predicated region
        $region17: #{tpu_custom_call.1} parent=11 // pred_check
          %p249 = pneg %p118
        $region18: #{tpu_custom_call.1} parent=11 // pred_check_branch
          %251 = sbr.rel (%p249) target = $region20
        $region19: #{tpu_custom_call.1} parent=11 // pred_region
          %s253 = ssub.s32 128, 128
          %254 = vsyncadd [#allocation10], %s253
          %s256 = sshll.u32 [#allocation9], 4
          %s257 = int_to_ptr.vmem [resolvable:$true] %s256
          %259 = dma.hbm_to_vmem [thread:$0]  %s3, 128, %s257, [#allocation10]
        $region20: #{tpu_custom_call.1} parent=11 // pred_fallthru
          _
        // Predicated region
        $region21: #{tpu_custom_call.1} parent=11 // pred_check
          %p260 = pneg %p139
        $region22: #{tpu_custom_call.1} parent=11 // pred_check_branch
          %262 = sbr.rel (%p260) target = $region24
        $region23: #{tpu_custom_call.1} parent=11 // pred_region
          %s264 = ssub.s32 65536, 65536
          %265 = vsyncadd [#allocation10], %s264
          %s266 = sshll.u32 [#allocation11], 4
          %s267 = int_to_ptr.vmem [resolvable:$true] %s266
          %272 = dma.hbm_to_vmem [thread:$0]  %s4, 65536, %s267, [#allocation10], 512, 512, 32
        $region24: #{tpu_custom_call.1} parent=11 // pred_fallthru
          _
        // Predicated region
        $region25: #{tpu_custom_call.1} parent=11 // pred_check
          %p273 = pneg %p160
        $region26: #{tpu_custom_call.1} parent=11 // pred_check_branch
          %275 = sbr.rel (%p273) target = $region28
        $region27: #{tpu_custom_call.1} parent=11 // pred_region
          %s277 = ssub.s32 128, 128
          %278 = vsyncadd [#allocation13], %s277
          %s280 = sshll.u32 [#allocation12], 4
          %s281 = int_to_ptr.vmem [resolvable:$true] %s280
          %283 = dma.hbm_to_vmem [thread:$0]  %s5, 128, %s281, [#allocation13]
        $region28: #{tpu_custom_call.1} parent=11 // pred_fallthru
          _
        // Predicated region
        $region29: #{tpu_custom_call.1} parent=11 // pred_check
          %p284 = pneg %p181
        $region30: #{tpu_custom_call.1} parent=11 // pred_check_branch
          %286 = sbr.rel (%p284) target = $region32
        $region31: #{tpu_custom_call.1} parent=11 // pred_region
          %s288 = ssub.s32 8192, 8192
          %289 = vsyncadd [#allocation13], %s288
          %s290 = sshll.u32 [#allocation14], 4
          %s291 = int_to_ptr.vmem [resolvable:$true] %s290
          %296 = dma.hbm_to_vmem [thread:$0]  %s6, 8192, %s291, [#allocation13], 64, 64, 4
        $region32: #{tpu_custom_call.1} parent=11 // pred_fallthru
          _
        // Predicated region
        $region33: #{tpu_custom_call.1} parent=11 // pred_check
          %p297 = pneg %p202
        $region34: #{tpu_custom_call.1} parent=11 // pred_check_branch
          %299 = sbr.rel (%p297) target = $region36
        $region35: #{tpu_custom_call.1} parent=11 // pred_region
          %s301 = ssub.s32 16, 16
          %302 = vsyncadd [#allocation16], %s301
          %s304 = sshll.u32 [#allocation15], 4
          %s305 = int_to_ptr.vmem [resolvable:$true] %s304
          %307 = dma.hbm_to_vmem [thread:$0]  %s7, 16, %s305, [#allocation16]
        $region36: #{tpu_custom_call.1} parent=11 // pred_fallthru
          _
      $region12: #{tpu_custom_call.1} parent=5 // pred_fallthru
        _
      %p308 = scmp.lt.s32.totalorder %s24, 3
      // Predicated region
      $region37: #{tpu_custom_call.1} parent=5 // pred_check
        %p309 = pneg %p308
      $region38: #{tpu_custom_call.1} parent=5 // pred_check_branch
        %311 = sbr.rel (%p309) target = $region40
      $region39: #{tpu_custom_call.1} parent=5 // pred_region
        // Predicated region
        $region41: #{tpu_custom_call.1} parent=39 // pred_check
          %p312 = pneg %p44
        $region42: #{tpu_custom_call.1} parent=39 // pred_check_branch
          %314 = sbr.rel (%p312) target = $region44
        $region43: #{tpu_custom_call.1} parent=39 // pred_region
          %s315 = sand.u32 %s34, 1
          %s316 = scalar_lea.sflag [#allocation4], %s315
          %s317 = sand.u32 %s34, 1
          %s318 = smul.addr %s317, 192
          %s319 = scalar_lea.vmem [#allocation3], %s318
          %s320 = smul.u32 24, %s24
          %s322 = ssub.s32 3072, 3072
          %323 = vsyncadd %s316, %s322
          %s324 = smul.addr %s320, 128
          %s325 = scalar_lea.hbm %s0, %s324
          %s327 = sshll.u32 %s319, 4
          %s328 = int_to_ptr.vmem [resolvable:$true] %s327
          %330 = dma.hbm_to_vmem [thread:$0]  %s325, 3072, %s328, %s316
        $region44: #{tpu_custom_call.1} parent=39 // pred_fallthru
          _
        // Predicated region
        $region45: #{tpu_custom_call.1} parent=39 // pred_check
          %p331 = pneg %p70
        $region46: #{tpu_custom_call.1} parent=39 // pred_check_branch
          %333 = sbr.rel (%p331) target = $region48
        $region47: #{tpu_custom_call.1} parent=39 // pred_region
          %s334 = sand.u32 %s24, 1
          %s335 = scalar_lea.sflag [#allocation7], %s334
          %s336 = sand.u32 %s60, 1
          %s337 = smul.addr %s336, 6144
          %s338 = scalar_lea.vmem [#allocation6], %s337
          %s339 = smul.u32 96, %s24
          %s341 = ssub.s32 98304, 98304
          %342 = vsyncadd %s335, %s341
          %s343 = smul.addr %s339, 8
          %s344 = smul.addr %s343, 128
          %s345 = scalar_lea.hbm %s1, %s344
          %s346 = sshll.u32 %s338, 4
          %s347 = int_to_ptr.vmem [resolvable:$true] %s346
          %352 = dma.hbm_to_vmem [thread:$0]  %s345, 98304, %s347, %s335, 1024, 1024, 64
        $region48: #{tpu_custom_call.1} parent=39 // pred_fallthru
          _
      $region40: #{tpu_custom_call.1} parent=5 // pred_fallthru
        _
      %p353 = scmp.le.s32.totalorder 1, %s24
      %p354 = scmp.lt.s32.totalorder %s24, 4
      %p355 = pnand %p353, %p354
      %p356 = pneg %p355
      // Predicated region
      $region49: #{tpu_custom_call.1} parent=5 // pred_check
        _
      $region50: #{tpu_custom_call.1} parent=5 // pred_check_branch
        %358 = sbr.rel (%p355) target = $region52
      $region51: #{tpu_custom_call.1} parent=5 // pred_region
        %s359 = ssub.s32 %s24, 1
        %s360 = sand.u32 %s37, 1
        %s361 = scalar_lea.sflag [#allocation4], %s360
        %s362 = sand.u32 %s37, 1
        %s363 = smul.addr %s362, 192
        %s364 = scalar_lea.vmem [#allocation3], %s363
        // Predicated region
        $region53: #{tpu_custom_call.1} parent=51 // pred_check
          %p365 = pneg %p50
        $region54: #{tpu_custom_call.1} parent=51 // pred_check_branch
          %367 = sbr.rel (%p365) target = $region56
        $region55: #{tpu_custom_call.1} parent=51 // pred_region
          %368 = dma.done %s361, 3072
        $region56: #{tpu_custom_call.1} parent=51 // pred_fallthru
          _
        %s369 = sand.u32 %s29, 1
        %s370 = scalar_lea.sflag [#allocation7], %s369
        %s371 = sand.u32 %s63, 1
        %s372 = smul.addr %s371, 6144
        %s373 = scalar_lea.vmem [#allocation6], %s372
        // Predicated region
        $region57: #{tpu_custom_call.1} parent=51 // pred_check
          %p374 = pneg %p76
        $region58: #{tpu_custom_call.1} parent=51 // pred_check_branch
          %376 = sbr.rel (%p374) target = $region60
        $region59: #{tpu_custom_call.1} parent=51 // pred_region
          %377 = dma.done %s370, 98304
        $region60: #{tpu_custom_call.1} parent=51 // pred_fallthru
          _
        // Predicated region
        $region61: #{tpu_custom_call.1} parent=51 // pred_check
          %p378 = pneg %p97
        $region62: #{tpu_custom_call.1} parent=51 // pred_check_branch
          %380 = sbr.rel (%p378) target = $region64
        $region63: #{tpu_custom_call.1} parent=51 // pred_region
          %381 = dma.done [#allocation7], 128
        $region64: #{tpu_custom_call.1} parent=51 // pred_fallthru
          _
        // Predicated region
        $region65: #{tpu_custom_call.1} parent=51 // pred_check
          %p382 = pneg %p118
        $region66: #{tpu_custom_call.1} parent=51 // pred_check_branch
          %384 = sbr.rel (%p382) target = $region68
        $region67: #{tpu_custom_call.1} parent=51 // pred_region
          %385 = dma.done [#allocation10], 128
        $region68: #{tpu_custom_call.1} parent=51 // pred_fallthru
          _
        // Predicated region
        $region69: #{tpu_custom_call.1} parent=51 // pred_check
          %p386 = pneg %p139
        $region70: #{tpu_custom_call.1} parent=51 // pred_check_branch
          %388 = sbr.rel (%p386) target = $region72
        $region71: #{tpu_custom_call.1} parent=51 // pred_region
          %389 = dma.done [#allocation10], 65536
        $region72: #{tpu_custom_call.1} parent=51 // pred_fallthru
          _
        // Predicated region
        $region73: #{tpu_custom_call.1} parent=51 // pred_check
          %p390 = pneg %p160
        $region74: #{tpu_custom_call.1} parent=51 // pred_check_branch
          %392 = sbr.rel (%p390) target = $region76
        $region75: #{tpu_custom_call.1} parent=51 // pred_region
          %393 = dma.done [#allocation13], 128
        $region76: #{tpu_custom_call.1} parent=51 // pred_fallthru
          _
        // Predicated region
        $region77: #{tpu_custom_call.1} parent=51 // pred_check
          %p394 = pneg %p181
        $region78: #{tpu_custom_call.1} parent=51 // pred_check_branch
          %396 = sbr.rel (%p394) target = $region80
        $region79: #{tpu_custom_call.1} parent=51 // pred_region
          %397 = dma.done [#allocation13], 8192
        $region80: #{tpu_custom_call.1} parent=51 // pred_fallthru
          _
        // Predicated region
        $region81: #{tpu_custom_call.1} parent=51 // pred_check
          %p398 = pneg %p202
        $region82: #{tpu_custom_call.1} parent=51 // pred_check_branch
          %400 = sbr.rel (%p398) target = $region84
        $region83: #{tpu_custom_call.1} parent=51 // pred_region
          %401 = dma.done [#allocation16], 16
        $region84: #{tpu_custom_call.1} parent=51 // pred_fallthru
          _
        %s402 = sand.u32 %s37, 1
        %s403 = scalar_lea.sflag [#allocation4], %s402
        %s404 = sand.u32 %s37, 1
        %s405 = smul.addr %s404, 192
        %s406 = scalar_lea.vmem [#allocation3], %s405
        %p407 = pneg %p50
        %p408 = pneg %p47
        %s409 = sand.u32 %s29, 1
        %s410 = scalar_lea.sflag [#allocation7], %s409
        %s411 = sand.u32 %s63, 1
        %s412 = smul.addr %s411, 6144
        %s413 = scalar_lea.vmem [#allocation6], %s412
        %p414 = pneg %p76
        %p415 = pneg %p73
        %p416 = pneg %p97
        %p417 = pneg %p94
        %p418 = pneg %p118
        %p419 = pneg %p115
        %p420 = pneg %p139
        %p421 = pneg %p136
        %p422 = pneg %p160
        %p423 = pneg %p157
        %p424 = pneg %p181
        %p425 = pneg %p178
        %p426 = pneg %p202
        %p427 = pneg %p199
        %p428 = pneg %p223
        %p429 = pneg %p220
        %s430 = smul.u32 24, %s29
        %s431 = smul.u32 96, %s29
        %p433 = scmp.eq.s32.totalorder %s29, 0
        // Predicated region
        $region85: #{tpu_custom_call.1} parent=51 // pred_check
          %p434 = pneg %p433
        $region86: #{tpu_custom_call.1} parent=51 // pred_check_branch
          %436 = sbr.rel (%p434) target = $region88
        $region87: #{tpu_custom_call.1} parent=51 // pred_region
          %437 = vst [vmem:[#allocation2] sm:$0xff] 0.0
          %438 = vst [vmem:[#allocation2 + $0x8] sm:$0xff] 0.0
          %439 = vst [vmem:[#allocation2 + $0x10] sm:$0xff] 0.0
          %440 = vst [vmem:[#allocation2 + $0x18] sm:$0xff] 0.0
          %441 = vst [vmem:[#allocation2 + $0x20] sm:$0xff] 0.0
          %442 = vst [vmem:[#allocation2 + $0x28] sm:$0xff] 0.0
          %443 = vst [vmem:[#allocation2 + $0x30] sm:$0xff] 0.0
          %444 = vst [vmem:[#allocation2 + $0x38] sm:$0xff] 0.0
        $region88: #{tpu_custom_call.1} parent=51 // pred_fallthru
          _
        %v445 = vld [vmem:[%s364] sm:$0xff]
        %v446 = vld [vmem:[%s364 + $0x8] sm:$0xff]
        %v447 = vld [vmem:[%s364 + $0x10] sm:$0xff]
        %v448 = vld [vmem:[%s364 + $0x18] sm:$0xff]
        %v449 = vld [vmem:[%s364 + $0x20] sm:$0xff]
        %v450 = vld [vmem:[%s364 + $0x28] sm:$0xff]
        %v451 = vld [vmem:[%s364 + $0x30] sm:$0xff]
        %v452 = vld [vmem:[%s364 + $0x38] sm:$0xff]
        %v453 = vld [vmem:[%s364 + $0x40] sm:$0xff]
        %v454 = vld [vmem:[%s364 + $0x48] sm:$0xff]
        %v455 = vld [vmem:[%s364 + $0x50] sm:$0xff]
        %v456 = vld [vmem:[%s364 + $0x58] sm:$0xff]
        %v457 = vld [vmem:[%s364 + $0x60] sm:$0xff]
        %v458 = vld [vmem:[%s364 + $0x68] sm:$0xff]
        %v459 = vld [vmem:[%s364 + $0x70] sm:$0xff]
        %v460 = vld [vmem:[%s364 + $0x78] sm:$0xff]
        %v461 = vld [vmem:[%s364 + $0x80] sm:$0xff]
        %v462 = vld [vmem:[%s364 + $0x88] sm:$0xff]
        %v463 = vld [vmem:[%s364 + $0x90] sm:$0xff]
        %v464 = vld [vmem:[%s364 + $0x98] sm:$0xff]
        %v465 = vld [vmem:[%s364 + $0xa0] sm:$0xff]
        %v466 = vld [vmem:[%s364 + $0xa8] sm:$0xff]
        %v467 = vld [vmem:[%s364 + $0xb0] sm:$0xff]
        %v468 = vld [vmem:[%s364 + $0xb8] sm:$0xff]
        %v469 = vpack.c.bf16 %v445, %v445
        %v470 = vpack.c.bf16 %v446, %v446
        %v471 = vpack.c.bf16 %v447, %v447
        %v472 = vpack.c.bf16 %v448, %v448
        %v473 = vpack.c.bf16 %v449, %v449
        %v474 = vpack.c.bf16 %v450, %v450
        %v475 = vpack.c.bf16 %v451, %v451
        %v476 = vpack.c.bf16 %v452, %v452
        %v477 = vpack.c.bf16 %v453, %v453
        %v478 = vpack.c.bf16 %v454, %v454
        %v479 = vpack.c.bf16 %v455, %v455
        %v480 = vpack.c.bf16 %v456, %v456
        %v481 = vpack.c.bf16 %v457, %v457
        %v482 = vpack.c.bf16 %v458, %v458
        %v483 = vpack.c.bf16 %v459, %v459
        %v484 = vpack.c.bf16 %v460, %v460
        %v485 = vpack.c.bf16 %v461, %v461
        %v486 = vpack.c.bf16 %v462, %v462
        %v487 = vpack.c.bf16 %v463, %v463
        %v488 = vpack.c.bf16 %v464, %v464
        %v489 = vpack.c.bf16 %v465, %v465
        %v490 = vpack.c.bf16 %v466, %v466
        %v491 = vpack.c.bf16 %v467, %v467
        %v492 = vpack.c.bf16 %v468, %v468
        %v493 = vld [vmem:[%s373] sm:$0xff]
        %v494 = vld [vmem:[%s373 + $0x8] sm:$0xff]
        %v495 = vld [vmem:[%s373 + $0x10] sm:$0xff]
        %v496 = vld [vmem:[%s373 + $0x18] sm:$0xff]
        %v497 = vld [vmem:[%s373 + $0x20] sm:$0xff]
        %v498 = vld [vmem:[%s373 + $0x28] sm:$0xff]
        %v499 = vld [vmem:[%s373 + $0x30] sm:$0xff]
        %v500 = vld [vmem:[%s373 + $0x38] sm:$0xff]
        %v501 = vld [vmem:[%s373 + $0x40] sm:$0xff]
        %v502 = vld [vmem:[%s373 + $0x48] sm:$0xff]
        %v503 = vld [vmem:[%s373 + $0x50] sm:$0xff]
        %v504 = vld [vmem:[%s373 + $0x58] sm:$0xff]
        %v505 = vld [vmem:[%s373 + $0x60] sm:$0xff]
        %v506 = vld [vmem:[%s373 + $0x68] sm:$0xff]
        %v507 = vld [vmem:[%s373 + $0x70] sm:$0xff]
        %v508 = vld [vmem:[%s373 + $0x78] sm:$0xff]
        %v509 = vld [vmem:[%s373 + $0x80] sm:$0xff]
        %v510 = vld [vmem:[%s373 + $0x88] sm:$0xff]
        %v511 = vld [vmem:[%s373 + $0x90] sm:$0xff]
        %v512 = vld [vmem:[%s373 + $0x98] sm:$0xff]
        %v513 = vld [vmem:[%s373 + $0xa0] sm:$0xff]
        %v514 = vld [vmem:[%s373 + $0xa8] sm:$0xff]
        %v515 = vld [vmem:[%s373 + $0xb0] sm:$0xff]
        %v516 = vld [vmem:[%s373 + $0xb8] sm:$0xff]
        %v517 = vld [vmem:[%s373 + $0xc0] sm:$0xff]
        %v518 = vld [vmem:[%s373 + $0xc8] sm:$0xff]
        %v519 = vld [vmem:[%s373 + $0xd0] sm:$0xff]
        %v520 = vld [vmem:[%s373 + $0xd8] sm:$0xff]
        %v521 = vld [vmem:[%s373 + $0xe0] sm:$0xff]
        %v522 = vld [vmem:[%s373 + $0xe8] sm:$0xff]
        %v523 = vld [vmem:[%s373 + $0xf0] sm:$0xff]
        %v524 = vld [vmem:[%s373 + $0xf8] sm:$0xff]
        %v525 = vld [vmem:[%s373 + $0x100] sm:$0xff]
        %v526 = vld [vmem:[%s373 + $0x108] sm:$0xff]
        %v527 = vld [vmem:[%s373 + $0x110] sm:$0xff]
        %v528 = vld [vmem:[%s373 + $0x118] sm:$0xff]
        %v529 = vld [vmem:[%s373 + $0x120] sm:$0xff]
        %v530 = vld [vmem:[%s373 + $0x128] sm:$0xff]
        %v531 = vld [vmem:[%s373 + $0x130] sm:$0xff]
        %v532 = vld [vmem:[%s373 + $0x138] sm:$0xff]
        %v533 = vld [vmem:[%s373 + $0x140] sm:$0xff]
        %v534 = vld [vmem:[%s373 + $0x148] sm:$0xff]
        %v535 = vld [vmem:[%s373 + $0x150] sm:$0xff]
        %v536 = vld [vmem:[%s373 + $0x158] sm:$0xff]
        %v537 = vld [vmem:[%s373 + $0x160] sm:$0xff]
        %v538 = vld [vmem:[%s373 + $0x168] sm:$0xff]
        %v539 = vld [vmem:[%s373 + $0x170] sm:$0xff]
        %v540 = vld [vmem:[%s373 + $0x178] sm:$0xff]
        %v541 = vld [vmem:[%s373 + $0x180] sm:$0xff]
        %v542 = vld [vmem:[%s373 + $0x188] sm:$0xff]
        %v543 = vld [vmem:[%s373 + $0x190] sm:$0xff]
        %v544 = vld [vmem:[%s373 + $0x198] sm:$0xff]
        %v545 = vld [vmem:[%s373 + $0x1a0] sm:$0xff]
        %v546 = vld [vmem:[%s373 + $0x1a8] sm:$0xff]
        %v547 = vld [vmem:[%s373 + $0x1b0] sm:$0xff]
        %v548 = vld [vmem:[%s373 + $0x1b8] sm:$0xff]
        %v549 = vld [vmem:[%s373 + $0x1c0] sm:$0xff]
        %v550 = vld [vmem:[%s373 + $0x1c8] sm:$0xff]
        %v551 = vld [vmem:[%s373 + $0x1d0] sm:$0xff]
        %v552 = vld [vmem:[%s373 + $0x1d8] sm:$0xff]
        %v553 = vld [vmem:[%s373 + $0x1e0] sm:$0xff]
        %v554 = vld [vmem:[%s373 + $0x1e8] sm:$0xff]
        %v555 = vld [vmem:[%s373 + $0x1f0] sm:$0xff]
        %v556 = vld [vmem:[%s373 + $0x1f8] sm:$0xff]
        %v557 = vld [vmem:[%s373 + $0x200] sm:$0xff]
        %v558 = vld [vmem:[%s373 + $0x208] sm:$0xff]
        %v559 = vld [vmem:[%s373 + $0x210] sm:$0xff]
        %v560 = vld [vmem:[%s373 + $0x218] sm:$0xff]
        %v561 = vld [vmem:[%s373 + $0x220] sm:$0xff]
        %v562 = vld [vmem:[%s373 + $0x228] sm:$0xff]
        %v563 = vld [vmem:[%s373 + $0x230] sm:$0xff]
        %v564 = vld [vmem:[%s373 + $0x238] sm:$0xff]
        %v565 = vld [vmem:[%s373 + $0x240] sm:$0xff]
        %v566 = vld [vmem:[%s373 + $0x248] sm:$0xff]
        %v567 = vld [vmem:[%s373 + $0x250] sm:$0xff]
        %v568 = vld [vmem:[%s373 + $0x258] sm:$0xff]
        %v569 = vld [vmem:[%s373 + $0x260] sm:$0xff]
        %v570 = vld [vmem:[%s373 + $0x268] sm:$0xff]
        %v571 = vld [vmem:[%s373 + $0x270] sm:$0xff]
        %v572 = vld [vmem:[%s373 + $0x278] sm:$0xff]
        %v573 = vld [vmem:[%s373 + $0x280] sm:$0xff]
        %v574 = vld [vmem:[%s373 + $0x288] sm:$0xff]
        %v575 = vld [vmem:[%s373 + $0x290] sm:$0xff]
        %v576 = vld [vmem:[%s373 + $0x298] sm:$0xff]
        %v577 = vld [vmem:[%s373 + $0x2a0] sm:$0xff]
        %v578 = vld [vmem:[%s373 + $0x2a8] sm:$0xff]
        %v579 = vld [vmem:[%s373 + $0x2b0] sm:$0xff]
        %v580 = vld [vmem:[%s373 + $0x2b8] sm:$0xff]
        %v581 = vld [vmem:[%s373 + $0x2c0] sm:$0xff]
        %v582 = vld [vmem:[%s373 + $0x2c8] sm:$0xff]
        %v583 = vld [vmem:[%s373 + $0x2d0] sm:$0xff]
        %v584 = vld [vmem:[%s373 + $0x2d8] sm:$0xff]
        %v585 = vld [vmem:[%s373 + $0x2e0] sm:$0xff]
        %v586 = vld [vmem:[%s373 + $0x2e8] sm:$0xff]
        %v587 = vld [vmem:[%s373 + $0x2f0] sm:$0xff]
        %v588 = vld [vmem:[%s373 + $0x2f8] sm:$0xff]
        %v589 = vld [vmem:[%s373 + $0x300] sm:$0xff]
        %v590 = vld [vmem:[%s373 + $0x308] sm:$0xff]
        %v591 = vld [vmem:[%s373 + $0x310] sm:$0xff]
        %v592 = vld [vmem:[%s373 + $0x318] sm:$0xff]
        %v593 = vld [vmem:[%s373 + $0x320] sm:$0xff]
        %v594 = vld [vmem:[%s373 + $0x328] sm:$0xff]
        %v595 = vld [vmem:[%s373 + $0x330] sm:$0xff]
        %v596 = vld [vmem:[%s373 + $0x338] sm:$0xff]
        %v597 = vld [vmem:[%s373 + $0x340] sm:$0xff]
        %v598 = vld [vmem:[%s373 + $0x348] sm:$0xff]
        %v599 = vld [vmem:[%s373 + $0x350] sm:$0xff]
        %v600 = vld [vmem:[%s373 + $0x358] sm:$0xff]
        %v601 = vld [vmem:[%s373 + $0x360] sm:$0xff]
        %v602 = vld [vmem:[%s373 + $0x368] sm:$0xff]
        %v603 = vld [vmem:[%s373 + $0x370] sm:$0xff]
        %v604 = vld [vmem:[%s373 + $0x378] sm:$0xff]
        %v605 = vld [vmem:[%s373 + $0x380] sm:$0xff]
        %v606 = vld [vmem:[%s373 + $0x388] sm:$0xff]
        %v607 = vld [vmem:[%s373 + $0x390] sm:$0xff]
        %v608 = vld [vmem:[%s373 + $0x398] sm:$0xff]
        %v609 = vld [vmem:[%s373 + $0x3a0] sm:$0xff]
        %v610 = vld [vmem:[%s373 + $0x3a8] sm:$0xff]
        %v611 = vld [vmem:[%s373 + $0x3b0] sm:$0xff]
        %v612 = vld [vmem:[%s373 + $0x3b8] sm:$0xff]
        %v613 = vld [vmem:[%s373 + $0x3c0] sm:$0xff]
        %v614 = vld [vmem:[%s373 + $0x3c8] sm:$0xff]
        %v615 = vld [vmem:[%s373 + $0x3d0] sm:$0xff]
        %v616 = vld [vmem:[%s373 + $0x3d8] sm:$0xff]
        %v617 = vld [vmem:[%s373 + $0x3e0] sm:$0xff]
        %v618 = vld [vmem:[%s373 + $0x3e8] sm:$0xff]
        %v619 = vld [vmem:[%s373 + $0x3f0] sm:$0xff]
        %v620 = vld [vmem:[%s373 + $0x3f8] sm:$0xff]
        %v621 = vld [vmem:[%s373 + $0x400] sm:$0xff]
        %v622 = vld [vmem:[%s373 + $0x408] sm:$0xff]
        %v623 = vld [vmem:[%s373 + $0x410] sm:$0xff]
        %v624 = vld [vmem:[%s373 + $0x418] sm:$0xff]
        %v625 = vld [vmem:[%s373 + $0x420] sm:$0xff]
        %v626 = vld [vmem:[%s373 + $0x428] sm:$0xff]
        %v627 = vld [vmem:[%s373 + $0x430] sm:$0xff]
        %v628 = vld [vmem:[%s373 + $0x438] sm:$0xff]
        %v629 = vld [vmem:[%s373 + $0x440] sm:$0xff]
        %v630 = vld [vmem:[%s373 + $0x448] sm:$0xff]
        %v631 = vld [vmem:[%s373 + $0x450] sm:$0xff]
        %v632 = vld [vmem:[%s373 + $0x458] sm:$0xff]
        %v633 = vld [vmem:[%s373 + $0x460] sm:$0xff]
        %v634 = vld [vmem:[%s373 + $0x468] sm:$0xff]
        %v635 = vld [vmem:[%s373 + $0x470] sm:$0xff]
        %v636 = vld [vmem:[%s373 + $0x478] sm:$0xff]
        %v637 = vld [vmem:[%s373 + $0x480] sm:$0xff]
        %v638 = vld [vmem:[%s373 + $0x488] sm:$0xff]
        %v639 = vld [vmem:[%s373 + $0x490] sm:$0xff]
        %v640 = vld [vmem:[%s373 + $0x498] sm:$0xff]
        %v641 = vld [vmem:[%s373 + $0x4a0] sm:$0xff]
        %v642 = vld [vmem:[%s373 + $0x4a8] sm:$0xff]
        %v643 = vld [vmem:[%s373 + $0x4b0] sm:$0xff]
        %v644 = vld [vmem:[%s373 + $0x4b8] sm:$0xff]
        %v645 = vld [vmem:[%s373 + $0x4c0] sm:$0xff]
        %v646 = vld [vmem:[%s373 + $0x4c8] sm:$0xff]
        %v647 = vld [vmem:[%s373 + $0x4d0] sm:$0xff]
        %v648 = vld [vmem:[%s373 + $0x4d8] sm:$0xff]
        %v649 = vld [vmem:[%s373 + $0x4e0] sm:$0xff]
        %v650 = vld [vmem:[%s373 + $0x4e8] sm:$0xff]
        %v651 = vld [vmem:[%s373 + $0x4f0] sm:$0xff]
        %v652 = vld [vmem:[%s373 + $0x4f8] sm:$0xff]
        %v653 = vld [vmem:[%s373 + $0x500] sm:$0xff]
        %v654 = vld [vmem:[%s373 + $0x508] sm:$0xff]
        %v655 = vld [vmem:[%s373 + $0x510] sm:$0xff]
        %v656 = vld [vmem:[%s373 + $0x518] sm:$0xff]
        %v657 = vld [vmem:[%s373 + $0x520] sm:$0xff]
        %v658 = vld [vmem:[%s373 + $0x528] sm:$0xff]
        %v659 = vld [vmem:[%s373 + $0x530] sm:$0xff]
        %v660 = vld [vmem:[%s373 + $0x538] sm:$0xff]
        %v661 = vld [vmem:[%s373 + $0x540] sm:$0xff]
        %v662 = vld [vmem:[%s373 + $0x548] sm:$0xff]
        %v663 = vld [vmem:[%s373 + $0x550] sm:$0xff]
        %v664 = vld [vmem:[%s373 + $0x558] sm:$0xff]
        %v665 = vld [vmem:[%s373 + $0x560] sm:$0xff]
        %v666 = vld [vmem:[%s373 + $0x568] sm:$0xff]
        %v667 = vld [vmem:[%s373 + $0x570] sm:$0xff]
        %v668 = vld [vmem:[%s373 + $0x578] sm:$0xff]
        %v669 = vld [vmem:[%s373 + $0x580] sm:$0xff]
        %v670 = vld [vmem:[%s373 + $0x588] sm:$0xff]
        %v671 = vld [vmem:[%s373 + $0x590] sm:$0xff]
        %v672 = vld [vmem:[%s373 + $0x598] sm:$0xff]
        %v673 = vld [vmem:[%s373 + $0x5a0] sm:$0xff]
        %v674 = vld [vmem:[%s373 + $0x5a8] sm:$0xff]
        %v675 = vld [vmem:[%s373 + $0x5b0] sm:$0xff]
        %v676 = vld [vmem:[%s373 + $0x5b8] sm:$0xff]
        %v677 = vld [vmem:[%s373 + $0x5c0] sm:$0xff]
        %v678 = vld [vmem:[%s373 + $0x5c8] sm:$0xff]
        %v679 = vld [vmem:[%s373 + $0x5d0] sm:$0xff]
        %v680 = vld [vmem:[%s373 + $0x5d8] sm:$0xff]
        %v681 = vld [vmem:[%s373 + $0x5e0] sm:$0xff]
        %v682 = vld [vmem:[%s373 + $0x5e8] sm:$0xff]
        %v683 = vld [vmem:[%s373 + $0x5f0] sm:$0xff]
        %v684 = vld [vmem:[%s373 + $0x5f8] sm:$0xff]
        %v685 = vld [vmem:[%s373 + $0x600] sm:$0xff]
        %v686 = vld [vmem:[%s373 + $0x608] sm:$0xff]
        %v687 = vld [vmem:[%s373 + $0x610] sm:$0xff]
        %v688 = vld [vmem:[%s373 + $0x618] sm:$0xff]
        %v689 = vld [vmem:[%s373 + $0x620] sm:$0xff]
        %v690 = vld [vmem:[%s373 + $0x628] sm:$0xff]
        %v691 = vld [vmem:[%s373 + $0x630] sm:$0xff]
        %v692 = vld [vmem:[%s373 + $0x638] sm:$0xff]
        %v693 = vld [vmem:[%s373 + $0x640] sm:$0xff]
        %v694 = vld [vmem:[%s373 + $0x648] sm:$0xff]
        %v695 = vld [vmem:[%s373 + $0x650] sm:$0xff]
        %v696 = vld [vmem:[%s373 + $0x658] sm:$0xff]
        %v697 = vld [vmem:[%s373 + $0x660] sm:$0xff]
        %v698 = vld [vmem:[%s373 + $0x668] sm:$0xff]
        %v699 = vld [vmem:[%s373 + $0x670] sm:$0xff]
        %v700 = vld [vmem:[%s373 + $0x678] sm:$0xff]
        %v701 = vld [vmem:[%s373 + $0x680] sm:$0xff]
        %v702 = vld [vmem:[%s373 + $0x688] sm:$0xff]
        %v703 = vld [vmem:[%s373 + $0x690] sm:$0xff]
        %v704 = vld [vmem:[%s373 + $0x698] sm:$0xff]
        %v705 = vld [vmem:[%s373 + $0x6a0] sm:$0xff]
        %v706 = vld [vmem:[%s373 + $0x6a8] sm:$0xff]
        %v707 = vld [vmem:[%s373 + $0x6b0] sm:$0xff]
        %v708 = vld [vmem:[%s373 + $0x6b8] sm:$0xff]
        %v709 = vld [vmem:[%s373 + $0x6c0] sm:$0xff]
        %v710 = vld [vmem:[%s373 + $0x6c8] sm:$0xff]
        %v711 = vld [vmem:[%s373 + $0x6d0] sm:$0xff]
        %v712 = vld [vmem:[%s373 + $0x6d8] sm:$0xff]
        %v713 = vld [vmem:[%s373 + $0x6e0] sm:$0xff]
        %v714 = vld [vmem:[%s373 + $0x6e8] sm:$0xff]
        %v715 = vld [vmem:[%s373 + $0x6f0] sm:$0xff]
        %v716 = vld [vmem:[%s373 + $0x6f8] sm:$0xff]
        %v717 = vld [vmem:[%s373 + $0x700] sm:$0xff]
        %v718 = vld [vmem:[%s373 + $0x708] sm:$0xff]
        %v719 = vld [vmem:[%s373 + $0x710] sm:$0xff]
        %v720 = vld [vmem:[%s373 + $0x718] sm:$0xff]
        %v721 = vld [vmem:[%s373 + $0x720] sm:$0xff]
        %v722 = vld [vmem:[%s373 + $0x728] sm:$0xff]
        %v723 = vld [vmem:[%s373 + $0x730] sm:$0xff]
        %v724 = vld [vmem:[%s373 + $0x738] sm:$0xff]
        %v725 = vld [vmem:[%s373 + $0x740] sm:$0xff]
        %v726 = vld [vmem:[%s373 + $0x748] sm:$0xff]
        %v727 = vld [vmem:[%s373 + $0x750] sm:$0xff]
        %v728 = vld [vmem:[%s373 + $0x758] sm:$0xff]
        %v729 = vld [vmem:[%s373 + $0x760] sm:$0xff]
        %v730 = vld [vmem:[%s373 + $0x768] sm:$0xff]
        %v731 = vld [vmem:[%s373 + $0x770] sm:$0xff]
        %v732 = vld [vmem:[%s373 + $0x778] sm:$0xff]
        %v733 = vld [vmem:[%s373 + $0x780] sm:$0xff]
        %v734 = vld [vmem:[%s373 + $0x788] sm:$0xff]
        %v735 = vld [vmem:[%s373 + $0x790] sm:$0xff]
        %v736 = vld [vmem:[%s373 + $0x798] sm:$0xff]
        %v737 = vld [vmem:[%s373 + $0x7a0] sm:$0xff]
        %v738 = vld [vmem:[%s373 + $0x7a8] sm:$0xff]
        %v739 = vld [vmem:[%s373 + $0x7b0] sm:$0xff]
        %v740 = vld [vmem:[%s373 + $0x7b8] sm:$0xff]
        %v741 = vld [vmem:[%s373 + $0x7c0] sm:$0xff]
        %v742 = vld [vmem:[%s373 + $0x7c8] sm:$0xff]
        %v743 = vld [vmem:[%s373 + $0x7d0] sm:$0xff]
        %v744 = vld [vmem:[%s373 + $0x7d8] sm:$0xff]
        %v745 = vld [vmem:[%s373 + $0x7e0] sm:$0xff]
        %v746 = vld [vmem:[%s373 + $0x7e8] sm:$0xff]
        %v747 = vld [vmem:[%s373 + $0x7f0] sm:$0xff]
        %v748 = vld [vmem:[%s373 + $0x7f8] sm:$0xff]
        %v749 = vld [vmem:[%s373 + $0x800] sm:$0xff]
        %v750 = vld [vmem:[%s373 + $0x808] sm:$0xff]
        %v751 = vld [vmem:[%s373 + $0x810] sm:$0xff]
        %v752 = vld [vmem:[%s373 + $0x818] sm:$0xff]
        %v753 = vld [vmem:[%s373 + $0x820] sm:$0xff]
        %v754 = vld [vmem:[%s373 + $0x828] sm:$0xff]
        %v755 = vld [vmem:[%s373 + $0x830] sm:$0xff]
        %v756 = vld [vmem:[%s373 + $0x838] sm:$0xff]
        %v757 = vld [vmem:[%s373 + $0x840] sm:$0xff]
        %v758 = vld [vmem:[%s373 + $0x848] sm:$0xff]
        %v759 = vld [vmem:[%s373 + $0x850] sm:$0xff]
        %v760 = vld [vmem:[%s373 + $0x858] sm:$0xff]
        %v761 = vld [vmem:[%s373 + $0x860] sm:$0xff]
        %v762 = vld [vmem:[%s373 + $0x868] sm:$0xff]
        %v763 = vld [vmem:[%s373 + $0x870] sm:$0xff]
        %v764 = vld [vmem:[%s373 + $0x878] sm:$0xff]
        %v765 = vld [vmem:[%s373 + $0x880] sm:$0xff]
        %v766 = vld [vmem:[%s373 + $0x888] sm:$0xff]
        %v767 = vld [vmem:[%s373 + $0x890] sm:$0xff]
        %v768 = vld [vmem:[%s373 + $0x898] sm:$0xff]
        %v769 = vld [vmem:[%s373 + $0x8a0] sm:$0xff]
        %v770 = vld [vmem:[%s373 + $0x8a8] sm:$0xff]
        %v771 = vld [vmem:[%s373 + $0x8b0] sm:$0xff]
        %v772 = vld [vmem:[%s373 + $0x8b8] sm:$0xff]
        %v773 = vld [vmem:[%s373 + $0x8c0] sm:$0xff]
        %v774 = vld [vmem:[%s373 + $0x8c8] sm:$0xff]
        %v775 = vld [vmem:[%s373 + $0x8d0] sm:$0xff]
        %v776 = vld [vmem:[%s373 + $0x8d8] sm:$0xff]
        %v777 = vld [vmem:[%s373 + $0x8e0] sm:$0xff]
        %v778 = vld [vmem:[%s373 + $0x8e8] sm:$0xff]
        %v779 = vld [vmem:[%s373 + $0x8f0] sm:$0xff]
        %v780 = vld [vmem:[%s373 + $0x8f8] sm:$0xff]
        %v781 = vld [vmem:[%s373 + $0x900] sm:$0xff]
        %v782 = vld [vmem:[%s373 + $0x908] sm:$0xff]
        %v783 = vld [vmem:[%s373 + $0x910] sm:$0xff]
        %v784 = vld [vmem:[%s373 + $0x918] sm:$0xff]
        %v785 = vld [vmem:[%s373 + $0x920] sm:$0xff]
        %v786 = vld [vmem:[%s373 + $0x928] sm:$0xff]
        %v787 = vld [vmem:[%s373 + $0x930] sm:$0xff]
        %v788 = vld [vmem:[%s373 + $0x938] sm:$0xff]
        %v789 = vld [vmem:[%s373 + $0x940] sm:$0xff]
        %v790 = vld [vmem:[%s373 + $0x948] sm:$0xff]
        %v791 = vld [vmem:[%s373 + $0x950] sm:$0xff]
        %v792 = vld [vmem:[%s373 + $0x958] sm:$0xff]
        %v793 = vld [vmem:[%s373 + $0x960] sm:$0xff]
        %v794 = vld [vmem:[%s373 + $0x968] sm:$0xff]
        %v795 = vld [vmem:[%s373 + $0x970] sm:$0xff]
        %v796 = vld [vmem:[%s373 + $0x978] sm:$0xff]
        %v797 = vld [vmem:[%s373 + $0x980] sm:$0xff]
        %v798 = vld [vmem:[%s373 + $0x988] sm:$0xff]
        %v799 = vld [vmem:[%s373 + $0x990] sm:$0xff]
        %v800 = vld [vmem:[%s373 + $0x998] sm:$0xff]
        %v801 = vld [vmem:[%s373 + $0x9a0] sm:$0xff]
        %v802 = vld [vmem:[%s373 + $0x9a8] sm:$0xff]
        %v803 = vld [vmem:[%s373 + $0x9b0] sm:$0xff]
        %v804 = vld [vmem:[%s373 + $0x9b8] sm:$0xff]
        %v805 = vld [vmem:[%s373 + $0x9c0] sm:$0xff]
        %v806 = vld [vmem:[%s373 + $0x9c8] sm:$0xff]
        %v807 = vld [vmem:[%s373 + $0x9d0] sm:$0xff]
        %v808 = vld [vmem:[%s373 + $0x9d8] sm:$0xff]
        %v809 = vld [vmem:[%s373 + $0x9e0] sm:$0xff]
        %v810 = vld [vmem:[%s373 + $0x9e8] sm:$0xff]
        %v811 = vld [vmem:[%s373 + $0x9f0] sm:$0xff]
        %v812 = vld [vmem:[%s373 + $0x9f8] sm:$0xff]
        %v813 = vld [vmem:[%s373 + $0xa00] sm:$0xff]
        %v814 = vld [vmem:[%s373 + $0xa08] sm:$0xff]
        %v815 = vld [vmem:[%s373 + $0xa10] sm:$0xff]
        %v816 = vld [vmem:[%s373 + $0xa18] sm:$0xff]
        %v817 = vld [vmem:[%s373 + $0xa20] sm:$0xff]
        %v818 = vld [vmem:[%s373 + $0xa28] sm:$0xff]
        %v819 = vld [vmem:[%s373 + $0xa30] sm:$0xff]
        %v820 = vld [vmem:[%s373 + $0xa38] sm:$0xff]
        %v821 = vld [vmem:[%s373 + $0xa40] sm:$0xff]
        %v822 = vld [vmem:[%s373 + $0xa48] sm:$0xff]
        %v823 = vld [vmem:[%s373 + $0xa50] sm:$0xff]
        %v824 = vld [vmem:[%s373 + $0xa58] sm:$0xff]
        %v825 = vld [vmem:[%s373 + $0xa60] sm:$0xff]
        %v826 = vld [vmem:[%s373 + $0xa68] sm:$0xff]
        %v827 = vld [vmem:[%s373 + $0xa70] sm:$0xff]
        %v828 = vld [vmem:[%s373 + $0xa78] sm:$0xff]
        %v829 = vld [vmem:[%s373 + $0xa80] sm:$0xff]
        %v830 = vld [vmem:[%s373 + $0xa88] sm:$0xff]
        %v831 = vld [vmem:[%s373 + $0xa90] sm:$0xff]
        %v832 = vld [vmem:[%s373 + $0xa98] sm:$0xff]
        %v833 = vld [vmem:[%s373 + $0xaa0] sm:$0xff]
        %v834 = vld [vmem:[%s373 + $0xaa8] sm:$0xff]
        %v835 = vld [vmem:[%s373 + $0xab0] sm:$0xff]
        %v836 = vld [vmem:[%s373 + $0xab8] sm:$0xff]
        %v837 = vld [vmem:[%s373 + $0xac0] sm:$0xff]
        %v838 = vld [vmem:[%s373 + $0xac8] sm:$0xff]
        %v839 = vld [vmem:[%s373 + $0xad0] sm:$0xff]
        %v840 = vld [vmem:[%s373 + $0xad8] sm:$0xff]
        %v841 = vld [vmem:[%s373 + $0xae0] sm:$0xff]
        %v842 = vld [vmem:[%s373 + $0xae8] sm:$0xff]
        %v843 = vld [vmem:[%s373 + $0xaf0] sm:$0xff]
        %v844 = vld [vmem:[%s373 + $0xaf8] sm:$0xff]
        %v845 = vld [vmem:[%s373 + $0xb00] sm:$0xff]
        %v846 = vld [vmem:[%s373 + $0xb08] sm:$0xff]
        %v847 = vld [vmem:[%s373 + $0xb10] sm:$0xff]
        %v848 = vld [vmem:[%s373 + $0xb18] sm:$0xff]
        %v849 = vld [vmem:[%s373 + $0xb20] sm:$0xff]
        %v850 = vld [vmem:[%s373 + $0xb28] sm:$0xff]
        %v851 = vld [vmem:[%s373 + $0xb30] sm:$0xff]
        %v852 = vld [vmem:[%s373 + $0xb38] sm:$0xff]
        %v853 = vld [vmem:[%s373 + $0xb40] sm:$0xff]
        %v854 = vld [vmem:[%s373 + $0xb48] sm:$0xff]
        %v855 = vld [vmem:[%s373 + $0xb50] sm:$0xff]
        %v856 = vld [vmem:[%s373 + $0xb58] sm:$0xff]
        %v857 = vld [vmem:[%s373 + $0xb60] sm:$0xff]
        %v858 = vld [vmem:[%s373 + $0xb68] sm:$0xff]
        %v859 = vld [vmem:[%s373 + $0xb70] sm:$0xff]
        %v860 = vld [vmem:[%s373 + $0xb78] sm:$0xff]
        %v861 = vld [vmem:[%s373 + $0xb80] sm:$0xff]
        %v862 = vld [vmem:[%s373 + $0xb88] sm:$0xff]
        %v863 = vld [vmem:[%s373 + $0xb90] sm:$0xff]
        %v864 = vld [vmem:[%s373 + $0xb98] sm:$0xff]
        %v865 = vld [vmem:[%s373 + $0xba0] sm:$0xff]
        %v866 = vld [vmem:[%s373 + $0xba8] sm:$0xff]
        %v867 = vld [vmem:[%s373 + $0xbb0] sm:$0xff]
        %v868 = vld [vmem:[%s373 + $0xbb8] sm:$0xff]
        %v869 = vld [vmem:[%s373 + $0xbc0] sm:$0xff]
        %v870 = vld [vmem:[%s373 + $0xbc8] sm:$0xff]
        %v871 = vld [vmem:[%s373 + $0xbd0] sm:$0xff]
        %v872 = vld [vmem:[%s373 + $0xbd8] sm:$0xff]
        %v873 = vld [vmem:[%s373 + $0xbe0] sm:$0xff]
        %v874 = vld [vmem:[%s373 + $0xbe8] sm:$0xff]
        %v875 = vld [vmem:[%s373 + $0xbf0] sm:$0xff]
        %v876 = vld [vmem:[%s373 + $0xbf8] sm:$0xff]
        %v877 = vld [vmem:[%s373 + $0xc00] sm:$0xff]
        %v878 = vld [vmem:[%s373 + $0xc08] sm:$0xff]
        %v879 = vld [vmem:[%s373 + $0xc10] sm:$0xff]
        %v880 = vld [vmem:[%s373 + $0xc18] sm:$0xff]
        %v881 = vld [vmem:[%s373 + $0xc20] sm:$0xff]
        %v882 = vld [vmem:[%s373 + $0xc28] sm:$0xff]
        %v883 = vld [vmem:[%s373 + $0xc30] sm:$0xff]
        %v884 = vld [vmem:[%s373 + $0xc38] sm:$0xff]
        %v885 = vld [vmem:[%s373 + $0xc40] sm:$0xff]
        %v886 = vld [vmem:[%s373 + $0xc48] sm:$0xff]
        %v887 = vld [vmem:[%s373 + $0xc50] sm:$0xff]
        %v888 = vld [vmem:[%s373 + $0xc58] sm:$0xff]
        %v889 = vld [vmem:[%s373 + $0xc60] sm:$0xff]
        %v890 = vld [vmem:[%s373 + $0xc68] sm:$0xff]
        %v891 = vld [vmem:[%s373 + $0xc70] sm:$0xff]
        %v892 = vld [vmem:[%s373 + $0xc78] sm:$0xff]
        %v893 = vld [vmem:[%s373 + $0xc80] sm:$0xff]
        %v894 = vld [vmem:[%s373 + $0xc88] sm:$0xff]
        %v895 = vld [vmem:[%s373 + $0xc90] sm:$0xff]
        %v896 = vld [vmem:[%s373 + $0xc98] sm:$0xff]
        %v897 = vld [vmem:[%s373 + $0xca0] sm:$0xff]
        %v898 = vld [vmem:[%s373 + $0xca8] sm:$0xff]
        %v899 = vld [vmem:[%s373 + $0xcb0] sm:$0xff]
        %v900 = vld [vmem:[%s373 + $0xcb8] sm:$0xff]
        %v901 = vld [vmem:[%s373 + $0xcc0] sm:$0xff]
        %v902 = vld [vmem:[%s373 + $0xcc8] sm:$0xff]
        %v903 = vld [vmem:[%s373 + $0xcd0] sm:$0xff]
        %v904 = vld [vmem:[%s373 + $0xcd8] sm:$0xff]
        %v905 = vld [vmem:[%s373 + $0xce0] sm:$0xff]
        %v906 = vld [vmem:[%s373 + $0xce8] sm:$0xff]
        %v907 = vld [vmem:[%s373 + $0xcf0] sm:$0xff]
        %v908 = vld [vmem:[%s373 + $0xcf8] sm:$0xff]
        %v909 = vld [vmem:[%s373 + $0xd00] sm:$0xff]
        %v910 = vld [vmem:[%s373 + $0xd08] sm:$0xff]
        %v911 = vld [vmem:[%s373 + $0xd10] sm:$0xff]
        %v912 = vld [vmem:[%s373 + $0xd18] sm:$0xff]
        %v913 = vld [vmem:[%s373 + $0xd20] sm:$0xff]
        %v914 = vld [vmem:[%s373 + $0xd28] sm:$0xff]
        %v915 = vld [vmem:[%s373 + $0xd30] sm:$0xff]
        %v916 = vld [vmem:[%s373 + $0xd38] sm:$0xff]
        %v917 = vld [vmem:[%s373 + $0xd40] sm:$0xff]
        %v918 = vld [vmem:[%s373 + $0xd48] sm:$0xff]
        %v919 = vld [vmem:[%s373 + $0xd50] sm:$0xff]
        %v920 = vld [vmem:[%s373 + $0xd58] sm:$0xff]
        %v921 = vld [vmem:[%s373 + $0xd60] sm:$0xff]
        %v922 = vld [vmem:[%s373 + $0xd68] sm:$0xff]
        %v923 = vld [vmem:[%s373 + $0xd70] sm:$0xff]
        %v924 = vld [vmem:[%s373 + $0xd78] sm:$0xff]
        %v925 = vld [vmem:[%s373 + $0xd80] sm:$0xff]
        %v926 = vld [vmem:[%s373 + $0xd88] sm:$0xff]
        %v927 = vld [vmem:[%s373 + $0xd90] sm:$0xff]
        %v928 = vld [vmem:[%s373 + $0xd98] sm:$0xff]
        %v929 = vld [vmem:[%s373 + $0xda0] sm:$0xff]
        %v930 = vld [vmem:[%s373 + $0xda8] sm:$0xff]
        %v931 = vld [vmem:[%s373 + $0xdb0] sm:$0xff]
        %v932 = vld [vmem:[%s373 + $0xdb8] sm:$0xff]
        %v933 = vld [vmem:[%s373 + $0xdc0] sm:$0xff]
        %v934 = vld [vmem:[%s373 + $0xdc8] sm:$0xff]
        %v935 = vld [vmem:[%s373 + $0xdd0] sm:$0xff]
        %v936 = vld [vmem:[%s373 + $0xdd8] sm:$0xff]
        %v937 = vld [vmem:[%s373 + $0xde0] sm:$0xff]
        %v938 = vld [vmem:[%s373 + $0xde8] sm:$0xff]
        %v939 = vld [vmem:[%s373 + $0xdf0] sm:$0xff]
        %v940 = vld [vmem:[%s373 + $0xdf8] sm:$0xff]
        %v941 = vld [vmem:[%s373 + $0xe00] sm:$0xff]
        %v942 = vld [vmem:[%s373 + $0xe08] sm:$0xff]
        %v943 = vld [vmem:[%s373 + $0xe10] sm:$0xff]
        %v944 = vld [vmem:[%s373 + $0xe18] sm:$0xff]
        %v945 = vld [vmem:[%s373 + $0xe20] sm:$0xff]
        %v946 = vld [vmem:[%s373 + $0xe28] sm:$0xff]
        %v947 = vld [vmem:[%s373 + $0xe30] sm:$0xff]
        %v948 = vld [vmem:[%s373 + $0xe38] sm:$0xff]
        %v949 = vld [vmem:[%s373 + $0xe40] sm:$0xff]
        %v950 = vld [vmem:[%s373 + $0xe48] sm:$0xff]
        %v951 = vld [vmem:[%s373 + $0xe50] sm:$0xff]
        %v952 = vld [vmem:[%s373 + $0xe58] sm:$0xff]
        %v953 = vld [vmem:[%s373 + $0xe60] sm:$0xff]
        %v954 = vld [vmem:[%s373 + $0xe68] sm:$0xff]
        %v955 = vld [vmem:[%s373 + $0xe70] sm:$0xff]
        %v956 = vld [vmem:[%s373 + $0xe78] sm:$0xff]
        %v957 = vld [vmem:[%s373 + $0xe80] sm:$0xff]
        %v958 = vld [vmem:[%s373 + $0xe88] sm:$0xff]
        %v959 = vld [vmem:[%s373 + $0xe90] sm:$0xff]
        %v960 = vld [vmem:[%s373 + $0xe98] sm:$0xff]
        %v961 = vld [vmem:[%s373 + $0xea0] sm:$0xff]
        %v962 = vld [vmem:[%s373 + $0xea8] sm:$0xff]
        %v963 = vld [vmem:[%s373 + $0xeb0] sm:$0xff]
        %v964 = vld [vmem:[%s373 + $0xeb8] sm:$0xff]
        %v965 = vld [vmem:[%s373 + $0xec0] sm:$0xff]
        %v966 = vld [vmem:[%s373 + $0xec8] sm:$0xff]
        %v967 = vld [vmem:[%s373 + $0xed0] sm:$0xff]
        %v968 = vld [vmem:[%s373 + $0xed8] sm:$0xff]
        %v969 = vld [vmem:[%s373 + $0xee0] sm:$0xff]
        %v970 = vld [vmem:[%s373 + $0xee8] sm:$0xff]
        %v971 = vld [vmem:[%s373 + $0xef0] sm:$0xff]
        %v972 = vld [vmem:[%s373 + $0xef8] sm:$0xff]
        %v973 = vld [vmem:[%s373 + $0xf00] sm:$0xff]
        %v974 = vld [vmem:[%s373 + $0xf08] sm:$0xff]
        %v975 = vld [vmem:[%s373 + $0xf10] sm:$0xff]
        %v976 = vld [vmem:[%s373 + $0xf18] sm:$0xff]
        %v977 = vld [vmem:[%s373 + $0xf20] sm:$0xff]
        %v978 = vld [vmem:[%s373 + $0xf28] sm:$0xff]
        %v979 = vld [vmem:[%s373 + $0xf30] sm:$0xff]
        %v980 = vld [vmem:[%s373 + $0xf38] sm:$0xff]
        %v981 = vld [vmem:[%s373 + $0xf40] sm:$0xff]
        %v982 = vld [vmem:[%s373 + $0xf48] sm:$0xff]
        %v983 = vld [vmem:[%s373 + $0xf50] sm:$0xff]
        %v984 = vld [vmem:[%s373 + $0xf58] sm:$0xff]
        %v985 = vld [vmem:[%s373 + $0xf60] sm:$0xff]
        %v986 = vld [vmem:[%s373 + $0xf68] sm:$0xff]
        %v987 = vld [vmem:[%s373 + $0xf70] sm:$0xff]
        %v988 = vld [vmem:[%s373 + $0xf78] sm:$0xff]
        %v989 = vld [vmem:[%s373 + $0xf80] sm:$0xff]
        %v990 = vld [vmem:[%s373 + $0xf88] sm:$0xff]
        %v991 = vld [vmem:[%s373 + $0xf90] sm:$0xff]
        %v992 = vld [vmem:[%s373 + $0xf98] sm:$0xff]
        %v993 = vld [vmem:[%s373 + $0xfa0] sm:$0xff]
        %v994 = vld [vmem:[%s373 + $0xfa8] sm:$0xff]
        %v995 = vld [vmem:[%s373 + $0xfb0] sm:$0xff]
        %v996 = vld [vmem:[%s373 + $0xfb8] sm:$0xff]
        %v997 = vld [vmem:[%s373 + $0xfc0] sm:$0xff]
        %v998 = vld [vmem:[%s373 + $0xfc8] sm:$0xff]
        %v999 = vld [vmem:[%s373 + $0xfd0] sm:$0xff]
        %v1000 = vld [vmem:[%s373 + $0xfd8] sm:$0xff]
        %v1001 = vld [vmem:[%s373 + $0xfe0] sm:$0xff]
        %v1002 = vld [vmem:[%s373 + $0xfe8] sm:$0xff]
        %v1003 = vld [vmem:[%s373 + $0xff0] sm:$0xff]
        %v1004 = vld [vmem:[%s373 + $0xff8] sm:$0xff]
        %v1005 = vld [vmem:[%s373 + $0x1000] sm:$0xff]
        %v1006 = vld [vmem:[%s373 + $0x1008] sm:$0xff]
        %v1007 = vld [vmem:[%s373 + $0x1010] sm:$0xff]
        %v1008 = vld [vmem:[%s373 + $0x1018] sm:$0xff]
        %v1009 = vld [vmem:[%s373 + $0x1020] sm:$0xff]
        %v1010 = vld [vmem:[%s373 + $0x1028] sm:$0xff]
        %v1011 = vld [vmem:[%s373 + $0x1030] sm:$0xff]
        %v1012 = vld [vmem:[%s373 + $0x1038] sm:$0xff]
        %v1013 = vld [vmem:[%s373 + $0x1040] sm:$0xff]
        %v1014 = vld [vmem:[%s373 + $0x1048] sm:$0xff]
        %v1015 = vld [vmem:[%s373 + $0x1050] sm:$0xff]
        %v1016 = vld [vmem:[%s373 + $0x1058] sm:$0xff]
        %v1017 = vld [vmem:[%s373 + $0x1060] sm:$0xff]
        %v1018 = vld [vmem:[%s373 + $0x1068] sm:$0xff]
        %v1019 = vld [vmem:[%s373 + $0x1070] sm:$0xff]
        %v1020 = vld [vmem:[%s373 + $0x1078] sm:$0xff]
        %v1021 = vld [vmem:[%s373 + $0x1080] sm:$0xff]
        %v1022 = vld [vmem:[%s373 + $0x1088] sm:$0xff]
        %v1023 = vld [vmem:[%s373 + $0x1090] sm:$0xff]
        %v1024 = vld [vmem:[%s373 + $0x1098] sm:$0xff]
        %v1025 = vld [vmem:[%s373 + $0x10a0] sm:$0xff]
        %v1026 = vld [vmem:[%s373 + $0x10a8] sm:$0xff]
        %v1027 = vld [vmem:[%s373 + $0x10b0] sm:$0xff]
        %v1028 = vld [vmem:[%s373 + $0x10b8] sm:$0xff]
        %v1029 = vld [vmem:[%s373 + $0x10c0] sm:$0xff]
        %v1030 = vld [vmem:[%s373 + $0x10c8] sm:$0xff]
        %v1031 = vld [vmem:[%s373 + $0x10d0] sm:$0xff]
        %v1032 = vld [vmem:[%s373 + $0x10d8] sm:$0xff]
        %v1033 = vld [vmem:[%s373 + $0x10e0] sm:$0xff]
        %v1034 = vld [vmem:[%s373 + $0x10e8] sm:$0xff]
        %v1035 = vld [vmem:[%s373 + $0x10f0] sm:$0xff]
        %v1036 = vld [vmem:[%s373 + $0x10f8] sm:$0xff]
        %v1037 = vld [vmem:[%s373 + $0x1100] sm:$0xff]
        %v1038 = vld [vmem:[%s373 + $0x1108] sm:$0xff]
        %v1039 = vld [vmem:[%s373 + $0x1110] sm:$0xff]
        %v1040 = vld [vmem:[%s373 + $0x1118] sm:$0xff]
        %v1041 = vld [vmem:[%s373 + $0x1120] sm:$0xff]
        %v1042 = vld [vmem:[%s373 + $0x1128] sm:$0xff]
        %v1043 = vld [vmem:[%s373 + $0x1130] sm:$0xff]
        %v1044 = vld [vmem:[%s373 + $0x1138] sm:$0xff]
        %v1045 = vld [vmem:[%s373 + $0x1140] sm:$0xff]
        %v1046 = vld [vmem:[%s373 + $0x1148] sm:$0xff]
        %v1047 = vld [vmem:[%s373 + $0x1150] sm:$0xff]
        %v1048 = vld [vmem:[%s373 + $0x1158] sm:$0xff]
        %v1049 = vld [vmem:[%s373 + $0x1160] sm:$0xff]
        %v1050 = vld [vmem:[%s373 + $0x1168] sm:$0xff]
        %v1051 = vld [vmem:[%s373 + $0x1170] sm:$0xff]
        %v1052 = vld [vmem:[%s373 + $0x1178] sm:$0xff]
        %v1053 = vld [vmem:[%s373 + $0x1180] sm:$0xff]
        %v1054 = vld [vmem:[%s373 + $0x1188] sm:$0xff]
        %v1055 = vld [vmem:[%s373 + $0x1190] sm:$0xff]
        %v1056 = vld [vmem:[%s373 + $0x1198] sm:$0xff]
        %v1057 = vld [vmem:[%s373 + $0x11a0] sm:$0xff]
        %v1058 = vld [vmem:[%s373 + $0x11a8] sm:$0xff]
        %v1059 = vld [vmem:[%s373 + $0x11b0] sm:$0xff]
        %v1060 = vld [vmem:[%s373 + $0x11b8] sm:$0xff]
        %v1061 = vld [vmem:[%s373 + $0x11c0] sm:$0xff]
        %v1062 = vld [vmem:[%s373 + $0x11c8] sm:$0xff]
        %v1063 = vld [vmem:[%s373 + $0x11d0] sm:$0xff]
        %v1064 = vld [vmem:[%s373 + $0x11d8] sm:$0xff]
        %v1065 = vld [vmem:[%s373 + $0x11e0] sm:$0xff]
        %v1066 = vld [vmem:[%s373 + $0x11e8] sm:$0xff]
        %v1067 = vld [vmem:[%s373 + $0x11f0] sm:$0xff]
        %v1068 = vld [vmem:[%s373 + $0x11f8] sm:$0xff]
        %v1069 = vld [vmem:[%s373 + $0x1200] sm:$0xff]
        %v1070 = vld [vmem:[%s373 + $0x1208] sm:$0xff]
        %v1071 = vld [vmem:[%s373 + $0x1210] sm:$0xff]
        %v1072 = vld [vmem:[%s373 + $0x1218] sm:$0xff]
        %v1073 = vld [vmem:[%s373 + $0x1220] sm:$0xff]
        %v1074 = vld [vmem:[%s373 + $0x1228] sm:$0xff]
        %v1075 = vld [vmem:[%s373 + $0x1230] sm:$0xff]
        %v1076 = vld [vmem:[%s373 + $0x1238] sm:$0xff]
        %v1077 = vld [vmem:[%s373 + $0x1240] sm:$0xff]
        %v1078 = vld [vmem:[%s373 + $0x1248] sm:$0xff]
        %v1079 = vld [vmem:[%s373 + $0x1250] sm:$0xff]
        %v1080 = vld [vmem:[%s373 + $0x1258] sm:$0xff]
        %v1081 = vld [vmem:[%s373 + $0x1260] sm:$0xff]
        %v1082 = vld [vmem:[%s373 + $0x1268] sm:$0xff]
        %v1083 = vld [vmem:[%s373 + $0x1270] sm:$0xff]
        %v1084 = vld [vmem:[%s373 + $0x1278] sm:$0xff]
        %v1085 = vld [vmem:[%s373 + $0x1280] sm:$0xff]
        %v1086 = vld [vmem:[%s373 + $0x1288] sm:$0xff]
        %v1087 = vld [vmem:[%s373 + $0x1290] sm:$0xff]
        %v1088 = vld [vmem:[%s373 + $0x1298] sm:$0xff]
        %v1089 = vld [vmem:[%s373 + $0x12a0] sm:$0xff]
        %v1090 = vld [vmem:[%s373 + $0x12a8] sm:$0xff]
        %v1091 = vld [vmem:[%s373 + $0x12b0] sm:$0xff]
        %v1092 = vld [vmem:[%s373 + $0x12b8] sm:$0xff]
        %v1093 = vld [vmem:[%s373 + $0x12c0] sm:$0xff]
        %v1094 = vld [vmem:[%s373 + $0x12c8] sm:$0xff]
        %v1095 = vld [vmem:[%s373 + $0x12d0] sm:$0xff]
        %v1096 = vld [vmem:[%s373 + $0x12d8] sm:$0xff]
        %v1097 = vld [vmem:[%s373 + $0x12e0] sm:$0xff]
        %v1098 = vld [vmem:[%s373 + $0x12e8] sm:$0xff]
        %v1099 = vld [vmem:[%s373 + $0x12f0] sm:$0xff]
        %v1100 = vld [vmem:[%s373 + $0x12f8] sm:$0xff]
        %v1101 = vld [vmem:[%s373 + $0x1300] sm:$0xff]
        %v1102 = vld [vmem:[%s373 + $0x1308] sm:$0xff]
        %v1103 = vld [vmem:[%s373 + $0x1310] sm:$0xff]
        %v1104 = vld [vmem:[%s373 + $0x1318] sm:$0xff]
        %v1105 = vld [vmem:[%s373 + $0x1320] sm:$0xff]
        %v1106 = vld [vmem:[%s373 + $0x1328] sm:$0xff]
        %v1107 = vld [vmem:[%s373 + $0x1330] sm:$0xff]
        %v1108 = vld [vmem:[%s373 + $0x1338] sm:$0xff]
        %v1109 = vld [vmem:[%s373 + $0x1340] sm:$0xff]
        %v1110 = vld [vmem:[%s373 + $0x1348] sm:$0xff]
        %v1111 = vld [vmem:[%s373 + $0x1350] sm:$0xff]
        %v1112 = vld [vmem:[%s373 + $0x1358] sm:$0xff]
        %v1113 = vld [vmem:[%s373 + $0x1360] sm:$0xff]
        %v1114 = vld [vmem:[%s373 + $0x1368] sm:$0xff]
        %v1115 = vld [vmem:[%s373 + $0x1370] sm:$0xff]
        %v1116 = vld [vmem:[%s373 + $0x1378] sm:$0xff]
        %v1117 = vld [vmem:[%s373 + $0x1380] sm:$0xff]
        %v1118 = vld [vmem:[%s373 + $0x1388] sm:$0xff]
        %v1119 = vld [vmem:[%s373 + $0x1390] sm:$0xff]
        %v1120 = vld [vmem:[%s373 + $0x1398] sm:$0xff]
        %v1121 = vld [vmem:[%s373 + $0x13a0] sm:$0xff]
        %v1122 = vld [vmem:[%s373 + $0x13a8] sm:$0xff]
        %v1123 = vld [vmem:[%s373 + $0x13b0] sm:$0xff]
        %v1124 = vld [vmem:[%s373 + $0x13b8] sm:$0xff]
        %v1125 = vld [vmem:[%s373 + $0x13c0] sm:$0xff]
        %v1126 = vld [vmem:[%s373 + $0x13c8] sm:$0xff]
        %v1127 = vld [vmem:[%s373 + $0x13d0] sm:$0xff]
        %v1128 = vld [vmem:[%s373 + $0x13d8] sm:$0xff]
        %v1129 = vld [vmem:[%s373 + $0x13e0] sm:$0xff]
        %v1130 = vld [vmem:[%s373 + $0x13e8] sm:$0xff]
        %v1131 = vld [vmem:[%s373 + $0x13f0] sm:$0xff]
        %v1132 = vld [vmem:[%s373 + $0x13f8] sm:$0xff]
        %v1133 = vld [vmem:[%s373 + $0x1400] sm:$0xff]
        %v1134 = vld [vmem:[%s373 + $0x1408] sm:$0xff]
        %v1135 = vld [vmem:[%s373 + $0x1410] sm:$0xff]
        %v1136 = vld [vmem:[%s373 + $0x1418] sm:$0xff]
        %v1137 = vld [vmem:[%s373 + $0x1420] sm:$0xff]
        %v1138 = vld [vmem:[%s373 + $0x1428] sm:$0xff]
        %v1139 = vld [vmem:[%s373 + $0x1430] sm:$0xff]
        %v1140 = vld [vmem:[%s373 + $0x1438] sm:$0xff]
        %v1141 = vld [vmem:[%s373 + $0x1440] sm:$0xff]
        %v1142 = vld [vmem:[%s373 + $0x1448] sm:$0xff]
        %v1143 = vld [vmem:[%s373 + $0x1450] sm:$0xff]
        %v1144 = vld [vmem:[%s373 + $0x1458] sm:$0xff]
        %v1145 = vld [vmem:[%s373 + $0x1460] sm:$0xff]
        %v1146 = vld [vmem:[%s373 + $0x1468] sm:$0xff]
        %v1147 = vld [vmem:[%s373 + $0x1470] sm:$0xff]
        %v1148 = vld [vmem:[%s373 + $0x1478] sm:$0xff]
        %v1149 = vld [vmem:[%s373 + $0x1480] sm:$0xff]
        %v1150 = vld [vmem:[%s373 + $0x1488] sm:$0xff]
        %v1151 = vld [vmem:[%s373 + $0x1490] sm:$0xff]
        %v1152 = vld [vmem:[%s373 + $0x1498] sm:$0xff]
        %v1153 = vld [vmem:[%s373 + $0x14a0] sm:$0xff]
        %v1154 = vld [vmem:[%s373 + $0x14a8] sm:$0xff]
        %v1155 = vld [vmem:[%s373 + $0x14b0] sm:$0xff]
        %v1156 = vld [vmem:[%s373 + $0x14b8] sm:$0xff]
        %v1157 = vld [vmem:[%s373 + $0x14c0] sm:$0xff]
        %v1158 = vld [vmem:[%s373 + $0x14c8] sm:$0xff]
        %v1159 = vld [vmem:[%s373 + $0x14d0] sm:$0xff]
        %v1160 = vld [vmem:[%s373 + $0x14d8] sm:$0xff]
        %v1161 = vld [vmem:[%s373 + $0x14e0] sm:$0xff]
        %v1162 = vld [vmem:[%s373 + $0x14e8] sm:$0xff]
        %v1163 = vld [vmem:[%s373 + $0x14f0] sm:$0xff]
        %v1164 = vld [vmem:[%s373 + $0x14f8] sm:$0xff]
        %v1165 = vld [vmem:[%s373 + $0x1500] sm:$0xff]
        %v1166 = vld [vmem:[%s373 + $0x1508] sm:$0xff]
        %v1167 = vld [vmem:[%s373 + $0x1510] sm:$0xff]
        %v1168 = vld [vmem:[%s373 + $0x1518] sm:$0xff]
        %v1169 = vld [vmem:[%s373 + $0x1520] sm:$0xff]
        %v1170 = vld [vmem:[%s373 + $0x1528] sm:$0xff]
        %v1171 = vld [vmem:[%s373 + $0x1530] sm:$0xff]
        %v1172 = vld [vmem:[%s373 + $0x1538] sm:$0xff]
        %v1173 = vld [vmem:[%s373 + $0x1540] sm:$0xff]
        %v1174 = vld [vmem:[%s373 + $0x1548] sm:$0xff]
        %v1175 = vld [vmem:[%s373 + $0x1550] sm:$0xff]
        %v1176 = vld [vmem:[%s373 + $0x1558] sm:$0xff]
        %v1177 = vld [vmem:[%s373 + $0x1560] sm:$0xff]
        %v1178 = vld [vmem:[%s373 + $0x1568] sm:$0xff]
        %v1179 = vld [vmem:[%s373 + $0x1570] sm:$0xff]
        %v1180 = vld [vmem:[%s373 + $0x1578] sm:$0xff]
        %v1181 = vld [vmem:[%s373 + $0x1580] sm:$0xff]
        %v1182 = vld [vmem:[%s373 + $0x1588] sm:$0xff]
        %v1183 = vld [vmem:[%s373 + $0x1590] sm:$0xff]
        %v1184 = vld [vmem:[%s373 + $0x1598] sm:$0xff]
        %v1185 = vld [vmem:[%s373 + $0x15a0] sm:$0xff]
        %v1186 = vld [vmem:[%s373 + $0x15a8] sm:$0xff]
        %v1187 = vld [vmem:[%s373 + $0x15b0] sm:$0xff]
        %v1188 = vld [vmem:[%s373 + $0x15b8] sm:$0xff]
        %v1189 = vld [vmem:[%s373 + $0x15c0] sm:$0xff]
        %v1190 = vld [vmem:[%s373 + $0x15c8] sm:$0xff]
        %v1191 = vld [vmem:[%s373 + $0x15d0] sm:$0xff]
        %v1192 = vld [vmem:[%s373 + $0x15d8] sm:$0xff]
        %v1193 = vld [vmem:[%s373 + $0x15e0] sm:$0xff]
        %v1194 = vld [vmem:[%s373 + $0x15e8] sm:$0xff]
        %v1195 = vld [vmem:[%s373 + $0x15f0] sm:$0xff]
        %v1196 = vld [vmem:[%s373 + $0x15f8] sm:$0xff]
        %v1197 = vld [vmem:[%s373 + $0x1600] sm:$0xff]
        %v1198 = vld [vmem:[%s373 + $0x1608] sm:$0xff]
        %v1199 = vld [vmem:[%s373 + $0x1610] sm:$0xff]
        %v1200 = vld [vmem:[%s373 + $0x1618] sm:$0xff]
        %v1201 = vld [vmem:[%s373 + $0x1620] sm:$0xff]
        %v1202 = vld [vmem:[%s373 + $0x1628] sm:$0xff]
        %v1203 = vld [vmem:[%s373 + $0x1630] sm:$0xff]
        %v1204 = vld [vmem:[%s373 + $0x1638] sm:$0xff]
        %v1205 = vld [vmem:[%s373 + $0x1640] sm:$0xff]
        %v1206 = vld [vmem:[%s373 + $0x1648] sm:$0xff]
        %v1207 = vld [vmem:[%s373 + $0x1650] sm:$0xff]
        %v1208 = vld [vmem:[%s373 + $0x1658] sm:$0xff]
        %v1209 = vld [vmem:[%s373 + $0x1660] sm:$0xff]
        %v1210 = vld [vmem:[%s373 + $0x1668] sm:$0xff]
        %v1211 = vld [vmem:[%s373 + $0x1670] sm:$0xff]
        %v1212 = vld [vmem:[%s373 + $0x1678] sm:$0xff]
        %v1213 = vld [vmem:[%s373 + $0x1680] sm:$0xff]
        %v1214 = vld [vmem:[%s373 + $0x1688] sm:$0xff]
        %v1215 = vld [vmem:[%s373 + $0x1690] sm:$0xff]
        %v1216 = vld [vmem:[%s373 + $0x1698] sm:$0xff]
        %v1217 = vld [vmem:[%s373 + $0x16a0] sm:$0xff]
        %v1218 = vld [vmem:[%s373 + $0x16a8] sm:$0xff]
        %v1219 = vld [vmem:[%s373 + $0x16b0] sm:$0xff]
        %v1220 = vld [vmem:[%s373 + $0x16b8] sm:$0xff]
        %v1221 = vld [vmem:[%s373 + $0x16c0] sm:$0xff]
        %v1222 = vld [vmem:[%s373 + $0x16c8] sm:$0xff]
        %v1223 = vld [vmem:[%s373 + $0x16d0] sm:$0xff]
        %v1224 = vld [vmem:[%s373 + $0x16d8] sm:$0xff]
        %v1225 = vld [vmem:[%s373 + $0x16e0] sm:$0xff]
        %v1226 = vld [vmem:[%s373 + $0x16e8] sm:$0xff]
        %v1227 = vld [vmem:[%s373 + $0x16f0] sm:$0xff]
        %v1228 = vld [vmem:[%s373 + $0x16f8] sm:$0xff]
        %v1229 = vld [vmem:[%s373 + $0x1700] sm:$0xff]
        %v1230 = vld [vmem:[%s373 + $0x1708] sm:$0xff]
        %v1231 = vld [vmem:[%s373 + $0x1710] sm:$0xff]
        %v1232 = vld [vmem:[%s373 + $0x1718] sm:$0xff]
        %v1233 = vld [vmem:[%s373 + $0x1720] sm:$0xff]
        %v1234 = vld [vmem:[%s373 + $0x1728] sm:$0xff]
        %v1235 = vld [vmem:[%s373 + $0x1730] sm:$0xff]
        %v1236 = vld [vmem:[%s373 + $0x1738] sm:$0xff]
        %v1237 = vld [vmem:[%s373 + $0x1740] sm:$0xff]
        %v1238 = vld [vmem:[%s373 + $0x1748] sm:$0xff]
        %v1239 = vld [vmem:[%s373 + $0x1750] sm:$0xff]
        %v1240 = vld [vmem:[%s373 + $0x1758] sm:$0xff]
        %v1241 = vld [vmem:[%s373 + $0x1760] sm:$0xff]
        %v1242 = vld [vmem:[%s373 + $0x1768] sm:$0xff]
        %v1243 = vld [vmem:[%s373 + $0x1770] sm:$0xff]
        %v1244 = vld [vmem:[%s373 + $0x1778] sm:$0xff]
        %v1245 = vld [vmem:[%s373 + $0x1780] sm:$0xff]
        %v1246 = vld [vmem:[%s373 + $0x1788] sm:$0xff]
        %v1247 = vld [vmem:[%s373 + $0x1790] sm:$0xff]
        %v1248 = vld [vmem:[%s373 + $0x1798] sm:$0xff]
        %v1249 = vld [vmem:[%s373 + $0x17a0] sm:$0xff]
        %v1250 = vld [vmem:[%s373 + $0x17a8] sm:$0xff]
        %v1251 = vld [vmem:[%s373 + $0x17b0] sm:$0xff]
        %v1252 = vld [vmem:[%s373 + $0x17b8] sm:$0xff]
        %v1253 = vld [vmem:[%s373 + $0x17c0] sm:$0xff]
        %v1254 = vld [vmem:[%s373 + $0x17c8] sm:$0xff]
        %v1255 = vld [vmem:[%s373 + $0x17d0] sm:$0xff]
        %v1256 = vld [vmem:[%s373 + $0x17d8] sm:$0xff]
        %v1257 = vld [vmem:[%s373 + $0x17e0] sm:$0xff]
        %v1258 = vld [vmem:[%s373 + $0x17e8] sm:$0xff]
        %v1259 = vld [vmem:[%s373 + $0x17f0] sm:$0xff]
        %v1260 = vld [vmem:[%s373 + $0x17f8] sm:$0xff]
        %v1261 = vunpack.c.l.s8.bf16 %v493
        %v1262 = vunpack.c.l.s8.bf16 %v494
        %v1263 = vunpack.c.l.s8.bf16 %v495
        %v1264 = vunpack.c.l.s8.bf16 %v496
        %v1265 = vunpack.c.l.s8.bf16 %v497
        %v1266 = vunpack.c.l.s8.bf16 %v498
        %v1267 = vunpack.c.l.s8.bf16 %v499
        %v1268 = vunpack.c.l.s8.bf16 %v500
        %v1269 = vunpack.c.h.s8.bf16 %v493
        %v1270 = vunpack.c.h.s8.bf16 %v494
        %v1271 = vunpack.c.h.s8.bf16 %v495
        %v1272 = vunpack.c.h.s8.bf16 %v496
        %v1273 = vunpack.c.h.s8.bf16 %v497
        %v1274 = vunpack.c.h.s8.bf16 %v498
        %v1275 = vunpack.c.h.s8.bf16 %v499
        %v1276 = vunpack.c.h.s8.bf16 %v500
        %v1277 = vunpack.c.l.s8.bf16 %v501
        %v1278 = vunpack.c.l.s8.bf16 %v502
        %v1279 = vunpack.c.l.s8.bf16 %v503
        %v1280 = vunpack.c.l.s8.bf16 %v504
        %v1281 = vunpack.c.l.s8.bf16 %v505
        %v1282 = vunpack.c.l.s8.bf16 %v506
        %v1283 = vunpack.c.l.s8.bf16 %v507
        %v1284 = vunpack.c.l.s8.bf16 %v508
        %v1285 = vunpack.c.h.s8.bf16 %v501
        %v1286 = vunpack.c.h.s8.bf16 %v502
        %v1287 = vunpack.c.h.s8.bf16 %v503
        %v1288 = vunpack.c.h.s8.bf16 %v504
        %v1289 = vunpack.c.h.s8.bf16 %v505
        %v1290 = vunpack.c.h.s8.bf16 %v506
        %v1291 = vunpack.c.h.s8.bf16 %v507
        %v1292 = vunpack.c.h.s8.bf16 %v508
        %v1293 = vunpack.c.l.s8.bf16 %v509
        %v1294 = vunpack.c.l.s8.bf16 %v510
        %v1295 = vunpack.c.l.s8.bf16 %v511
        %v1296 = vunpack.c.l.s8.bf16 %v512
        %v1297 = vunpack.c.l.s8.bf16 %v513
        %v1298 = vunpack.c.l.s8.bf16 %v514
        %v1299 = vunpack.c.l.s8.bf16 %v515
        %v1300 = vunpack.c.l.s8.bf16 %v516
        %v1301 = vunpack.c.h.s8.bf16 %v509
        %v1302 = vunpack.c.h.s8.bf16 %v510
        %v1303 = vunpack.c.h.s8.bf16 %v511
        %v1304 = vunpack.c.h.s8.bf16 %v512
        %v1305 = vunpack.c.h.s8.bf16 %v513
        %v1306 = vunpack.c.h.s8.bf16 %v514
        %v1307 = vunpack.c.h.s8.bf16 %v515
        %v1308 = vunpack.c.h.s8.bf16 %v516
        %v1309 = vunpack.c.l.s8.bf16 %v517
        %v1310 = vunpack.c.l.s8.bf16 %v518
        %v1311 = vunpack.c.l.s8.bf16 %v519
        %v1312 = vunpack.c.l.s8.bf16 %v520
        %v1313 = vunpack.c.l.s8.bf16 %v521
        %v1314 = vunpack.c.l.s8.bf16 %v522
        %v1315 = vunpack.c.l.s8.bf16 %v523
        %v1316 = vunpack.c.l.s8.bf16 %v524
        %v1317 = vunpack.c.h.s8.bf16 %v517
        %v1318 = vunpack.c.h.s8.bf16 %v518
        %v1319 = vunpack.c.h.s8.bf16 %v519
        %v1320 = vunpack.c.h.s8.bf16 %v520
        %v1321 = vunpack.c.h.s8.bf16 %v521
        %v1322 = vunpack.c.h.s8.bf16 %v522
        %v1323 = vunpack.c.h.s8.bf16 %v523
        %v1324 = vunpack.c.h.s8.bf16 %v524
        %v1325 = vunpack.c.l.s8.bf16 %v525
        %v1326 = vunpack.c.l.s8.bf16 %v526
        %v1327 = vunpack.c.l.s8.bf16 %v527
        %v1328 = vunpack.c.l.s8.bf16 %v528
        %v1329 = vunpack.c.l.s8.bf16 %v529
        %v1330 = vunpack.c.l.s8.bf16 %v530
        %v1331 = vunpack.c.l.s8.bf16 %v531
        %v1332 = vunpack.c.l.s8.bf16 %v532
        %v1333 = vunpack.c.h.s8.bf16 %v525
        %v1334 = vunpack.c.h.s8.bf16 %v526
        %v1335 = vunpack.c.h.s8.bf16 %v527
        %v1336 = vunpack.c.h.s8.bf16 %v528
        %v1337 = vunpack.c.h.s8.bf16 %v529
        %v1338 = vunpack.c.h.s8.bf16 %v530
        %v1339 = vunpack.c.h.s8.bf16 %v531
        %v1340 = vunpack.c.h.s8.bf16 %v532
        %v1341 = vunpack.c.l.s8.bf16 %v533
        %v1342 = vunpack.c.l.s8.bf16 %v534
        %v1343 = vunpack.c.l.s8.bf16 %v535
        %v1344 = vunpack.c.l.s8.bf16 %v536
        %v1345 = vunpack.c.l.s8.bf16 %v537
        %v1346 = vunpack.c.l.s8.bf16 %v538
        %v1347 = vunpack.c.l.s8.bf16 %v539
        %v1348 = vunpack.c.l.s8.bf16 %v540
        %v1349 = vunpack.c.h.s8.bf16 %v533
        %v1350 = vunpack.c.h.s8.bf16 %v534
        %v1351 = vunpack.c.h.s8.bf16 %v535
        %v1352 = vunpack.c.h.s8.bf16 %v536
        %v1353 = vunpack.c.h.s8.bf16 %v537
        %v1354 = vunpack.c.h.s8.bf16 %v538
        %v1355 = vunpack.c.h.s8.bf16 %v539
        %v1356 = vunpack.c.h.s8.bf16 %v540
        %v1357 = vunpack.c.l.s8.bf16 %v541
        %v1358 = vunpack.c.l.s8.bf16 %v542
        %v1359 = vunpack.c.l.s8.bf16 %v543
        %v1360 = vunpack.c.l.s8.bf16 %v544
        %v1361 = vunpack.c.l.s8.bf16 %v545
        %v1362 = vunpack.c.l.s8.bf16 %v546
        %v1363 = vunpack.c.l.s8.bf16 %v547
        %v1364 = vunpack.c.l.s8.bf16 %v548
        %v1365 = vunpack.c.h.s8.bf16 %v541
        %v1366 = vunpack.c.h.s8.bf16 %v542
        %v1367 = vunpack.c.h.s8.bf16 %v543
        %v1368 = vunpack.c.h.s8.bf16 %v544
        %v1369 = vunpack.c.h.s8.bf16 %v545
        %v1370 = vunpack.c.h.s8.bf16 %v546
        %v1371 = vunpack.c.h.s8.bf16 %v547
        %v1372 = vunpack.c.h.s8.bf16 %v548
        %v1373 = vunpack.c.l.s8.bf16 %v549
        %v1374 = vunpack.c.l.s8.bf16 %v550
        %v1375 = vunpack.c.l.s8.bf16 %v551
        %v1376 = vunpack.c.l.s8.bf16 %v552
        %v1377 = vunpack.c.l.s8.bf16 %v553
        %v1378 = vunpack.c.l.s8.bf16 %v554
        %v1379 = vunpack.c.l.s8.bf16 %v555
        %v1380 = vunpack.c.l.s8.bf16 %v556
        %v1381 = vunpack.c.h.s8.bf16 %v549
        %v1382 = vunpack.c.h.s8.bf16 %v550
        %v1383 = vunpack.c.h.s8.bf16 %v551
        %v1384 = vunpack.c.h.s8.bf16 %v552
        %v1385 = vunpack.c.h.s8.bf16 %v553
        %v1386 = vunpack.c.h.s8.bf16 %v554
        %v1387 = vunpack.c.h.s8.bf16 %v555
        %v1388 = vunpack.c.h.s8.bf16 %v556
        %v1389 = vunpack.c.l.s8.bf16 %v557
        %v1390 = vunpack.c.l.s8.bf16 %v558
        %v1391 = vunpack.c.l.s8.bf16 %v559
        %v1392 = vunpack.c.l.s8.bf16 %v560
        %v1393 = vunpack.c.l.s8.bf16 %v561
        %v1394 = vunpack.c.l.s8.bf16 %v562
        %v1395 = vunpack.c.l.s8.bf16 %v563
        %v1396 = vunpack.c.l.s8.bf16 %v564
        %v1397 = vunpack.c.h.s8.bf16 %v557
        %v1398 = vunpack.c.h.s8.bf16 %v558
        %v1399 = vunpack.c.h.s8.bf16 %v559
        %v1400 = vunpack.c.h.s8.bf16 %v560
        %v1401 = vunpack.c.h.s8.bf16 %v561
        %v1402 = vunpack.c.h.s8.bf16 %v562
        %v1403 = vunpack.c.h.s8.bf16 %v563
        %v1404 = vunpack.c.h.s8.bf16 %v564
        %v1405 = vunpack.c.l.s8.bf16 %v565
        %v1406 = vunpack.c.l.s8.bf16 %v566
        %v1407 = vunpack.c.l.s8.bf16 %v567
        %v1408 = vunpack.c.l.s8.bf16 %v568
        %v1409 = vunpack.c.l.s8.bf16 %v569
        %v1410 = vunpack.c.l.s8.bf16 %v570
        %v1411 = vunpack.c.l.s8.bf16 %v571
        %v1412 = vunpack.c.l.s8.bf16 %v572
        %v1413 = vunpack.c.h.s8.bf16 %v565
        %v1414 = vunpack.c.h.s8.bf16 %v566
        %v1415 = vunpack.c.h.s8.bf16 %v567
        %v1416 = vunpack.c.h.s8.bf16 %v568
        %v1417 = vunpack.c.h.s8.bf16 %v569
        %v1418 = vunpack.c.h.s8.bf16 %v570
        %v1419 = vunpack.c.h.s8.bf16 %v571
        %v1420 = vunpack.c.h.s8.bf16 %v572
        %v1421 = vunpack.c.l.s8.bf16 %v573
        %v1422 = vunpack.c.l.s8.bf16 %v574
        %v1423 = vunpack.c.l.s8.bf16 %v575
        %v1424 = vunpack.c.l.s8.bf16 %v576
        %v1425 = vunpack.c.l.s8.bf16 %v577
        %v1426 = vunpack.c.l.s8.bf16 %v578
        %v1427 = vunpack.c.l.s8.bf16 %v579
        %v1428 = vunpack.c.l.s8.bf16 %v580
        %v1429 = vunpack.c.h.s8.bf16 %v573
        %v1430 = vunpack.c.h.s8.bf16 %v574
        %v1431 = vunpack.c.h.s8.bf16 %v575
        %v1432 = vunpack.c.h.s8.bf16 %v576
        %v1433 = vunpack.c.h.s8.bf16 %v577
        %v1434 = vunpack.c.h.s8.bf16 %v578
        %v1435 = vunpack.c.h.s8.bf16 %v579
        %v1436 = vunpack.c.h.s8.bf16 %v580
        %v1437 = vunpack.c.l.s8.bf16 %v581
        %v1438 = vunpack.c.l.s8.bf16 %v582
        %v1439 = vunpack.c.l.s8.bf16 %v583
        %v1440 = vunpack.c.l.s8.bf16 %v584
        %v1441 = vunpack.c.l.s8.bf16 %v585
        %v1442 = vunpack.c.l.s8.bf16 %v586
        %v1443 = vunpack.c.l.s8.bf16 %v587
        %v1444 = vunpack.c.l.s8.bf16 %v588
        %v1445 = vunpack.c.h.s8.bf16 %v581
        %v1446 = vunpack.c.h.s8.bf16 %v582
        %v1447 = vunpack.c.h.s8.bf16 %v583
        %v1448 = vunpack.c.h.s8.bf16 %v584
        %v1449 = vunpack.c.h.s8.bf16 %v585
        %v1450 = vunpack.c.h.s8.bf16 %v586
        %v1451 = vunpack.c.h.s8.bf16 %v587
        %v1452 = vunpack.c.h.s8.bf16 %v588
        %v1453 = vunpack.c.l.s8.bf16 %v589
        %v1454 = vunpack.c.l.s8.bf16 %v590
        %v1455 = vunpack.c.l.s8.bf16 %v591
        %v1456 = vunpack.c.l.s8.bf16 %v592
        %v1457 = vunpack.c.l.s8.bf16 %v593
        %v1458 = vunpack.c.l.s8.bf16 %v594
        %v1459 = vunpack.c.l.s8.bf16 %v595
        %v1460 = vunpack.c.l.s8.bf16 %v596
        %v1461 = vunpack.c.h.s8.bf16 %v589
        %v1462 = vunpack.c.h.s8.bf16 %v590
        %v1463 = vunpack.c.h.s8.bf16 %v591
        %v1464 = vunpack.c.h.s8.bf16 %v592
        %v1465 = vunpack.c.h.s8.bf16 %v593
        %v1466 = vunpack.c.h.s8.bf16 %v594
        %v1467 = vunpack.c.h.s8.bf16 %v595
        %v1468 = vunpack.c.h.s8.bf16 %v596
        %v1469 = vunpack.c.l.s8.bf16 %v597
        %v1470 = vunpack.c.l.s8.bf16 %v598
        %v1471 = vunpack.c.l.s8.bf16 %v599
        %v1472 = vunpack.c.l.s8.bf16 %v600
        %v1473 = vunpack.c.l.s8.bf16 %v601
        %v1474 = vunpack.c.l.s8.bf16 %v602
        %v1475 = vunpack.c.l.s8.bf16 %v603
        %v1476 = vunpack.c.l.s8.bf16 %v604
        %v1477 = vunpack.c.h.s8.bf16 %v597
        %v1478 = vunpack.c.h.s8.bf16 %v598
        %v1479 = vunpack.c.h.s8.bf16 %v599
        %v1480 = vunpack.c.h.s8.bf16 %v600
        %v1481 = vunpack.c.h.s8.bf16 %v601
        %v1482 = vunpack.c.h.s8.bf16 %v602
        %v1483 = vunpack.c.h.s8.bf16 %v603
        %v1484 = vunpack.c.h.s8.bf16 %v604
        %v1485 = vunpack.c.l.s8.bf16 %v605
        %v1486 = vunpack.c.l.s8.bf16 %v606
        %v1487 = vunpack.c.l.s8.bf16 %v607
        %v1488 = vunpack.c.l.s8.bf16 %v608
        %v1489 = vunpack.c.l.s8.bf16 %v609
        %v1490 = vunpack.c.l.s8.bf16 %v610
        %v1491 = vunpack.c.l.s8.bf16 %v611
        %v1492 = vunpack.c.l.s8.bf16 %v612
        %v1493 = vunpack.c.h.s8.bf16 %v605
        %v1494 = vunpack.c.h.s8.bf16 %v606
        %v1495 = vunpack.c.h.s8.bf16 %v607
        %v1496 = vunpack.c.h.s8.bf16 %v608
        %v1497 = vunpack.c.h.s8.bf16 %v609
        %v1498 = vunpack.c.h.s8.bf16 %v610
        %v1499 = vunpack.c.h.s8.bf16 %v611
        %v1500 = vunpack.c.h.s8.bf16 %v612
        %v1501 = vunpack.c.l.s8.bf16 %v613
        %v1502 = vunpack.c.l.s8.bf16 %v614
        %v1503 = vunpack.c.l.s8.bf16 %v615
        %v1504 = vunpack.c.l.s8.bf16 %v616
        %v1505 = vunpack.c.l.s8.bf16 %v617
        %v1506 = vunpack.c.l.s8.bf16 %v618
        %v1507 = vunpack.c.l.s8.bf16 %v619
        %v1508 = vunpack.c.l.s8.bf16 %v620
        %v1509 = vunpack.c.h.s8.bf16 %v613
        %v1510 = vunpack.c.h.s8.bf16 %v614
        %v1511 = vunpack.c.h.s8.bf16 %v615
        %v1512 = vunpack.c.h.s8.bf16 %v616
        %v1513 = vunpack.c.h.s8.bf16 %v617
        %v1514 = vunpack.c.h.s8.bf16 %v618
        %v1515 = vunpack.c.h.s8.bf16 %v619
        %v1516 = vunpack.c.h.s8.bf16 %v620
        %v1517 = vunpack.c.l.s8.bf16 %v621
        %v1518 = vunpack.c.l.s8.bf16 %v622
        %v1519 = vunpack.c.l.s8.bf16 %v623
        %v1520 = vunpack.c.l.s8.bf16 %v624
        %v1521 = vunpack.c.l.s8.bf16 %v625
        %v1522 = vunpack.c.l.s8.bf16 %v626
        %v1523 = vunpack.c.l.s8.bf16 %v627
        %v1524 = vunpack.c.l.s8.bf16 %v628
        %v1525 = vunpack.c.h.s8.bf16 %v621
        %v1526 = vunpack.c.h.s8.bf16 %v622
        %v1527 = vunpack.c.h.s8.bf16 %v623
        %v1528 = vunpack.c.h.s8.bf16 %v624
        %v1529 = vunpack.c.h.s8.bf16 %v625
        %v1530 = vunpack.c.h.s8.bf16 %v626
        %v1531 = vunpack.c.h.s8.bf16 %v627
        %v1532 = vunpack.c.h.s8.bf16 %v628
        %v1533 = vunpack.c.l.s8.bf16 %v629
        %v1534 = vunpack.c.l.s8.bf16 %v630
        %v1535 = vunpack.c.l.s8.bf16 %v631
        %v1536 = vunpack.c.l.s8.bf16 %v632
        %v1537 = vunpack.c.l.s8.bf16 %v633
        %v1538 = vunpack.c.l.s8.bf16 %v634
        %v1539 = vunpack.c.l.s8.bf16 %v635
        %v1540 = vunpack.c.l.s8.bf16 %v636
        %v1541 = vunpack.c.h.s8.bf16 %v629
        %v1542 = vunpack.c.h.s8.bf16 %v630
        %v1543 = vunpack.c.h.s8.bf16 %v631
        %v1544 = vunpack.c.h.s8.bf16 %v632
        %v1545 = vunpack.c.h.s8.bf16 %v633
        %v1546 = vunpack.c.h.s8.bf16 %v634
        %v1547 = vunpack.c.h.s8.bf16 %v635
        %v1548 = vunpack.c.h.s8.bf16 %v636
        %v1549 = vunpack.c.l.s8.bf16 %v637
        %v1550 = vunpack.c.l.s8.bf16 %v638
        %v1551 = vunpack.c.l.s8.bf16 %v639
        %v1552 = vunpack.c.l.s8.bf16 %v640
        %v1553 = vunpack.c.l.s8.bf16 %v641
        %v1554 = vunpack.c.l.s8.bf16 %v642
        %v1555 = vunpack.c.l.s8.bf16 %v643
        %v1556 = vunpack.c.l.s8.bf16 %v644
        %v1557 = vunpack.c.h.s8.bf16 %v637
        %v1558 = vunpack.c.h.s8.bf16 %v638
        %v1559 = vunpack.c.h.s8.bf16 %v639
        %v1560 = vunpack.c.h.s8.bf16 %v640
        %v1561 = vunpack.c.h.s8.bf16 %v641
        %v1562 = vunpack.c.h.s8.bf16 %v642
        %v1563 = vunpack.c.h.s8.bf16 %v643
        %v1564 = vunpack.c.h.s8.bf16 %v644
        %v1565 = vunpack.c.l.s8.bf16 %v645
        %v1566 = vunpack.c.l.s8.bf16 %v646
        %v1567 = vunpack.c.l.s8.bf16 %v647
        %v1568 = vunpack.c.l.s8.bf16 %v648
        %v1569 = vunpack.c.l.s8.bf16 %v649
        %v1570 = vunpack.c.l.s8.bf16 %v650
        %v1571 = vunpack.c.l.s8.bf16 %v651
        %v1572 = vunpack.c.l.s8.bf16 %v652
        %v1573 = vunpack.c.h.s8.bf16 %v645
        %v1574 = vunpack.c.h.s8.bf16 %v646
        %v1575 = vunpack.c.h.s8.bf16 %v647
        %v1576 = vunpack.c.h.s8.bf16 %v648
        %v1577 = vunpack.c.h.s8.bf16 %v649
        %v1578 = vunpack.c.h.s8.bf16 %v650
        %v1579 = vunpack.c.h.s8.bf16 %v651
        %v1580 = vunpack.c.h.s8.bf16 %v652
        %v1581 = vunpack.c.l.s8.bf16 %v653
        %v1582 = vunpack.c.l.s8.bf16 %v654
        %v1583 = vunpack.c.l.s8.bf16 %v655
        %v1584 = vunpack.c.l.s8.bf16 %v656
        %v1585 = vunpack.c.l.s8.bf16 %v657
        %v1586 = vunpack.c.l.s8.bf16 %v658
        %v1587 = vunpack.c.l.s8.bf16 %v659
        %v1588 = vunpack.c.l.s8.bf16 %v660
        %v1589 = vunpack.c.h.s8.bf16 %v653
        %v1590 = vunpack.c.h.s8.bf16 %v654
        %v1591 = vunpack.c.h.s8.bf16 %v655
        %v1592 = vunpack.c.h.s8.bf16 %v656
        %v1593 = vunpack.c.h.s8.bf16 %v657
        %v1594 = vunpack.c.h.s8.bf16 %v658
        %v1595 = vunpack.c.h.s8.bf16 %v659
        %v1596 = vunpack.c.h.s8.bf16 %v660
        %v1597 = vunpack.c.l.s8.bf16 %v661
        %v1598 = vunpack.c.l.s8.bf16 %v662
        %v1599 = vunpack.c.l.s8.bf16 %v663
        %v1600 = vunpack.c.l.s8.bf16 %v664
        %v1601 = vunpack.c.l.s8.bf16 %v665
        %v1602 = vunpack.c.l.s8.bf16 %v666
        %v1603 = vunpack.c.l.s8.bf16 %v667
        %v1604 = vunpack.c.l.s8.bf16 %v668
        %v1605 = vunpack.c.h.s8.bf16 %v661
        %v1606 = vunpack.c.h.s8.bf16 %v662
        %v1607 = vunpack.c.h.s8.bf16 %v663
        %v1608 = vunpack.c.h.s8.bf16 %v664
        %v1609 = vunpack.c.h.s8.bf16 %v665
        %v1610 = vunpack.c.h.s8.bf16 %v666
        %v1611 = vunpack.c.h.s8.bf16 %v667
        %v1612 = vunpack.c.h.s8.bf16 %v668
        %v1613 = vunpack.c.l.s8.bf16 %v669
        %v1614 = vunpack.c.l.s8.bf16 %v670
        %v1615 = vunpack.c.l.s8.bf16 %v671
        %v1616 = vunpack.c.l.s8.bf16 %v672
        %v1617 = vunpack.c.l.s8.bf16 %v673
        %v1618 = vunpack.c.l.s8.bf16 %v674
        %v1619 = vunpack.c.l.s8.bf16 %v675
        %v1620 = vunpack.c.l.s8.bf16 %v676
        %v1621 = vunpack.c.h.s8.bf16 %v669
        %v1622 = vunpack.c.h.s8.bf16 %v670
        %v1623 = vunpack.c.h.s8.bf16 %v671
        %v1624 = vunpack.c.h.s8.bf16 %v672
        %v1625 = vunpack.c.h.s8.bf16 %v673
        %v1626 = vunpack.c.h.s8.bf16 %v674
        %v1627 = vunpack.c.h.s8.bf16 %v675
        %v1628 = vunpack.c.h.s8.bf16 %v676
        %v1629 = vunpack.c.l.s8.bf16 %v677
        %v1630 = vunpack.c.l.s8.bf16 %v678
        %v1631 = vunpack.c.l.s8.bf16 %v679
        %v1632 = vunpack.c.l.s8.bf16 %v680
        %v1633 = vunpack.c.l.s8.bf16 %v681
        %v1634 = vunpack.c.l.s8.bf16 %v682
        %v1635 = vunpack.c.l.s8.bf16 %v683
        %v1636 = vunpack.c.l.s8.bf16 %v684
        %v1637 = vunpack.c.h.s8.bf16 %v677
        %v1638 = vunpack.c.h.s8.bf16 %v678
        %v1639 = vunpack.c.h.s8.bf16 %v679
        %v1640 = vunpack.c.h.s8.bf16 %v680
        %v1641 = vunpack.c.h.s8.bf16 %v681
        %v1642 = vunpack.c.h.s8.bf16 %v682
        %v1643 = vunpack.c.h.s8.bf16 %v683
        %v1644 = vunpack.c.h.s8.bf16 %v684
        %v1645 = vunpack.c.l.s8.bf16 %v685
        %v1646 = vunpack.c.l.s8.bf16 %v686
        %v1647 = vunpack.c.l.s8.bf16 %v687
        %v1648 = vunpack.c.l.s8.bf16 %v688
        %v1649 = vunpack.c.l.s8.bf16 %v689
        %v1650 = vunpack.c.l.s8.bf16 %v690
        %v1651 = vunpack.c.l.s8.bf16 %v691
        %v1652 = vunpack.c.l.s8.bf16 %v692
        %v1653 = vunpack.c.h.s8.bf16 %v685
        %v1654 = vunpack.c.h.s8.bf16 %v686
        %v1655 = vunpack.c.h.s8.bf16 %v687
        %v1656 = vunpack.c.h.s8.bf16 %v688
        %v1657 = vunpack.c.h.s8.bf16 %v689
        %v1658 = vunpack.c.h.s8.bf16 %v690
        %v1659 = vunpack.c.h.s8.bf16 %v691
        %v1660 = vunpack.c.h.s8.bf16 %v692
        %v1661 = vunpack.c.l.s8.bf16 %v693
        %v1662 = vunpack.c.l.s8.bf16 %v694
        %v1663 = vunpack.c.l.s8.bf16 %v695
        %v1664 = vunpack.c.l.s8.bf16 %v696
        %v1665 = vunpack.c.l.s8.bf16 %v697
        %v1666 = vunpack.c.l.s8.bf16 %v698
        %v1667 = vunpack.c.l.s8.bf16 %v699
        %v1668 = vunpack.c.l.s8.bf16 %v700
        %v1669 = vunpack.c.h.s8.bf16 %v693
        %v1670 = vunpack.c.h.s8.bf16 %v694
        %v1671 = vunpack.c.h.s8.bf16 %v695
        %v1672 = vunpack.c.h.s8.bf16 %v696
        %v1673 = vunpack.c.h.s8.bf16 %v697
        %v1674 = vunpack.c.h.s8.bf16 %v698
        %v1675 = vunpack.c.h.s8.bf16 %v699
        %v1676 = vunpack.c.h.s8.bf16 %v700
        %v1677 = vunpack.c.l.s8.bf16 %v701
        %v1678 = vunpack.c.l.s8.bf16 %v702
        %v1679 = vunpack.c.l.s8.bf16 %v703
        %v1680 = vunpack.c.l.s8.bf16 %v704
        %v1681 = vunpack.c.l.s8.bf16 %v705
        %v1682 = vunpack.c.l.s8.bf16 %v706
        %v1683 = vunpack.c.l.s8.bf16 %v707
        %v1684 = vunpack.c.l.s8.bf16 %v708
        %v1685 = vunpack.c.h.s8.bf16 %v701
        %v1686 = vunpack.c.h.s8.bf16 %v702
        %v1687 = vunpack.c.h.s8.bf16 %v703
        %v1688 = vunpack.c.h.s8.bf16 %v704
        %v1689 = vunpack.c.h.s8.bf16 %v705
        %v1690 = vunpack.c.h.s8.bf16 %v706
        %v1691 = vunpack.c.h.s8.bf16 %v707
        %v1692 = vunpack.c.h.s8.bf16 %v708
        %v1693 = vunpack.c.l.s8.bf16 %v709
        %v1694 = vunpack.c.l.s8.bf16 %v710
        %v1695 = vunpack.c.l.s8.bf16 %v711
        %v1696 = vunpack.c.l.s8.bf16 %v712
        %v1697 = vunpack.c.l.s8.bf16 %v713
        %v1698 = vunpack.c.l.s8.bf16 %v714
        %v1699 = vunpack.c.l.s8.bf16 %v715
        %v1700 = vunpack.c.l.s8.bf16 %v716
        %v1701 = vunpack.c.h.s8.bf16 %v709
        %v1702 = vunpack.c.h.s8.bf16 %v710
        %v1703 = vunpack.c.h.s8.bf16 %v711
        %v1704 = vunpack.c.h.s8.bf16 %v712
        %v1705 = vunpack.c.h.s8.bf16 %v713
        %v1706 = vunpack.c.h.s8.bf16 %v714
        %v1707 = vunpack.c.h.s8.bf16 %v715
        %v1708 = vunpack.c.h.s8.bf16 %v716
        %v1709 = vunpack.c.l.s8.bf16 %v717
        %v1710 = vunpack.c.l.s8.bf16 %v718
        %v1711 = vunpack.c.l.s8.bf16 %v719
        %v1712 = vunpack.c.l.s8.bf16 %v720
        %v1713 = vunpack.c.l.s8.bf16 %v721
        %v1714 = vunpack.c.l.s8.bf16 %v722
        %v1715 = vunpack.c.l.s8.bf16 %v723
        %v1716 = vunpack.c.l.s8.bf16 %v724
        %v1717 = vunpack.c.h.s8.bf16 %v717
        %v1718 = vunpack.c.h.s8.bf16 %v718
        %v1719 = vunpack.c.h.s8.bf16 %v719
        %v1720 = vunpack.c.h.s8.bf16 %v720
        %v1721 = vunpack.c.h.s8.bf16 %v721
        %v1722 = vunpack.c.h.s8.bf16 %v722
        %v1723 = vunpack.c.h.s8.bf16 %v723
        %v1724 = vunpack.c.h.s8.bf16 %v724
        %v1725 = vunpack.c.l.s8.bf16 %v725
        %v1726 = vunpack.c.l.s8.bf16 %v726
        %v1727 = vunpack.c.l.s8.bf16 %v727
        %v1728 = vunpack.c.l.s8.bf16 %v728
        %v1729 = vunpack.c.l.s8.bf16 %v729
        %v1730 = vunpack.c.l.s8.bf16 %v730
        %v1731 = vunpack.c.l.s8.bf16 %v731
        %v1732 = vunpack.c.l.s8.bf16 %v732
        %v1733 = vunpack.c.h.s8.bf16 %v725
        %v1734 = vunpack.c.h.s8.bf16 %v726
        %v1735 = vunpack.c.h.s8.bf16 %v727
        %v1736 = vunpack.c.h.s8.bf16 %v728
        %v1737 = vunpack.c.h.s8.bf16 %v729
        %v1738 = vunpack.c.h.s8.bf16 %v730
        %v1739 = vunpack.c.h.s8.bf16 %v731
        %v1740 = vunpack.c.h.s8.bf16 %v732
        %v1741 = vunpack.c.l.s8.bf16 %v733
        %v1742 = vunpack.c.l.s8.bf16 %v734
        %v1743 = vunpack.c.l.s8.bf16 %v735
        %v1744 = vunpack.c.l.s8.bf16 %v736
        %v1745 = vunpack.c.l.s8.bf16 %v737
        %v1746 = vunpack.c.l.s8.bf16 %v738
        %v1747 = vunpack.c.l.s8.bf16 %v739
        %v1748 = vunpack.c.l.s8.bf16 %v740
        %v1749 = vunpack.c.h.s8.bf16 %v733
        %v1750 = vunpack.c.h.s8.bf16 %v734
        %v1751 = vunpack.c.h.s8.bf16 %v735
        %v1752 = vunpack.c.h.s8.bf16 %v736
        %v1753 = vunpack.c.h.s8.bf16 %v737
        %v1754 = vunpack.c.h.s8.bf16 %v738
        %v1755 = vunpack.c.h.s8.bf16 %v739
        %v1756 = vunpack.c.h.s8.bf16 %v740
        %v1757 = vunpack.c.l.s8.bf16 %v741
        %v1758 = vunpack.c.l.s8.bf16 %v742
        %v1759 = vunpack.c.l.s8.bf16 %v743
        %v1760 = vunpack.c.l.s8.bf16 %v744
        %v1761 = vunpack.c.l.s8.bf16 %v745
        %v1762 = vunpack.c.l.s8.bf16 %v746
        %v1763 = vunpack.c.l.s8.bf16 %v747
        %v1764 = vunpack.c.l.s8.bf16 %v748
        %v1765 = vunpack.c.h.s8.bf16 %v741
        %v1766 = vunpack.c.h.s8.bf16 %v742
        %v1767 = vunpack.c.h.s8.bf16 %v743
        %v1768 = vunpack.c.h.s8.bf16 %v744
        %v1769 = vunpack.c.h.s8.bf16 %v745
        %v1770 = vunpack.c.h.s8.bf16 %v746
        %v1771 = vunpack.c.h.s8.bf16 %v747
        %v1772 = vunpack.c.h.s8.bf16 %v748
        %v1773 = vunpack.c.l.s8.bf16 %v749
        %v1774 = vunpack.c.l.s8.bf16 %v750
        %v1775 = vunpack.c.l.s8.bf16 %v751
        %v1776 = vunpack.c.l.s8.bf16 %v752
        %v1777 = vunpack.c.l.s8.bf16 %v753
        %v1778 = vunpack.c.l.s8.bf16 %v754
        %v1779 = vunpack.c.l.s8.bf16 %v755
        %v1780 = vunpack.c.l.s8.bf16 %v756
        %v1781 = vunpack.c.h.s8.bf16 %v749
        %v1782 = vunpack.c.h.s8.bf16 %v750
        %v1783 = vunpack.c.h.s8.bf16 %v751
        %v1784 = vunpack.c.h.s8.bf16 %v752
        %v1785 = vunpack.c.h.s8.bf16 %v753
        %v1786 = vunpack.c.h.s8.bf16 %v754
        %v1787 = vunpack.c.h.s8.bf16 %v755
        %v1788 = vunpack.c.h.s8.bf16 %v756
        %v1789 = vunpack.c.l.s8.bf16 %v757
        %v1790 = vunpack.c.l.s8.bf16 %v758
        %v1791 = vunpack.c.l.s8.bf16 %v759
        %v1792 = vunpack.c.l.s8.bf16 %v760
        %v1793 = vunpack.c.l.s8.bf16 %v761
        %v1794 = vunpack.c.l.s8.bf16 %v762
        %v1795 = vunpack.c.l.s8.bf16 %v763
        %v1796 = vunpack.c.l.s8.bf16 %v764
        %v1797 = vunpack.c.h.s8.bf16 %v757
        %v1798 = vunpack.c.h.s8.bf16 %v758
        %v1799 = vunpack.c.h.s8.bf16 %v759
        %v1800 = vunpack.c.h.s8.bf16 %v760
        %v1801 = vunpack.c.h.s8.bf16 %v761
        %v1802 = vunpack.c.h.s8.bf16 %v762
        %v1803 = vunpack.c.h.s8.bf16 %v763
        %v1804 = vunpack.c.h.s8.bf16 %v764
        %v1805 = vunpack.c.l.s8.bf16 %v765
        %v1806 = vunpack.c.l.s8.bf16 %v766
        %v1807 = vunpack.c.l.s8.bf16 %v767
        %v1808 = vunpack.c.l.s8.bf16 %v768
        %v1809 = vunpack.c.l.s8.bf16 %v769
        %v1810 = vunpack.c.l.s8.bf16 %v770
        %v1811 = vunpack.c.l.s8.bf16 %v771
        %v1812 = vunpack.c.l.s8.bf16 %v772
        %v1813 = vunpack.c.h.s8.bf16 %v765
        %v1814 = vunpack.c.h.s8.bf16 %v766
        %v1815 = vunpack.c.h.s8.bf16 %v767
        %v1816 = vunpack.c.h.s8.bf16 %v768
        %v1817 = vunpack.c.h.s8.bf16 %v769
        %v1818 = vunpack.c.h.s8.bf16 %v770
        %v1819 = vunpack.c.h.s8.bf16 %v771
        %v1820 = vunpack.c.h.s8.bf16 %v772
        %v1821 = vunpack.c.l.s8.bf16 %v773
        %v1822 = vunpack.c.l.s8.bf16 %v774
        %v1823 = vunpack.c.l.s8.bf16 %v775
        %v1824 = vunpack.c.l.s8.bf16 %v776
        %v1825 = vunpack.c.l.s8.bf16 %v777
        %v1826 = vunpack.c.l.s8.bf16 %v778
        %v1827 = vunpack.c.l.s8.bf16 %v779
        %v1828 = vunpack.c.l.s8.bf16 %v780
        %v1829 = vunpack.c.h.s8.bf16 %v773
        %v1830 = vunpack.c.h.s8.bf16 %v774
        %v1831 = vunpack.c.h.s8.bf16 %v775
        %v1832 = vunpack.c.h.s8.bf16 %v776
        %v1833 = vunpack.c.h.s8.bf16 %v777
        %v1834 = vunpack.c.h.s8.bf16 %v778
        %v1835 = vunpack.c.h.s8.bf16 %v779
        %v1836 = vunpack.c.h.s8.bf16 %v780
        %v1837 = vunpack.c.l.s8.bf16 %v781
        %v1838 = vunpack.c.l.s8.bf16 %v782
        %v1839 = vunpack.c.l.s8.bf16 %v783
        %v1840 = vunpack.c.l.s8.bf16 %v784
        %v1841 = vunpack.c.l.s8.bf16 %v785
        %v1842 = vunpack.c.l.s8.bf16 %v786
        %v1843 = vunpack.c.l.s8.bf16 %v787
        %v1844 = vunpack.c.l.s8.bf16 %v788
        %v1845 = vunpack.c.h.s8.bf16 %v781
        %v1846 = vunpack.c.h.s8.bf16 %v782
        %v1847 = vunpack.c.h.s8.bf16 %v783
        %v1848 = vunpack.c.h.s8.bf16 %v784
        %v1849 = vunpack.c.h.s8.bf16 %v785
        %v1850 = vunpack.c.h.s8.bf16 %v786
        %v1851 = vunpack.c.h.s8.bf16 %v787
        %v1852 = vunpack.c.h.s8.bf16 %v788
        %v1853 = vunpack.c.l.s8.bf16 %v789
        %v1854 = vunpack.c.l.s8.bf16 %v790
        %v1855 = vunpack.c.l.s8.bf16 %v791
        %v1856 = vunpack.c.l.s8.bf16 %v792
        %v1857 = vunpack.c.l.s8.bf16 %v793
        %v1858 = vunpack.c.l.s8.bf16 %v794
        %v1859 = vunpack.c.l.s8.bf16 %v795
        %v1860 = vunpack.c.l.s8.bf16 %v796
        %v1861 = vunpack.c.h.s8.bf16 %v789
        %v1862 = vunpack.c.h.s8.bf16 %v790
        %v1863 = vunpack.c.h.s8.bf16 %v791
        %v1864 = vunpack.c.h.s8.bf16 %v792
        %v1865 = vunpack.c.h.s8.bf16 %v793
        %v1866 = vunpack.c.h.s8.bf16 %v794
        %v1867 = vunpack.c.h.s8.bf16 %v795
        %v1868 = vunpack.c.h.s8.bf16 %v796
        %v1869 = vunpack.c.l.s8.bf16 %v797
        %v1870 = vunpack.c.l.s8.bf16 %v798
        %v1871 = vunpack.c.l.s8.bf16 %v799
        %v1872 = vunpack.c.l.s8.bf16 %v800
        %v1873 = vunpack.c.l.s8.bf16 %v801
        %v1874 = vunpack.c.l.s8.bf16 %v802
        %v1875 = vunpack.c.l.s8.bf16 %v803
        %v1876 = vunpack.c.l.s8.bf16 %v804
        %v1877 = vunpack.c.h.s8.bf16 %v797
        %v1878 = vunpack.c.h.s8.bf16 %v798
        %v1879 = vunpack.c.h.s8.bf16 %v799
        %v1880 = vunpack.c.h.s8.bf16 %v800
        %v1881 = vunpack.c.h.s8.bf16 %v801
        %v1882 = vunpack.c.h.s8.bf16 %v802
        %v1883 = vunpack.c.h.s8.bf16 %v803
        %v1884 = vunpack.c.h.s8.bf16 %v804
        %v1885 = vunpack.c.l.s8.bf16 %v805
        %v1886 = vunpack.c.l.s8.bf16 %v806
        %v1887 = vunpack.c.l.s8.bf16 %v807
        %v1888 = vunpack.c.l.s8.bf16 %v808
        %v1889 = vunpack.c.l.s8.bf16 %v809
        %v1890 = vunpack.c.l.s8.bf16 %v810
        %v1891 = vunpack.c.l.s8.bf16 %v811
        %v1892 = vunpack.c.l.s8.bf16 %v812
        %v1893 = vunpack.c.h.s8.bf16 %v805
        %v1894 = vunpack.c.h.s8.bf16 %v806
        %v1895 = vunpack.c.h.s8.bf16 %v807
        %v1896 = vunpack.c.h.s8.bf16 %v808
        %v1897 = vunpack.c.h.s8.bf16 %v809
        %v1898 = vunpack.c.h.s8.bf16 %v810
        %v1899 = vunpack.c.h.s8.bf16 %v811
        %v1900 = vunpack.c.h.s8.bf16 %v812
        %v1901 = vunpack.c.l.s8.bf16 %v813
        %v1902 = vunpack.c.l.s8.bf16 %v814
        %v1903 = vunpack.c.l.s8.bf16 %v815
        %v1904 = vunpack.c.l.s8.bf16 %v816
        %v1905 = vunpack.c.l.s8.bf16 %v817
        %v1906 = vunpack.c.l.s8.bf16 %v818
        %v1907 = vunpack.c.l.s8.bf16 %v819
        %v1908 = vunpack.c.l.s8.bf16 %v820
        %v1909 = vunpack.c.h.s8.bf16 %v813
        %v1910 = vunpack.c.h.s8.bf16 %v814
        %v1911 = vunpack.c.h.s8.bf16 %v815
        %v1912 = vunpack.c.h.s8.bf16 %v816
        %v1913 = vunpack.c.h.s8.bf16 %v817
        %v1914 = vunpack.c.h.s8.bf16 %v818
        %v1915 = vunpack.c.h.s8.bf16 %v819
        %v1916 = vunpack.c.h.s8.bf16 %v820
        %v1917 = vunpack.c.l.s8.bf16 %v821
        %v1918 = vunpack.c.l.s8.bf16 %v822
        %v1919 = vunpack.c.l.s8.bf16 %v823
        %v1920 = vunpack.c.l.s8.bf16 %v824
        %v1921 = vunpack.c.l.s8.bf16 %v825
        %v1922 = vunpack.c.l.s8.bf16 %v826
        %v1923 = vunpack.c.l.s8.bf16 %v827
        %v1924 = vunpack.c.l.s8.bf16 %v828
        %v1925 = vunpack.c.h.s8.bf16 %v821
        %v1926 = vunpack.c.h.s8.bf16 %v822
        %v1927 = vunpack.c.h.s8.bf16 %v823
        %v1928 = vunpack.c.h.s8.bf16 %v824
        %v1929 = vunpack.c.h.s8.bf16 %v825
        %v1930 = vunpack.c.h.s8.bf16 %v826
        %v1931 = vunpack.c.h.s8.bf16 %v827
        %v1932 = vunpack.c.h.s8.bf16 %v828
        %v1933 = vunpack.c.l.s8.bf16 %v829
        %v1934 = vunpack.c.l.s8.bf16 %v830
        %v1935 = vunpack.c.l.s8.bf16 %v831
        %v1936 = vunpack.c.l.s8.bf16 %v832
        %v1937 = vunpack.c.l.s8.bf16 %v833
        %v1938 = vunpack.c.l.s8.bf16 %v834
        %v1939 = vunpack.c.l.s8.bf16 %v835
        %v1940 = vunpack.c.l.s8.bf16 %v836
        %v1941 = vunpack.c.h.s8.bf16 %v829
        %v1942 = vunpack.c.h.s8.bf16 %v830
        %v1943 = vunpack.c.h.s8.bf16 %v831
        %v1944 = vunpack.c.h.s8.bf16 %v832
        %v1945 = vunpack.c.h.s8.bf16 %v833
        %v1946 = vunpack.c.h.s8.bf16 %v834
        %v1947 = vunpack.c.h.s8.bf16 %v835
        %v1948 = vunpack.c.h.s8.bf16 %v836
        %v1949 = vunpack.c.l.s8.bf16 %v837
        %v1950 = vunpack.c.l.s8.bf16 %v838
        %v1951 = vunpack.c.l.s8.bf16 %v839
        %v1952 = vunpack.c.l.s8.bf16 %v840
        %v1953 = vunpack.c.l.s8.bf16 %v841
        %v1954 = vunpack.c.l.s8.bf16 %v842
        %v1955 = vunpack.c.l.s8.bf16 %v843
        %v1956 = vunpack.c.l.s8.bf16 %v844
        %v1957 = vunpack.c.h.s8.bf16 %v837
        %v1958 = vunpack.c.h.s8.bf16 %v838
        %v1959 = vunpack.c.h.s8.bf16 %v839
        %v1960 = vunpack.c.h.s8.bf16 %v840
        %v1961 = vunpack.c.h.s8.bf16 %v841
        %v1962 = vunpack.c.h.s8.bf16 %v842
        %v1963 = vunpack.c.h.s8.bf16 %v843
        %v1964 = vunpack.c.h.s8.bf16 %v844
        %v1965 = vunpack.c.l.s8.bf16 %v845
        %v1966 = vunpack.c.l.s8.bf16 %v846
        %v1967 = vunpack.c.l.s8.bf16 %v847
        %v1968 = vunpack.c.l.s8.bf16 %v848
        %v1969 = vunpack.c.l.s8.bf16 %v849
        %v1970 = vunpack.c.l.s8.bf16 %v850
        %v1971 = vunpack.c.l.s8.bf16 %v851
        %v1972 = vunpack.c.l.s8.bf16 %v852
        %v1973 = vunpack.c.h.s8.bf16 %v845
        %v1974 = vunpack.c.h.s8.bf16 %v846
        %v1975 = vunpack.c.h.s8.bf16 %v847
        %v1976 = vunpack.c.h.s8.bf16 %v848
        %v1977 = vunpack.c.h.s8.bf16 %v849
        %v1978 = vunpack.c.h.s8.bf16 %v850
        %v1979 = vunpack.c.h.s8.bf16 %v851
        %v1980 = vunpack.c.h.s8.bf16 %v852
        %v1981 = vunpack.c.l.s8.bf16 %v853
        %v1982 = vunpack.c.l.s8.bf16 %v854
        %v1983 = vunpack.c.l.s8.bf16 %v855
        %v1984 = vunpack.c.l.s8.bf16 %v856
        %v1985 = vunpack.c.l.s8.bf16 %v857
        %v1986 = vunpack.c.l.s8.bf16 %v858
        %v1987 = vunpack.c.l.s8.bf16 %v859
        %v1988 = vunpack.c.l.s8.bf16 %v860
        %v1989 = vunpack.c.h.s8.bf16 %v853
        %v1990 = vunpack.c.h.s8.bf16 %v854
        %v1991 = vunpack.c.h.s8.bf16 %v855
        %v1992 = vunpack.c.h.s8.bf16 %v856
        %v1993 = vunpack.c.h.s8.bf16 %v857
        %v1994 = vunpack.c.h.s8.bf16 %v858
        %v1995 = vunpack.c.h.s8.bf16 %v859
        %v1996 = vunpack.c.h.s8.bf16 %v860
        %v1997 = vunpack.c.l.s8.bf16 %v861
        %v1998 = vunpack.c.l.s8.bf16 %v862
        %v1999 = vunpack.c.l.s8.bf16 %v863
        %v2000 = vunpack.c.l.s8.bf16 %v864
        %v2001 = vunpack.c.l.s8.bf16 %v865
        %v2002 = vunpack.c.l.s8.bf16 %v866
        %v2003 = vunpack.c.l.s8.bf16 %v867
        %v2004 = vunpack.c.l.s8.bf16 %v868
        %v2005 = vunpack.c.h.s8.bf16 %v861
        %v2006 = vunpack.c.h.s8.bf16 %v862
        %v2007 = vunpack.c.h.s8.bf16 %v863
        %v2008 = vunpack.c.h.s8.bf16 %v864
        %v2009 = vunpack.c.h.s8.bf16 %v865
        %v2010 = vunpack.c.h.s8.bf16 %v866
        %v2011 = vunpack.c.h.s8.bf16 %v867
        %v2012 = vunpack.c.h.s8.bf16 %v868
        %v2013 = vunpack.c.l.s8.bf16 %v869
        %v2014 = vunpack.c.l.s8.bf16 %v870
        %v2015 = vunpack.c.l.s8.bf16 %v871
        %v2016 = vunpack.c.l.s8.bf16 %v872
        %v2017 = vunpack.c.l.s8.bf16 %v873
        %v2018 = vunpack.c.l.s8.bf16 %v874
        %v2019 = vunpack.c.l.s8.bf16 %v875
        %v2020 = vunpack.c.l.s8.bf16 %v876
        %v2021 = vunpack.c.h.s8.bf16 %v869
        %v2022 = vunpack.c.h.s8.bf16 %v870
        %v2023 = vunpack.c.h.s8.bf16 %v871
        %v2024 = vunpack.c.h.s8.bf16 %v872
        %v2025 = vunpack.c.h.s8.bf16 %v873
        %v2026 = vunpack.c.h.s8.bf16 %v874
        %v2027 = vunpack.c.h.s8.bf16 %v875
        %v2028 = vunpack.c.h.s8.bf16 %v876
        %v2029 = vunpack.c.l.s8.bf16 %v877
        %v2030 = vunpack.c.l.s8.bf16 %v878
        %v2031 = vunpack.c.l.s8.bf16 %v879
        %v2032 = vunpack.c.l.s8.bf16 %v880
        %v2033 = vunpack.c.l.s8.bf16 %v881
        %v2034 = vunpack.c.l.s8.bf16 %v882
        %v2035 = vunpack.c.l.s8.bf16 %v883
        %v2036 = vunpack.c.l.s8.bf16 %v884
        %v2037 = vunpack.c.h.s8.bf16 %v877
        %v2038 = vunpack.c.h.s8.bf16 %v878
        %v2039 = vunpack.c.h.s8.bf16 %v879
        %v2040 = vunpack.c.h.s8.bf16 %v880
        %v2041 = vunpack.c.h.s8.bf16 %v881
        %v2042 = vunpack.c.h.s8.bf16 %v882
        %v2043 = vunpack.c.h.s8.bf16 %v883
        %v2044 = vunpack.c.h.s8.bf16 %v884
        %v2045 = vunpack.c.l.s8.bf16 %v885
        %v2046 = vunpack.c.l.s8.bf16 %v886
        %v2047 = vunpack.c.l.s8.bf16 %v887
        %v2048 = vunpack.c.l.s8.bf16 %v888
        %v2049 = vunpack.c.l.s8.bf16 %v889
        %v2050 = vunpack.c.l.s8.bf16 %v890
        %v2051 = vunpack.c.l.s8.bf16 %v891
        %v2052 = vunpack.c.l.s8.bf16 %v892
        %v2053 = vunpack.c.h.s8.bf16 %v885
        %v2054 = vunpack.c.h.s8.bf16 %v886
        %v2055 = vunpack.c.h.s8.bf16 %v887
        %v2056 = vunpack.c.h.s8.bf16 %v888
        %v2057 = vunpack.c.h.s8.bf16 %v889
        %v2058 = vunpack.c.h.s8.bf16 %v890
        %v2059 = vunpack.c.h.s8.bf16 %v891
        %v2060 = vunpack.c.h.s8.bf16 %v892
        %v2061 = vunpack.c.l.s8.bf16 %v893
        %v2062 = vunpack.c.l.s8.bf16 %v894
        %v2063 = vunpack.c.l.s8.bf16 %v895
        %v2064 = vunpack.c.l.s8.bf16 %v896
        %v2065 = vunpack.c.l.s8.bf16 %v897
        %v2066 = vunpack.c.l.s8.bf16 %v898
        %v2067 = vunpack.c.l.s8.bf16 %v899
        %v2068 = vunpack.c.l.s8.bf16 %v900
        %v2069 = vunpack.c.h.s8.bf16 %v893
        %v2070 = vunpack.c.h.s8.bf16 %v894
        %v2071 = vunpack.c.h.s8.bf16 %v895
        %v2072 = vunpack.c.h.s8.bf16 %v896
        %v2073 = vunpack.c.h.s8.bf16 %v897
        %v2074 = vunpack.c.h.s8.bf16 %v898
        %v2075 = vunpack.c.h.s8.bf16 %v899
        %v2076 = vunpack.c.h.s8.bf16 %v900
        %v2077 = vunpack.c.l.s8.bf16 %v901
        %v2078 = vunpack.c.l.s8.bf16 %v902
        %v2079 = vunpack.c.l.s8.bf16 %v903
        %v2080 = vunpack.c.l.s8.bf16 %v904
        %v2081 = vunpack.c.l.s8.bf16 %v905
        %v2082 = vunpack.c.l.s8.bf16 %v906
        %v2083 = vunpack.c.l.s8.bf16 %v907
        %v2084 = vunpack.c.l.s8.bf16 %v908
        %v2085 = vunpack.c.h.s8.bf16 %v901
        %v2086 = vunpack.c.h.s8.bf16 %v902
        %v2087 = vunpack.c.h.s8.bf16 %v903
        %v2088 = vunpack.c.h.s8.bf16 %v904
        %v2089 = vunpack.c.h.s8.bf16 %v905
        %v2090 = vunpack.c.h.s8.bf16 %v906
        %v2091 = vunpack.c.h.s8.bf16 %v907
        %v2092 = vunpack.c.h.s8.bf16 %v908
        %v2093 = vunpack.c.l.s8.bf16 %v909
        %v2094 = vunpack.c.l.s8.bf16 %v910
        %v2095 = vunpack.c.l.s8.bf16 %v911
        %v2096 = vunpack.c.l.s8.bf16 %v912
        %v2097 = vunpack.c.l.s8.bf16 %v913
        %v2098 = vunpack.c.l.s8.bf16 %v914
        %v2099 = vunpack.c.l.s8.bf16 %v915
        %v2100 = vunpack.c.l.s8.bf16 %v916
        %v2101 = vunpack.c.h.s8.bf16 %v909
        %v2102 = vunpack.c.h.s8.bf16 %v910
        %v2103 = vunpack.c.h.s8.bf16 %v911
        %v2104 = vunpack.c.h.s8.bf16 %v912
        %v2105 = vunpack.c.h.s8.bf16 %v913
        %v2106 = vunpack.c.h.s8.bf16 %v914
        %v2107 = vunpack.c.h.s8.bf16 %v915
        %v2108 = vunpack.c.h.s8.bf16 %v916
        %v2109 = vunpack.c.l.s8.bf16 %v917
        %v2110 = vunpack.c.l.s8.bf16 %v918
        %v2111 = vunpack.c.l.s8.bf16 %v919
        %v2112 = vunpack.c.l.s8.bf16 %v920
        %v2113 = vunpack.c.l.s8.bf16 %v921
        %v2114 = vunpack.c.l.s8.bf16 %v922
        %v2115 = vunpack.c.l.s8.bf16 %v923
        %v2116 = vunpack.c.l.s8.bf16 %v924
        %v2117 = vunpack.c.h.s8.bf16 %v917
        %v2118 = vunpack.c.h.s8.bf16 %v918
        %v2119 = vunpack.c.h.s8.bf16 %v919
        %v2120 = vunpack.c.h.s8.bf16 %v920
        %v2121 = vunpack.c.h.s8.bf16 %v921
        %v2122 = vunpack.c.h.s8.bf16 %v922
        %v2123 = vunpack.c.h.s8.bf16 %v923
        %v2124 = vunpack.c.h.s8.bf16 %v924
        %v2125 = vunpack.c.l.s8.bf16 %v925
        %v2126 = vunpack.c.l.s8.bf16 %v926
        %v2127 = vunpack.c.l.s8.bf16 %v927
        %v2128 = vunpack.c.l.s8.bf16 %v928
        %v2129 = vunpack.c.l.s8.bf16 %v929
        %v2130 = vunpack.c.l.s8.bf16 %v930
        %v2131 = vunpack.c.l.s8.bf16 %v931
        %v2132 = vunpack.c.l.s8.bf16 %v932
        %v2133 = vunpack.c.h.s8.bf16 %v925
        %v2134 = vunpack.c.h.s8.bf16 %v926
        %v2135 = vunpack.c.h.s8.bf16 %v927
        %v2136 = vunpack.c.h.s8.bf16 %v928
        %v2137 = vunpack.c.h.s8.bf16 %v929
        %v2138 = vunpack.c.h.s8.bf16 %v930
        %v2139 = vunpack.c.h.s8.bf16 %v931
        %v2140 = vunpack.c.h.s8.bf16 %v932
        %v2141 = vunpack.c.l.s8.bf16 %v933
        %v2142 = vunpack.c.l.s8.bf16 %v934
        %v2143 = vunpack.c.l.s8.bf16 %v935
        %v2144 = vunpack.c.l.s8.bf16 %v936
        %v2145 = vunpack.c.l.s8.bf16 %v937
        %v2146 = vunpack.c.l.s8.bf16 %v938
        %v2147 = vunpack.c.l.s8.bf16 %v939
        %v2148 = vunpack.c.l.s8.bf16 %v940
        %v2149 = vunpack.c.h.s8.bf16 %v933
        %v2150 = vunpack.c.h.s8.bf16 %v934
        %v2151 = vunpack.c.h.s8.bf16 %v935
        %v2152 = vunpack.c.h.s8.bf16 %v936
        %v2153 = vunpack.c.h.s8.bf16 %v937
        %v2154 = vunpack.c.h.s8.bf16 %v938
        %v2155 = vunpack.c.h.s8.bf16 %v939
        %v2156 = vunpack.c.h.s8.bf16 %v940
        %v2157 = vunpack.c.l.s8.bf16 %v941
        %v2158 = vunpack.c.l.s8.bf16 %v942
        %v2159 = vunpack.c.l.s8.bf16 %v943
        %v2160 = vunpack.c.l.s8.bf16 %v944
        %v2161 = vunpack.c.l.s8.bf16 %v945
        %v2162 = vunpack.c.l.s8.bf16 %v946
        %v2163 = vunpack.c.l.s8.bf16 %v947
        %v2164 = vunpack.c.l.s8.bf16 %v948
        %v2165 = vunpack.c.h.s8.bf16 %v941
        %v2166 = vunpack.c.h.s8.bf16 %v942
        %v2167 = vunpack.c.h.s8.bf16 %v943
        %v2168 = vunpack.c.h.s8.bf16 %v944
        %v2169 = vunpack.c.h.s8.bf16 %v945
        %v2170 = vunpack.c.h.s8.bf16 %v946
        %v2171 = vunpack.c.h.s8.bf16 %v947
        %v2172 = vunpack.c.h.s8.bf16 %v948
        %v2173 = vunpack.c.l.s8.bf16 %v949
        %v2174 = vunpack.c.l.s8.bf16 %v950
        %v2175 = vunpack.c.l.s8.bf16 %v951
        %v2176 = vunpack.c.l.s8.bf16 %v952
        %v2177 = vunpack.c.l.s8.bf16 %v953
        %v2178 = vunpack.c.l.s8.bf16 %v954
        %v2179 = vunpack.c.l.s8.bf16 %v955
        %v2180 = vunpack.c.l.s8.bf16 %v956
        %v2181 = vunpack.c.h.s8.bf16 %v949
        %v2182 = vunpack.c.h.s8.bf16 %v950
        %v2183 = vunpack.c.h.s8.bf16 %v951
        %v2184 = vunpack.c.h.s8.bf16 %v952
        %v2185 = vunpack.c.h.s8.bf16 %v953
        %v2186 = vunpack.c.h.s8.bf16 %v954
        %v2187 = vunpack.c.h.s8.bf16 %v955
        %v2188 = vunpack.c.h.s8.bf16 %v956
        %v2189 = vunpack.c.l.s8.bf16 %v957
        %v2190 = vunpack.c.l.s8.bf16 %v958
        %v2191 = vunpack.c.l.s8.bf16 %v959
        %v2192 = vunpack.c.l.s8.bf16 %v960
        %v2193 = vunpack.c.l.s8.bf16 %v961
        %v2194 = vunpack.c.l.s8.bf16 %v962
        %v2195 = vunpack.c.l.s8.bf16 %v963
        %v2196 = vunpack.c.l.s8.bf16 %v964
        %v2197 = vunpack.c.h.s8.bf16 %v957
        %v2198 = vunpack.c.h.s8.bf16 %v958
        %v2199 = vunpack.c.h.s8.bf16 %v959
        %v2200 = vunpack.c.h.s8.bf16 %v960
        %v2201 = vunpack.c.h.s8.bf16 %v961
        %v2202 = vunpack.c.h.s8.bf16 %v962
        %v2203 = vunpack.c.h.s8.bf16 %v963
        %v2204 = vunpack.c.h.s8.bf16 %v964
        %v2205 = vunpack.c.l.s8.bf16 %v965
        %v2206 = vunpack.c.l.s8.bf16 %v966
        %v2207 = vunpack.c.l.s8.bf16 %v967
        %v2208 = vunpack.c.l.s8.bf16 %v968
        %v2209 = vunpack.c.l.s8.bf16 %v969
        %v2210 = vunpack.c.l.s8.bf16 %v970
        %v2211 = vunpack.c.l.s8.bf16 %v971
        %v2212 = vunpack.c.l.s8.bf16 %v972
        %v2213 = vunpack.c.h.s8.bf16 %v965
        %v2214 = vunpack.c.h.s8.bf16 %v966
        %v2215 = vunpack.c.h.s8.bf16 %v967
        %v2216 = vunpack.c.h.s8.bf16 %v968
        %v2217 = vunpack.c.h.s8.bf16 %v969
        %v2218 = vunpack.c.h.s8.bf16 %v970
        %v2219 = vunpack.c.h.s8.bf16 %v971
        %v2220 = vunpack.c.h.s8.bf16 %v972
        %v2221 = vunpack.c.l.s8.bf16 %v973
        %v2222 = vunpack.c.l.s8.bf16 %v974
        %v2223 = vunpack.c.l.s8.bf16 %v975
        %v2224 = vunpack.c.l.s8.bf16 %v976
        %v2225 = vunpack.c.l.s8.bf16 %v977
        %v2226 = vunpack.c.l.s8.bf16 %v978
        %v2227 = vunpack.c.l.s8.bf16 %v979
        %v2228 = vunpack.c.l.s8.bf16 %v980
        %v2229 = vunpack.c.h.s8.bf16 %v973
        %v2230 = vunpack.c.h.s8.bf16 %v974
        %v2231 = vunpack.c.h.s8.bf16 %v975
        %v2232 = vunpack.c.h.s8.bf16 %v976
        %v2233 = vunpack.c.h.s8.bf16 %v977
        %v2234 = vunpack.c.h.s8.bf16 %v978
        %v2235 = vunpack.c.h.s8.bf16 %v979
        %v2236 = vunpack.c.h.s8.bf16 %v980
        %v2237 = vunpack.c.l.s8.bf16 %v981
        %v2238 = vunpack.c.l.s8.bf16 %v982
        %v2239 = vunpack.c.l.s8.bf16 %v983
        %v2240 = vunpack.c.l.s8.bf16 %v984
        %v2241 = vunpack.c.l.s8.bf16 %v985
        %v2242 = vunpack.c.l.s8.bf16 %v986
        %v2243 = vunpack.c.l.s8.bf16 %v987
        %v2244 = vunpack.c.l.s8.bf16 %v988
        %v2245 = vunpack.c.h.s8.bf16 %v981
        %v2246 = vunpack.c.h.s8.bf16 %v982
        %v2247 = vunpack.c.h.s8.bf16 %v983
        %v2248 = vunpack.c.h.s8.bf16 %v984
        %v2249 = vunpack.c.h.s8.bf16 %v985
        %v2250 = vunpack.c.h.s8.bf16 %v986
        %v2251 = vunpack.c.h.s8.bf16 %v987
        %v2252 = vunpack.c.h.s8.bf16 %v988
        %v2253 = vunpack.c.l.s8.bf16 %v989
        %v2254 = vunpack.c.l.s8.bf16 %v990
        %v2255 = vunpack.c.l.s8.bf16 %v991
        %v2256 = vunpack.c.l.s8.bf16 %v992
        %v2257 = vunpack.c.l.s8.bf16 %v993
        %v2258 = vunpack.c.l.s8.bf16 %v994
        %v2259 = vunpack.c.l.s8.bf16 %v995
        %v2260 = vunpack.c.l.s8.bf16 %v996
        %v2261 = vunpack.c.h.s8.bf16 %v989
        %v2262 = vunpack.c.h.s8.bf16 %v990
        %v2263 = vunpack.c.h.s8.bf16 %v991
        %v2264 = vunpack.c.h.s8.bf16 %v992
        %v2265 = vunpack.c.h.s8.bf16 %v993
        %v2266 = vunpack.c.h.s8.bf16 %v994
        %v2267 = vunpack.c.h.s8.bf16 %v995
        %v2268 = vunpack.c.h.s8.bf16 %v996
        %v2269 = vunpack.c.l.s8.bf16 %v997
        %v2270 = vunpack.c.l.s8.bf16 %v998
        %v2271 = vunpack.c.l.s8.bf16 %v999
        %v2272 = vunpack.c.l.s8.bf16 %v1000
        %v2273 = vunpack.c.l.s8.bf16 %v1001
        %v2274 = vunpack.c.l.s8.bf16 %v1002
        %v2275 = vunpack.c.l.s8.bf16 %v1003
        %v2276 = vunpack.c.l.s8.bf16 %v1004
        %v2277 = vunpack.c.h.s8.bf16 %v997
        %v2278 = vunpack.c.h.s8.bf16 %v998
        %v2279 = vunpack.c.h.s8.bf16 %v999
        %v2280 = vunpack.c.h.s8.bf16 %v1000
        %v2281 = vunpack.c.h.s8.bf16 %v1001
        %v2282 = vunpack.c.h.s8.bf16 %v1002
        %v2283 = vunpack.c.h.s8.bf16 %v1003
        %v2284 = vunpack.c.h.s8.bf16 %v1004
        %v2285 = vunpack.c.l.s8.bf16 %v1005
        %v2286 = vunpack.c.l.s8.bf16 %v1006
        %v2287 = vunpack.c.l.s8.bf16 %v1007
        %v2288 = vunpack.c.l.s8.bf16 %v1008
        %v2289 = vunpack.c.l.s8.bf16 %v1009
        %v2290 = vunpack.c.l.s8.bf16 %v1010
        %v2291 = vunpack.c.l.s8.bf16 %v1011
        %v2292 = vunpack.c.l.s8.bf16 %v1012
        %v2293 = vunpack.c.h.s8.bf16 %v1005
        %v2294 = vunpack.c.h.s8.bf16 %v1006
        %v2295 = vunpack.c.h.s8.bf16 %v1007
        %v2296 = vunpack.c.h.s8.bf16 %v1008
        %v2297 = vunpack.c.h.s8.bf16 %v1009
        %v2298 = vunpack.c.h.s8.bf16 %v1010
        %v2299 = vunpack.c.h.s8.bf16 %v1011
        %v2300 = vunpack.c.h.s8.bf16 %v1012
        %v2301 = vunpack.c.l.s8.bf16 %v1013
        %v2302 = vunpack.c.l.s8.bf16 %v1014
        %v2303 = vunpack.c.l.s8.bf16 %v1015
        %v2304 = vunpack.c.l.s8.bf16 %v1016
        %v2305 = vunpack.c.l.s8.bf16 %v1017
        %v2306 = vunpack.c.l.s8.bf16 %v1018
        %v2307 = vunpack.c.l.s8.bf16 %v1019
        %v2308 = vunpack.c.l.s8.bf16 %v1020
        %v2309 = vunpack.c.h.s8.bf16 %v1013
        %v2310 = vunpack.c.h.s8.bf16 %v1014
        %v2311 = vunpack.c.h.s8.bf16 %v1015
        %v2312 = vunpack.c.h.s8.bf16 %v1016
        %v2313 = vunpack.c.h.s8.bf16 %v1017
        %v2314 = vunpack.c.h.s8.bf16 %v1018
        %v2315 = vunpack.c.h.s8.bf16 %v1019
        %v2316 = vunpack.c.h.s8.bf16 %v1020
        %v2317 = vunpack.c.l.s8.bf16 %v1021
        %v2318 = vunpack.c.l.s8.bf16 %v1022
        %v2319 = vunpack.c.l.s8.bf16 %v1023
        %v2320 = vunpack.c.l.s8.bf16 %v1024
        %v2321 = vunpack.c.l.s8.bf16 %v1025
        %v2322 = vunpack.c.l.s8.bf16 %v1026
        %v2323 = vunpack.c.l.s8.bf16 %v1027
        %v2324 = vunpack.c.l.s8.bf16 %v1028
        %v2325 = vunpack.c.h.s8.bf16 %v1021
        %v2326 = vunpack.c.h.s8.bf16 %v1022
        %v2327 = vunpack.c.h.s8.bf16 %v1023
        %v2328 = vunpack.c.h.s8.bf16 %v1024
        %v2329 = vunpack.c.h.s8.bf16 %v1025
        %v2330 = vunpack.c.h.s8.bf16 %v1026
        %v2331 = vunpack.c.h.s8.bf16 %v1027
        %v2332 = vunpack.c.h.s8.bf16 %v1028
        %v2333 = vunpack.c.l.s8.bf16 %v1029
        %v2334 = vunpack.c.l.s8.bf16 %v1030
        %v2335 = vunpack.c.l.s8.bf16 %v1031
        %v2336 = vunpack.c.l.s8.bf16 %v1032
        %v2337 = vunpack.c.l.s8.bf16 %v1033
        %v2338 = vunpack.c.l.s8.bf16 %v1034
        %v2339 = vunpack.c.l.s8.bf16 %v1035
        %v2340 = vunpack.c.l.s8.bf16 %v1036
        %v2341 = vunpack.c.h.s8.bf16 %v1029
        %v2342 = vunpack.c.h.s8.bf16 %v1030
        %v2343 = vunpack.c.h.s8.bf16 %v1031
        %v2344 = vunpack.c.h.s8.bf16 %v1032
        %v2345 = vunpack.c.h.s8.bf16 %v1033
        %v2346 = vunpack.c.h.s8.bf16 %v1034
        %v2347 = vunpack.c.h.s8.bf16 %v1035
        %v2348 = vunpack.c.h.s8.bf16 %v1036
        %v2349 = vunpack.c.l.s8.bf16 %v1037
        %v2350 = vunpack.c.l.s8.bf16 %v1038
        %v2351 = vunpack.c.l.s8.bf16 %v1039
        %v2352 = vunpack.c.l.s8.bf16 %v1040
        %v2353 = vunpack.c.l.s8.bf16 %v1041
        %v2354 = vunpack.c.l.s8.bf16 %v1042
        %v2355 = vunpack.c.l.s8.bf16 %v1043
        %v2356 = vunpack.c.l.s8.bf16 %v1044
        %v2357 = vunpack.c.h.s8.bf16 %v1037
        %v2358 = vunpack.c.h.s8.bf16 %v1038
        %v2359 = vunpack.c.h.s8.bf16 %v1039
        %v2360 = vunpack.c.h.s8.bf16 %v1040
        %v2361 = vunpack.c.h.s8.bf16 %v1041
        %v2362 = vunpack.c.h.s8.bf16 %v1042
        %v2363 = vunpack.c.h.s8.bf16 %v1043
        %v2364 = vunpack.c.h.s8.bf16 %v1044
        %v2365 = vunpack.c.l.s8.bf16 %v1045
        %v2366 = vunpack.c.l.s8.bf16 %v1046
        %v2367 = vunpack.c.l.s8.bf16 %v1047
        %v2368 = vunpack.c.l.s8.bf16 %v1048
        %v2369 = vunpack.c.l.s8.bf16 %v1049
        %v2370 = vunpack.c.l.s8.bf16 %v1050
        %v2371 = vunpack.c.l.s8.bf16 %v1051
        %v2372 = vunpack.c.l.s8.bf16 %v1052
        %v2373 = vunpack.c.h.s8.bf16 %v1045
        %v2374 = vunpack.c.h.s8.bf16 %v1046
        %v2375 = vunpack.c.h.s8.bf16 %v1047
        %v2376 = vunpack.c.h.s8.bf16 %v1048
        %v2377 = vunpack.c.h.s8.bf16 %v1049
        %v2378 = vunpack.c.h.s8.bf16 %v1050
        %v2379 = vunpack.c.h.s8.bf16 %v1051
        %v2380 = vunpack.c.h.s8.bf16 %v1052
        %v2381 = vunpack.c.l.s8.bf16 %v1053
        %v2382 = vunpack.c.l.s8.bf16 %v1054
        %v2383 = vunpack.c.l.s8.bf16 %v1055
        %v2384 = vunpack.c.l.s8.bf16 %v1056
        %v2385 = vunpack.c.l.s8.bf16 %v1057
        %v2386 = vunpack.c.l.s8.bf16 %v1058
        %v2387 = vunpack.c.l.s8.bf16 %v1059
        %v2388 = vunpack.c.l.s8.bf16 %v1060
        %v2389 = vunpack.c.h.s8.bf16 %v1053
        %v2390 = vunpack.c.h.s8.bf16 %v1054
        %v2391 = vunpack.c.h.s8.bf16 %v1055
        %v2392 = vunpack.c.h.s8.bf16 %v1056
        %v2393 = vunpack.c.h.s8.bf16 %v1057
        %v2394 = vunpack.c.h.s8.bf16 %v1058
        %v2395 = vunpack.c.h.s8.bf16 %v1059
        %v2396 = vunpack.c.h.s8.bf16 %v1060
        %v2397 = vunpack.c.l.s8.bf16 %v1061
        %v2398 = vunpack.c.l.s8.bf16 %v1062
        %v2399 = vunpack.c.l.s8.bf16 %v1063
        %v2400 = vunpack.c.l.s8.bf16 %v1064
        %v2401 = vunpack.c.l.s8.bf16 %v1065
        %v2402 = vunpack.c.l.s8.bf16 %v1066
        %v2403 = vunpack.c.l.s8.bf16 %v1067
        %v2404 = vunpack.c.l.s8.bf16 %v1068
        %v2405 = vunpack.c.h.s8.bf16 %v1061
        %v2406 = vunpack.c.h.s8.bf16 %v1062
        %v2407 = vunpack.c.h.s8.bf16 %v1063
        %v2408 = vunpack.c.h.s8.bf16 %v1064
        %v2409 = vunpack.c.h.s8.bf16 %v1065
        %v2410 = vunpack.c.h.s8.bf16 %v1066
        %v2411 = vunpack.c.h.s8.bf16 %v1067
        %v2412 = vunpack.c.h.s8.bf16 %v1068
        %v2413 = vunpack.c.l.s8.bf16 %v1069
        %v2414 = vunpack.c.l.s8.bf16 %v1070
        %v2415 = vunpack.c.l.s8.bf16 %v1071
        %v2416 = vunpack.c.l.s8.bf16 %v1072
        %v2417 = vunpack.c.l.s8.bf16 %v1073
        %v2418 = vunpack.c.l.s8.bf16 %v1074
        %v2419 = vunpack.c.l.s8.bf16 %v1075
        %v2420 = vunpack.c.l.s8.bf16 %v1076
        %v2421 = vunpack.c.h.s8.bf16 %v1069
        %v2422 = vunpack.c.h.s8.bf16 %v1070
        %v2423 = vunpack.c.h.s8.bf16 %v1071
        %v2424 = vunpack.c.h.s8.bf16 %v1072
        %v2425 = vunpack.c.h.s8.bf16 %v1073
        %v2426 = vunpack.c.h.s8.bf16 %v1074
        %v2427 = vunpack.c.h.s8.bf16 %v1075
        %v2428 = vunpack.c.h.s8.bf16 %v1076
        %v2429 = vunpack.c.l.s8.bf16 %v1077
        %v2430 = vunpack.c.l.s8.bf16 %v1078
        %v2431 = vunpack.c.l.s8.bf16 %v1079
        %v2432 = vunpack.c.l.s8.bf16 %v1080
        %v2433 = vunpack.c.l.s8.bf16 %v1081
        %v2434 = vunpack.c.l.s8.bf16 %v1082
        %v2435 = vunpack.c.l.s8.bf16 %v1083
        %v2436 = vunpack.c.l.s8.bf16 %v1084
        %v2437 = vunpack.c.h.s8.bf16 %v1077
        %v2438 = vunpack.c.h.s8.bf16 %v1078
        %v2439 = vunpack.c.h.s8.bf16 %v1079
        %v2440 = vunpack.c.h.s8.bf16 %v1080
        %v2441 = vunpack.c.h.s8.bf16 %v1081
        %v2442 = vunpack.c.h.s8.bf16 %v1082
        %v2443 = vunpack.c.h.s8.bf16 %v1083
        %v2444 = vunpack.c.h.s8.bf16 %v1084
        %v2445 = vunpack.c.l.s8.bf16 %v1085
        %v2446 = vunpack.c.l.s8.bf16 %v1086
        %v2447 = vunpack.c.l.s8.bf16 %v1087
        %v2448 = vunpack.c.l.s8.bf16 %v1088
        %v2449 = vunpack.c.l.s8.bf16 %v1089
        %v2450 = vunpack.c.l.s8.bf16 %v1090
        %v2451 = vunpack.c.l.s8.bf16 %v1091
        %v2452 = vunpack.c.l.s8.bf16 %v1092
        %v2453 = vunpack.c.h.s8.bf16 %v1085
        %v2454 = vunpack.c.h.s8.bf16 %v1086
        %v2455 = vunpack.c.h.s8.bf16 %v1087
        %v2456 = vunpack.c.h.s8.bf16 %v1088
        %v2457 = vunpack.c.h.s8.bf16 %v1089
        %v2458 = vunpack.c.h.s8.bf16 %v1090
        %v2459 = vunpack.c.h.s8.bf16 %v1091
        %v2460 = vunpack.c.h.s8.bf16 %v1092
        %v2461 = vunpack.c.l.s8.bf16 %v1093
        %v2462 = vunpack.c.l.s8.bf16 %v1094
        %v2463 = vunpack.c.l.s8.bf16 %v1095
        %v2464 = vunpack.c.l.s8.bf16 %v1096
        %v2465 = vunpack.c.l.s8.bf16 %v1097
        %v2466 = vunpack.c.l.s8.bf16 %v1098
        %v2467 = vunpack.c.l.s8.bf16 %v1099
        %v2468 = vunpack.c.l.s8.bf16 %v1100
        %v2469 = vunpack.c.h.s8.bf16 %v1093
        %v2470 = vunpack.c.h.s8.bf16 %v1094
        %v2471 = vunpack.c.h.s8.bf16 %v1095
        %v2472 = vunpack.c.h.s8.bf16 %v1096
        %v2473 = vunpack.c.h.s8.bf16 %v1097
        %v2474 = vunpack.c.h.s8.bf16 %v1098
        %v2475 = vunpack.c.h.s8.bf16 %v1099
        %v2476 = vunpack.c.h.s8.bf16 %v1100
        %v2477 = vunpack.c.l.s8.bf16 %v1101
        %v2478 = vunpack.c.l.s8.bf16 %v1102
        %v2479 = vunpack.c.l.s8.bf16 %v1103
        %v2480 = vunpack.c.l.s8.bf16 %v1104
        %v2481 = vunpack.c.l.s8.bf16 %v1105
        %v2482 = vunpack.c.l.s8.bf16 %v1106
        %v2483 = vunpack.c.l.s8.bf16 %v1107
        %v2484 = vunpack.c.l.s8.bf16 %v1108
        %v2485 = vunpack.c.h.s8.bf16 %v1101
        %v2486 = vunpack.c.h.s8.bf16 %v1102
        %v2487 = vunpack.c.h.s8.bf16 %v1103
        %v2488 = vunpack.c.h.s8.bf16 %v1104
        %v2489 = vunpack.c.h.s8.bf16 %v1105
        %v2490 = vunpack.c.h.s8.bf16 %v1106
        %v2491 = vunpack.c.h.s8.bf16 %v1107
        %v2492 = vunpack.c.h.s8.bf16 %v1108
        %v2493 = vunpack.c.l.s8.bf16 %v1109
        %v2494 = vunpack.c.l.s8.bf16 %v1110
        %v2495 = vunpack.c.l.s8.bf16 %v1111
        %v2496 = vunpack.c.l.s8.bf16 %v1112
        %v2497 = vunpack.c.l.s8.bf16 %v1113
        %v2498 = vunpack.c.l.s8.bf16 %v1114
        %v2499 = vunpack.c.l.s8.bf16 %v1115
        %v2500 = vunpack.c.l.s8.bf16 %v1116
        %v2501 = vunpack.c.h.s8.bf16 %v1109
        %v2502 = vunpack.c.h.s8.bf16 %v1110
        %v2503 = vunpack.c.h.s8.bf16 %v1111
        %v2504 = vunpack.c.h.s8.bf16 %v1112
        %v2505 = vunpack.c.h.s8.bf16 %v1113
        %v2506 = vunpack.c.h.s8.bf16 %v1114
        %v2507 = vunpack.c.h.s8.bf16 %v1115
        %v2508 = vunpack.c.h.s8.bf16 %v1116
        %v2509 = vunpack.c.l.s8.bf16 %v1117
        %v2510 = vunpack.c.l.s8.bf16 %v1118
        %v2511 = vunpack.c.l.s8.bf16 %v1119
        %v2512 = vunpack.c.l.s8.bf16 %v1120
        %v2513 = vunpack.c.l.s8.bf16 %v1121
        %v2514 = vunpack.c.l.s8.bf16 %v1122
        %v2515 = vunpack.c.l.s8.bf16 %v1123
        %v2516 = vunpack.c.l.s8.bf16 %v1124
        %v2517 = vunpack.c.h.s8.bf16 %v1117
        %v2518 = vunpack.c.h.s8.bf16 %v1118
        %v2519 = vunpack.c.h.s8.bf16 %v1119
        %v2520 = vunpack.c.h.s8.bf16 %v1120
        %v2521 = vunpack.c.h.s8.bf16 %v1121
        %v2522 = vunpack.c.h.s8.bf16 %v1122
        %v2523 = vunpack.c.h.s8.bf16 %v1123
        %v2524 = vunpack.c.h.s8.bf16 %v1124
        %v2525 = vunpack.c.l.s8.bf16 %v1125
        %v2526 = vunpack.c.l.s8.bf16 %v1126
        %v2527 = vunpack.c.l.s8.bf16 %v1127
        %v2528 = vunpack.c.l.s8.bf16 %v1128
        %v2529 = vunpack.c.l.s8.bf16 %v1129
        %v2530 = vunpack.c.l.s8.bf16 %v1130
        %v2531 = vunpack.c.l.s8.bf16 %v1131
        %v2532 = vunpack.c.l.s8.bf16 %v1132
        %v2533 = vunpack.c.h.s8.bf16 %v1125
        %v2534 = vunpack.c.h.s8.bf16 %v1126
        %v2535 = vunpack.c.h.s8.bf16 %v1127
        %v2536 = vunpack.c.h.s8.bf16 %v1128
        %v2537 = vunpack.c.h.s8.bf16 %v1129
        %v2538 = vunpack.c.h.s8.bf16 %v1130
        %v2539 = vunpack.c.h.s8.bf16 %v1131
        %v2540 = vunpack.c.h.s8.bf16 %v1132
        %v2541 = vunpack.c.l.s8.bf16 %v1133
        %v2542 = vunpack.c.l.s8.bf16 %v1134
        %v2543 = vunpack.c.l.s8.bf16 %v1135
        %v2544 = vunpack.c.l.s8.bf16 %v1136
        %v2545 = vunpack.c.l.s8.bf16 %v1137
        %v2546 = vunpack.c.l.s8.bf16 %v1138
        %v2547 = vunpack.c.l.s8.bf16 %v1139
        %v2548 = vunpack.c.l.s8.bf16 %v1140
        %v2549 = vunpack.c.h.s8.bf16 %v1133
        %v2550 = vunpack.c.h.s8.bf16 %v1134
        %v2551 = vunpack.c.h.s8.bf16 %v1135
        %v2552 = vunpack.c.h.s8.bf16 %v1136
        %v2553 = vunpack.c.h.s8.bf16 %v1137
        %v2554 = vunpack.c.h.s8.bf16 %v1138
        %v2555 = vunpack.c.h.s8.bf16 %v1139
        %v2556 = vunpack.c.h.s8.bf16 %v1140
        %v2557 = vunpack.c.l.s8.bf16 %v1141
        %v2558 = vunpack.c.l.s8.bf16 %v1142
        %v2559 = vunpack.c.l.s8.bf16 %v1143
        %v2560 = vunpack.c.l.s8.bf16 %v1144
        %v2561 = vunpack.c.l.s8.bf16 %v1145
        %v2562 = vunpack.c.l.s8.bf16 %v1146
        %v2563 = vunpack.c.l.s8.bf16 %v1147
        %v2564 = vunpack.c.l.s8.bf16 %v1148
        %v2565 = vunpack.c.h.s8.bf16 %v1141
        %v2566 = vunpack.c.h.s8.bf16 %v1142
        %v2567 = vunpack.c.h.s8.bf16 %v1143
        %v2568 = vunpack.c.h.s8.bf16 %v1144
        %v2569 = vunpack.c.h.s8.bf16 %v1145
        %v2570 = vunpack.c.h.s8.bf16 %v1146
        %v2571 = vunpack.c.h.s8.bf16 %v1147
        %v2572 = vunpack.c.h.s8.bf16 %v1148
        %v2573 = vunpack.c.l.s8.bf16 %v1149
        %v2574 = vunpack.c.l.s8.bf16 %v1150
        %v2575 = vunpack.c.l.s8.bf16 %v1151
        %v2576 = vunpack.c.l.s8.bf16 %v1152
        %v2577 = vunpack.c.l.s8.bf16 %v1153
        %v2578 = vunpack.c.l.s8.bf16 %v1154
        %v2579 = vunpack.c.l.s8.bf16 %v1155
        %v2580 = vunpack.c.l.s8.bf16 %v1156
        %v2581 = vunpack.c.h.s8.bf16 %v1149
        %v2582 = vunpack.c.h.s8.bf16 %v1150
        %v2583 = vunpack.c.h.s8.bf16 %v1151
        %v2584 = vunpack.c.h.s8.bf16 %v1152
        %v2585 = vunpack.c.h.s8.bf16 %v1153
        %v2586 = vunpack.c.h.s8.bf16 %v1154
        %v2587 = vunpack.c.h.s8.bf16 %v1155
        %v2588 = vunpack.c.h.s8.bf16 %v1156
        %v2589 = vunpack.c.l.s8.bf16 %v1157
        %v2590 = vunpack.c.l.s8.bf16 %v1158
        %v2591 = vunpack.c.l.s8.bf16 %v1159
        %v2592 = vunpack.c.l.s8.bf16 %v1160
        %v2593 = vunpack.c.l.s8.bf16 %v1161
        %v2594 = vunpack.c.l.s8.bf16 %v1162
        %v2595 = vunpack.c.l.s8.bf16 %v1163
        %v2596 = vunpack.c.l.s8.bf16 %v1164
        %v2597 = vunpack.c.h.s8.bf16 %v1157
        %v2598 = vunpack.c.h.s8.bf16 %v1158
        %v2599 = vunpack.c.h.s8.bf16 %v1159
        %v2600 = vunpack.c.h.s8.bf16 %v1160
        %v2601 = vunpack.c.h.s8.bf16 %v1161
        %v2602 = vunpack.c.h.s8.bf16 %v1162
        %v2603 = vunpack.c.h.s8.bf16 %v1163
        %v2604 = vunpack.c.h.s8.bf16 %v1164
        %v2605 = vunpack.c.l.s8.bf16 %v1165
        %v2606 = vunpack.c.l.s8.bf16 %v1166
        %v2607 = vunpack.c.l.s8.bf16 %v1167
        %v2608 = vunpack.c.l.s8.bf16 %v1168
        %v2609 = vunpack.c.l.s8.bf16 %v1169
        %v2610 = vunpack.c.l.s8.bf16 %v1170
        %v2611 = vunpack.c.l.s8.bf16 %v1171
        %v2612 = vunpack.c.l.s8.bf16 %v1172
        %v2613 = vunpack.c.h.s8.bf16 %v1165
        %v2614 = vunpack.c.h.s8.bf16 %v1166
        %v2615 = vunpack.c.h.s8.bf16 %v1167
        %v2616 = vunpack.c.h.s8.bf16 %v1168
        %v2617 = vunpack.c.h.s8.bf16 %v1169
        %v2618 = vunpack.c.h.s8.bf16 %v1170
        %v2619 = vunpack.c.h.s8.bf16 %v1171
        %v2620 = vunpack.c.h.s8.bf16 %v1172
        %v2621 = vunpack.c.l.s8.bf16 %v1173
        %v2622 = vunpack.c.l.s8.bf16 %v1174
        %v2623 = vunpack.c.l.s8.bf16 %v1175
        %v2624 = vunpack.c.l.s8.bf16 %v1176
        %v2625 = vunpack.c.l.s8.bf16 %v1177
        %v2626 = vunpack.c.l.s8.bf16 %v1178
        %v2627 = vunpack.c.l.s8.bf16 %v1179
        %v2628 = vunpack.c.l.s8.bf16 %v1180
        %v2629 = vunpack.c.h.s8.bf16 %v1173
        %v2630 = vunpack.c.h.s8.bf16 %v1174
        %v2631 = vunpack.c.h.s8.bf16 %v1175
        %v2632 = vunpack.c.h.s8.bf16 %v1176
        %v2633 = vunpack.c.h.s8.bf16 %v1177
        %v2634 = vunpack.c.h.s8.bf16 %v1178
        %v2635 = vunpack.c.h.s8.bf16 %v1179
        %v2636 = vunpack.c.h.s8.bf16 %v1180
        %v2637 = vunpack.c.l.s8.bf16 %v1181
        %v2638 = vunpack.c.l.s8.bf16 %v1182
        %v2639 = vunpack.c.l.s8.bf16 %v1183
        %v2640 = vunpack.c.l.s8.bf16 %v1184
        %v2641 = vunpack.c.l.s8.bf16 %v1185
        %v2642 = vunpack.c.l.s8.bf16 %v1186
        %v2643 = vunpack.c.l.s8.bf16 %v1187
        %v2644 = vunpack.c.l.s8.bf16 %v1188
        %v2645 = vunpack.c.h.s8.bf16 %v1181
        %v2646 = vunpack.c.h.s8.bf16 %v1182
        %v2647 = vunpack.c.h.s8.bf16 %v1183
        %v2648 = vunpack.c.h.s8.bf16 %v1184
        %v2649 = vunpack.c.h.s8.bf16 %v1185
        %v2650 = vunpack.c.h.s8.bf16 %v1186
        %v2651 = vunpack.c.h.s8.bf16 %v1187
        %v2652 = vunpack.c.h.s8.bf16 %v1188
        %v2653 = vunpack.c.l.s8.bf16 %v1189
        %v2654 = vunpack.c.l.s8.bf16 %v1190
        %v2655 = vunpack.c.l.s8.bf16 %v1191
        %v2656 = vunpack.c.l.s8.bf16 %v1192
        %v2657 = vunpack.c.l.s8.bf16 %v1193
        %v2658 = vunpack.c.l.s8.bf16 %v1194
        %v2659 = vunpack.c.l.s8.bf16 %v1195
        %v2660 = vunpack.c.l.s8.bf16 %v1196
        %v2661 = vunpack.c.h.s8.bf16 %v1189
        %v2662 = vunpack.c.h.s8.bf16 %v1190
        %v2663 = vunpack.c.h.s8.bf16 %v1191
        %v2664 = vunpack.c.h.s8.bf16 %v1192
        %v2665 = vunpack.c.h.s8.bf16 %v1193
        %v2666 = vunpack.c.h.s8.bf16 %v1194
        %v2667 = vunpack.c.h.s8.bf16 %v1195
        %v2668 = vunpack.c.h.s8.bf16 %v1196
        %v2669 = vunpack.c.l.s8.bf16 %v1197
        %v2670 = vunpack.c.l.s8.bf16 %v1198
        %v2671 = vunpack.c.l.s8.bf16 %v1199
        %v2672 = vunpack.c.l.s8.bf16 %v1200
        %v2673 = vunpack.c.l.s8.bf16 %v1201
        %v2674 = vunpack.c.l.s8.bf16 %v1202
        %v2675 = vunpack.c.l.s8.bf16 %v1203
        %v2676 = vunpack.c.l.s8.bf16 %v1204
        %v2677 = vunpack.c.h.s8.bf16 %v1197
        %v2678 = vunpack.c.h.s8.bf16 %v1198
        %v2679 = vunpack.c.h.s8.bf16 %v1199
        %v2680 = vunpack.c.h.s8.bf16 %v1200
        %v2681 = vunpack.c.h.s8.bf16 %v1201
        %v2682 = vunpack.c.h.s8.bf16 %v1202
        %v2683 = vunpack.c.h.s8.bf16 %v1203
        %v2684 = vunpack.c.h.s8.bf16 %v1204
        %v2685 = vunpack.c.l.s8.bf16 %v1205
        %v2686 = vunpack.c.l.s8.bf16 %v1206
        %v2687 = vunpack.c.l.s8.bf16 %v1207
        %v2688 = vunpack.c.l.s8.bf16 %v1208
        %v2689 = vunpack.c.l.s8.bf16 %v1209
        %v2690 = vunpack.c.l.s8.bf16 %v1210
        %v2691 = vunpack.c.l.s8.bf16 %v1211
        %v2692 = vunpack.c.l.s8.bf16 %v1212
        %v2693 = vunpack.c.h.s8.bf16 %v1205
        %v2694 = vunpack.c.h.s8.bf16 %v1206
        %v2695 = vunpack.c.h.s8.bf16 %v1207
        %v2696 = vunpack.c.h.s8.bf16 %v1208
        %v2697 = vunpack.c.h.s8.bf16 %v1209
        %v2698 = vunpack.c.h.s8.bf16 %v1210
        %v2699 = vunpack.c.h.s8.bf16 %v1211
        %v2700 = vunpack.c.h.s8.bf16 %v1212
        %v2701 = vunpack.c.l.s8.bf16 %v1213
        %v2702 = vunpack.c.l.s8.bf16 %v1214
        %v2703 = vunpack.c.l.s8.bf16 %v1215
        %v2704 = vunpack.c.l.s8.bf16 %v1216
        %v2705 = vunpack.c.l.s8.bf16 %v1217
        %v2706 = vunpack.c.l.s8.bf16 %v1218
        %v2707 = vunpack.c.l.s8.bf16 %v1219
        %v2708 = vunpack.c.l.s8.bf16 %v1220
        %v2709 = vunpack.c.h.s8.bf16 %v1213
        %v2710 = vunpack.c.h.s8.bf16 %v1214
        %v2711 = vunpack.c.h.s8.bf16 %v1215
        %v2712 = vunpack.c.h.s8.bf16 %v1216
        %v2713 = vunpack.c.h.s8.bf16 %v1217
        %v2714 = vunpack.c.h.s8.bf16 %v1218
        %v2715 = vunpack.c.h.s8.bf16 %v1219
        %v2716 = vunpack.c.h.s8.bf16 %v1220
        %v2717 = vunpack.c.l.s8.bf16 %v1221
        %v2718 = vunpack.c.l.s8.bf16 %v1222
        %v2719 = vunpack.c.l.s8.bf16 %v1223
        %v2720 = vunpack.c.l.s8.bf16 %v1224
        %v2721 = vunpack.c.l.s8.bf16 %v1225
        %v2722 = vunpack.c.l.s8.bf16 %v1226
        %v2723 = vunpack.c.l.s8.bf16 %v1227
        %v2724 = vunpack.c.l.s8.bf16 %v1228
        %v2725 = vunpack.c.h.s8.bf16 %v1221
        %v2726 = vunpack.c.h.s8.bf16 %v1222
        %v2727 = vunpack.c.h.s8.bf16 %v1223
        %v2728 = vunpack.c.h.s8.bf16 %v1224
        %v2729 = vunpack.c.h.s8.bf16 %v1225
        %v2730 = vunpack.c.h.s8.bf16 %v1226
        %v2731 = vunpack.c.h.s8.bf16 %v1227
        %v2732 = vunpack.c.h.s8.bf16 %v1228
        %v2733 = vunpack.c.l.s8.bf16 %v1229
        %v2734 = vunpack.c.l.s8.bf16 %v1230
        %v2735 = vunpack.c.l.s8.bf16 %v1231
        %v2736 = vunpack.c.l.s8.bf16 %v1232
        %v2737 = vunpack.c.l.s8.bf16 %v1233
        %v2738 = vunpack.c.l.s8.bf16 %v1234
        %v2739 = vunpack.c.l.s8.bf16 %v1235
        %v2740 = vunpack.c.l.s8.bf16 %v1236
        %v2741 = vunpack.c.h.s8.bf16 %v1229
        %v2742 = vunpack.c.h.s8.bf16 %v1230
        %v2743 = vunpack.c.h.s8.bf16 %v1231
        %v2744 = vunpack.c.h.s8.bf16 %v1232
        %v2745 = vunpack.c.h.s8.bf16 %v1233
        %v2746 = vunpack.c.h.s8.bf16 %v1234
        %v2747 = vunpack.c.h.s8.bf16 %v1235
        %v2748 = vunpack.c.h.s8.bf16 %v1236
        %v2749 = vunpack.c.l.s8.bf16 %v1237
        %v2750 = vunpack.c.l.s8.bf16 %v1238
        %v2751 = vunpack.c.l.s8.bf16 %v1239
        %v2752 = vunpack.c.l.s8.bf16 %v1240
        %v2753 = vunpack.c.l.s8.bf16 %v1241
        %v2754 = vunpack.c.l.s8.bf16 %v1242
        %v2755 = vunpack.c.l.s8.bf16 %v1243
        %v2756 = vunpack.c.l.s8.bf16 %v1244
        %v2757 = vunpack.c.h.s8.bf16 %v1237
        %v2758 = vunpack.c.h.s8.bf16 %v1238
        %v2759 = vunpack.c.h.s8.bf16 %v1239
        %v2760 = vunpack.c.h.s8.bf16 %v1240
        %v2761 = vunpack.c.h.s8.bf16 %v1241
        %v2762 = vunpack.c.h.s8.bf16 %v1242
        %v2763 = vunpack.c.h.s8.bf16 %v1243
        %v2764 = vunpack.c.h.s8.bf16 %v1244
        %v2765 = vunpack.c.l.s8.bf16 %v1245
        %v2766 = vunpack.c.l.s8.bf16 %v1246
        %v2767 = vunpack.c.l.s8.bf16 %v1247
        %v2768 = vunpack.c.l.s8.bf16 %v1248
        %v2769 = vunpack.c.l.s8.bf16 %v1249
        %v2770 = vunpack.c.l.s8.bf16 %v1250
        %v2771 = vunpack.c.l.s8.bf16 %v1251
        %v2772 = vunpack.c.l.s8.bf16 %v1252
        %v2773 = vunpack.c.h.s8.bf16 %v1245
        %v2774 = vunpack.c.h.s8.bf16 %v1246
        %v2775 = vunpack.c.h.s8.bf16 %v1247
        %v2776 = vunpack.c.h.s8.bf16 %v1248
        %v2777 = vunpack.c.h.s8.bf16 %v1249
        %v2778 = vunpack.c.h.s8.bf16 %v1250
        %v2779 = vunpack.c.h.s8.bf16 %v1251
        %v2780 = vunpack.c.h.s8.bf16 %v1252
        %v2781 = vunpack.c.l.s8.bf16 %v1253
        %v2782 = vunpack.c.l.s8.bf16 %v1254
        %v2783 = vunpack.c.l.s8.bf16 %v1255
        %v2784 = vunpack.c.l.s8.bf16 %v1256
        %v2785 = vunpack.c.l.s8.bf16 %v1257
        %v2786 = vunpack.c.l.s8.bf16 %v1258
        %v2787 = vunpack.c.l.s8.bf16 %v1259
        %v2788 = vunpack.c.l.s8.bf16 %v1260
        %v2789 = vunpack.c.h.s8.bf16 %v1253
        %v2790 = vunpack.c.h.s8.bf16 %v1254
        %v2791 = vunpack.c.h.s8.bf16 %v1255
        %v2792 = vunpack.c.h.s8.bf16 %v1256
        %v2793 = vunpack.c.h.s8.bf16 %v1257
        %v2794 = vunpack.c.h.s8.bf16 %v1258
        %v2795 = vunpack.c.h.s8.bf16 %v1259
        %v2796 = vunpack.c.h.s8.bf16 %v1260
        %v2797 = vld [vmem:[#allocation2] sm:$0xff]
        %v2798 = vld [vmem:[#allocation2 + $0x8] sm:$0xff]
        %v2799 = vld [vmem:[#allocation2 + $0x10] sm:$0xff]
        %v2800 = vld [vmem:[#allocation2 + $0x18] sm:$0xff]
        %v2801 = vld [vmem:[#allocation2 + $0x20] sm:$0xff]
        %v2802 = vld [vmem:[#allocation2 + $0x28] sm:$0xff]
        %v2803 = vld [vmem:[#allocation2 + $0x30] sm:$0xff]
        %v2804 = vld [vmem:[#allocation2 + $0x38] sm:$0xff]
        %2805 = vmatprep.subr.bf16.mxu0 %v1318
        %2806 = vmatpush1.bf16.msra.mxu0 %v1317
        %2807 = vmatprep.subr.bf16.mxu0 %v1310
        %2808 = vmatpush1.bf16.msra.mxu0 %v1309
        %2809 = vmatprep.subr.bf16.mxu0 %v1302
        %2810 = vmatpush1.bf16.msra.mxu0 %v1301
        %2811 = vmatprep.subr.bf16.mxu0 %v1294
        %2812 = vmatpush1.bf16.msra.mxu0 %v1293
        %2813 = vmatprep.subr.bf16.mxu0 %v1286
        %2814 = vmatpush1.bf16.msra.mxu0 %v1285
        %2815 = vmatprep.subr.bf16.mxu0 %v1278
        %2816 = vmatpush1.bf16.msra.mxu0 %v1277
        %2817 = vmatprep.subr.bf16.mxu0 %v1270
        %2818 = vmatpush1.bf16.msra.mxu0 %v1269
        %2819 = vmatprep.subr.bf16.mxu0 %v1262
        %2820 = vmatpush1.bf16.msra.mxu0 %v1261
        %2821 = vmatprep.subr.bf16.mxu0 %v1382
        %2822 = vmatpush2.bf16.msra.mxu0 %v1381
        %2823 = vmatprep.subr.bf16.mxu0 %v1374
        %2824 = vmatpush2.bf16.msra.mxu0 %v1373
        %2825 = vmatprep.subr.bf16.mxu0 %v1366
        %2826 = vmatpush2.bf16.msra.mxu0 %v1365
        %2827 = vmatprep.subr.bf16.mxu0 %v1358
        %2828 = vmatpush2.bf16.msra.mxu0 %v1357
        %2829 = vmatprep.subr.bf16.mxu0 %v1350
        %2830 = vmatpush2.bf16.msra.mxu0 %v1349
        %2831 = vmatprep.subr.bf16.mxu0 %v1342
        %2832 = vmatpush2.bf16.msra.mxu0 %v1341
        %2833 = vmatprep.subr.bf16.mxu0 %v1334
        %2834 = vmatpush2.bf16.msra.mxu0 %v1333
        %2835 = vmatprep.subr.bf16.mxu0 %v1326
        %2836 = vmatpush2.bf16.msra.mxu0 %v1325
        %2837 = vmatprep.mubr.bf16.mxu0 %v470
        %2838 = vmatmul.mubr.bf16.gmra.mxu0 %v469
        %v2839 = vpop.f32.mrf.mxu0
        %v2840 = vadd.f32 0.0, %v2839
        %v2841 = vpop.f32.mrf.mxu0
        %v2842 = vadd.f32 0.0, %v2841
        %v2843 = vpop.f32.mrf.mxu0
        %v2844 = vpop.f32.mrf.mxu0
        %2845 = vdwg.mxu0
        %2846 = vmatprep.subr.bf16.mxu0 %v1446
        %2847 = vmatpush1.bf16.msra.mxu0 %v1445
        %2848 = vmatprep.subr.bf16.mxu0 %v1438
        %2849 = vmatpush1.bf16.msra.mxu0 %v1437
        %2850 = vmatprep.subr.bf16.mxu0 %v1430
        %2851 = vmatpush1.bf16.msra.mxu0 %v1429
        %2852 = vmatprep.subr.bf16.mxu0 %v1422
        %2853 = vmatpush1.bf16.msra.mxu0 %v1421
        %2854 = vmatprep.subr.bf16.mxu0 %v1414
        %2855 = vmatpush1.bf16.msra.mxu0 %v1413
        %2856 = vmatprep.subr.bf16.mxu0 %v1406
        %2857 = vmatpush1.bf16.msra.mxu0 %v1405
        %2858 = vmatprep.subr.bf16.mxu0 %v1398
        %2859 = vmatpush1.bf16.msra.mxu0 %v1397
        %2860 = vmatprep.subr.bf16.mxu0 %v1390
        %2861 = vmatpush1.bf16.msra.mxu0 %v1389
        %2862 = vmatprep.subr.bf16.mxu0 %v1510
        %2863 = vmatpush2.bf16.msra.mxu0 %v1509
        %2864 = vmatprep.subr.bf16.mxu0 %v1502
        %2865 = vmatpush2.bf16.msra.mxu0 %v1501
        %2866 = vmatprep.subr.bf16.mxu0 %v1494
        %2867 = vmatpush2.bf16.msra.mxu0 %v1493
        %2868 = vmatprep.subr.bf16.mxu0 %v1486
        %2869 = vmatpush2.bf16.msra.mxu0 %v1485
        %2870 = vmatprep.subr.bf16.mxu0 %v1478
        %2871 = vmatpush2.bf16.msra.mxu0 %v1477
        %2872 = vmatprep.subr.bf16.mxu0 %v1470
        %2873 = vmatpush2.bf16.msra.mxu0 %v1469
        %2874 = vmatprep.subr.bf16.mxu0 %v1462
        %2875 = vmatpush2.bf16.msra.mxu0 %v1461
        %2876 = vmatprep.subr.bf16.mxu0 %v1454
        %2877 = vmatpush2.bf16.msra.mxu0 %v1453
        %2878 = vmatprep.mubr.bf16.mxu0 %v472
        %2879 = vmatmul.mubr.bf16.gmra.mxu0 %v471
        %v2880 = vpop.f32.mrf.mxu0
        %v2881 = vadd.f32 %v2840, %v2880
        %v2882 = vpop.f32.mrf.mxu0
        %v2883 = vadd.f32 %v2842, %v2882
        %v2884 = vpop.f32.mrf.mxu0
        %v2885 = vpop.f32.mrf.mxu0
        %2886 = vdwg.mxu0
        %2887 = vmatprep.subr.bf16.mxu0 %v1574
        %2888 = vmatpush1.bf16.msra.mxu0 %v1573
        %2889 = vmatprep.subr.bf16.mxu0 %v1566
        %2890 = vmatpush1.bf16.msra.mxu0 %v1565
        %2891 = vmatprep.subr.bf16.mxu0 %v1558
        %2892 = vmatpush1.bf16.msra.mxu0 %v1557
        %2893 = vmatprep.subr.bf16.mxu0 %v1550
        %2894 = vmatpush1.bf16.msra.mxu0 %v1549
        %2895 = vmatprep.subr.bf16.mxu0 %v1542
        %2896 = vmatpush1.bf16.msra.mxu0 %v1541
        %2897 = vmatprep.subr.bf16.mxu0 %v1534
        %2898 = vmatpush1.bf16.msra.mxu0 %v1533
        %2899 = vmatprep.subr.bf16.mxu0 %v1526
        %2900 = vmatpush1.bf16.msra.mxu0 %v1525
        %2901 = vmatprep.subr.bf16.mxu0 %v1518
        %2902 = vmatpush1.bf16.msra.mxu0 %v1517
        %2903 = vmatprep.subr.bf16.mxu0 %v1638
        %2904 = vmatpush2.bf16.msra.mxu0 %v1637
        %2905 = vmatprep.subr.bf16.mxu0 %v1630
        %2906 = vmatpush2.bf16.msra.mxu0 %v1629
        %2907 = vmatprep.subr.bf16.mxu0 %v1622
        %2908 = vmatpush2.bf16.msra.mxu0 %v1621
        %2909 = vmatprep.subr.bf16.mxu0 %v1614
        %2910 = vmatpush2.bf16.msra.mxu0 %v1613
        %2911 = vmatprep.subr.bf16.mxu0 %v1606
        %2912 = vmatpush2.bf16.msra.mxu0 %v1605
        %2913 = vmatprep.subr.bf16.mxu0 %v1598
        %2914 = vmatpush2.bf16.msra.mxu0 %v1597
        %2915 = vmatprep.subr.bf16.mxu0 %v1590
        %2916 = vmatpush2.bf16.msra.mxu0 %v1589
        %2917 = vmatprep.subr.bf16.mxu0 %v1582
        %2918 = vmatpush2.bf16.msra.mxu0 %v1581
        %2919 = vmatprep.mubr.bf16.mxu0 %v474
        %2920 = vmatmul.mubr.bf16.gmra.mxu0 %v473
        %v2921 = vpop.f32.mrf.mxu0
        %v2922 = vadd.f32 %v2881, %v2921
        %v2923 = vpop.f32.mrf.mxu0
        %v2924 = vadd.f32 %v2883, %v2923
        %v2925 = vpop.f32.mrf.mxu0
        %v2926 = vpop.f32.mrf.mxu0
        %2927 = vdwg.mxu0
        %2928 = vmatprep.subr.bf16.mxu0 %v1702
        %2929 = vmatpush1.bf16.msra.mxu0 %v1701
        %2930 = vmatprep.subr.bf16.mxu0 %v1694
        %2931 = vmatpush1.bf16.msra.mxu0 %v1693
        %2932 = vmatprep.subr.bf16.mxu0 %v1686
        %2933 = vmatpush1.bf16.msra.mxu0 %v1685
        %2934 = vmatprep.subr.bf16.mxu0 %v1678
        %2935 = vmatpush1.bf16.msra.mxu0 %v1677
        %2936 = vmatprep.subr.bf16.mxu0 %v1670
        %2937 = vmatpush1.bf16.msra.mxu0 %v1669
        %2938 = vmatprep.subr.bf16.mxu0 %v1662
        %2939 = vmatpush1.bf16.msra.mxu0 %v1661
        %2940 = vmatprep.subr.bf16.mxu0 %v1654
        %2941 = vmatpush1.bf16.msra.mxu0 %v1653
        %2942 = vmatprep.subr.bf16.mxu0 %v1646
        %2943 = vmatpush1.bf16.msra.mxu0 %v1645
        %2944 = vmatprep.subr.bf16.mxu0 %v1766
        %2945 = vmatpush2.bf16.msra.mxu0 %v1765
        %2946 = vmatprep.subr.bf16.mxu0 %v1758
        %2947 = vmatpush2.bf16.msra.mxu0 %v1757
        %2948 = vmatprep.subr.bf16.mxu0 %v1750
        %2949 = vmatpush2.bf16.msra.mxu0 %v1749
        %2950 = vmatprep.subr.bf16.mxu0 %v1742
        %2951 = vmatpush2.bf16.msra.mxu0 %v1741
        %2952 = vmatprep.subr.bf16.mxu0 %v1734
        %2953 = vmatpush2.bf16.msra.mxu0 %v1733
        %2954 = vmatprep.subr.bf16.mxu0 %v1726
        %2955 = vmatpush2.bf16.msra.mxu0 %v1725
        %2956 = vmatprep.subr.bf16.mxu0 %v1718
        %2957 = vmatpush2.bf16.msra.mxu0 %v1717
        %2958 = vmatprep.subr.bf16.mxu0 %v1710
        %2959 = vmatpush2.bf16.msra.mxu0 %v1709
        %2960 = vmatprep.mubr.bf16.mxu0 %v476
        %2961 = vmatmul.mubr.bf16.gmra.mxu0 %v475
        %v2962 = vpop.f32.mrf.mxu0
        %v2963 = vadd.f32 %v2922, %v2962
        %v2964 = vpop.f32.mrf.mxu0
        %v2965 = vadd.f32 %v2924, %v2964
        %v2966 = vpop.f32.mrf.mxu0
        %v2967 = vpop.f32.mrf.mxu0
        %2968 = vdwg.mxu0
        %2969 = vmatprep.subr.bf16.mxu0 %v1830
        %2970 = vmatpush1.bf16.msra.mxu0 %v1829
        %2971 = vmatprep.subr.bf16.mxu0 %v1822
        %2972 = vmatpush1.bf16.msra.mxu0 %v1821
        %2973 = vmatprep.subr.bf16.mxu0 %v1814
        %2974 = vmatpush1.bf16.msra.mxu0 %v1813
        %2975 = vmatprep.subr.bf16.mxu0 %v1806
        %2976 = vmatpush1.bf16.msra.mxu0 %v1805
        %2977 = vmatprep.subr.bf16.mxu0 %v1798
        %2978 = vmatpush1.bf16.msra.mxu0 %v1797
        %2979 = vmatprep.subr.bf16.mxu0 %v1790
        %2980 = vmatpush1.bf16.msra.mxu0 %v1789
        %2981 = vmatprep.subr.bf16.mxu0 %v1782
        %2982 = vmatpush1.bf16.msra.mxu0 %v1781
        %2983 = vmatprep.subr.bf16.mxu0 %v1774
        %2984 = vmatpush1.bf16.msra.mxu0 %v1773
        %2985 = vmatprep.subr.bf16.mxu0 %v1894
        %2986 = vmatpush2.bf16.msra.mxu0 %v1893
        %2987 = vmatprep.subr.bf16.mxu0 %v1886
        %2988 = vmatpush2.bf16.msra.mxu0 %v1885
        %2989 = vmatprep.subr.bf16.mxu0 %v1878
        %2990 = vmatpush2.bf16.msra.mxu0 %v1877
        %2991 = vmatprep.subr.bf16.mxu0 %v1870
        %2992 = vmatpush2.bf16.msra.mxu0 %v1869
        %2993 = vmatprep.subr.bf16.mxu0 %v1862
        %2994 = vmatpush2.bf16.msra.mxu0 %v1861
        %2995 = vmatprep.subr.bf16.mxu0 %v1854
        %2996 = vmatpush2.bf16.msra.mxu0 %v1853
        %2997 = vmatprep.subr.bf16.mxu0 %v1846
        %2998 = vmatpush2.bf16.msra.mxu0 %v1845
        %2999 = vmatprep.subr.bf16.mxu0 %v1838
        %3000 = vmatpush2.bf16.msra.mxu0 %v1837
        %3001 = vmatprep.mubr.bf16.mxu0 %v478
        %3002 = vmatmul.mubr.bf16.gmra.mxu0 %v477
        %v3003 = vpop.f32.mrf.mxu0
        %v3004 = vadd.f32 %v2963, %v3003
        %v3005 = vpop.f32.mrf.mxu0
        %v3006 = vadd.f32 %v2965, %v3005
        %v3007 = vpop.f32.mrf.mxu0
        %v3008 = vpop.f32.mrf.mxu0
        %3009 = vdwg.mxu0
        %3010 = vmatprep.subr.bf16.mxu0 %v1958
        %3011 = vmatpush1.bf16.msra.mxu0 %v1957
        %3012 = vmatprep.subr.bf16.mxu0 %v1950
        %3013 = vmatpush1.bf16.msra.mxu0 %v1949
        %3014 = vmatprep.subr.bf16.mxu0 %v1942
        %3015 = vmatpush1.bf16.msra.mxu0 %v1941
        %3016 = vmatprep.subr.bf16.mxu0 %v1934
        %3017 = vmatpush1.bf16.msra.mxu0 %v1933
        %3018 = vmatprep.subr.bf16.mxu0 %v1926
        %3019 = vmatpush1.bf16.msra.mxu0 %v1925
        %3020 = vmatprep.subr.bf16.mxu0 %v1918
        %3021 = vmatpush1.bf16.msra.mxu0 %v1917
        %3022 = vmatprep.subr.bf16.mxu0 %v1910
        %3023 = vmatpush1.bf16.msra.mxu0 %v1909
        %3024 = vmatprep.subr.bf16.mxu0 %v1902
        %3025 = vmatpush1.bf16.msra.mxu0 %v1901
        %3026 = vmatprep.subr.bf16.mxu0 %v2022
        %3027 = vmatpush2.bf16.msra.mxu0 %v2021
        %3028 = vmatprep.subr.bf16.mxu0 %v2014
        %3029 = vmatpush2.bf16.msra.mxu0 %v2013
        %3030 = vmatprep.subr.bf16.mxu0 %v2006
        %3031 = vmatpush2.bf16.msra.mxu0 %v2005
        %3032 = vmatprep.subr.bf16.mxu0 %v1998
        %3033 = vmatpush2.bf16.msra.mxu0 %v1997
        %3034 = vmatprep.subr.bf16.mxu0 %v1990
        %3035 = vmatpush2.bf16.msra.mxu0 %v1989
        %3036 = vmatprep.subr.bf16.mxu0 %v1982
        %3037 = vmatpush2.bf16.msra.mxu0 %v1981
        %3038 = vmatprep.subr.bf16.mxu0 %v1974
        %3039 = vmatpush2.bf16.msra.mxu0 %v1973
        %3040 = vmatprep.subr.bf16.mxu0 %v1966
        %3041 = vmatpush2.bf16.msra.mxu0 %v1965
        %3042 = vmatprep.mubr.bf16.mxu0 %v480
        %3043 = vmatmul.mubr.bf16.gmra.mxu0 %v479
        %v3044 = vpop.f32.mrf.mxu0
        %v3045 = vadd.f32 %v3004, %v3044
        %v3046 = vpop.f32.mrf.mxu0
        %v3047 = vadd.f32 %v3006, %v3046
        %v3048 = vpop.f32.mrf.mxu0
        %v3049 = vpop.f32.mrf.mxu0
        %3050 = vdwg.mxu0
        %3051 = vmatprep.subr.bf16.mxu0 %v2086
        %3052 = vmatpush1.bf16.msra.mxu0 %v2085
        %3053 = vmatprep.subr.bf16.mxu0 %v2078
        %3054 = vmatpush1.bf16.msra.mxu0 %v2077
        %3055 = vmatprep.subr.bf16.mxu0 %v2070
        %3056 = vmatpush1.bf16.msra.mxu0 %v2069
        %3057 = vmatprep.subr.bf16.mxu0 %v2062
        %3058 = vmatpush1.bf16.msra.mxu0 %v2061
        %3059 = vmatprep.subr.bf16.mxu0 %v2054
        %3060 = vmatpush1.bf16.msra.mxu0 %v2053
        %3061 = vmatprep.subr.bf16.mxu0 %v2046
        %3062 = vmatpush1.bf16.msra.mxu0 %v2045
        %3063 = vmatprep.subr.bf16.mxu0 %v2038
        %3064 = vmatpush1.bf16.msra.mxu0 %v2037
        %3065 = vmatprep.subr.bf16.mxu0 %v2030
        %3066 = vmatpush1.bf16.msra.mxu0 %v2029
        %3067 = vmatprep.subr.bf16.mxu0 %v2150
        %3068 = vmatpush2.bf16.msra.mxu0 %v2149
        %3069 = vmatprep.subr.bf16.mxu0 %v2142
        %3070 = vmatpush2.bf16.msra.mxu0 %v2141
        %3071 = vmatprep.subr.bf16.mxu0 %v2134
        %3072 = vmatpush2.bf16.msra.mxu0 %v2133
        %3073 = vmatprep.subr.bf16.mxu0 %v2126
        %3074 = vmatpush2.bf16.msra.mxu0 %v2125
        %3075 = vmatprep.subr.bf16.mxu0 %v2118
        %3076 = vmatpush2.bf16.msra.mxu0 %v2117
        %3077 = vmatprep.subr.bf16.mxu0 %v2110
        %3078 = vmatpush2.bf16.msra.mxu0 %v2109
        %3079 = vmatprep.subr.bf16.mxu0 %v2102
        %3080 = vmatpush2.bf16.msra.mxu0 %v2101
        %3081 = vmatprep.subr.bf16.mxu0 %v2094
        %3082 = vmatpush2.bf16.msra.mxu0 %v2093
        %3083 = vmatprep.mubr.bf16.mxu0 %v482
        %3084 = vmatmul.mubr.bf16.gmra.mxu0 %v481
        %v3085 = vpop.f32.mrf.mxu0
        %v3086 = vadd.f32 %v3045, %v3085
        %v3087 = vpop.f32.mrf.mxu0
        %v3088 = vadd.f32 %v3047, %v3087
        %v3089 = vpop.f32.mrf.mxu0
        %v3090 = vpop.f32.mrf.mxu0
        %3091 = vdwg.mxu0
        %3092 = vmatprep.subr.bf16.mxu0 %v2214
        %3093 = vmatpush1.bf16.msra.mxu0 %v2213
        %3094 = vmatprep.subr.bf16.mxu0 %v2206
        %3095 = vmatpush1.bf16.msra.mxu0 %v2205
        %3096 = vmatprep.subr.bf16.mxu0 %v2198
        %3097 = vmatpush1.bf16.msra.mxu0 %v2197
        %3098 = vmatprep.subr.bf16.mxu0 %v2190
        %3099 = vmatpush1.bf16.msra.mxu0 %v2189
        %3100 = vmatprep.subr.bf16.mxu0 %v2182
        %3101 = vmatpush1.bf16.msra.mxu0 %v2181
        %3102 = vmatprep.subr.bf16.mxu0 %v2174
        %3103 = vmatpush1.bf16.msra.mxu0 %v2173
        %3104 = vmatprep.subr.bf16.mxu0 %v2166
        %3105 = vmatpush1.bf16.msra.mxu0 %v2165
        %3106 = vmatprep.subr.bf16.mxu0 %v2158
        %3107 = vmatpush1.bf16.msra.mxu0 %v2157
        %3108 = vmatprep.subr.bf16.mxu0 %v2278
        %3109 = vmatpush2.bf16.msra.mxu0 %v2277
        %3110 = vmatprep.subr.bf16.mxu0 %v2270
        %3111 = vmatpush2.bf16.msra.mxu0 %v2269
        %3112 = vmatprep.subr.bf16.mxu0 %v2262
        %3113 = vmatpush2.bf16.msra.mxu0 %v2261
        %3114 = vmatprep.subr.bf16.mxu0 %v2254
        %3115 = vmatpush2.bf16.msra.mxu0 %v2253
        %3116 = vmatprep.subr.bf16.mxu0 %v2246
        %3117 = vmatpush2.bf16.msra.mxu0 %v2245
        %3118 = vmatprep.subr.bf16.mxu0 %v2238
        %3119 = vmatpush2.bf16.msra.mxu0 %v2237
        %3120 = vmatprep.subr.bf16.mxu0 %v2230
        %3121 = vmatpush2.bf16.msra.mxu0 %v2229
        %3122 = vmatprep.subr.bf16.mxu0 %v2222
        %3123 = vmatpush2.bf16.msra.mxu0 %v2221
        %3124 = vmatprep.mubr.bf16.mxu0 %v484
        %3125 = vmatmul.mubr.bf16.gmra.mxu0 %v483
        %v3126 = vpop.f32.mrf.mxu0
        %v3127 = vadd.f32 %v3086, %v3126
        %v3128 = vpop.f32.mrf.mxu0
        %v3129 = vadd.f32 %v3088, %v3128
        %v3130 = vpop.f32.mrf.mxu0
        %v3131 = vpop.f32.mrf.mxu0
        %3132 = vdwg.mxu0
        %3133 = vmatprep.subr.bf16.mxu0 %v2342
        %3134 = vmatpush1.bf16.msra.mxu0 %v2341
        %3135 = vmatprep.subr.bf16.mxu0 %v2334
        %3136 = vmatpush1.bf16.msra.mxu0 %v2333
        %3137 = vmatprep.subr.bf16.mxu0 %v2326
        %3138 = vmatpush1.bf16.msra.mxu0 %v2325
        %3139 = vmatprep.subr.bf16.mxu0 %v2318
        %3140 = vmatpush1.bf16.msra.mxu0 %v2317
        %3141 = vmatprep.subr.bf16.mxu0 %v2310
        %3142 = vmatpush1.bf16.msra.mxu0 %v2309
        %3143 = vmatprep.subr.bf16.mxu0 %v2302
        %3144 = vmatpush1.bf16.msra.mxu0 %v2301
        %3145 = vmatprep.subr.bf16.mxu0 %v2294
        %3146 = vmatpush1.bf16.msra.mxu0 %v2293
        %3147 = vmatprep.subr.bf16.mxu0 %v2286
        %3148 = vmatpush1.bf16.msra.mxu0 %v2285
        %3149 = vmatprep.subr.bf16.mxu0 %v2406
        %3150 = vmatpush2.bf16.msra.mxu0 %v2405
        %3151 = vmatprep.subr.bf16.mxu0 %v2398
        %3152 = vmatpush2.bf16.msra.mxu0 %v2397
        %3153 = vmatprep.subr.bf16.mxu0 %v2390
        %3154 = vmatpush2.bf16.msra.mxu0 %v2389
        %3155 = vmatprep.subr.bf16.mxu0 %v2382
        %3156 = vmatpush2.bf16.msra.mxu0 %v2381
        %3157 = vmatprep.subr.bf16.mxu0 %v2374
        %3158 = vmatpush2.bf16.msra.mxu0 %v2373
        %3159 = vmatprep.subr.bf16.mxu0 %v2366
        %3160 = vmatpush2.bf16.msra.mxu0 %v2365
        %3161 = vmatprep.subr.bf16.mxu0 %v2358
        %3162 = vmatpush2.bf16.msra.mxu0 %v2357
        %3163 = vmatprep.subr.bf16.mxu0 %v2350
        %3164 = vmatpush2.bf16.msra.mxu0 %v2349
        %3165 = vmatprep.mubr.bf16.mxu0 %v486
        %3166 = vmatmul.mubr.bf16.gmra.mxu0 %v485
        %v3167 = vpop.f32.mrf.mxu0
        %v3168 = vadd.f32 %v3127, %v3167
        %v3169 = vpop.f32.mrf.mxu0
        %v3170 = vadd.f32 %v3129, %v3169
        %v3171 = vpop.f32.mrf.mxu0
        %v3172 = vpop.f32.mrf.mxu0
        %3173 = vdwg.mxu0
        %3174 = vmatprep.subr.bf16.mxu0 %v2470
        %3175 = vmatpush1.bf16.msra.mxu0 %v2469
        %3176 = vmatprep.subr.bf16.mxu0 %v2462
        %3177 = vmatpush1.bf16.msra.mxu0 %v2461
        %3178 = vmatprep.subr.bf16.mxu0 %v2454
        %3179 = vmatpush1.bf16.msra.mxu0 %v2453
        %3180 = vmatprep.subr.bf16.mxu0 %v2446
        %3181 = vmatpush1.bf16.msra.mxu0 %v2445
        %3182 = vmatprep.subr.bf16.mxu0 %v2438
        %3183 = vmatpush1.bf16.msra.mxu0 %v2437
        %3184 = vmatprep.subr.bf16.mxu0 %v2430
        %3185 = vmatpush1.bf16.msra.mxu0 %v2429
        %3186 = vmatprep.subr.bf16.mxu0 %v2422
        %3187 = vmatpush1.bf16.msra.mxu0 %v2421
        %3188 = vmatprep.subr.bf16.mxu0 %v2414
        %3189 = vmatpush1.bf16.msra.mxu0 %v2413
        %3190 = vmatprep.subr.bf16.mxu0 %v2534
        %3191 = vmatpush2.bf16.msra.mxu0 %v2533
        %3192 = vmatprep.subr.bf16.mxu0 %v2526
        %3193 = vmatpush2.bf16.msra.mxu0 %v2525
        %3194 = vmatprep.subr.bf16.mxu0 %v2518
        %3195 = vmatpush2.bf16.msra.mxu0 %v2517
        %3196 = vmatprep.subr.bf16.mxu0 %v2510
        %3197 = vmatpush2.bf16.msra.mxu0 %v2509
        %3198 = vmatprep.subr.bf16.mxu0 %v2502
        %3199 = vmatpush2.bf16.msra.mxu0 %v2501
        %3200 = vmatprep.subr.bf16.mxu0 %v2494
        %3201 = vmatpush2.bf16.msra.mxu0 %v2493
        %3202 = vmatprep.subr.bf16.mxu0 %v2486
        %3203 = vmatpush2.bf16.msra.mxu0 %v2485
        %3204 = vmatprep.subr.bf16.mxu0 %v2478
        %3205 = vmatpush2.bf16.msra.mxu0 %v2477
        %3206 = vmatprep.mubr.bf16.mxu0 %v488
        %3207 = vmatmul.mubr.bf16.gmra.mxu0 %v487
        %v3208 = vpop.f32.mrf.mxu0
        %v3209 = vadd.f32 %v3168, %v3208
        %v3210 = vpop.f32.mrf.mxu0
        %v3211 = vadd.f32 %v3170, %v3210
        %v3212 = vpop.f32.mrf.mxu0
        %v3213 = vpop.f32.mrf.mxu0
        %3214 = vdwg.mxu0
        %3215 = vmatprep.subr.bf16.mxu0 %v2598
        %3216 = vmatpush1.bf16.msra.mxu0 %v2597
        %3217 = vmatprep.subr.bf16.mxu0 %v2590
        %3218 = vmatpush1.bf16.msra.mxu0 %v2589
        %3219 = vmatprep.subr.bf16.mxu0 %v2582
        %3220 = vmatpush1.bf16.msra.mxu0 %v2581
        %3221 = vmatprep.subr.bf16.mxu0 %v2574
        %3222 = vmatpush1.bf16.msra.mxu0 %v2573
        %3223 = vmatprep.subr.bf16.mxu0 %v2566
        %3224 = vmatpush1.bf16.msra.mxu0 %v2565
        %3225 = vmatprep.subr.bf16.mxu0 %v2558
        %3226 = vmatpush1.bf16.msra.mxu0 %v2557
        %3227 = vmatprep.subr.bf16.mxu0 %v2550
        %3228 = vmatpush1.bf16.msra.mxu0 %v2549
        %3229 = vmatprep.subr.bf16.mxu0 %v2542
        %3230 = vmatpush1.bf16.msra.mxu0 %v2541
        %3231 = vmatprep.subr.bf16.mxu0 %v2662
        %3232 = vmatpush2.bf16.msra.mxu0 %v2661
        %3233 = vmatprep.subr.bf16.mxu0 %v2654
        %3234 = vmatpush2.bf16.msra.mxu0 %v2653
        %3235 = vmatprep.subr.bf16.mxu0 %v2646
        %3236 = vmatpush2.bf16.msra.mxu0 %v2645
        %3237 = vmatprep.subr.bf16.mxu0 %v2638
        %3238 = vmatpush2.bf16.msra.mxu0 %v2637
        %3239 = vmatprep.subr.bf16.mxu0 %v2630
        %3240 = vmatpush2.bf16.msra.mxu0 %v2629
        %3241 = vmatprep.subr.bf16.mxu0 %v2622
        %3242 = vmatpush2.bf16.msra.mxu0 %v2621
        %3243 = vmatprep.subr.bf16.mxu0 %v2614
        %3244 = vmatpush2.bf16.msra.mxu0 %v2613
        %3245 = vmatprep.subr.bf16.mxu0 %v2606
        %3246 = vmatpush2.bf16.msra.mxu0 %v2605
        %3247 = vmatprep.mubr.bf16.mxu0 %v490
        %3248 = vmatmul.mubr.bf16.gmra.mxu0 %v489
        %v3249 = vpop.f32.mrf.mxu0
        %v3250 = vadd.f32 %v3209, %v3249
        %v3251 = vpop.f32.mrf.mxu0
        %v3252 = vadd.f32 %v3211, %v3251
        %v3253 = vpop.f32.mrf.mxu0
        %v3254 = vpop.f32.mrf.mxu0
        %3255 = vdwg.mxu0
        %3256 = vmatprep.subr.bf16.mxu0 %v2726
        %3257 = vmatpush1.bf16.msra.mxu0 %v2725
        %3258 = vmatprep.subr.bf16.mxu0 %v2718
        %3259 = vmatpush1.bf16.msra.mxu0 %v2717
        %3260 = vmatprep.subr.bf16.mxu0 %v2710
        %3261 = vmatpush1.bf16.msra.mxu0 %v2709
        %3262 = vmatprep.subr.bf16.mxu0 %v2702
        %3263 = vmatpush1.bf16.msra.mxu0 %v2701
        %3264 = vmatprep.subr.bf16.mxu0 %v2694
        %3265 = vmatpush1.bf16.msra.mxu0 %v2693
        %3266 = vmatprep.subr.bf16.mxu0 %v2686
        %3267 = vmatpush1.bf16.msra.mxu0 %v2685
        %3268 = vmatprep.subr.bf16.mxu0 %v2678
        %3269 = vmatpush1.bf16.msra.mxu0 %v2677
        %3270 = vmatprep.subr.bf16.mxu0 %v2670
        %3271 = vmatpush1.bf16.msra.mxu0 %v2669
        %3272 = vmatprep.subr.bf16.mxu0 %v2790
        %3273 = vmatpush2.bf16.msra.mxu0 %v2789
        %3274 = vmatprep.subr.bf16.mxu0 %v2782
        %3275 = vmatpush2.bf16.msra.mxu0 %v2781
        %3276 = vmatprep.subr.bf16.mxu0 %v2774
        %3277 = vmatpush2.bf16.msra.mxu0 %v2773
        %3278 = vmatprep.subr.bf16.mxu0 %v2766
        %3279 = vmatpush2.bf16.msra.mxu0 %v2765
        %3280 = vmatprep.subr.bf16.mxu0 %v2758
        %3281 = vmatpush2.bf16.msra.mxu0 %v2757
        %3282 = vmatprep.subr.bf16.mxu0 %v2750
        %3283 = vmatpush2.bf16.msra.mxu0 %v2749
        %3284 = vmatprep.subr.bf16.mxu0 %v2742
        %3285 = vmatpush2.bf16.msra.mxu0 %v2741
        %3286 = vmatprep.subr.bf16.mxu0 %v2734
        %3287 = vmatpush2.bf16.msra.mxu0 %v2733
        %3288 = vmatprep.mubr.bf16.mxu0 %v492
        %3289 = vmatmul.mubr.bf16.gmra.mxu0 %v491
        %v3290 = vpop.f32.mrf.mxu0
        %v3291 = vadd.f32 %v3250, %v3290
        %v3292 = vpop.f32.mrf.mxu0
        %v3293 = vadd.f32 %v3252, %v3292
        %v3294 = vpop.f32.mrf.mxu0
        %v3295 = vpop.f32.mrf.mxu0
        %3296 = vdwg.mxu0
        %3297 = vmatprep.subr.bf16.mxu0 %v1320
        %3298 = vmatpush1.bf16.msra.mxu0 %v1319
        %3299 = vmatprep.subr.bf16.mxu0 %v1312
        %3300 = vmatpush1.bf16.msra.mxu0 %v1311
        %3301 = vmatprep.subr.bf16.mxu0 %v1304
        %3302 = vmatpush1.bf16.msra.mxu0 %v1303
        %3303 = vmatprep.subr.bf16.mxu0 %v1296
        %3304 = vmatpush1.bf16.msra.mxu0 %v1295
        %3305 = vmatprep.subr.bf16.mxu0 %v1288
        %3306 = vmatpush1.bf16.msra.mxu0 %v1287
        %3307 = vmatprep.subr.bf16.mxu0 %v1280
        %3308 = vmatpush1.bf16.msra.mxu0 %v1279
        %3309 = vmatprep.subr.bf16.mxu0 %v1272
        %3310 = vmatpush1.bf16.msra.mxu0 %v1271
        %3311 = vmatprep.subr.bf16.mxu0 %v1264
        %3312 = vmatpush1.bf16.msra.mxu0 %v1263
        %3313 = vmatprep.subr.bf16.mxu0 %v1384
        %3314 = vmatpush2.bf16.msra.mxu0 %v1383
        %3315 = vmatprep.subr.bf16.mxu0 %v1376
        %3316 = vmatpush2.bf16.msra.mxu0 %v1375
        %3317 = vmatprep.subr.bf16.mxu0 %v1368
        %3318 = vmatpush2.bf16.msra.mxu0 %v1367
        %3319 = vmatprep.subr.bf16.mxu0 %v1360
        %3320 = vmatpush2.bf16.msra.mxu0 %v1359
        %3321 = vmatprep.subr.bf16.mxu0 %v1352
        %3322 = vmatpush2.bf16.msra.mxu0 %v1351
        %3323 = vmatprep.subr.bf16.mxu0 %v1344
        %3324 = vmatpush2.bf16.msra.mxu0 %v1343
        %3325 = vmatprep.subr.bf16.mxu0 %v1336
        %3326 = vmatpush2.bf16.msra.mxu0 %v1335
        %3327 = vmatprep.subr.bf16.mxu0 %v1328
        %3328 = vmatpush2.bf16.msra.mxu0 %v1327
        %3329 = vmatprep.mubr.bf16.mxu0 %v470
        %3330 = vmatmul.mubr.bf16.gmra.mxu0 %v469
        %v3331 = vpop.f32.mrf.mxu0
        %v3332 = vadd.f32 0.0, %v3331
        %v3333 = vpop.f32.mrf.mxu0
        %v3334 = vadd.f32 0.0, %v3333
        %v3335 = vpop.f32.mrf.mxu0
        %v3336 = vpop.f32.mrf.mxu0
        %3337 = vdwg.mxu0
        %3338 = vmatprep.subr.bf16.mxu0 %v1448
        %3339 = vmatpush1.bf16.msra.mxu0 %v1447
        %3340 = vmatprep.subr.bf16.mxu0 %v1440
        %3341 = vmatpush1.bf16.msra.mxu0 %v1439
        %3342 = vmatprep.subr.bf16.mxu0 %v1432
        %3343 = vmatpush1.bf16.msra.mxu0 %v1431
        %3344 = vmatprep.subr.bf16.mxu0 %v1424
        %3345 = vmatpush1.bf16.msra.mxu0 %v1423
        %3346 = vmatprep.subr.bf16.mxu0 %v1416
        %3347 = vmatpush1.bf16.msra.mxu0 %v1415
        %3348 = vmatprep.subr.bf16.mxu0 %v1408
        %3349 = vmatpush1.bf16.msra.mxu0 %v1407
        %3350 = vmatprep.subr.bf16.mxu0 %v1400
        %3351 = vmatpush1.bf16.msra.mxu0 %v1399
        %3352 = vmatprep.subr.bf16.mxu0 %v1392
        %3353 = vmatpush1.bf16.msra.mxu0 %v1391
        %3354 = vmatprep.subr.bf16.mxu0 %v1512
        %3355 = vmatpush2.bf16.msra.mxu0 %v1511
        %3356 = vmatprep.subr.bf16.mxu0 %v1504
        %3357 = vmatpush2.bf16.msra.mxu0 %v1503
        %3358 = vmatprep.subr.bf16.mxu0 %v1496
        %3359 = vmatpush2.bf16.msra.mxu0 %v1495
        %3360 = vmatprep.subr.bf16.mxu0 %v1488
        %3361 = vmatpush2.bf16.msra.mxu0 %v1487
        %3362 = vmatprep.subr.bf16.mxu0 %v1480
        %3363 = vmatpush2.bf16.msra.mxu0 %v1479
        %3364 = vmatprep.subr.bf16.mxu0 %v1472
        %3365 = vmatpush2.bf16.msra.mxu0 %v1471
        %3366 = vmatprep.subr.bf16.mxu0 %v1464
        %3367 = vmatpush2.bf16.msra.mxu0 %v1463
        %3368 = vmatprep.subr.bf16.mxu0 %v1456
        %3369 = vmatpush2.bf16.msra.mxu0 %v1455
        %3370 = vmatprep.mubr.bf16.mxu0 %v472
        %3371 = vmatmul.mubr.bf16.gmra.mxu0 %v471
        %v3372 = vpop.f32.mrf.mxu0
        %v3373 = vadd.f32 %v3332, %v3372
        %v3374 = vpop.f32.mrf.mxu0
        %v3375 = vadd.f32 %v3334, %v3374
        %v3376 = vpop.f32.mrf.mxu0
        %v3377 = vpop.f32.mrf.mxu0
        %3378 = vdwg.mxu0
        %3379 = vmatprep.subr.bf16.mxu0 %v1576
        %3380 = vmatpush1.bf16.msra.mxu0 %v1575
        %3381 = vmatprep.subr.bf16.mxu0 %v1568
        %3382 = vmatpush1.bf16.msra.mxu0 %v1567
        %3383 = vmatprep.subr.bf16.mxu0 %v1560
        %3384 = vmatpush1.bf16.msra.mxu0 %v1559
        %3385 = vmatprep.subr.bf16.mxu0 %v1552
        %3386 = vmatpush1.bf16.msra.mxu0 %v1551
        %3387 = vmatprep.subr.bf16.mxu0 %v1544
        %3388 = vmatpush1.bf16.msra.mxu0 %v1543
        %3389 = vmatprep.subr.bf16.mxu0 %v1536
        %3390 = vmatpush1.bf16.msra.mxu0 %v1535
        %3391 = vmatprep.subr.bf16.mxu0 %v1528
        %3392 = vmatpush1.bf16.msra.mxu0 %v1527
        %3393 = vmatprep.subr.bf16.mxu0 %v1520
        %3394 = vmatpush1.bf16.msra.mxu0 %v1519
        %3395 = vmatprep.subr.bf16.mxu0 %v1640
        %3396 = vmatpush2.bf16.msra.mxu0 %v1639
        %3397 = vmatprep.subr.bf16.mxu0 %v1632
        %3398 = vmatpush2.bf16.msra.mxu0 %v1631
        %3399 = vmatprep.subr.bf16.mxu0 %v1624
        %3400 = vmatpush2.bf16.msra.mxu0 %v1623
        %3401 = vmatprep.subr.bf16.mxu0 %v1616
        %3402 = vmatpush2.bf16.msra.mxu0 %v1615
        %3403 = vmatprep.subr.bf16.mxu0 %v1608
        %3404 = vmatpush2.bf16.msra.mxu0 %v1607
        %3405 = vmatprep.subr.bf16.mxu0 %v1600
        %3406 = vmatpush2.bf16.msra.mxu0 %v1599
        %3407 = vmatprep.subr.bf16.mxu0 %v1592
        %3408 = vmatpush2.bf16.msra.mxu0 %v1591
        %3409 = vmatprep.subr.bf16.mxu0 %v1584
        %3410 = vmatpush2.bf16.msra.mxu0 %v1583
        %3411 = vmatprep.mubr.bf16.mxu0 %v474
        %3412 = vmatmul.mubr.bf16.gmra.mxu0 %v473
        %v3413 = vpop.f32.mrf.mxu0
        %v3414 = vadd.f32 %v3373, %v3413
        %v3415 = vpop.f32.mrf.mxu0
        %v3416 = vadd.f32 %v3375, %v3415
        %v3417 = vpop.f32.mrf.mxu0
        %v3418 = vpop.f32.mrf.mxu0
        %3419 = vdwg.mxu0
        %3420 = vmatprep.subr.bf16.mxu0 %v1704
        %3421 = vmatpush1.bf16.msra.mxu0 %v1703
        %3422 = vmatprep.subr.bf16.mxu0 %v1696
        %3423 = vmatpush1.bf16.msra.mxu0 %v1695
        %3424 = vmatprep.subr.bf16.mxu0 %v1688
        %3425 = vmatpush1.bf16.msra.mxu0 %v1687
        %3426 = vmatprep.subr.bf16.mxu0 %v1680
        %3427 = vmatpush1.bf16.msra.mxu0 %v1679
        %3428 = vmatprep.subr.bf16.mxu0 %v1672
        %3429 = vmatpush1.bf16.msra.mxu0 %v1671
        %3430 = vmatprep.subr.bf16.mxu0 %v1664
        %3431 = vmatpush1.bf16.msra.mxu0 %v1663
        %3432 = vmatprep.subr.bf16.mxu0 %v1656
        %3433 = vmatpush1.bf16.msra.mxu0 %v1655
        %3434 = vmatprep.subr.bf16.mxu0 %v1648
        %3435 = vmatpush1.bf16.msra.mxu0 %v1647
        %3436 = vmatprep.subr.bf16.mxu0 %v1768
        %3437 = vmatpush2.bf16.msra.mxu0 %v1767
        %3438 = vmatprep.subr.bf16.mxu0 %v1760
        %3439 = vmatpush2.bf16.msra.mxu0 %v1759
        %3440 = vmatprep.subr.bf16.mxu0 %v1752
        %3441 = vmatpush2.bf16.msra.mxu0 %v1751
        %3442 = vmatprep.subr.bf16.mxu0 %v1744
        %3443 = vmatpush2.bf16.msra.mxu0 %v1743
        %3444 = vmatprep.subr.bf16.mxu0 %v1736
        %3445 = vmatpush2.bf16.msra.mxu0 %v1735
        %3446 = vmatprep.subr.bf16.mxu0 %v1728
        %3447 = vmatpush2.bf16.msra.mxu0 %v1727
        %3448 = vmatprep.subr.bf16.mxu0 %v1720
        %3449 = vmatpush2.bf16.msra.mxu0 %v1719
        %3450 = vmatprep.subr.bf16.mxu0 %v1712
        %3451 = vmatpush2.bf16.msra.mxu0 %v1711
        %3452 = vmatprep.mubr.bf16.mxu0 %v476
        %3453 = vmatmul.mubr.bf16.gmra.mxu0 %v475
        %v3454 = vpop.f32.mrf.mxu0
        %v3455 = vadd.f32 %v3414, %v3454
        %v3456 = vpop.f32.mrf.mxu0
        %v3457 = vadd.f32 %v3416, %v3456
        %v3458 = vpop.f32.mrf.mxu0
        %v3459 = vpop.f32.mrf.mxu0
        %3460 = vdwg.mxu0
        %3461 = vmatprep.subr.bf16.mxu0 %v1832
        %3462 = vmatpush1.bf16.msra.mxu0 %v1831
        %3463 = vmatprep.subr.bf16.mxu0 %v1824
        %3464 = vmatpush1.bf16.msra.mxu0 %v1823
        %3465 = vmatprep.subr.bf16.mxu0 %v1816
        %3466 = vmatpush1.bf16.msra.mxu0 %v1815
        %3467 = vmatprep.subr.bf16.mxu0 %v1808
        %3468 = vmatpush1.bf16.msra.mxu0 %v1807
        %3469 = vmatprep.subr.bf16.mxu0 %v1800
        %3470 = vmatpush1.bf16.msra.mxu0 %v1799
        %3471 = vmatprep.subr.bf16.mxu0 %v1792
        %3472 = vmatpush1.bf16.msra.mxu0 %v1791
        %3473 = vmatprep.subr.bf16.mxu0 %v1784
        %3474 = vmatpush1.bf16.msra.mxu0 %v1783
        %3475 = vmatprep.subr.bf16.mxu0 %v1776
        %3476 = vmatpush1.bf16.msra.mxu0 %v1775
        %3477 = vmatprep.subr.bf16.mxu0 %v1896
        %3478 = vmatpush2.bf16.msra.mxu0 %v1895
        %3479 = vmatprep.subr.bf16.mxu0 %v1888
        %3480 = vmatpush2.bf16.msra.mxu0 %v1887
        %3481 = vmatprep.subr.bf16.mxu0 %v1880
        %3482 = vmatpush2.bf16.msra.mxu0 %v1879
        %3483 = vmatprep.subr.bf16.mxu0 %v1872
        %3484 = vmatpush2.bf16.msra.mxu0 %v1871
        %3485 = vmatprep.subr.bf16.mxu0 %v1864
        %3486 = vmatpush2.bf16.msra.mxu0 %v1863
        %3487 = vmatprep.subr.bf16.mxu0 %v1856
        %3488 = vmatpush2.bf16.msra.mxu0 %v1855
        %3489 = vmatprep.subr.bf16.mxu0 %v1848
        %3490 = vmatpush2.bf16.msra.mxu0 %v1847
        %3491 = vmatprep.subr.bf16.mxu0 %v1840
        %3492 = vmatpush2.bf16.msra.mxu0 %v1839
        %3493 = vmatprep.mubr.bf16.mxu0 %v478
        %3494 = vmatmul.mubr.bf16.gmra.mxu0 %v477
        %v3495 = vpop.f32.mrf.mxu0
        %v3496 = vadd.f32 %v3455, %v3495
        %v3497 = vpop.f32.mrf.mxu0
        %v3498 = vadd.f32 %v3457, %v3497
        %v3499 = vpop.f32.mrf.mxu0
        %v3500 = vpop.f32.mrf.mxu0
        %3501 = vdwg.mxu0
        %3502 = vmatprep.subr.bf16.mxu0 %v1960
        %3503 = vmatpush1.bf16.msra.mxu0 %v1959
        %3504 = vmatprep.subr.bf16.mxu0 %v1952
        %3505 = vmatpush1.bf16.msra.mxu0 %v1951
        %3506 = vmatprep.subr.bf16.mxu0 %v1944
        %3507 = vmatpush1.bf16.msra.mxu0 %v1943
        %3508 = vmatprep.subr.bf16.mxu0 %v1936
        %3509 = vmatpush1.bf16.msra.mxu0 %v1935
        %3510 = vmatprep.subr.bf16.mxu0 %v1928
        %3511 = vmatpush1.bf16.msra.mxu0 %v1927
        %3512 = vmatprep.subr.bf16.mxu0 %v1920
        %3513 = vmatpush1.bf16.msra.mxu0 %v1919
        %3514 = vmatprep.subr.bf16.mxu0 %v1912
        %3515 = vmatpush1.bf16.msra.mxu0 %v1911
        %3516 = vmatprep.subr.bf16.mxu0 %v1904
        %3517 = vmatpush1.bf16.msra.mxu0 %v1903
        %3518 = vmatprep.subr.bf16.mxu0 %v2024
        %3519 = vmatpush2.bf16.msra.mxu0 %v2023
        %3520 = vmatprep.subr.bf16.mxu0 %v2016
        %3521 = vmatpush2.bf16.msra.mxu0 %v2015
        %3522 = vmatprep.subr.bf16.mxu0 %v2008
        %3523 = vmatpush2.bf16.msra.mxu0 %v2007
        %3524 = vmatprep.subr.bf16.mxu0 %v2000
        %3525 = vmatpush2.bf16.msra.mxu0 %v1999
        %3526 = vmatprep.subr.bf16.mxu0 %v1992
        %3527 = vmatpush2.bf16.msra.mxu0 %v1991
        %3528 = vmatprep.subr.bf16.mxu0 %v1984
        %3529 = vmatpush2.bf16.msra.mxu0 %v1983
        %3530 = vmatprep.subr.bf16.mxu0 %v1976
        %3531 = vmatpush2.bf16.msra.mxu0 %v1975
        %3532 = vmatprep.subr.bf16.mxu0 %v1968
        %3533 = vmatpush2.bf16.msra.mxu0 %v1967
        %3534 = vmatprep.mubr.bf16.mxu0 %v480
        %3535 = vmatmul.mubr.bf16.gmra.mxu0 %v479
        %v3536 = vpop.f32.mrf.mxu0
        %v3537 = vadd.f32 %v3496, %v3536
        %v3538 = vpop.f32.mrf.mxu0
        %v3539 = vadd.f32 %v3498, %v3538
        %v3540 = vpop.f32.mrf.mxu0
        %v3541 = vpop.f32.mrf.mxu0
        %3542 = vdwg.mxu0
        %3543 = vmatprep.subr.bf16.mxu0 %v2088
        %3544 = vmatpush1.bf16.msra.mxu0 %v2087
        %3545 = vmatprep.subr.bf16.mxu0 %v2080
        %3546 = vmatpush1.bf16.msra.mxu0 %v2079
        %3547 = vmatprep.subr.bf16.mxu0 %v2072
        %3548 = vmatpush1.bf16.msra.mxu0 %v2071
        %3549 = vmatprep.subr.bf16.mxu0 %v2064
        %3550 = vmatpush1.bf16.msra.mxu0 %v2063
        %3551 = vmatprep.subr.bf16.mxu0 %v2056
        %3552 = vmatpush1.bf16.msra.mxu0 %v2055
        %3553 = vmatprep.subr.bf16.mxu0 %v2048
        %3554 = vmatpush1.bf16.msra.mxu0 %v2047
        %3555 = vmatprep.subr.bf16.mxu0 %v2040
        %3556 = vmatpush1.bf16.msra.mxu0 %v2039
        %3557 = vmatprep.subr.bf16.mxu0 %v2032
        %3558 = vmatpush1.bf16.msra.mxu0 %v2031
        %3559 = vmatprep.subr.bf16.mxu0 %v2152
        %3560 = vmatpush2.bf16.msra.mxu0 %v2151
        %3561 = vmatprep.subr.bf16.mxu0 %v2144
        %3562 = vmatpush2.bf16.msra.mxu0 %v2143
        %3563 = vmatprep.subr.bf16.mxu0 %v2136
        %3564 = vmatpush2.bf16.msra.mxu0 %v2135
        %3565 = vmatprep.subr.bf16.mxu0 %v2128
        %3566 = vmatpush2.bf16.msra.mxu0 %v2127
        %3567 = vmatprep.subr.bf16.mxu0 %v2120
        %3568 = vmatpush2.bf16.msra.mxu0 %v2119
        %3569 = vmatprep.subr.bf16.mxu0 %v2112
        %3570 = vmatpush2.bf16.msra.mxu0 %v2111
        %3571 = vmatprep.subr.bf16.mxu0 %v2104
        %3572 = vmatpush2.bf16.msra.mxu0 %v2103
        %3573 = vmatprep.subr.bf16.mxu0 %v2096
        %3574 = vmatpush2.bf16.msra.mxu0 %v2095
        %3575 = vmatprep.mubr.bf16.mxu0 %v482
        %3576 = vmatmul.mubr.bf16.gmra.mxu0 %v481
        %v3577 = vpop.f32.mrf.mxu0
        %v3578 = vadd.f32 %v3537, %v3577
        %v3579 = vpop.f32.mrf.mxu0
        %v3580 = vadd.f32 %v3539, %v3579
        %v3581 = vpop.f32.mrf.mxu0
        %v3582 = vpop.f32.mrf.mxu0
        %3583 = vdwg.mxu0
        %3584 = vmatprep.subr.bf16.mxu0 %v2216
        %3585 = vmatpush1.bf16.msra.mxu0 %v2215
        %3586 = vmatprep.subr.bf16.mxu0 %v2208
        %3587 = vmatpush1.bf16.msra.mxu0 %v2207
        %3588 = vmatprep.subr.bf16.mxu0 %v2200
        %3589 = vmatpush1.bf16.msra.mxu0 %v2199
        %3590 = vmatprep.subr.bf16.mxu0 %v2192
        %3591 = vmatpush1.bf16.msra.mxu0 %v2191
        %3592 = vmatprep.subr.bf16.mxu0 %v2184
        %3593 = vmatpush1.bf16.msra.mxu0 %v2183
        %3594 = vmatprep.subr.bf16.mxu0 %v2176
        %3595 = vmatpush1.bf16.msra.mxu0 %v2175
        %3596 = vmatprep.subr.bf16.mxu0 %v2168
        %3597 = vmatpush1.bf16.msra.mxu0 %v2167
        %3598 = vmatprep.subr.bf16.mxu0 %v2160
        %3599 = vmatpush1.bf16.msra.mxu0 %v2159
        %3600 = vmatprep.subr.bf16.mxu0 %v2280
        %3601 = vmatpush2.bf16.msra.mxu0 %v2279
        %3602 = vmatprep.subr.bf16.mxu0 %v2272
        %3603 = vmatpush2.bf16.msra.mxu0 %v2271
        %3604 = vmatprep.subr.bf16.mxu0 %v2264
        %3605 = vmatpush2.bf16.msra.mxu0 %v2263
        %3606 = vmatprep.subr.bf16.mxu0 %v2256
        %3607 = vmatpush2.bf16.msra.mxu0 %v2255
        %3608 = vmatprep.subr.bf16.mxu0 %v2248
        %3609 = vmatpush2.bf16.msra.mxu0 %v2247
        %3610 = vmatprep.subr.bf16.mxu0 %v2240
        %3611 = vmatpush2.bf16.msra.mxu0 %v2239
        %3612 = vmatprep.subr.bf16.mxu0 %v2232
        %3613 = vmatpush2.bf16.msra.mxu0 %v2231
        %3614 = vmatprep.subr.bf16.mxu0 %v2224
        %3615 = vmatpush2.bf16.msra.mxu0 %v2223
        %3616 = vmatprep.mubr.bf16.mxu0 %v484
        %3617 = vmatmul.mubr.bf16.gmra.mxu0 %v483
        %v3618 = vpop.f32.mrf.mxu0
        %v3619 = vadd.f32 %v3578, %v3618
        %v3620 = vpop.f32.mrf.mxu0
        %v3621 = vadd.f32 %v3580, %v3620
        %v3622 = vpop.f32.mrf.mxu0
        %v3623 = vpop.f32.mrf.mxu0
        %3624 = vdwg.mxu0
        %3625 = vmatprep.subr.bf16.mxu0 %v2344
        %3626 = vmatpush1.bf16.msra.mxu0 %v2343
        %3627 = vmatprep.subr.bf16.mxu0 %v2336
        %3628 = vmatpush1.bf16.msra.mxu0 %v2335
        %3629 = vmatprep.subr.bf16.mxu0 %v2328
        %3630 = vmatpush1.bf16.msra.mxu0 %v2327
        %3631 = vmatprep.subr.bf16.mxu0 %v2320
        %3632 = vmatpush1.bf16.msra.mxu0 %v2319
        %3633 = vmatprep.subr.bf16.mxu0 %v2312
        %3634 = vmatpush1.bf16.msra.mxu0 %v2311
        %3635 = vmatprep.subr.bf16.mxu0 %v2304
        %3636 = vmatpush1.bf16.msra.mxu0 %v2303
        %3637 = vmatprep.subr.bf16.mxu0 %v2296
        %3638 = vmatpush1.bf16.msra.mxu0 %v2295
        %3639 = vmatprep.subr.bf16.mxu0 %v2288
        %3640 = vmatpush1.bf16.msra.mxu0 %v2287
        %3641 = vmatprep.subr.bf16.mxu0 %v2408
        %3642 = vmatpush2.bf16.msra.mxu0 %v2407
        %3643 = vmatprep.subr.bf16.mxu0 %v2400
        %3644 = vmatpush2.bf16.msra.mxu0 %v2399
        %3645 = vmatprep.subr.bf16.mxu0 %v2392
        %3646 = vmatpush2.bf16.msra.mxu0 %v2391
        %3647 = vmatprep.subr.bf16.mxu0 %v2384
        %3648 = vmatpush2.bf16.msra.mxu0 %v2383
        %3649 = vmatprep.subr.bf16.mxu0 %v2376
        %3650 = vmatpush2.bf16.msra.mxu0 %v2375
        %3651 = vmatprep.subr.bf16.mxu0 %v2368
        %3652 = vmatpush2.bf16.msra.mxu0 %v2367
        %3653 = vmatprep.subr.bf16.mxu0 %v2360
        %3654 = vmatpush2.bf16.msra.mxu0 %v2359
        %3655 = vmatprep.subr.bf16.mxu0 %v2352
        %3656 = vmatpush2.bf16.msra.mxu0 %v2351
        %3657 = vmatprep.mubr.bf16.mxu0 %v486
        %3658 = vmatmul.mubr.bf16.gmra.mxu0 %v485
        %v3659 = vpop.f32.mrf.mxu0
        %v3660 = vadd.f32 %v3619, %v3659
        %v3661 = vpop.f32.mrf.mxu0
        %v3662 = vadd.f32 %v3621, %v3661
        %v3663 = vpop.f32.mrf.mxu0
        %v3664 = vpop.f32.mrf.mxu0
        %3665 = vdwg.mxu0
        %3666 = vmatprep.subr.bf16.mxu0 %v2472
        %3667 = vmatpush1.bf16.msra.mxu0 %v2471
        %3668 = vmatprep.subr.bf16.mxu0 %v2464
        %3669 = vmatpush1.bf16.msra.mxu0 %v2463
        %3670 = vmatprep.subr.bf16.mxu0 %v2456
        %3671 = vmatpush1.bf16.msra.mxu0 %v2455
        %3672 = vmatprep.subr.bf16.mxu0 %v2448
        %3673 = vmatpush1.bf16.msra.mxu0 %v2447
        %3674 = vmatprep.subr.bf16.mxu0 %v2440
        %3675 = vmatpush1.bf16.msra.mxu0 %v2439
        %3676 = vmatprep.subr.bf16.mxu0 %v2432
        %3677 = vmatpush1.bf16.msra.mxu0 %v2431
        %3678 = vmatprep.subr.bf16.mxu0 %v2424
        %3679 = vmatpush1.bf16.msra.mxu0 %v2423
        %3680 = vmatprep.subr.bf16.mxu0 %v2416
        %3681 = vmatpush1.bf16.msra.mxu0 %v2415
        %3682 = vmatprep.subr.bf16.mxu0 %v2536
        %3683 = vmatpush2.bf16.msra.mxu0 %v2535
        %3684 = vmatprep.subr.bf16.mxu0 %v2528
        %3685 = vmatpush2.bf16.msra.mxu0 %v2527
        %3686 = vmatprep.subr.bf16.mxu0 %v2520
        %3687 = vmatpush2.bf16.msra.mxu0 %v2519
        %3688 = vmatprep.subr.bf16.mxu0 %v2512
        %3689 = vmatpush2.bf16.msra.mxu0 %v2511
        %3690 = vmatprep.subr.bf16.mxu0 %v2504
        %3691 = vmatpush2.bf16.msra.mxu0 %v2503
        %3692 = vmatprep.subr.bf16.mxu0 %v2496
        %3693 = vmatpush2.bf16.msra.mxu0 %v2495
        %3694 = vmatprep.subr.bf16.mxu0 %v2488
        %3695 = vmatpush2.bf16.msra.mxu0 %v2487
        %3696 = vmatprep.subr.bf16.mxu0 %v2480
        %3697 = vmatpush2.bf16.msra.mxu0 %v2479
        %3698 = vmatprep.mubr.bf16.mxu0 %v488
        %3699 = vmatmul.mubr.bf16.gmra.mxu0 %v487
        %v3700 = vpop.f32.mrf.mxu0
        %v3701 = vadd.f32 %v3660, %v3700
        %v3702 = vpop.f32.mrf.mxu0
        %v3703 = vadd.f32 %v3662, %v3702
        %v3704 = vpop.f32.mrf.mxu0
        %v3705 = vpop.f32.mrf.mxu0
        %3706 = vdwg.mxu0
        %3707 = vmatprep.subr.bf16.mxu0 %v2600
        %3708 = vmatpush1.bf16.msra.mxu0 %v2599
        %3709 = vmatprep.subr.bf16.mxu0 %v2592
        %3710 = vmatpush1.bf16.msra.mxu0 %v2591
        %3711 = vmatprep.subr.bf16.mxu0 %v2584
        %3712 = vmatpush1.bf16.msra.mxu0 %v2583
        %3713 = vmatprep.subr.bf16.mxu0 %v2576
        %3714 = vmatpush1.bf16.msra.mxu0 %v2575
        %3715 = vmatprep.subr.bf16.mxu0 %v2568
        %3716 = vmatpush1.bf16.msra.mxu0 %v2567
        %3717 = vmatprep.subr.bf16.mxu0 %v2560
        %3718 = vmatpush1.bf16.msra.mxu0 %v2559
        %3719 = vmatprep.subr.bf16.mxu0 %v2552
        %3720 = vmatpush1.bf16.msra.mxu0 %v2551
        %3721 = vmatprep.subr.bf16.mxu0 %v2544
        %3722 = vmatpush1.bf16.msra.mxu0 %v2543
        %3723 = vmatprep.subr.bf16.mxu0 %v2664
        %3724 = vmatpush2.bf16.msra.mxu0 %v2663
        %3725 = vmatprep.subr.bf16.mxu0 %v2656
        %3726 = vmatpush2.bf16.msra.mxu0 %v2655
        %3727 = vmatprep.subr.bf16.mxu0 %v2648
        %3728 = vmatpush2.bf16.msra.mxu0 %v2647
        %3729 = vmatprep.subr.bf16.mxu0 %v2640
        %3730 = vmatpush2.bf16.msra.mxu0 %v2639
        %3731 = vmatprep.subr.bf16.mxu0 %v2632
        %3732 = vmatpush2.bf16.msra.mxu0 %v2631
        %3733 = vmatprep.subr.bf16.mxu0 %v2624
        %3734 = vmatpush2.bf16.msra.mxu0 %v2623
        %3735 = vmatprep.subr.bf16.mxu0 %v2616
        %3736 = vmatpush2.bf16.msra.mxu0 %v2615
        %3737 = vmatprep.subr.bf16.mxu0 %v2608
        %3738 = vmatpush2.bf16.msra.mxu0 %v2607
        %3739 = vmatprep.mubr.bf16.mxu0 %v490
        %3740 = vmatmul.mubr.bf16.gmra.mxu0 %v489
        %v3741 = vpop.f32.mrf.mxu0
        %v3742 = vadd.f32 %v3701, %v3741
        %v3743 = vpop.f32.mrf.mxu0
        %v3744 = vadd.f32 %v3703, %v3743
        %v3745 = vpop.f32.mrf.mxu0
        %v3746 = vpop.f32.mrf.mxu0
        %3747 = vdwg.mxu0
        %3748 = vmatprep.subr.bf16.mxu0 %v2728
        %3749 = vmatpush1.bf16.msra.mxu0 %v2727
        %3750 = vmatprep.subr.bf16.mxu0 %v2720
        %3751 = vmatpush1.bf16.msra.mxu0 %v2719
        %3752 = vmatprep.subr.bf16.mxu0 %v2712
        %3753 = vmatpush1.bf16.msra.mxu0 %v2711
        %3754 = vmatprep.subr.bf16.mxu0 %v2704
        %3755 = vmatpush1.bf16.msra.mxu0 %v2703
        %3756 = vmatprep.subr.bf16.mxu0 %v2696
        %3757 = vmatpush1.bf16.msra.mxu0 %v2695
        %3758 = vmatprep.subr.bf16.mxu0 %v2688
        %3759 = vmatpush1.bf16.msra.mxu0 %v2687
        %3760 = vmatprep.subr.bf16.mxu0 %v2680
        %3761 = vmatpush1.bf16.msra.mxu0 %v2679
        %3762 = vmatprep.subr.bf16.mxu0 %v2672
        %3763 = vmatpush1.bf16.msra.mxu0 %v2671
        %3764 = vmatprep.subr.bf16.mxu0 %v2792
        %3765 = vmatpush2.bf16.msra.mxu0 %v2791
        %3766 = vmatprep.subr.bf16.mxu0 %v2784
        %3767 = vmatpush2.bf16.msra.mxu0 %v2783
        %3768 = vmatprep.subr.bf16.mxu0 %v2776
        %3769 = vmatpush2.bf16.msra.mxu0 %v2775
        %3770 = vmatprep.subr.bf16.mxu0 %v2768
        %3771 = vmatpush2.bf16.msra.mxu0 %v2767
        %3772 = vmatprep.subr.bf16.mxu0 %v2760
        %3773 = vmatpush2.bf16.msra.mxu0 %v2759
        %3774 = vmatprep.subr.bf16.mxu0 %v2752
        %3775 = vmatpush2.bf16.msra.mxu0 %v2751
        %3776 = vmatprep.subr.bf16.mxu0 %v2744
        %3777 = vmatpush2.bf16.msra.mxu0 %v2743
        %3778 = vmatprep.subr.bf16.mxu0 %v2736
        %3779 = vmatpush2.bf16.msra.mxu0 %v2735
        %3780 = vmatprep.mubr.bf16.mxu0 %v492
        %3781 = vmatmul.mubr.bf16.gmra.mxu0 %v491
        %v3782 = vpop.f32.mrf.mxu0
        %v3783 = vadd.f32 %v3742, %v3782
        %v3784 = vpop.f32.mrf.mxu0
        %v3785 = vadd.f32 %v3744, %v3784
        %v3786 = vpop.f32.mrf.mxu0
        %v3787 = vpop.f32.mrf.mxu0
        %3788 = vdwg.mxu0
        %3789 = vmatprep.subr.bf16.mxu0 %v1322
        %3790 = vmatpush1.bf16.msra.mxu0 %v1321
        %3791 = vmatprep.subr.bf16.mxu0 %v1314
        %3792 = vmatpush1.bf16.msra.mxu0 %v1313
        %3793 = vmatprep.subr.bf16.mxu0 %v1306
        %3794 = vmatpush1.bf16.msra.mxu0 %v1305
        %3795 = vmatprep.subr.bf16.mxu0 %v1298
        %3796 = vmatpush1.bf16.msra.mxu0 %v1297
        %3797 = vmatprep.subr.bf16.mxu0 %v1290
        %3798 = vmatpush1.bf16.msra.mxu0 %v1289
        %3799 = vmatprep.subr.bf16.mxu0 %v1282
        %3800 = vmatpush1.bf16.msra.mxu0 %v1281
        %3801 = vmatprep.subr.bf16.mxu0 %v1274
        %3802 = vmatpush1.bf16.msra.mxu0 %v1273
        %3803 = vmatprep.subr.bf16.mxu0 %v1266
        %3804 = vmatpush1.bf16.msra.mxu0 %v1265
        %3805 = vmatprep.subr.bf16.mxu0 %v1386
        %3806 = vmatpush2.bf16.msra.mxu0 %v1385
        %3807 = vmatprep.subr.bf16.mxu0 %v1378
        %3808 = vmatpush2.bf16.msra.mxu0 %v1377
        %3809 = vmatprep.subr.bf16.mxu0 %v1370
        %3810 = vmatpush2.bf16.msra.mxu0 %v1369
        %3811 = vmatprep.subr.bf16.mxu0 %v1362
        %3812 = vmatpush2.bf16.msra.mxu0 %v1361
        %3813 = vmatprep.subr.bf16.mxu0 %v1354
        %3814 = vmatpush2.bf16.msra.mxu0 %v1353
        %3815 = vmatprep.subr.bf16.mxu0 %v1346
        %3816 = vmatpush2.bf16.msra.mxu0 %v1345
        %3817 = vmatprep.subr.bf16.mxu0 %v1338
        %3818 = vmatpush2.bf16.msra.mxu0 %v1337
        %3819 = vmatprep.subr.bf16.mxu0 %v1330
        %3820 = vmatpush2.bf16.msra.mxu0 %v1329
        %3821 = vmatprep.mubr.bf16.mxu0 %v470
        %3822 = vmatmul.mubr.bf16.gmra.mxu0 %v469
        %v3823 = vpop.f32.mrf.mxu0
        %v3824 = vadd.f32 0.0, %v3823
        %v3825 = vpop.f32.mrf.mxu0
        %v3826 = vadd.f32 0.0, %v3825
        %v3827 = vpop.f32.mrf.mxu0
        %v3828 = vpop.f32.mrf.mxu0
        %3829 = vdwg.mxu0
        %3830 = vmatprep.subr.bf16.mxu0 %v1450
        %3831 = vmatpush1.bf16.msra.mxu0 %v1449
        %3832 = vmatprep.subr.bf16.mxu0 %v1442
        %3833 = vmatpush1.bf16.msra.mxu0 %v1441
        %3834 = vmatprep.subr.bf16.mxu0 %v1434
        %3835 = vmatpush1.bf16.msra.mxu0 %v1433
        %3836 = vmatprep.subr.bf16.mxu0 %v1426
        %3837 = vmatpush1.bf16.msra.mxu0 %v1425
        %3838 = vmatprep.subr.bf16.mxu0 %v1418
        %3839 = vmatpush1.bf16.msra.mxu0 %v1417
        %3840 = vmatprep.subr.bf16.mxu0 %v1410
        %3841 = vmatpush1.bf16.msra.mxu0 %v1409
        %3842 = vmatprep.subr.bf16.mxu0 %v1402
        %3843 = vmatpush1.bf16.msra.mxu0 %v1401
        %3844 = vmatprep.subr.bf16.mxu0 %v1394
        %3845 = vmatpush1.bf16.msra.mxu0 %v1393
        %3846 = vmatprep.subr.bf16.mxu0 %v1514
        %3847 = vmatpush2.bf16.msra.mxu0 %v1513
        %3848 = vmatprep.subr.bf16.mxu0 %v1506
        %3849 = vmatpush2.bf16.msra.mxu0 %v1505
        %3850 = vmatprep.subr.bf16.mxu0 %v1498
        %3851 = vmatpush2.bf16.msra.mxu0 %v1497
        %3852 = vmatprep.subr.bf16.mxu0 %v1490
        %3853 = vmatpush2.bf16.msra.mxu0 %v1489
        %3854 = vmatprep.subr.bf16.mxu0 %v1482
        %3855 = vmatpush2.bf16.msra.mxu0 %v1481
        %3856 = vmatprep.subr.bf16.mxu0 %v1474
        %3857 = vmatpush2.bf16.msra.mxu0 %v1473
        %3858 = vmatprep.subr.bf16.mxu0 %v1466
        %3859 = vmatpush2.bf16.msra.mxu0 %v1465
        %3860 = vmatprep.subr.bf16.mxu0 %v1458
        %3861 = vmatpush2.bf16.msra.mxu0 %v1457
        %3862 = vmatprep.mubr.bf16.mxu0 %v472
        %3863 = vmatmul.mubr.bf16.gmra.mxu0 %v471
        %v3864 = vpop.f32.mrf.mxu0
        %v3865 = vadd.f32 %v3824, %v3864
        %v3866 = vpop.f32.mrf.mxu0
        %v3867 = vadd.f32 %v3826, %v3866
        %v3868 = vpop.f32.mrf.mxu0
        %v3869 = vpop.f32.mrf.mxu0
        %3870 = vdwg.mxu0
        %3871 = vmatprep.subr.bf16.mxu0 %v1578
        %3872 = vmatpush1.bf16.msra.mxu0 %v1577
        %3873 = vmatprep.subr.bf16.mxu0 %v1570
        %3874 = vmatpush1.bf16.msra.mxu0 %v1569
        %3875 = vmatprep.subr.bf16.mxu0 %v1562
        %3876 = vmatpush1.bf16.msra.mxu0 %v1561
        %3877 = vmatprep.subr.bf16.mxu0 %v1554
        %3878 = vmatpush1.bf16.msra.mxu0 %v1553
        %3879 = vmatprep.subr.bf16.mxu0 %v1546
        %3880 = vmatpush1.bf16.msra.mxu0 %v1545
        %3881 = vmatprep.subr.bf16.mxu0 %v1538
        %3882 = vmatpush1.bf16.msra.mxu0 %v1537
        %3883 = vmatprep.subr.bf16.mxu0 %v1530
        %3884 = vmatpush1.bf16.msra.mxu0 %v1529
        %3885 = vmatprep.subr.bf16.mxu0 %v1522
        %3886 = vmatpush1.bf16.msra.mxu0 %v1521
        %3887 = vmatprep.subr.bf16.mxu0 %v1642
        %3888 = vmatpush2.bf16.msra.mxu0 %v1641
        %3889 = vmatprep.subr.bf16.mxu0 %v1634
        %3890 = vmatpush2.bf16.msra.mxu0 %v1633
        %3891 = vmatprep.subr.bf16.mxu0 %v1626
        %3892 = vmatpush2.bf16.msra.mxu0 %v1625
        %3893 = vmatprep.subr.bf16.mxu0 %v1618
        %3894 = vmatpush2.bf16.msra.mxu0 %v1617
        %3895 = vmatprep.subr.bf16.mxu0 %v1610
        %3896 = vmatpush2.bf16.msra.mxu0 %v1609
        %3897 = vmatprep.subr.bf16.mxu0 %v1602
        %3898 = vmatpush2.bf16.msra.mxu0 %v1601
        %3899 = vmatprep.subr.bf16.mxu0 %v1594
        %3900 = vmatpush2.bf16.msra.mxu0 %v1593
        %3901 = vmatprep.subr.bf16.mxu0 %v1586
        %3902 = vmatpush2.bf16.msra.mxu0 %v1585
        %3903 = vmatprep.mubr.bf16.mxu0 %v474
        %3904 = vmatmul.mubr.bf16.gmra.mxu0 %v473
        %v3905 = vpop.f32.mrf.mxu0
        %v3906 = vadd.f32 %v3865, %v3905
        %v3907 = vpop.f32.mrf.mxu0
        %v3908 = vadd.f32 %v3867, %v3907
        %v3909 = vpop.f32.mrf.mxu0
        %v3910 = vpop.f32.mrf.mxu0
        %3911 = vdwg.mxu0
        %3912 = vmatprep.subr.bf16.mxu0 %v1706
        %3913 = vmatpush1.bf16.msra.mxu0 %v1705
        %3914 = vmatprep.subr.bf16.mxu0 %v1698
        %3915 = vmatpush1.bf16.msra.mxu0 %v1697
        %3916 = vmatprep.subr.bf16.mxu0 %v1690
        %3917 = vmatpush1.bf16.msra.mxu0 %v1689
        %3918 = vmatprep.subr.bf16.mxu0 %v1682
        %3919 = vmatpush1.bf16.msra.mxu0 %v1681
        %3920 = vmatprep.subr.bf16.mxu0 %v1674
        %3921 = vmatpush1.bf16.msra.mxu0 %v1673
        %3922 = vmatprep.subr.bf16.mxu0 %v1666
        %3923 = vmatpush1.bf16.msra.mxu0 %v1665
        %3924 = vmatprep.subr.bf16.mxu0 %v1658
        %3925 = vmatpush1.bf16.msra.mxu0 %v1657
        %3926 = vmatprep.subr.bf16.mxu0 %v1650
        %3927 = vmatpush1.bf16.msra.mxu0 %v1649
        %3928 = vmatprep.subr.bf16.mxu0 %v1770
        %3929 = vmatpush2.bf16.msra.mxu0 %v1769
        %3930 = vmatprep.subr.bf16.mxu0 %v1762
        %3931 = vmatpush2.bf16.msra.mxu0 %v1761
        %3932 = vmatprep.subr.bf16.mxu0 %v1754
        %3933 = vmatpush2.bf16.msra.mxu0 %v1753
        %3934 = vmatprep.subr.bf16.mxu0 %v1746
        %3935 = vmatpush2.bf16.msra.mxu0 %v1745
        %3936 = vmatprep.subr.bf16.mxu0 %v1738
        %3937 = vmatpush2.bf16.msra.mxu0 %v1737
        %3938 = vmatprep.subr.bf16.mxu0 %v1730
        %3939 = vmatpush2.bf16.msra.mxu0 %v1729
        %3940 = vmatprep.subr.bf16.mxu0 %v1722
        %3941 = vmatpush2.bf16.msra.mxu0 %v1721
        %3942 = vmatprep.subr.bf16.mxu0 %v1714
        %3943 = vmatpush2.bf16.msra.mxu0 %v1713
        %3944 = vmatprep.mubr.bf16.mxu0 %v476
        %3945 = vmatmul.mubr.bf16.gmra.mxu0 %v475
        %v3946 = vpop.f32.mrf.mxu0
        %v3947 = vadd.f32 %v3906, %v3946
        %v3948 = vpop.f32.mrf.mxu0
        %v3949 = vadd.f32 %v3908, %v3948
        %v3950 = vpop.f32.mrf.mxu0
        %v3951 = vpop.f32.mrf.mxu0
        %3952 = vdwg.mxu0
        %3953 = vmatprep.subr.bf16.mxu0 %v1834
        %3954 = vmatpush1.bf16.msra.mxu0 %v1833
        %3955 = vmatprep.subr.bf16.mxu0 %v1826
        %3956 = vmatpush1.bf16.msra.mxu0 %v1825
        %3957 = vmatprep.subr.bf16.mxu0 %v1818
        %3958 = vmatpush1.bf16.msra.mxu0 %v1817
        %3959 = vmatprep.subr.bf16.mxu0 %v1810
        %3960 = vmatpush1.bf16.msra.mxu0 %v1809
        %3961 = vmatprep.subr.bf16.mxu0 %v1802
        %3962 = vmatpush1.bf16.msra.mxu0 %v1801
        %3963 = vmatprep.subr.bf16.mxu0 %v1794
        %3964 = vmatpush1.bf16.msra.mxu0 %v1793
        %3965 = vmatprep.subr.bf16.mxu0 %v1786
        %3966 = vmatpush1.bf16.msra.mxu0 %v1785
        %3967 = vmatprep.subr.bf16.mxu0 %v1778
        %3968 = vmatpush1.bf16.msra.mxu0 %v1777
        %3969 = vmatprep.subr.bf16.mxu0 %v1898
        %3970 = vmatpush2.bf16.msra.mxu0 %v1897
        %3971 = vmatprep.subr.bf16.mxu0 %v1890
        %3972 = vmatpush2.bf16.msra.mxu0 %v1889
        %3973 = vmatprep.subr.bf16.mxu0 %v1882
        %3974 = vmatpush2.bf16.msra.mxu0 %v1881
        %3975 = vmatprep.subr.bf16.mxu0 %v1874
        %3976 = vmatpush2.bf16.msra.mxu0 %v1873
        %3977 = vmatprep.subr.bf16.mxu0 %v1866
        %3978 = vmatpush2.bf16.msra.mxu0 %v1865
        %3979 = vmatprep.subr.bf16.mxu0 %v1858
        %3980 = vmatpush2.bf16.msra.mxu0 %v1857
        %3981 = vmatprep.subr.bf16.mxu0 %v1850
        %3982 = vmatpush2.bf16.msra.mxu0 %v1849
        %3983 = vmatprep.subr.bf16.mxu0 %v1842
        %3984 = vmatpush2.bf16.msra.mxu0 %v1841
        %3985 = vmatprep.mubr.bf16.mxu0 %v478
        %3986 = vmatmul.mubr.bf16.gmra.mxu0 %v477
        %v3987 = vpop.f32.mrf.mxu0
        %v3988 = vadd.f32 %v3947, %v3987
        %v3989 = vpop.f32.mrf.mxu0
        %v3990 = vadd.f32 %v3949, %v3989
        %v3991 = vpop.f32.mrf.mxu0
        %v3992 = vpop.f32.mrf.mxu0
        %3993 = vdwg.mxu0
        %3994 = vmatprep.subr.bf16.mxu0 %v1962
        %3995 = vmatpush1.bf16.msra.mxu0 %v1961
        %3996 = vmatprep.subr.bf16.mxu0 %v1954
        %3997 = vmatpush1.bf16.msra.mxu0 %v1953
        %3998 = vmatprep.subr.bf16.mxu0 %v1946
        %3999 = vmatpush1.bf16.msra.mxu0 %v1945
        %4000 = vmatprep.subr.bf16.mxu0 %v1938
        %4001 = vmatpush1.bf16.msra.mxu0 %v1937
        %4002 = vmatprep.subr.bf16.mxu0 %v1930
        %4003 = vmatpush1.bf16.msra.mxu0 %v1929
        %4004 = vmatprep.subr.bf16.mxu0 %v1922
        %4005 = vmatpush1.bf16.msra.mxu0 %v1921
        %4006 = vmatprep.subr.bf16.mxu0 %v1914
        %4007 = vmatpush1.bf16.msra.mxu0 %v1913
        %4008 = vmatprep.subr.bf16.mxu0 %v1906
        %4009 = vmatpush1.bf16.msra.mxu0 %v1905
        %4010 = vmatprep.subr.bf16.mxu0 %v2026
        %4011 = vmatpush2.bf16.msra.mxu0 %v2025
        %4012 = vmatprep.subr.bf16.mxu0 %v2018
        %4013 = vmatpush2.bf16.msra.mxu0 %v2017
        %4014 = vmatprep.subr.bf16.mxu0 %v2010
        %4015 = vmatpush2.bf16.msra.mxu0 %v2009
        %4016 = vmatprep.subr.bf16.mxu0 %v2002
        %4017 = vmatpush2.bf16.msra.mxu0 %v2001
        %4018 = vmatprep.subr.bf16.mxu0 %v1994
        %4019 = vmatpush2.bf16.msra.mxu0 %v1993
        %4020 = vmatprep.subr.bf16.mxu0 %v1986
        %4021 = vmatpush2.bf16.msra.mxu0 %v1985
        %4022 = vmatprep.subr.bf16.mxu0 %v1978
        %4023 = vmatpush2.bf16.msra.mxu0 %v1977
        %4024 = vmatprep.subr.bf16.mxu0 %v1970
        %4025 = vmatpush2.bf16.msra.mxu0 %v1969
        %4026 = vmatprep.mubr.bf16.mxu0 %v480
        %4027 = vmatmul.mubr.bf16.gmra.mxu0 %v479
        %v4028 = vpop.f32.mrf.mxu0
        %v4029 = vadd.f32 %v3988, %v4028
        %v4030 = vpop.f32.mrf.mxu0
        %v4031 = vadd.f32 %v3990, %v4030
        %v4032 = vpop.f32.mrf.mxu0
        %v4033 = vpop.f32.mrf.mxu0
        %4034 = vdwg.mxu0
        %4035 = vmatprep.subr.bf16.mxu0 %v2090
        %4036 = vmatpush1.bf16.msra.mxu0 %v2089
        %4037 = vmatprep.subr.bf16.mxu0 %v2082
        %4038 = vmatpush1.bf16.msra.mxu0 %v2081
        %4039 = vmatprep.subr.bf16.mxu0 %v2074
        %4040 = vmatpush1.bf16.msra.mxu0 %v2073
        %4041 = vmatprep.subr.bf16.mxu0 %v2066
        %4042 = vmatpush1.bf16.msra.mxu0 %v2065
        %4043 = vmatprep.subr.bf16.mxu0 %v2058
        %4044 = vmatpush1.bf16.msra.mxu0 %v2057
        %4045 = vmatprep.subr.bf16.mxu0 %v2050
        %4046 = vmatpush1.bf16.msra.mxu0 %v2049
        %4047 = vmatprep.subr.bf16.mxu0 %v2042
        %4048 = vmatpush1.bf16.msra.mxu0 %v2041
        %4049 = vmatprep.subr.bf16.mxu0 %v2034
        %4050 = vmatpush1.bf16.msra.mxu0 %v2033
        %4051 = vmatprep.subr.bf16.mxu0 %v2154
        %4052 = vmatpush2.bf16.msra.mxu0 %v2153
        %4053 = vmatprep.subr.bf16.mxu0 %v2146
        %4054 = vmatpush2.bf16.msra.mxu0 %v2145
        %4055 = vmatprep.subr.bf16.mxu0 %v2138
        %4056 = vmatpush2.bf16.msra.mxu0 %v2137
        %4057 = vmatprep.subr.bf16.mxu0 %v2130
        %4058 = vmatpush2.bf16.msra.mxu0 %v2129
        %4059 = vmatprep.subr.bf16.mxu0 %v2122
        %4060 = vmatpush2.bf16.msra.mxu0 %v2121
        %4061 = vmatprep.subr.bf16.mxu0 %v2114
        %4062 = vmatpush2.bf16.msra.mxu0 %v2113
        %4063 = vmatprep.subr.bf16.mxu0 %v2106
        %4064 = vmatpush2.bf16.msra.mxu0 %v2105
        %4065 = vmatprep.subr.bf16.mxu0 %v2098
        %4066 = vmatpush2.bf16.msra.mxu0 %v2097
        %4067 = vmatprep.mubr.bf16.mxu0 %v482
        %4068 = vmatmul.mubr.bf16.gmra.mxu0 %v481
        %v4069 = vpop.f32.mrf.mxu0
        %v4070 = vadd.f32 %v4029, %v4069
        %v4071 = vpop.f32.mrf.mxu0
        %v4072 = vadd.f32 %v4031, %v4071
        %v4073 = vpop.f32.mrf.mxu0
        %v4074 = vpop.f32.mrf.mxu0
        %4075 = vdwg.mxu0
        %4076 = vmatprep.subr.bf16.mxu0 %v2218
        %4077 = vmatpush1.bf16.msra.mxu0 %v2217
        %4078 = vmatprep.subr.bf16.mxu0 %v2210
        %4079 = vmatpush1.bf16.msra.mxu0 %v2209
        %4080 = vmatprep.subr.bf16.mxu0 %v2202
        %4081 = vmatpush1.bf16.msra.mxu0 %v2201
        %4082 = vmatprep.subr.bf16.mxu0 %v2194
        %4083 = vmatpush1.bf16.msra.mxu0 %v2193
        %4084 = vmatprep.subr.bf16.mxu0 %v2186
        %4085 = vmatpush1.bf16.msra.mxu0 %v2185
        %4086 = vmatprep.subr.bf16.mxu0 %v2178
        %4087 = vmatpush1.bf16.msra.mxu0 %v2177
        %4088 = vmatprep.subr.bf16.mxu0 %v2170
        %4089 = vmatpush1.bf16.msra.mxu0 %v2169
        %4090 = vmatprep.subr.bf16.mxu0 %v2162
        %4091 = vmatpush1.bf16.msra.mxu0 %v2161
        %4092 = vmatprep.subr.bf16.mxu0 %v2282
        %4093 = vmatpush2.bf16.msra.mxu0 %v2281
        %4094 = vmatprep.subr.bf16.mxu0 %v2274
        %4095 = vmatpush2.bf16.msra.mxu0 %v2273
        %4096 = vmatprep.subr.bf16.mxu0 %v2266
        %4097 = vmatpush2.bf16.msra.mxu0 %v2265
        %4098 = vmatprep.subr.bf16.mxu0 %v2258
        %4099 = vmatpush2.bf16.msra.mxu0 %v2257
        %4100 = vmatprep.subr.bf16.mxu0 %v2250
        %4101 = vmatpush2.bf16.msra.mxu0 %v2249
        %4102 = vmatprep.subr.bf16.mxu0 %v2242
        %4103 = vmatpush2.bf16.msra.mxu0 %v2241
        %4104 = vmatprep.subr.bf16.mxu0 %v2234
        %4105 = vmatpush2.bf16.msra.mxu0 %v2233
        %4106 = vmatprep.subr.bf16.mxu0 %v2226
        %4107 = vmatpush2.bf16.msra.mxu0 %v2225
        %4108 = vmatprep.mubr.bf16.mxu0 %v484
        %4109 = vmatmul.mubr.bf16.gmra.mxu0 %v483
        %v4110 = vpop.f32.mrf.mxu0
        %v4111 = vadd.f32 %v4070, %v4110
        %v4112 = vpop.f32.mrf.mxu0
        %v4113 = vadd.f32 %v4072, %v4112
        %v4114 = vpop.f32.mrf.mxu0
        %v4115 = vpop.f32.mrf.mxu0
        %4116 = vdwg.mxu0
        %4117 = vmatprep.subr.bf16.mxu0 %v2346
        %4118 = vmatpush1.bf16.msra.mxu0 %v2345
        %4119 = vmatprep.subr.bf16.mxu0 %v2338
        %4120 = vmatpush1.bf16.msra.mxu0 %v2337
        %4121 = vmatprep.subr.bf16.mxu0 %v2330
        %4122 = vmatpush1.bf16.msra.mxu0 %v2329
        %4123 = vmatprep.subr.bf16.mxu0 %v2322
        %4124 = vmatpush1.bf16.msra.mxu0 %v2321
        %4125 = vmatprep.subr.bf16.mxu0 %v2314
        %4126 = vmatpush1.bf16.msra.mxu0 %v2313
        %4127 = vmatprep.subr.bf16.mxu0 %v2306
        %4128 = vmatpush1.bf16.msra.mxu0 %v2305
        %4129 = vmatprep.subr.bf16.mxu0 %v2298
        %4130 = vmatpush1.bf16.msra.mxu0 %v2297
        %4131 = vmatprep.subr.bf16.mxu0 %v2290
        %4132 = vmatpush1.bf16.msra.mxu0 %v2289
        %4133 = vmatprep.subr.bf16.mxu0 %v2410
        %4134 = vmatpush2.bf16.msra.mxu0 %v2409
        %4135 = vmatprep.subr.bf16.mxu0 %v2402
        %4136 = vmatpush2.bf16.msra.mxu0 %v2401
        %4137 = vmatprep.subr.bf16.mxu0 %v2394
        %4138 = vmatpush2.bf16.msra.mxu0 %v2393
        %4139 = vmatprep.subr.bf16.mxu0 %v2386
        %4140 = vmatpush2.bf16.msra.mxu0 %v2385
        %4141 = vmatprep.subr.bf16.mxu0 %v2378
        %4142 = vmatpush2.bf16.msra.mxu0 %v2377
        %4143 = vmatprep.subr.bf16.mxu0 %v2370
        %4144 = vmatpush2.bf16.msra.mxu0 %v2369
        %4145 = vmatprep.subr.bf16.mxu0 %v2362
        %4146 = vmatpush2.bf16.msra.mxu0 %v2361
        %4147 = vmatprep.subr.bf16.mxu0 %v2354
        %4148 = vmatpush2.bf16.msra.mxu0 %v2353
        %4149 = vmatprep.mubr.bf16.mxu0 %v486
        %4150 = vmatmul.mubr.bf16.gmra.mxu0 %v485
        %v4151 = vpop.f32.mrf.mxu0
        %v4152 = vadd.f32 %v4111, %v4151
        %v4153 = vpop.f32.mrf.mxu0
        %v4154 = vadd.f32 %v4113, %v4153
        %v4155 = vpop.f32.mrf.mxu0
        %v4156 = vpop.f32.mrf.mxu0
        %4157 = vdwg.mxu0
        %4158 = vmatprep.subr.bf16.mxu0 %v2474
        %4159 = vmatpush1.bf16.msra.mxu0 %v2473
        %4160 = vmatprep.subr.bf16.mxu0 %v2466
        %4161 = vmatpush1.bf16.msra.mxu0 %v2465
        %4162 = vmatprep.subr.bf16.mxu0 %v2458
        %4163 = vmatpush1.bf16.msra.mxu0 %v2457
        %4164 = vmatprep.subr.bf16.mxu0 %v2450
        %4165 = vmatpush1.bf16.msra.mxu0 %v2449
        %4166 = vmatprep.subr.bf16.mxu0 %v2442
        %4167 = vmatpush1.bf16.msra.mxu0 %v2441
        %4168 = vmatprep.subr.bf16.mxu0 %v2434
        %4169 = vmatpush1.bf16.msra.mxu0 %v2433
        %4170 = vmatprep.subr.bf16.mxu0 %v2426
        %4171 = vmatpush1.bf16.msra.mxu0 %v2425
        %4172 = vmatprep.subr.bf16.mxu0 %v2418
        %4173 = vmatpush1.bf16.msra.mxu0 %v2417
        %4174 = vmatprep.subr.bf16.mxu0 %v2538
        %4175 = vmatpush2.bf16.msra.mxu0 %v2537
        %4176 = vmatprep.subr.bf16.mxu0 %v2530
        %4177 = vmatpush2.bf16.msra.mxu0 %v2529
        %4178 = vmatprep.subr.bf16.mxu0 %v2522
        %4179 = vmatpush2.bf16.msra.mxu0 %v2521
        %4180 = vmatprep.subr.bf16.mxu0 %v2514
        %4181 = vmatpush2.bf16.msra.mxu0 %v2513
        %4182 = vmatprep.subr.bf16.mxu0 %v2506
        %4183 = vmatpush2.bf16.msra.mxu0 %v2505
        %4184 = vmatprep.subr.bf16.mxu0 %v2498
        %4185 = vmatpush2.bf16.msra.mxu0 %v2497
        %4186 = vmatprep.subr.bf16.mxu0 %v2490
        %4187 = vmatpush2.bf16.msra.mxu0 %v2489
        %4188 = vmatprep.subr.bf16.mxu0 %v2482
        %4189 = vmatpush2.bf16.msra.mxu0 %v2481
        %4190 = vmatprep.mubr.bf16.mxu0 %v488
        %4191 = vmatmul.mubr.bf16.gmra.mxu0 %v487
        %v4192 = vpop.f32.mrf.mxu0
        %v4193 = vadd.f32 %v4152, %v4192
        %v4194 = vpop.f32.mrf.mxu0
        %v4195 = vadd.f32 %v4154, %v4194
        %v4196 = vpop.f32.mrf.mxu0
        %v4197 = vpop.f32.mrf.mxu0
        %4198 = vdwg.mxu0
        %4199 = vmatprep.subr.bf16.mxu0 %v2602
        %4200 = vmatpush1.bf16.msra.mxu0 %v2601
        %4201 = vmatprep.subr.bf16.mxu0 %v2594
        %4202 = vmatpush1.bf16.msra.mxu0 %v2593
        %4203 = vmatprep.subr.bf16.mxu0 %v2586
        %4204 = vmatpush1.bf16.msra.mxu0 %v2585
        %4205 = vmatprep.subr.bf16.mxu0 %v2578
        %4206 = vmatpush1.bf16.msra.mxu0 %v2577
        %4207 = vmatprep.subr.bf16.mxu0 %v2570
        %4208 = vmatpush1.bf16.msra.mxu0 %v2569
        %4209 = vmatprep.subr.bf16.mxu0 %v2562
        %4210 = vmatpush1.bf16.msra.mxu0 %v2561
        %4211 = vmatprep.subr.bf16.mxu0 %v2554
        %4212 = vmatpush1.bf16.msra.mxu0 %v2553
        %4213 = vmatprep.subr.bf16.mxu0 %v2546
        %4214 = vmatpush1.bf16.msra.mxu0 %v2545
        %4215 = vmatprep.subr.bf16.mxu0 %v2666
        %4216 = vmatpush2.bf16.msra.mxu0 %v2665
        %4217 = vmatprep.subr.bf16.mxu0 %v2658
        %4218 = vmatpush2.bf16.msra.mxu0 %v2657
        %4219 = vmatprep.subr.bf16.mxu0 %v2650
        %4220 = vmatpush2.bf16.msra.mxu0 %v2649
        %4221 = vmatprep.subr.bf16.mxu0 %v2642
        %4222 = vmatpush2.bf16.msra.mxu0 %v2641
        %4223 = vmatprep.subr.bf16.mxu0 %v2634
        %4224 = vmatpush2.bf16.msra.mxu0 %v2633
        %4225 = vmatprep.subr.bf16.mxu0 %v2626
        %4226 = vmatpush2.bf16.msra.mxu0 %v2625
        %4227 = vmatprep.subr.bf16.mxu0 %v2618
        %4228 = vmatpush2.bf16.msra.mxu0 %v2617
        %4229 = vmatprep.subr.bf16.mxu0 %v2610
        %4230 = vmatpush2.bf16.msra.mxu0 %v2609
        %4231 = vmatprep.mubr.bf16.mxu0 %v490
        %4232 = vmatmul.mubr.bf16.gmra.mxu0 %v489
        %v4233 = vpop.f32.mrf.mxu0
        %v4234 = vadd.f32 %v4193, %v4233
        %v4235 = vpop.f32.mrf.mxu0
        %v4236 = vadd.f32 %v4195, %v4235
        %v4237 = vpop.f32.mrf.mxu0
        %v4238 = vpop.f32.mrf.mxu0
        %4239 = vdwg.mxu0
        %4240 = vmatprep.subr.bf16.mxu0 %v2730
        %4241 = vmatpush1.bf16.msra.mxu0 %v2729
        %4242 = vmatprep.subr.bf16.mxu0 %v2722
        %4243 = vmatpush1.bf16.msra.mxu0 %v2721
        %4244 = vmatprep.subr.bf16.mxu0 %v2714
        %4245 = vmatpush1.bf16.msra.mxu0 %v2713
        %4246 = vmatprep.subr.bf16.mxu0 %v2706
        %4247 = vmatpush1.bf16.msra.mxu0 %v2705
        %4248 = vmatprep.subr.bf16.mxu0 %v2698
        %4249 = vmatpush1.bf16.msra.mxu0 %v2697
        %4250 = vmatprep.subr.bf16.mxu0 %v2690
        %4251 = vmatpush1.bf16.msra.mxu0 %v2689
        %4252 = vmatprep.subr.bf16.mxu0 %v2682
        %4253 = vmatpush1.bf16.msra.mxu0 %v2681
        %4254 = vmatprep.subr.bf16.mxu0 %v2674
        %4255 = vmatpush1.bf16.msra.mxu0 %v2673
        %4256 = vmatprep.subr.bf16.mxu0 %v2794
        %4257 = vmatpush2.bf16.msra.mxu0 %v2793
        %4258 = vmatprep.subr.bf16.mxu0 %v2786
        %4259 = vmatpush2.bf16.msra.mxu0 %v2785
        %4260 = vmatprep.subr.bf16.mxu0 %v2778
        %4261 = vmatpush2.bf16.msra.mxu0 %v2777
        %4262 = vmatprep.subr.bf16.mxu0 %v2770
        %4263 = vmatpush2.bf16.msra.mxu0 %v2769
        %4264 = vmatprep.subr.bf16.mxu0 %v2762
        %4265 = vmatpush2.bf16.msra.mxu0 %v2761
        %4266 = vmatprep.subr.bf16.mxu0 %v2754
        %4267 = vmatpush2.bf16.msra.mxu0 %v2753
        %4268 = vmatprep.subr.bf16.mxu0 %v2746
        %4269 = vmatpush2.bf16.msra.mxu0 %v2745
        %4270 = vmatprep.subr.bf16.mxu0 %v2738
        %4271 = vmatpush2.bf16.msra.mxu0 %v2737
        %4272 = vmatprep.mubr.bf16.mxu0 %v492
        %4273 = vmatmul.mubr.bf16.gmra.mxu0 %v491
        %v4274 = vpop.f32.mrf.mxu0
        %v4275 = vadd.f32 %v4234, %v4274
        %v4276 = vpop.f32.mrf.mxu0
        %v4277 = vadd.f32 %v4236, %v4276
        %v4278 = vpop.f32.mrf.mxu0
        %v4279 = vpop.f32.mrf.mxu0
        %4280 = vdwg.mxu0
        %4281 = vmatprep.subr.bf16.mxu0 %v1324
        %4282 = vmatpush1.bf16.msra.mxu0 %v1323
        %4283 = vmatprep.subr.bf16.mxu0 %v1316
        %4284 = vmatpush1.bf16.msra.mxu0 %v1315
        %4285 = vmatprep.subr.bf16.mxu0 %v1308
        %4286 = vmatpush1.bf16.msra.mxu0 %v1307
        %4287 = vmatprep.subr.bf16.mxu0 %v1300
        %4288 = vmatpush1.bf16.msra.mxu0 %v1299
        %4289 = vmatprep.subr.bf16.mxu0 %v1292
        %4290 = vmatpush1.bf16.msra.mxu0 %v1291
        %4291 = vmatprep.subr.bf16.mxu0 %v1284
        %4292 = vmatpush1.bf16.msra.mxu0 %v1283
        %4293 = vmatprep.subr.bf16.mxu0 %v1276
        %4294 = vmatpush1.bf16.msra.mxu0 %v1275
        %4295 = vmatprep.subr.bf16.mxu0 %v1268
        %4296 = vmatpush1.bf16.msra.mxu0 %v1267
        %4297 = vmatprep.subr.bf16.mxu0 %v1388
        %4298 = vmatpush2.bf16.msra.mxu0 %v1387
        %4299 = vmatprep.subr.bf16.mxu0 %v1380
        %4300 = vmatpush2.bf16.msra.mxu0 %v1379
        %4301 = vmatprep.subr.bf16.mxu0 %v1372
        %4302 = vmatpush2.bf16.msra.mxu0 %v1371
        %4303 = vmatprep.subr.bf16.mxu0 %v1364
        %4304 = vmatpush2.bf16.msra.mxu0 %v1363
        %4305 = vmatprep.subr.bf16.mxu0 %v1356
        %4306 = vmatpush2.bf16.msra.mxu0 %v1355
        %4307 = vmatprep.subr.bf16.mxu0 %v1348
        %4308 = vmatpush2.bf16.msra.mxu0 %v1347
        %4309 = vmatprep.subr.bf16.mxu0 %v1340
        %4310 = vmatpush2.bf16.msra.mxu0 %v1339
        %4311 = vmatprep.subr.bf16.mxu0 %v1332
        %4312 = vmatpush2.bf16.msra.mxu0 %v1331
        %4313 = vmatprep.mubr.bf16.mxu0 %v470
        %4314 = vmatmul.mubr.bf16.gmra.mxu0 %v469
        %v4315 = vpop.f32.mrf.mxu0
        %v4316 = vadd.f32 0.0, %v4315
        %v4317 = vpop.f32.mrf.mxu0
        %v4318 = vadd.f32 0.0, %v4317
        %v4319 = vpop.f32.mrf.mxu0
        %v4320 = vpop.f32.mrf.mxu0
        %4321 = vdwg.mxu0
        %4322 = vmatprep.subr.bf16.mxu0 %v1452
        %4323 = vmatpush1.bf16.msra.mxu0 %v1451
        %4324 = vmatprep.subr.bf16.mxu0 %v1444
        %4325 = vmatpush1.bf16.msra.mxu0 %v1443
        %4326 = vmatprep.subr.bf16.mxu0 %v1436
        %4327 = vmatpush1.bf16.msra.mxu0 %v1435
        %4328 = vmatprep.subr.bf16.mxu0 %v1428
        %4329 = vmatpush1.bf16.msra.mxu0 %v1427
        %4330 = vmatprep.subr.bf16.mxu0 %v1420
        %4331 = vmatpush1.bf16.msra.mxu0 %v1419
        %4332 = vmatprep.subr.bf16.mxu0 %v1412
        %4333 = vmatpush1.bf16.msra.mxu0 %v1411
        %4334 = vmatprep.subr.bf16.mxu0 %v1404
        %4335 = vmatpush1.bf16.msra.mxu0 %v1403
        %4336 = vmatprep.subr.bf16.mxu0 %v1396
        %4337 = vmatpush1.bf16.msra.mxu0 %v1395
        %4338 = vmatprep.subr.bf16.mxu0 %v1516
        %4339 = vmatpush2.bf16.msra.mxu0 %v1515
        %4340 = vmatprep.subr.bf16.mxu0 %v1508
        %4341 = vmatpush2.bf16.msra.mxu0 %v1507
        %4342 = vmatprep.subr.bf16.mxu0 %v1500
        %4343 = vmatpush2.bf16.msra.mxu0 %v1499
        %4344 = vmatprep.subr.bf16.mxu0 %v1492
        %4345 = vmatpush2.bf16.msra.mxu0 %v1491
        %4346 = vmatprep.subr.bf16.mxu0 %v1484
        %4347 = vmatpush2.bf16.msra.mxu0 %v1483
        %4348 = vmatprep.subr.bf16.mxu0 %v1476
        %4349 = vmatpush2.bf16.msra.mxu0 %v1475
        %4350 = vmatprep.subr.bf16.mxu0 %v1468
        %4351 = vmatpush2.bf16.msra.mxu0 %v1467
        %4352 = vmatprep.subr.bf16.mxu0 %v1460
        %4353 = vmatpush2.bf16.msra.mxu0 %v1459
        %4354 = vmatprep.mubr.bf16.mxu0 %v472
        %4355 = vmatmul.mubr.bf16.gmra.mxu0 %v471
        %v4356 = vpop.f32.mrf.mxu0
        %v4357 = vadd.f32 %v4316, %v4356
        %v4358 = vpop.f32.mrf.mxu0
        %v4359 = vadd.f32 %v4318, %v4358
        %v4360 = vpop.f32.mrf.mxu0
        %v4361 = vpop.f32.mrf.mxu0
        %4362 = vdwg.mxu0
        %4363 = vmatprep.subr.bf16.mxu0 %v1580
        %4364 = vmatpush1.bf16.msra.mxu0 %v1579
        %4365 = vmatprep.subr.bf16.mxu0 %v1572
        %4366 = vmatpush1.bf16.msra.mxu0 %v1571
        %4367 = vmatprep.subr.bf16.mxu0 %v1564
        %4368 = vmatpush1.bf16.msra.mxu0 %v1563
        %4369 = vmatprep.subr.bf16.mxu0 %v1556
        %4370 = vmatpush1.bf16.msra.mxu0 %v1555
        %4371 = vmatprep.subr.bf16.mxu0 %v1548
        %4372 = vmatpush1.bf16.msra.mxu0 %v1547
        %4373 = vmatprep.subr.bf16.mxu0 %v1540
        %4374 = vmatpush1.bf16.msra.mxu0 %v1539
        %4375 = vmatprep.subr.bf16.mxu0 %v1532
        %4376 = vmatpush1.bf16.msra.mxu0 %v1531
        %4377 = vmatprep.subr.bf16.mxu0 %v1524
        %4378 = vmatpush1.bf16.msra.mxu0 %v1523
        %4379 = vmatprep.subr.bf16.mxu0 %v1644
        %4380 = vmatpush2.bf16.msra.mxu0 %v1643
        %4381 = vmatprep.subr.bf16.mxu0 %v1636
        %4382 = vmatpush2.bf16.msra.mxu0 %v1635
        %4383 = vmatprep.subr.bf16.mxu0 %v1628
        %4384 = vmatpush2.bf16.msra.mxu0 %v1627
        %4385 = vmatprep.subr.bf16.mxu0 %v1620
        %4386 = vmatpush2.bf16.msra.mxu0 %v1619
        %4387 = vmatprep.subr.bf16.mxu0 %v1612
        %4388 = vmatpush2.bf16.msra.mxu0 %v1611
        %4389 = vmatprep.subr.bf16.mxu0 %v1604
        %4390 = vmatpush2.bf16.msra.mxu0 %v1603
        %4391 = vmatprep.subr.bf16.mxu0 %v1596
        %4392 = vmatpush2.bf16.msra.mxu0 %v1595
        %4393 = vmatprep.subr.bf16.mxu0 %v1588
        %4394 = vmatpush2.bf16.msra.mxu0 %v1587
        %4395 = vmatprep.mubr.bf16.mxu0 %v474
        %4396 = vmatmul.mubr.bf16.gmra.mxu0 %v473
        %v4397 = vpop.f32.mrf.mxu0
        %v4398 = vadd.f32 %v4357, %v4397
        %v4399 = vpop.f32.mrf.mxu0
        %v4400 = vadd.f32 %v4359, %v4399
        %v4401 = vpop.f32.mrf.mxu0
        %v4402 = vpop.f32.mrf.mxu0
        %4403 = vdwg.mxu0
        %4404 = vmatprep.subr.bf16.mxu0 %v1708
        %4405 = vmatpush1.bf16.msra.mxu0 %v1707
        %4406 = vmatprep.subr.bf16.mxu0 %v1700
        %4407 = vmatpush1.bf16.msra.mxu0 %v1699
        %4408 = vmatprep.subr.bf16.mxu0 %v1692
        %4409 = vmatpush1.bf16.msra.mxu0 %v1691
        %4410 = vmatprep.subr.bf16.mxu0 %v1684
        %4411 = vmatpush1.bf16.msra.mxu0 %v1683
        %4412 = vmatprep.subr.bf16.mxu0 %v1676
        %4413 = vmatpush1.bf16.msra.mxu0 %v1675
        %4414 = vmatprep.subr.bf16.mxu0 %v1668
        %4415 = vmatpush1.bf16.msra.mxu0 %v1667
        %4416 = vmatprep.subr.bf16.mxu0 %v1660
        %4417 = vmatpush1.bf16.msra.mxu0 %v1659
        %4418 = vmatprep.subr.bf16.mxu0 %v1652
        %4419 = vmatpush1.bf16.msra.mxu0 %v1651
        %4420 = vmatprep.subr.bf16.mxu0 %v1772
        %4421 = vmatpush2.bf16.msra.mxu0 %v1771
        %4422 = vmatprep.subr.bf16.mxu0 %v1764
        %4423 = vmatpush2.bf16.msra.mxu0 %v1763
        %4424 = vmatprep.subr.bf16.mxu0 %v1756
        %4425 = vmatpush2.bf16.msra.mxu0 %v1755
        %4426 = vmatprep.subr.bf16.mxu0 %v1748
        %4427 = vmatpush2.bf16.msra.mxu0 %v1747
        %4428 = vmatprep.subr.bf16.mxu0 %v1740
        %4429 = vmatpush2.bf16.msra.mxu0 %v1739
        %4430 = vmatprep.subr.bf16.mxu0 %v1732
        %4431 = vmatpush2.bf16.msra.mxu0 %v1731
        %4432 = vmatprep.subr.bf16.mxu0 %v1724
        %4433 = vmatpush2.bf16.msra.mxu0 %v1723
        %4434 = vmatprep.subr.bf16.mxu0 %v1716
        %4435 = vmatpush2.bf16.msra.mxu0 %v1715
        %4436 = vmatprep.mubr.bf16.mxu0 %v476
        %4437 = vmatmul.mubr.bf16.gmra.mxu0 %v475
        %v4438 = vpop.f32.mrf.mxu0
        %v4439 = vadd.f32 %v4398, %v4438
        %v4440 = vpop.f32.mrf.mxu0
        %v4441 = vadd.f32 %v4400, %v4440
        %v4442 = vpop.f32.mrf.mxu0
        %v4443 = vpop.f32.mrf.mxu0
        %4444 = vdwg.mxu0
        %4445 = vmatprep.subr.bf16.mxu0 %v1836
        %4446 = vmatpush1.bf16.msra.mxu0 %v1835
        %4447 = vmatprep.subr.bf16.mxu0 %v1828
        %4448 = vmatpush1.bf16.msra.mxu0 %v1827
        %4449 = vmatprep.subr.bf16.mxu0 %v1820
        %4450 = vmatpush1.bf16.msra.mxu0 %v1819
        %4451 = vmatprep.subr.bf16.mxu0 %v1812
        %4452 = vmatpush1.bf16.msra.mxu0 %v1811
        %4453 = vmatprep.subr.bf16.mxu0 %v1804
        %4454 = vmatpush1.bf16.msra.mxu0 %v1803
        %4455 = vmatprep.subr.bf16.mxu0 %v1796
        %4456 = vmatpush1.bf16.msra.mxu0 %v1795
        %4457 = vmatprep.subr.bf16.mxu0 %v1788
        %4458 = vmatpush1.bf16.msra.mxu0 %v1787
        %4459 = vmatprep.subr.bf16.mxu0 %v1780
        %4460 = vmatpush1.bf16.msra.mxu0 %v1779
        %4461 = vmatprep.subr.bf16.mxu0 %v1900
        %4462 = vmatpush2.bf16.msra.mxu0 %v1899
        %4463 = vmatprep.subr.bf16.mxu0 %v1892
        %4464 = vmatpush2.bf16.msra.mxu0 %v1891
        %4465 = vmatprep.subr.bf16.mxu0 %v1884
        %4466 = vmatpush2.bf16.msra.mxu0 %v1883
        %4467 = vmatprep.subr.bf16.mxu0 %v1876
        %4468 = vmatpush2.bf16.msra.mxu0 %v1875
        %4469 = vmatprep.subr.bf16.mxu0 %v1868
        %4470 = vmatpush2.bf16.msra.mxu0 %v1867
        %4471 = vmatprep.subr.bf16.mxu0 %v1860
        %4472 = vmatpush2.bf16.msra.mxu0 %v1859
        %4473 = vmatprep.subr.bf16.mxu0 %v1852
        %4474 = vmatpush2.bf16.msra.mxu0 %v1851
        %4475 = vmatprep.subr.bf16.mxu0 %v1844
        %4476 = vmatpush2.bf16.msra.mxu0 %v1843
        %4477 = vmatprep.mubr.bf16.mxu0 %v478
        %4478 = vmatmul.mubr.bf16.gmra.mxu0 %v477
        %v4479 = vpop.f32.mrf.mxu0
        %v4480 = vadd.f32 %v4439, %v4479
        %v4481 = vpop.f32.mrf.mxu0
        %v4482 = vadd.f32 %v4441, %v4481
        %v4483 = vpop.f32.mrf.mxu0
        %v4484 = vpop.f32.mrf.mxu0
        %4485 = vdwg.mxu0
        %4486 = vmatprep.subr.bf16.mxu0 %v1964
        %4487 = vmatpush1.bf16.msra.mxu0 %v1963
        %4488 = vmatprep.subr.bf16.mxu0 %v1956
        %4489 = vmatpush1.bf16.msra.mxu0 %v1955
        %4490 = vmatprep.subr.bf16.mxu0 %v1948
        %4491 = vmatpush1.bf16.msra.mxu0 %v1947
        %4492 = vmatprep.subr.bf16.mxu0 %v1940
        %4493 = vmatpush1.bf16.msra.mxu0 %v1939
        %4494 = vmatprep.subr.bf16.mxu0 %v1932
        %4495 = vmatpush1.bf16.msra.mxu0 %v1931
        %4496 = vmatprep.subr.bf16.mxu0 %v1924
        %4497 = vmatpush1.bf16.msra.mxu0 %v1923
        %4498 = vmatprep.subr.bf16.mxu0 %v1916
        %4499 = vmatpush1.bf16.msra.mxu0 %v1915
        %4500 = vmatprep.subr.bf16.mxu0 %v1908
        %4501 = vmatpush1.bf16.msra.mxu0 %v1907
        %4502 = vmatprep.subr.bf16.mxu0 %v2028
        %4503 = vmatpush2.bf16.msra.mxu0 %v2027
        %4504 = vmatprep.subr.bf16.mxu0 %v2020
        %4505 = vmatpush2.bf16.msra.mxu0 %v2019
        %4506 = vmatprep.subr.bf16.mxu0 %v2012
        %4507 = vmatpush2.bf16.msra.mxu0 %v2011
        %4508 = vmatprep.subr.bf16.mxu0 %v2004
        %4509 = vmatpush2.bf16.msra.mxu0 %v2003
        %4510 = vmatprep.subr.bf16.mxu0 %v1996
        %4511 = vmatpush2.bf16.msra.mxu0 %v1995
        %4512 = vmatprep.subr.bf16.mxu0 %v1988
        %4513 = vmatpush2.bf16.msra.mxu0 %v1987
        %4514 = vmatprep.subr.bf16.mxu0 %v1980
        %4515 = vmatpush2.bf16.msra.mxu0 %v1979
        %4516 = vmatprep.subr.bf16.mxu0 %v1972
        %4517 = vmatpush2.bf16.msra.mxu0 %v1971
        %4518 = vmatprep.mubr.bf16.mxu0 %v480
        %4519 = vmatmul.mubr.bf16.gmra.mxu0 %v479
        %v4520 = vpop.f32.mrf.mxu0
        %v4521 = vadd.f32 %v4480, %v4520
        %v4522 = vpop.f32.mrf.mxu0
        %v4523 = vadd.f32 %v4482, %v4522
        %v4524 = vpop.f32.mrf.mxu0
        %v4525 = vpop.f32.mrf.mxu0
        %4526 = vdwg.mxu0
        %4527 = vmatprep.subr.bf16.mxu0 %v2092
        %4528 = vmatpush1.bf16.msra.mxu0 %v2091
        %4529 = vmatprep.subr.bf16.mxu0 %v2084
        %4530 = vmatpush1.bf16.msra.mxu0 %v2083
        %4531 = vmatprep.subr.bf16.mxu0 %v2076
        %4532 = vmatpush1.bf16.msra.mxu0 %v2075
        %4533 = vmatprep.subr.bf16.mxu0 %v2068
        %4534 = vmatpush1.bf16.msra.mxu0 %v2067
        %4535 = vmatprep.subr.bf16.mxu0 %v2060
        %4536 = vmatpush1.bf16.msra.mxu0 %v2059
        %4537 = vmatprep.subr.bf16.mxu0 %v2052
        %4538 = vmatpush1.bf16.msra.mxu0 %v2051
        %4539 = vmatprep.subr.bf16.mxu0 %v2044
        %4540 = vmatpush1.bf16.msra.mxu0 %v2043
        %4541 = vmatprep.subr.bf16.mxu0 %v2036
        %4542 = vmatpush1.bf16.msra.mxu0 %v2035
        %4543 = vmatprep.subr.bf16.mxu0 %v2156
        %4544 = vmatpush2.bf16.msra.mxu0 %v2155
        %4545 = vmatprep.subr.bf16.mxu0 %v2148
        %4546 = vmatpush2.bf16.msra.mxu0 %v2147
        %4547 = vmatprep.subr.bf16.mxu0 %v2140
        %4548 = vmatpush2.bf16.msra.mxu0 %v2139
        %4549 = vmatprep.subr.bf16.mxu0 %v2132
        %4550 = vmatpush2.bf16.msra.mxu0 %v2131
        %4551 = vmatprep.subr.bf16.mxu0 %v2124
        %4552 = vmatpush2.bf16.msra.mxu0 %v2123
        %4553 = vmatprep.subr.bf16.mxu0 %v2116
        %4554 = vmatpush2.bf16.msra.mxu0 %v2115
        %4555 = vmatprep.subr.bf16.mxu0 %v2108
        %4556 = vmatpush2.bf16.msra.mxu0 %v2107
        %4557 = vmatprep.subr.bf16.mxu0 %v2100
        %4558 = vmatpush2.bf16.msra.mxu0 %v2099
        %4559 = vmatprep.mubr.bf16.mxu0 %v482
        %4560 = vmatmul.mubr.bf16.gmra.mxu0 %v481
        %v4561 = vpop.f32.mrf.mxu0
        %v4562 = vadd.f32 %v4521, %v4561
        %v4563 = vpop.f32.mrf.mxu0
        %v4564 = vadd.f32 %v4523, %v4563
        %v4565 = vpop.f32.mrf.mxu0
        %v4566 = vpop.f32.mrf.mxu0
        %4567 = vdwg.mxu0
        %4568 = vmatprep.subr.bf16.mxu0 %v2220
        %4569 = vmatpush1.bf16.msra.mxu0 %v2219
        %4570 = vmatprep.subr.bf16.mxu0 %v2212
        %4571 = vmatpush1.bf16.msra.mxu0 %v2211
        %4572 = vmatprep.subr.bf16.mxu0 %v2204
        %4573 = vmatpush1.bf16.msra.mxu0 %v2203
        %4574 = vmatprep.subr.bf16.mxu0 %v2196
        %4575 = vmatpush1.bf16.msra.mxu0 %v2195
        %4576 = vmatprep.subr.bf16.mxu0 %v2188
        %4577 = vmatpush1.bf16.msra.mxu0 %v2187
        %4578 = vmatprep.subr.bf16.mxu0 %v2180
        %4579 = vmatpush1.bf16.msra.mxu0 %v2179
        %4580 = vmatprep.subr.bf16.mxu0 %v2172
        %4581 = vmatpush1.bf16.msra.mxu0 %v2171
        %4582 = vmatprep.subr.bf16.mxu0 %v2164
        %4583 = vmatpush1.bf16.msra.mxu0 %v2163
        %4584 = vmatprep.subr.bf16.mxu0 %v2284
        %4585 = vmatpush2.bf16.msra.mxu0 %v2283
        %4586 = vmatprep.subr.bf16.mxu0 %v2276
        %4587 = vmatpush2.bf16.msra.mxu0 %v2275
        %4588 = vmatprep.subr.bf16.mxu0 %v2268
        %4589 = vmatpush2.bf16.msra.mxu0 %v2267
        %4590 = vmatprep.subr.bf16.mxu0 %v2260
        %4591 = vmatpush2.bf16.msra.mxu0 %v2259
        %4592 = vmatprep.subr.bf16.mxu0 %v2252
        %4593 = vmatpush2.bf16.msra.mxu0 %v2251
        %4594 = vmatprep.subr.bf16.mxu0 %v2244
        %4595 = vmatpush2.bf16.msra.mxu0 %v2243
        %4596 = vmatprep.subr.bf16.mxu0 %v2236
        %4597 = vmatpush2.bf16.msra.mxu0 %v2235
        %4598 = vmatprep.subr.bf16.mxu0 %v2228
        %4599 = vmatpush2.bf16.msra.mxu0 %v2227
        %4600 = vmatprep.mubr.bf16.mxu0 %v484
        %4601 = vmatmul.mubr.bf16.gmra.mxu0 %v483
        %v4602 = vpop.f32.mrf.mxu0
        %v4603 = vadd.f32 %v4562, %v4602
        %v4604 = vpop.f32.mrf.mxu0
        %v4605 = vadd.f32 %v4564, %v4604
        %v4606 = vpop.f32.mrf.mxu0
        %v4607 = vpop.f32.mrf.mxu0
        %4608 = vdwg.mxu0
        %4609 = vmatprep.subr.bf16.mxu0 %v2348
        %4610 = vmatpush1.bf16.msra.mxu0 %v2347
        %4611 = vmatprep.subr.bf16.mxu0 %v2340
        %4612 = vmatpush1.bf16.msra.mxu0 %v2339
        %4613 = vmatprep.subr.bf16.mxu0 %v2332
        %4614 = vmatpush1.bf16.msra.mxu0 %v2331
        %4615 = vmatprep.subr.bf16.mxu0 %v2324
        %4616 = vmatpush1.bf16.msra.mxu0 %v2323
        %4617 = vmatprep.subr.bf16.mxu0 %v2316
        %4618 = vmatpush1.bf16.msra.mxu0 %v2315
        %4619 = vmatprep.subr.bf16.mxu0 %v2308
        %4620 = vmatpush1.bf16.msra.mxu0 %v2307
        %4621 = vmatprep.subr.bf16.mxu0 %v2300
        %4622 = vmatpush1.bf16.msra.mxu0 %v2299
        %4623 = vmatprep.subr.bf16.mxu0 %v2292
        %4624 = vmatpush1.bf16.msra.mxu0 %v2291
        %4625 = vmatprep.subr.bf16.mxu0 %v2412
        %4626 = vmatpush2.bf16.msra.mxu0 %v2411
        %4627 = vmatprep.subr.bf16.mxu0 %v2404
        %4628 = vmatpush2.bf16.msra.mxu0 %v2403
        %4629 = vmatprep.subr.bf16.mxu0 %v2396
        %4630 = vmatpush2.bf16.msra.mxu0 %v2395
        %4631 = vmatprep.subr.bf16.mxu0 %v2388
        %4632 = vmatpush2.bf16.msra.mxu0 %v2387
        %4633 = vmatprep.subr.bf16.mxu0 %v2380
        %4634 = vmatpush2.bf16.msra.mxu0 %v2379
        %4635 = vmatprep.subr.bf16.mxu0 %v2372
        %4636 = vmatpush2.bf16.msra.mxu0 %v2371
        %4637 = vmatprep.subr.bf16.mxu0 %v2364
        %4638 = vmatpush2.bf16.msra.mxu0 %v2363
        %4639 = vmatprep.subr.bf16.mxu0 %v2356
        %4640 = vmatpush2.bf16.msra.mxu0 %v2355
        %4641 = vmatprep.mubr.bf16.mxu0 %v486
        %4642 = vmatmul.mubr.bf16.gmra.mxu0 %v485
        %v4643 = vpop.f32.mrf.mxu0
        %v4644 = vadd.f32 %v4603, %v4643
        %v4645 = vpop.f32.mrf.mxu0
        %v4646 = vadd.f32 %v4605, %v4645
        %v4647 = vpop.f32.mrf.mxu0
        %v4648 = vpop.f32.mrf.mxu0
        %4649 = vdwg.mxu0
        %4650 = vmatprep.subr.bf16.mxu0 %v2476
        %4651 = vmatpush1.bf16.msra.mxu0 %v2475
        %4652 = vmatprep.subr.bf16.mxu0 %v2468
        %4653 = vmatpush1.bf16.msra.mxu0 %v2467
        %4654 = vmatprep.subr.bf16.mxu0 %v2460
        %4655 = vmatpush1.bf16.msra.mxu0 %v2459
        %4656 = vmatprep.subr.bf16.mxu0 %v2452
        %4657 = vmatpush1.bf16.msra.mxu0 %v2451
        %4658 = vmatprep.subr.bf16.mxu0 %v2444
        %4659 = vmatpush1.bf16.msra.mxu0 %v2443
        %4660 = vmatprep.subr.bf16.mxu0 %v2436
        %4661 = vmatpush1.bf16.msra.mxu0 %v2435
        %4662 = vmatprep.subr.bf16.mxu0 %v2428
        %4663 = vmatpush1.bf16.msra.mxu0 %v2427
        %4664 = vmatprep.subr.bf16.mxu0 %v2420
        %4665 = vmatpush1.bf16.msra.mxu0 %v2419
        %4666 = vmatprep.subr.bf16.mxu0 %v2540
        %4667 = vmatpush2.bf16.msra.mxu0 %v2539
        %4668 = vmatprep.subr.bf16.mxu0 %v2532
        %4669 = vmatpush2.bf16.msra.mxu0 %v2531
        %4670 = vmatprep.subr.bf16.mxu0 %v2524
        %4671 = vmatpush2.bf16.msra.mxu0 %v2523
        %4672 = vmatprep.subr.bf16.mxu0 %v2516
        %4673 = vmatpush2.bf16.msra.mxu0 %v2515
        %4674 = vmatprep.subr.bf16.mxu0 %v2508
        %4675 = vmatpush2.bf16.msra.mxu0 %v2507
        %4676 = vmatprep.subr.bf16.mxu0 %v2500
        %4677 = vmatpush2.bf16.msra.mxu0 %v2499
        %4678 = vmatprep.subr.bf16.mxu0 %v2492
        %4679 = vmatpush2.bf16.msra.mxu0 %v2491
        %4680 = vmatprep.subr.bf16.mxu0 %v2484
        %4681 = vmatpush2.bf16.msra.mxu0 %v2483
        %4682 = vmatprep.mubr.bf16.mxu0 %v488
        %4683 = vmatmul.mubr.bf16.gmra.mxu0 %v487
        %v4684 = vpop.f32.mrf.mxu0
        %v4685 = vadd.f32 %v4644, %v4684
        %v4686 = vpop.f32.mrf.mxu0
        %v4687 = vadd.f32 %v4646, %v4686
        %v4688 = vpop.f32.mrf.mxu0
        %v4689 = vpop.f32.mrf.mxu0
        %4690 = vdwg.mxu0
        %4691 = vmatprep.subr.bf16.mxu0 %v2604
        %4692 = vmatpush1.bf16.msra.mxu0 %v2603
        %4693 = vmatprep.subr.bf16.mxu0 %v2596
        %4694 = vmatpush1.bf16.msra.mxu0 %v2595
        %4695 = vmatprep.subr.bf16.mxu0 %v2588
        %4696 = vmatpush1.bf16.msra.mxu0 %v2587
        %4697 = vmatprep.subr.bf16.mxu0 %v2580
        %4698 = vmatpush1.bf16.msra.mxu0 %v2579
        %4699 = vmatprep.subr.bf16.mxu0 %v2572
        %4700 = vmatpush1.bf16.msra.mxu0 %v2571
        %4701 = vmatprep.subr.bf16.mxu0 %v2564
        %4702 = vmatpush1.bf16.msra.mxu0 %v2563
        %4703 = vmatprep.subr.bf16.mxu0 %v2556
        %4704 = vmatpush1.bf16.msra.mxu0 %v2555
        %4705 = vmatprep.subr.bf16.mxu0 %v2548
        %4706 = vmatpush1.bf16.msra.mxu0 %v2547
        %4707 = vmatprep.subr.bf16.mxu0 %v2668
        %4708 = vmatpush2.bf16.msra.mxu0 %v2667
        %4709 = vmatprep.subr.bf16.mxu0 %v2660
        %4710 = vmatpush2.bf16.msra.mxu0 %v2659
        %4711 = vmatprep.subr.bf16.mxu0 %v2652
        %4712 = vmatpush2.bf16.msra.mxu0 %v2651
        %4713 = vmatprep.subr.bf16.mxu0 %v2644
        %4714 = vmatpush2.bf16.msra.mxu0 %v2643
        %4715 = vmatprep.subr.bf16.mxu0 %v2636
        %4716 = vmatpush2.bf16.msra.mxu0 %v2635
        %4717 = vmatprep.subr.bf16.mxu0 %v2628
        %4718 = vmatpush2.bf16.msra.mxu0 %v2627
        %4719 = vmatprep.subr.bf16.mxu0 %v2620
        %4720 = vmatpush2.bf16.msra.mxu0 %v2619
        %4721 = vmatprep.subr.bf16.mxu0 %v2612
        %4722 = vmatpush2.bf16.msra.mxu0 %v2611
        %4723 = vmatprep.mubr.bf16.mxu0 %v490
        %4724 = vmatmul.mubr.bf16.gmra.mxu0 %v489
        %v4725 = vpop.f32.mrf.mxu0
        %v4726 = vadd.f32 %v4685, %v4725
        %v4727 = vpop.f32.mrf.mxu0
        %v4728 = vadd.f32 %v4687, %v4727
        %v4729 = vpop.f32.mrf.mxu0
        %v4730 = vpop.f32.mrf.mxu0
        %4731 = vdwg.mxu0
        %4732 = vmatprep.subr.bf16.mxu0 %v2732
        %4733 = vmatpush1.bf16.msra.mxu0 %v2731
        %4734 = vmatprep.subr.bf16.mxu0 %v2724
        %4735 = vmatpush1.bf16.msra.mxu0 %v2723
        %4736 = vmatprep.subr.bf16.mxu0 %v2716
        %4737 = vmatpush1.bf16.msra.mxu0 %v2715
        %4738 = vmatprep.subr.bf16.mxu0 %v2708
        %4739 = vmatpush1.bf16.msra.mxu0 %v2707
        %4740 = vmatprep.subr.bf16.mxu0 %v2700
        %4741 = vmatpush1.bf16.msra.mxu0 %v2699
        %4742 = vmatprep.subr.bf16.mxu0 %v2692
        %4743 = vmatpush1.bf16.msra.mxu0 %v2691
        %4744 = vmatprep.subr.bf16.mxu0 %v2684
        %4745 = vmatpush1.bf16.msra.mxu0 %v2683
        %4746 = vmatprep.subr.bf16.mxu0 %v2676
        %4747 = vmatpush1.bf16.msra.mxu0 %v2675
        %4748 = vmatprep.subr.bf16.mxu0 %v2796
        %4749 = vmatpush2.bf16.msra.mxu0 %v2795
        %4750 = vmatprep.subr.bf16.mxu0 %v2788
        %4751 = vmatpush2.bf16.msra.mxu0 %v2787
        %4752 = vmatprep.subr.bf16.mxu0 %v2780
        %4753 = vmatpush2.bf16.msra.mxu0 %v2779
        %4754 = vmatprep.subr.bf16.mxu0 %v2772
        %4755 = vmatpush2.bf16.msra.mxu0 %v2771
        %4756 = vmatprep.subr.bf16.mxu0 %v2764
        %4757 = vmatpush2.bf16.msra.mxu0 %v2763
        %4758 = vmatprep.subr.bf16.mxu0 %v2756
        %4759 = vmatpush2.bf16.msra.mxu0 %v2755
        %4760 = vmatprep.subr.bf16.mxu0 %v2748
        %4761 = vmatpush2.bf16.msra.mxu0 %v2747
        %4762 = vmatprep.subr.bf16.mxu0 %v2740
        %4763 = vmatpush2.bf16.msra.mxu0 %v2739
        %4764 = vmatprep.mubr.bf16.mxu0 %v492
        %4765 = vmatmul.mubr.bf16.gmra.mxu0 %v491
        %v4766 = vpop.f32.mrf.mxu0
        %v4767 = vadd.f32 %v4726, %v4766
        %v4768 = vpop.f32.mrf.mxu0
        %v4769 = vadd.f32 %v4728, %v4768
        %v4770 = vpop.f32.mrf.mxu0
        %v4771 = vpop.f32.mrf.mxu0
        %4772 = vdwg.mxu0
        %v4773 = vadd.f32 %v2797, %v3291
        %v4774 = vadd.f32 %v2798, %v3293
        %v4775 = vadd.f32 %v2799, %v3783
        %v4776 = vadd.f32 %v2800, %v3785
        %v4777 = vadd.f32 %v2801, %v4275
        %v4778 = vadd.f32 %v2802, %v4277
        %v4779 = vadd.f32 %v2803, %v4767
        %v4780 = vadd.f32 %v2804, %v4769
        %4781 = vst [vmem:[#allocation2] sm:$0xff] %v4773
        %4782 = vst [vmem:[#allocation2 + $0x8] sm:$0xff] %v4774
        %4783 = vst [vmem:[#allocation2 + $0x10] sm:$0xff] %v4775
        %4784 = vst [vmem:[#allocation2 + $0x18] sm:$0xff] %v4776
        %4785 = vst [vmem:[#allocation2 + $0x20] sm:$0xff] %v4777
        %4786 = vst [vmem:[#allocation2 + $0x28] sm:$0xff] %v4778
        %4787 = vst [vmem:[#allocation2 + $0x30] sm:$0xff] %v4779
        %4788 = vst [vmem:[#allocation2 + $0x38] sm:$0xff] %v4780
        %p4789 = scmp.eq.s32.totalorder %s29, 2
        // Predicated region
        $region89: #{tpu_custom_call.1} parent=51 // pred_check
          %p4790 = pneg %p4789
        $region90: #{tpu_custom_call.1} parent=51 // pred_check_branch
          %4792 = sbr.rel (%p4790) target = $region92
        $region91: #{tpu_custom_call.1} parent=51 // pred_region
          %v4793 = vld [vmem:[#allocation2] sm:$0xff]
          %v4794 = vld [vmem:[#allocation2 + $0x8] sm:$0xff]
          %v4795 = vld [vmem:[#allocation2 + $0x10] sm:$0xff]
          %v4796 = vld [vmem:[#allocation2 + $0x18] sm:$0xff]
          %v4797 = vld [vmem:[#allocation2 + $0x20] sm:$0xff]
          %v4798 = vld [vmem:[#allocation2 + $0x28] sm:$0xff]
          %v4799 = vld [vmem:[#allocation2 + $0x30] sm:$0xff]
          %v4800 = vld [vmem:[#allocation2 + $0x38] sm:$0xff]
          %v4801 = vld [vmem:[#allocation8] sm:$0xff]
          %v4803 = vlaneseq
          %v4804 = vshrl.u32 %v4803, 7
          %v4805 = vsub.s32 0, %v4804
          %v4806 = vrot.slane %v4801, %v4805
          %v4807 = vlaneseq
          %v4808 = vshrl.u32 %v4807, 7
          %v4809 = vsub.s32 1, %v4808
          %v4810 = vrot.slane %v4801, %v4809
          %v4811 = vlaneseq
          %v4812 = vshrl.u32 %v4811, 7
          %v4813 = vsub.s32 2, %v4812
          %v4814 = vrot.slane %v4801, %v4813
          %v4815 = vlaneseq
          %v4816 = vshrl.u32 %v4815, 7
          %v4817 = vsub.s32 3, %v4816
          %v4818 = vrot.slane %v4801, %v4817
          %v4819 = vlaneseq
          %v4820 = vshrl.u32 %v4819, 7
          %v4821 = vsub.s32 4, %v4820
          %v4822 = vrot.slane %v4801, %v4821
          %v4823 = vlaneseq
          %v4824 = vshrl.u32 %v4823, 7
          %v4825 = vsub.s32 5, %v4824
          %v4826 = vrot.slane %v4801, %v4825
          %v4827 = vlaneseq
          %v4828 = vshrl.u32 %v4827, 7
          %v4829 = vsub.s32 6, %v4828
          %v4830 = vrot.slane %v4801, %v4829
          %v4831 = vlaneseq
          %v4832 = vshrl.u32 %v4831, 7
          %v4833 = vsub.s32 7, %v4832
          %v4834 = vrot.slane %v4801, %v4833
          %v4843 = vmul.f32 %v4793, %v4806
          %v4844 = vmul.f32 %v4794, %v4810
          %v4845 = vmul.f32 %v4795, %v4814
          %v4846 = vmul.f32 %v4796, %v4818
          %v4847 = vmul.f32 %v4797, %v4822
          %v4848 = vmul.f32 %v4798, %v4826
          %v4849 = vmul.f32 %v4799, %v4830
          %v4850 = vmul.f32 %v4800, %v4834
          %v4851 = vld [vmem:[#allocation9] sm:$0xff]
          %v4853 = vlaneseq
          %v4854 = vshrl.u32 %v4853, 7
          %v4855 = vsub.s32 0, %v4854
          %v4856 = vrot.slane %v4851, %v4855
          %v4857 = vlaneseq
          %v4858 = vshrl.u32 %v4857, 7
          %v4859 = vsub.s32 1, %v4858
          %v4860 = vrot.slane %v4851, %v4859
          %v4861 = vlaneseq
          %v4862 = vshrl.u32 %v4861, 7
          %v4863 = vsub.s32 2, %v4862
          %v4864 = vrot.slane %v4851, %v4863
          %v4865 = vlaneseq
          %v4866 = vshrl.u32 %v4865, 7
          %v4867 = vsub.s32 3, %v4866
          %v4868 = vrot.slane %v4851, %v4867
          %v4869 = vlaneseq
          %v4870 = vshrl.u32 %v4869, 7
          %v4871 = vsub.s32 4, %v4870
          %v4872 = vrot.slane %v4851, %v4871
          %v4873 = vlaneseq
          %v4874 = vshrl.u32 %v4873, 7
          %v4875 = vsub.s32 5, %v4874
          %v4876 = vrot.slane %v4851, %v4875
          %v4877 = vlaneseq
          %v4878 = vshrl.u32 %v4877, 7
          %v4879 = vsub.s32 6, %v4878
          %v4880 = vrot.slane %v4851, %v4879
          %v4881 = vlaneseq
          %v4882 = vshrl.u32 %v4881, 7
          %v4883 = vsub.s32 7, %v4882
          %v4884 = vrot.slane %v4851, %v4883
          %v4893 = vadd.f32 %v4843, %v4856
          %v4894 = vadd.f32 %v4844, %v4860
          %v4895 = vadd.f32 %v4845, %v4864
          %v4896 = vadd.f32 %v4846, %v4868
          %v4897 = vadd.f32 %v4847, %v4872
          %v4898 = vadd.f32 %v4848, %v4876
          %v4899 = vadd.f32 %v4849, %v4880
          %v4900 = vadd.f32 %v4850, %v4884
          %vm4901 = vcmp.ge.f32.partialorder %v4893, 0.0
          %vm4902 = vcmp.ge.f32.partialorder %v4894, 0.0
          %vm4903 = vcmp.ge.f32.partialorder %v4895, 0.0
          %vm4904 = vcmp.ge.f32.partialorder %v4896, 0.0
          %vm4905 = vcmp.ge.f32.partialorder %v4897, 0.0
          %vm4906 = vcmp.ge.f32.partialorder %v4898, 0.0
          %vm4907 = vcmp.ge.f32.partialorder %v4899, 0.0
          %vm4908 = vcmp.ge.f32.partialorder %v4900, 0.0
          %v4909 = vmul.f32 %v4893, 0.01
          %v4910 = vmul.f32 %v4894, 0.01
          %v4911 = vmul.f32 %v4895, 0.01
          %v4912 = vmul.f32 %v4896, 0.01
          %v4913 = vmul.f32 %v4897, 0.01
          %v4914 = vmul.f32 %v4898, 0.01
          %v4915 = vmul.f32 %v4899, 0.01
          %v4916 = vmul.f32 %v4900, 0.01
          %v4917 = vsel %vm4901, %v4893, %v4909
          %v4918 = vsel %vm4902, %v4894, %v4910
          %v4919 = vsel %vm4903, %v4895, %v4911
          %v4920 = vsel %vm4904, %v4896, %v4912
          %v4921 = vsel %vm4905, %v4897, %v4913
          %v4922 = vsel %vm4906, %v4898, %v4914
          %v4923 = vsel %vm4907, %v4899, %v4915
          %v4924 = vsel %vm4908, %v4900, %v4916
          %v4925 = vpack.c.bf16 %v4917, %v4917
          %v4926 = vpack.c.bf16 %v4918, %v4918
          %v4927 = vpack.c.bf16 %v4919, %v4919
          %v4928 = vpack.c.bf16 %v4920, %v4920
          %v4929 = vpack.c.bf16 %v4921, %v4921
          %v4930 = vpack.c.bf16 %v4922, %v4922
          %v4931 = vpack.c.bf16 %v4923, %v4923
          %v4932 = vpack.c.bf16 %v4924, %v4924
          %v4933 = vld [vmem:[#allocation11] sm:$0xff]
          %v4934 = vld [vmem:[#allocation11 + $0x8] sm:$0xff]
          %v4935 = vld [vmem:[#allocation11 + $0x10] sm:$0xff]
          %v4936 = vld [vmem:[#allocation11 + $0x18] sm:$0xff]
          %v4937 = vld [vmem:[#allocation11 + $0x20] sm:$0xff]
          %v4938 = vld [vmem:[#allocation11 + $0x28] sm:$0xff]
          %v4939 = vld [vmem:[#allocation11 + $0x30] sm:$0xff]
          %v4940 = vld [vmem:[#allocation11 + $0x38] sm:$0xff]
          %v4941 = vld [vmem:[#allocation11 + $0x40] sm:$0xff]
          %v4942 = vld [vmem:[#allocation11 + $0x48] sm:$0xff]
          %v4943 = vld [vmem:[#allocation11 + $0x50] sm:$0xff]
          %v4944 = vld [vmem:[#allocation11 + $0x58] sm:$0xff]
          %v4945 = vld [vmem:[#allocation11 + $0x60] sm:$0xff]
          %v4946 = vld [vmem:[#allocation11 + $0x68] sm:$0xff]
          %v4947 = vld [vmem:[#allocation11 + $0x70] sm:$0xff]
          %v4948 = vld [vmem:[#allocation11 + $0x78] sm:$0xff]
          %v4949 = vld [vmem:[#allocation11 + $0x80] sm:$0xff]
          %v4950 = vld [vmem:[#allocation11 + $0x88] sm:$0xff]
          %v4951 = vld [vmem:[#allocation11 + $0x90] sm:$0xff]
          %v4952 = vld [vmem:[#allocation11 + $0x98] sm:$0xff]
          %v4953 = vld [vmem:[#allocation11 + $0xa0] sm:$0xff]
          %v4954 = vld [vmem:[#allocation11 + $0xa8] sm:$0xff]
          %v4955 = vld [vmem:[#allocation11 + $0xb0] sm:$0xff]
          %v4956 = vld [vmem:[#allocation11 + $0xb8] sm:$0xff]
          %v4957 = vld [vmem:[#allocation11 + $0xc0] sm:$0xff]
          %v4958 = vld [vmem:[#allocation11 + $0xc8] sm:$0xff]
          %v4959 = vld [vmem:[#allocation11 + $0xd0] sm:$0xff]
          %v4960 = vld [vmem:[#allocation11 + $0xd8] sm:$0xff]
          %v4961 = vld [vmem:[#allocation11 + $0xe0] sm:$0xff]
          %v4962 = vld [vmem:[#allocation11 + $0xe8] sm:$0xff]
          %v4963 = vld [vmem:[#allocation11 + $0xf0] sm:$0xff]
          %v4964 = vld [vmem:[#allocation11 + $0xf8] sm:$0xff]
          %v4965 = vld [vmem:[#allocation11 + $0x100] sm:$0xff]
          %v4966 = vld [vmem:[#allocation11 + $0x108] sm:$0xff]
          %v4967 = vld [vmem:[#allocation11 + $0x110] sm:$0xff]
          %v4968 = vld [vmem:[#allocation11 + $0x118] sm:$0xff]
          %v4969 = vld [vmem:[#allocation11 + $0x120] sm:$0xff]
          %v4970 = vld [vmem:[#allocation11 + $0x128] sm:$0xff]
          %v4971 = vld [vmem:[#allocation11 + $0x130] sm:$0xff]
          %v4972 = vld [vmem:[#allocation11 + $0x138] sm:$0xff]
          %v4973 = vld [vmem:[#allocation11 + $0x140] sm:$0xff]
          %v4974 = vld [vmem:[#allocation11 + $0x148] sm:$0xff]
          %v4975 = vld [vmem:[#allocation11 + $0x150] sm:$0xff]
          %v4976 = vld [vmem:[#allocation11 + $0x158] sm:$0xff]
          %v4977 = vld [vmem:[#allocation11 + $0x160] sm:$0xff]
          %v4978 = vld [vmem:[#allocation11 + $0x168] sm:$0xff]
          %v4979 = vld [vmem:[#allocation11 + $0x170] sm:$0xff]
          %v4980 = vld [vmem:[#allocation11 + $0x178] sm:$0xff]
          %v4981 = vld [vmem:[#allocation11 + $0x180] sm:$0xff]
          %v4982 = vld [vmem:[#allocation11 + $0x188] sm:$0xff]
          %v4983 = vld [vmem:[#allocation11 + $0x190] sm:$0xff]
          %v4984 = vld [vmem:[#allocation11 + $0x198] sm:$0xff]
          %v4985 = vld [vmem:[#allocation11 + $0x1a0] sm:$0xff]
          %v4986 = vld [vmem:[#allocation11 + $0x1a8] sm:$0xff]
          %v4987 = vld [vmem:[#allocation11 + $0x1b0] sm:$0xff]
          %v4988 = vld [vmem:[#allocation11 + $0x1b8] sm:$0xff]
          %v4989 = vld [vmem:[#allocation11 + $0x1c0] sm:$0xff]
          %v4990 = vld [vmem:[#allocation11 + $0x1c8] sm:$0xff]
          %v4991 = vld [vmem:[#allocation11 + $0x1d0] sm:$0xff]
          %v4992 = vld [vmem:[#allocation11 + $0x1d8] sm:$0xff]
          %v4993 = vld [vmem:[#allocation11 + $0x1e0] sm:$0xff]
          %v4994 = vld [vmem:[#allocation11 + $0x1e8] sm:$0xff]
          %v4995 = vld [vmem:[#allocation11 + $0x1f0] sm:$0xff]
          %v4996 = vld [vmem:[#allocation11 + $0x1f8] sm:$0xff]
          %v4997 = vld [vmem:[#allocation11 + $0x200] sm:$0xff]
          %v4998 = vld [vmem:[#allocation11 + $0x208] sm:$0xff]
          %v4999 = vld [vmem:[#allocation11 + $0x210] sm:$0xff]
          %v5000 = vld [vmem:[#allocation11 + $0x218] sm:$0xff]
          %v5001 = vld [vmem:[#allocation11 + $0x220] sm:$0xff]
          %v5002 = vld [vmem:[#allocation11 + $0x228] sm:$0xff]
          %v5003 = vld [vmem:[#allocation11 + $0x230] sm:$0xff]
          %v5004 = vld [vmem:[#allocation11 + $0x238] sm:$0xff]
          %v5005 = vld [vmem:[#allocation11 + $0x240] sm:$0xff]
          %v5006 = vld [vmem:[#allocation11 + $0x248] sm:$0xff]
          %v5007 = vld [vmem:[#allocation11 + $0x250] sm:$0xff]
          %v5008 = vld [vmem:[#allocation11 + $0x258] sm:$0xff]
          %v5009 = vld [vmem:[#allocation11 + $0x260] sm:$0xff]
          %v5010 = vld [vmem:[#allocation11 + $0x268] sm:$0xff]
          %v5011 = vld [vmem:[#allocation11 + $0x270] sm:$0xff]
          %v5012 = vld [vmem:[#allocation11 + $0x278] sm:$0xff]
          %v5013 = vld [vmem:[#allocation11 + $0x280] sm:$0xff]
          %v5014 = vld [vmem:[#allocation11 + $0x288] sm:$0xff]
          %v5015 = vld [vmem:[#allocation11 + $0x290] sm:$0xff]
          %v5016 = vld [vmem:[#allocation11 + $0x298] sm:$0xff]
          %v5017 = vld [vmem:[#allocation11 + $0x2a0] sm:$0xff]
          %v5018 = vld [vmem:[#allocation11 + $0x2a8] sm:$0xff]
          %v5019 = vld [vmem:[#allocation11 + $0x2b0] sm:$0xff]
          %v5020 = vld [vmem:[#allocation11 + $0x2b8] sm:$0xff]
          %v5021 = vld [vmem:[#allocation11 + $0x2c0] sm:$0xff]
          %v5022 = vld [vmem:[#allocation11 + $0x2c8] sm:$0xff]
          %v5023 = vld [vmem:[#allocation11 + $0x2d0] sm:$0xff]
          %v5024 = vld [vmem:[#allocation11 + $0x2d8] sm:$0xff]
          %v5025 = vld [vmem:[#allocation11 + $0x2e0] sm:$0xff]
          %v5026 = vld [vmem:[#allocation11 + $0x2e8] sm:$0xff]
          %v5027 = vld [vmem:[#allocation11 + $0x2f0] sm:$0xff]
          %v5028 = vld [vmem:[#allocation11 + $0x2f8] sm:$0xff]
          %v5029 = vld [vmem:[#allocation11 + $0x300] sm:$0xff]
          %v5030 = vld [vmem:[#allocation11 + $0x308] sm:$0xff]
          %v5031 = vld [vmem:[#allocation11 + $0x310] sm:$0xff]
          %v5032 = vld [vmem:[#allocation11 + $0x318] sm:$0xff]
          %v5033 = vld [vmem:[#allocation11 + $0x320] sm:$0xff]
          %v5034 = vld [vmem:[#allocation11 + $0x328] sm:$0xff]
          %v5035 = vld [vmem:[#allocation11 + $0x330] sm:$0xff]
          %v5036 = vld [vmem:[#allocation11 + $0x338] sm:$0xff]
          %v5037 = vld [vmem:[#allocation11 + $0x340] sm:$0xff]
          %v5038 = vld [vmem:[#allocation11 + $0x348] sm:$0xff]
          %v5039 = vld [vmem:[#allocation11 + $0x350] sm:$0xff]
          %v5040 = vld [vmem:[#allocation11 + $0x358] sm:$0xff]
          %v5041 = vld [vmem:[#allocation11 + $0x360] sm:$0xff]
          %v5042 = vld [vmem:[#allocation11 + $0x368] sm:$0xff]
          %v5043 = vld [vmem:[#allocation11 + $0x370] sm:$0xff]
          %v5044 = vld [vmem:[#allocation11 + $0x378] sm:$0xff]
          %v5045 = vld [vmem:[#allocation11 + $0x380] sm:$0xff]
          %v5046 = vld [vmem:[#allocation11 + $0x388] sm:$0xff]
          %v5047 = vld [vmem:[#allocation11 + $0x390] sm:$0xff]
          %v5048 = vld [vmem:[#allocation11 + $0x398] sm:$0xff]
          %v5049 = vld [vmem:[#allocation11 + $0x3a0] sm:$0xff]
          %v5050 = vld [vmem:[#allocation11 + $0x3a8] sm:$0xff]
          %v5051 = vld [vmem:[#allocation11 + $0x3b0] sm:$0xff]
          %v5052 = vld [vmem:[#allocation11 + $0x3b8] sm:$0xff]
          %v5053 = vld [vmem:[#allocation11 + $0x3c0] sm:$0xff]
          %v5054 = vld [vmem:[#allocation11 + $0x3c8] sm:$0xff]
          %v5055 = vld [vmem:[#allocation11 + $0x3d0] sm:$0xff]
          %v5056 = vld [vmem:[#allocation11 + $0x3d8] sm:$0xff]
          %v5057 = vld [vmem:[#allocation11 + $0x3e0] sm:$0xff]
          %v5058 = vld [vmem:[#allocation11 + $0x3e8] sm:$0xff]
          %v5059 = vld [vmem:[#allocation11 + $0x3f0] sm:$0xff]
          %v5060 = vld [vmem:[#allocation11 + $0x3f8] sm:$0xff]
          %v5061 = vld [vmem:[#allocation11 + $0x400] sm:$0xff]
          %v5062 = vld [vmem:[#allocation11 + $0x408] sm:$0xff]
          %v5063 = vld [vmem:[#allocation11 + $0x410] sm:$0xff]
          %v5064 = vld [vmem:[#allocation11 + $0x418] sm:$0xff]
          %v5065 = vld [vmem:[#allocation11 + $0x420] sm:$0xff]
          %v5066 = vld [vmem:[#allocation11 + $0x428] sm:$0xff]
          %v5067 = vld [vmem:[#allocation11 + $0x430] sm:$0xff]
          %v5068 = vld [vmem:[#allocation11 + $0x438] sm:$0xff]
          %v5069 = vld [vmem:[#allocation11 + $0x440] sm:$0xff]
          %v5070 = vld [vmem:[#allocation11 + $0x448] sm:$0xff]
          %v5071 = vld [vmem:[#allocation11 + $0x450] sm:$0xff]
          %v5072 = vld [vmem:[#allocation11 + $0x458] sm:$0xff]
          %v5073 = vld [vmem:[#allocation11 + $0x460] sm:$0xff]
          %v5074 = vld [vmem:[#allocation11 + $0x468] sm:$0xff]
          %v5075 = vld [vmem:[#allocation11 + $0x470] sm:$0xff]
          %v5076 = vld [vmem:[#allocation11 + $0x478] sm:$0xff]
          %v5077 = vld [vmem:[#allocation11 + $0x480] sm:$0xff]
          %v5078 = vld [vmem:[#allocation11 + $0x488] sm:$0xff]
          %v5079 = vld [vmem:[#allocation11 + $0x490] sm:$0xff]
          %v5080 = vld [vmem:[#allocation11 + $0x498] sm:$0xff]
          %v5081 = vld [vmem:[#allocation11 + $0x4a0] sm:$0xff]
          %v5082 = vld [vmem:[#allocation11 + $0x4a8] sm:$0xff]
          %v5083 = vld [vmem:[#allocation11 + $0x4b0] sm:$0xff]
          %v5084 = vld [vmem:[#allocation11 + $0x4b8] sm:$0xff]
          %v5085 = vld [vmem:[#allocation11 + $0x4c0] sm:$0xff]
          %v5086 = vld [vmem:[#allocation11 + $0x4c8] sm:$0xff]
          %v5087 = vld [vmem:[#allocation11 + $0x4d0] sm:$0xff]
          %v5088 = vld [vmem:[#allocation11 + $0x4d8] sm:$0xff]
          %v5089 = vld [vmem:[#allocation11 + $0x4e0] sm:$0xff]
          %v5090 = vld [vmem:[#allocation11 + $0x4e8] sm:$0xff]
          %v5091 = vld [vmem:[#allocation11 + $0x4f0] sm:$0xff]
          %v5092 = vld [vmem:[#allocation11 + $0x4f8] sm:$0xff]
          %v5093 = vld [vmem:[#allocation11 + $0x500] sm:$0xff]
          %v5094 = vld [vmem:[#allocation11 + $0x508] sm:$0xff]
          %v5095 = vld [vmem:[#allocation11 + $0x510] sm:$0xff]
          %v5096 = vld [vmem:[#allocation11 + $0x518] sm:$0xff]
          %v5097 = vld [vmem:[#allocation11 + $0x520] sm:$0xff]
          %v5098 = vld [vmem:[#allocation11 + $0x528] sm:$0xff]
          %v5099 = vld [vmem:[#allocation11 + $0x530] sm:$0xff]
          %v5100 = vld [vmem:[#allocation11 + $0x538] sm:$0xff]
          %v5101 = vld [vmem:[#allocation11 + $0x540] sm:$0xff]
          %v5102 = vld [vmem:[#allocation11 + $0x548] sm:$0xff]
          %v5103 = vld [vmem:[#allocation11 + $0x550] sm:$0xff]
          %v5104 = vld [vmem:[#allocation11 + $0x558] sm:$0xff]
          %v5105 = vld [vmem:[#allocation11 + $0x560] sm:$0xff]
          %v5106 = vld [vmem:[#allocation11 + $0x568] sm:$0xff]
          %v5107 = vld [vmem:[#allocation11 + $0x570] sm:$0xff]
          %v5108 = vld [vmem:[#allocation11 + $0x578] sm:$0xff]
          %v5109 = vld [vmem:[#allocation11 + $0x580] sm:$0xff]
          %v5110 = vld [vmem:[#allocation11 + $0x588] sm:$0xff]
          %v5111 = vld [vmem:[#allocation11 + $0x590] sm:$0xff]
          %v5112 = vld [vmem:[#allocation11 + $0x598] sm:$0xff]
          %v5113 = vld [vmem:[#allocation11 + $0x5a0] sm:$0xff]
          %v5114 = vld [vmem:[#allocation11 + $0x5a8] sm:$0xff]
          %v5115 = vld [vmem:[#allocation11 + $0x5b0] sm:$0xff]
          %v5116 = vld [vmem:[#allocation11 + $0x5b8] sm:$0xff]
          %v5117 = vld [vmem:[#allocation11 + $0x5c0] sm:$0xff]
          %v5118 = vld [vmem:[#allocation11 + $0x5c8] sm:$0xff]
          %v5119 = vld [vmem:[#allocation11 + $0x5d0] sm:$0xff]
          %v5120 = vld [vmem:[#allocation11 + $0x5d8] sm:$0xff]
          %v5121 = vld [vmem:[#allocation11 + $0x5e0] sm:$0xff]
          %v5122 = vld [vmem:[#allocation11 + $0x5e8] sm:$0xff]
          %v5123 = vld [vmem:[#allocation11 + $0x5f0] sm:$0xff]
          %v5124 = vld [vmem:[#allocation11 + $0x5f8] sm:$0xff]
          %v5125 = vld [vmem:[#allocation11 + $0x600] sm:$0xff]
          %v5126 = vld [vmem:[#allocation11 + $0x608] sm:$0xff]
          %v5127 = vld [vmem:[#allocation11 + $0x610] sm:$0xff]
          %v5128 = vld [vmem:[#allocation11 + $0x618] sm:$0xff]
          %v5129 = vld [vmem:[#allocation11 + $0x620] sm:$0xff]
          %v5130 = vld [vmem:[#allocation11 + $0x628] sm:$0xff]
          %v5131 = vld [vmem:[#allocation11 + $0x630] sm:$0xff]
          %v5132 = vld [vmem:[#allocation11 + $0x638] sm:$0xff]
          %v5133 = vld [vmem:[#allocation11 + $0x640] sm:$0xff]
          %v5134 = vld [vmem:[#allocation11 + $0x648] sm:$0xff]
          %v5135 = vld [vmem:[#allocation11 + $0x650] sm:$0xff]
          %v5136 = vld [vmem:[#allocation11 + $0x658] sm:$0xff]
          %v5137 = vld [vmem:[#allocation11 + $0x660] sm:$0xff]
          %v5138 = vld [vmem:[#allocation11 + $0x668] sm:$0xff]
          %v5139 = vld [vmem:[#allocation11 + $0x670] sm:$0xff]
          %v5140 = vld [vmem:[#allocation11 + $0x678] sm:$0xff]
          %v5141 = vld [vmem:[#allocation11 + $0x680] sm:$0xff]
          %v5142 = vld [vmem:[#allocation11 + $0x688] sm:$0xff]
          %v5143 = vld [vmem:[#allocation11 + $0x690] sm:$0xff]
          %v5144 = vld [vmem:[#allocation11 + $0x698] sm:$0xff]
          %v5145 = vld [vmem:[#allocation11 + $0x6a0] sm:$0xff]
          %v5146 = vld [vmem:[#allocation11 + $0x6a8] sm:$0xff]
          %v5147 = vld [vmem:[#allocation11 + $0x6b0] sm:$0xff]
          %v5148 = vld [vmem:[#allocation11 + $0x6b8] sm:$0xff]
          %v5149 = vld [vmem:[#allocation11 + $0x6c0] sm:$0xff]
          %v5150 = vld [vmem:[#allocation11 + $0x6c8] sm:$0xff]
          %v5151 = vld [vmem:[#allocation11 + $0x6d0] sm:$0xff]
          %v5152 = vld [vmem:[#allocation11 + $0x6d8] sm:$0xff]
          %v5153 = vld [vmem:[#allocation11 + $0x6e0] sm:$0xff]
          %v5154 = vld [vmem:[#allocation11 + $0x6e8] sm:$0xff]
          %v5155 = vld [vmem:[#allocation11 + $0x6f0] sm:$0xff]
          %v5156 = vld [vmem:[#allocation11 + $0x6f8] sm:$0xff]
          %v5157 = vld [vmem:[#allocation11 + $0x700] sm:$0xff]
          %v5158 = vld [vmem:[#allocation11 + $0x708] sm:$0xff]
          %v5159 = vld [vmem:[#allocation11 + $0x710] sm:$0xff]
          %v5160 = vld [vmem:[#allocation11 + $0x718] sm:$0xff]
          %v5161 = vld [vmem:[#allocation11 + $0x720] sm:$0xff]
          %v5162 = vld [vmem:[#allocation11 + $0x728] sm:$0xff]
          %v5163 = vld [vmem:[#allocation11 + $0x730] sm:$0xff]
          %v5164 = vld [vmem:[#allocation11 + $0x738] sm:$0xff]
          %v5165 = vld [vmem:[#allocation11 + $0x740] sm:$0xff]
          %v5166 = vld [vmem:[#allocation11 + $0x748] sm:$0xff]
          %v5167 = vld [vmem:[#allocation11 + $0x750] sm:$0xff]
          %v5168 = vld [vmem:[#allocation11 + $0x758] sm:$0xff]
          %v5169 = vld [vmem:[#allocation11 + $0x760] sm:$0xff]
          %v5170 = vld [vmem:[#allocation11 + $0x768] sm:$0xff]
          %v5171 = vld [vmem:[#allocation11 + $0x770] sm:$0xff]
          %v5172 = vld [vmem:[#allocation11 + $0x778] sm:$0xff]
          %v5173 = vld [vmem:[#allocation11 + $0x780] sm:$0xff]
          %v5174 = vld [vmem:[#allocation11 + $0x788] sm:$0xff]
          %v5175 = vld [vmem:[#allocation11 + $0x790] sm:$0xff]
          %v5176 = vld [vmem:[#allocation11 + $0x798] sm:$0xff]
          %v5177 = vld [vmem:[#allocation11 + $0x7a0] sm:$0xff]
          %v5178 = vld [vmem:[#allocation11 + $0x7a8] sm:$0xff]
          %v5179 = vld [vmem:[#allocation11 + $0x7b0] sm:$0xff]
          %v5180 = vld [vmem:[#allocation11 + $0x7b8] sm:$0xff]
          %v5181 = vld [vmem:[#allocation11 + $0x7c0] sm:$0xff]
          %v5182 = vld [vmem:[#allocation11 + $0x7c8] sm:$0xff]
          %v5183 = vld [vmem:[#allocation11 + $0x7d0] sm:$0xff]
          %v5184 = vld [vmem:[#allocation11 + $0x7d8] sm:$0xff]
          %v5185 = vld [vmem:[#allocation11 + $0x7e0] sm:$0xff]
          %v5186 = vld [vmem:[#allocation11 + $0x7e8] sm:$0xff]
          %v5187 = vld [vmem:[#allocation11 + $0x7f0] sm:$0xff]
          %v5188 = vld [vmem:[#allocation11 + $0x7f8] sm:$0xff]
          %v5189 = vld [vmem:[#allocation11 + $0x800] sm:$0xff]
          %v5190 = vld [vmem:[#allocation11 + $0x808] sm:$0xff]
          %v5191 = vld [vmem:[#allocation11 + $0x810] sm:$0xff]
          %v5192 = vld [vmem:[#allocation11 + $0x818] sm:$0xff]
          %v5193 = vld [vmem:[#allocation11 + $0x820] sm:$0xff]
          %v5194 = vld [vmem:[#allocation11 + $0x828] sm:$0xff]
          %v5195 = vld [vmem:[#allocation11 + $0x830] sm:$0xff]
          %v5196 = vld [vmem:[#allocation11 + $0x838] sm:$0xff]
          %v5197 = vld [vmem:[#allocation11 + $0x840] sm:$0xff]
          %v5198 = vld [vmem:[#allocation11 + $0x848] sm:$0xff]
          %v5199 = vld [vmem:[#allocation11 + $0x850] sm:$0xff]
          %v5200 = vld [vmem:[#allocation11 + $0x858] sm:$0xff]
          %v5201 = vld [vmem:[#allocation11 + $0x860] sm:$0xff]
          %v5202 = vld [vmem:[#allocation11 + $0x868] sm:$0xff]
          %v5203 = vld [vmem:[#allocation11 + $0x870] sm:$0xff]
          %v5204 = vld [vmem:[#allocation11 + $0x878] sm:$0xff]
          %v5205 = vld [vmem:[#allocation11 + $0x880] sm:$0xff]
          %v5206 = vld [vmem:[#allocation11 + $0x888] sm:$0xff]
          %v5207 = vld [vmem:[#allocation11 + $0x890] sm:$0xff]
          %v5208 = vld [vmem:[#allocation11 + $0x898] sm:$0xff]
          %v5209 = vld [vmem:[#allocation11 + $0x8a0] sm:$0xff]
          %v5210 = vld [vmem:[#allocation11 + $0x8a8] sm:$0xff]
          %v5211 = vld [vmem:[#allocation11 + $0x8b0] sm:$0xff]
          %v5212 = vld [vmem:[#allocation11 + $0x8b8] sm:$0xff]
          %v5213 = vld [vmem:[#allocation11 + $0x8c0] sm:$0xff]
          %v5214 = vld [vmem:[#allocation11 + $0x8c8] sm:$0xff]
          %v5215 = vld [vmem:[#allocation11 + $0x8d0] sm:$0xff]
          %v5216 = vld [vmem:[#allocation11 + $0x8d8] sm:$0xff]
          %v5217 = vld [vmem:[#allocation11 + $0x8e0] sm:$0xff]
          %v5218 = vld [vmem:[#allocation11 + $0x8e8] sm:$0xff]
          %v5219 = vld [vmem:[#allocation11 + $0x8f0] sm:$0xff]
          %v5220 = vld [vmem:[#allocation11 + $0x8f8] sm:$0xff]
          %v5221 = vld [vmem:[#allocation11 + $0x900] sm:$0xff]
          %v5222 = vld [vmem:[#allocation11 + $0x908] sm:$0xff]
          %v5223 = vld [vmem:[#allocation11 + $0x910] sm:$0xff]
          %v5224 = vld [vmem:[#allocation11 + $0x918] sm:$0xff]
          %v5225 = vld [vmem:[#allocation11 + $0x920] sm:$0xff]
          %v5226 = vld [vmem:[#allocation11 + $0x928] sm:$0xff]
          %v5227 = vld [vmem:[#allocation11 + $0x930] sm:$0xff]
          %v5228 = vld [vmem:[#allocation11 + $0x938] sm:$0xff]
          %v5229 = vld [vmem:[#allocation11 + $0x940] sm:$0xff]
          %v5230 = vld [vmem:[#allocation11 + $0x948] sm:$0xff]
          %v5231 = vld [vmem:[#allocation11 + $0x950] sm:$0xff]
          %v5232 = vld [vmem:[#allocation11 + $0x958] sm:$0xff]
          %v5233 = vld [vmem:[#allocation11 + $0x960] sm:$0xff]
          %v5234 = vld [vmem:[#allocation11 + $0x968] sm:$0xff]
          %v5235 = vld [vmem:[#allocation11 + $0x970] sm:$0xff]
          %v5236 = vld [vmem:[#allocation11 + $0x978] sm:$0xff]
          %v5237 = vld [vmem:[#allocation11 + $0x980] sm:$0xff]
          %v5238 = vld [vmem:[#allocation11 + $0x988] sm:$0xff]
          %v5239 = vld [vmem:[#allocation11 + $0x990] sm:$0xff]
          %v5240 = vld [vmem:[#allocation11 + $0x998] sm:$0xff]
          %v5241 = vld [vmem:[#allocation11 + $0x9a0] sm:$0xff]
          %v5242 = vld [vmem:[#allocation11 + $0x9a8] sm:$0xff]
          %v5243 = vld [vmem:[#allocation11 + $0x9b0] sm:$0xff]
          %v5244 = vld [vmem:[#allocation11 + $0x9b8] sm:$0xff]
          %v5245 = vld [vmem:[#allocation11 + $0x9c0] sm:$0xff]
          %v5246 = vld [vmem:[#allocation11 + $0x9c8] sm:$0xff]
          %v5247 = vld [vmem:[#allocation11 + $0x9d0] sm:$0xff]
          %v5248 = vld [vmem:[#allocation11 + $0x9d8] sm:$0xff]
          %v5249 = vld [vmem:[#allocation11 + $0x9e0] sm:$0xff]
          %v5250 = vld [vmem:[#allocation11 + $0x9e8] sm:$0xff]
          %v5251 = vld [vmem:[#allocation11 + $0x9f0] sm:$0xff]
          %v5252 = vld [vmem:[#allocation11 + $0x9f8] sm:$0xff]
          %v5253 = vld [vmem:[#allocation11 + $0xa00] sm:$0xff]
          %v5254 = vld [vmem:[#allocation11 + $0xa08] sm:$0xff]
          %v5255 = vld [vmem:[#allocation11 + $0xa10] sm:$0xff]
          %v5256 = vld [vmem:[#allocation11 + $0xa18] sm:$0xff]
          %v5257 = vld [vmem:[#allocation11 + $0xa20] sm:$0xff]
          %v5258 = vld [vmem:[#allocation11 + $0xa28] sm:$0xff]
          %v5259 = vld [vmem:[#allocation11 + $0xa30] sm:$0xff]
          %v5260 = vld [vmem:[#allocation11 + $0xa38] sm:$0xff]
          %v5261 = vld [vmem:[#allocation11 + $0xa40] sm:$0xff]
          %v5262 = vld [vmem:[#allocation11 + $0xa48] sm:$0xff]
          %v5263 = vld [vmem:[#allocation11 + $0xa50] sm:$0xff]
          %v5264 = vld [vmem:[#allocation11 + $0xa58] sm:$0xff]
          %v5265 = vld [vmem:[#allocation11 + $0xa60] sm:$0xff]
          %v5266 = vld [vmem:[#allocation11 + $0xa68] sm:$0xff]
          %v5267 = vld [vmem:[#allocation11 + $0xa70] sm:$0xff]
          %v5268 = vld [vmem:[#allocation11 + $0xa78] sm:$0xff]
          %v5269 = vld [vmem:[#allocation11 + $0xa80] sm:$0xff]
          %v5270 = vld [vmem:[#allocation11 + $0xa88] sm:$0xff]
          %v5271 = vld [vmem:[#allocation11 + $0xa90] sm:$0xff]
          %v5272 = vld [vmem:[#allocation11 + $0xa98] sm:$0xff]
          %v5273 = vld [vmem:[#allocation11 + $0xaa0] sm:$0xff]
          %v5274 = vld [vmem:[#allocation11 + $0xaa8] sm:$0xff]
          %v5275 = vld [vmem:[#allocation11 + $0xab0] sm:$0xff]
          %v5276 = vld [vmem:[#allocation11 + $0xab8] sm:$0xff]
          %v5277 = vld [vmem:[#allocation11 + $0xac0] sm:$0xff]
          %v5278 = vld [vmem:[#allocation11 + $0xac8] sm:$0xff]
          %v5279 = vld [vmem:[#allocation11 + $0xad0] sm:$0xff]
          %v5280 = vld [vmem:[#allocation11 + $0xad8] sm:$0xff]
          %v5281 = vld [vmem:[#allocation11 + $0xae0] sm:$0xff]
          %v5282 = vld [vmem:[#allocation11 + $0xae8] sm:$0xff]
          %v5283 = vld [vmem:[#allocation11 + $0xaf0] sm:$0xff]
          %v5284 = vld [vmem:[#allocation11 + $0xaf8] sm:$0xff]
          %v5285 = vld [vmem:[#allocation11 + $0xb00] sm:$0xff]
          %v5286 = vld [vmem:[#allocation11 + $0xb08] sm:$0xff]
          %v5287 = vld [vmem:[#allocation11 + $0xb10] sm:$0xff]
          %v5288 = vld [vmem:[#allocation11 + $0xb18] sm:$0xff]
          %v5289 = vld [vmem:[#allocation11 + $0xb20] sm:$0xff]
          %v5290 = vld [vmem:[#allocation11 + $0xb28] sm:$0xff]
          %v5291 = vld [vmem:[#allocation11 + $0xb30] sm:$0xff]
          %v5292 = vld [vmem:[#allocation11 + $0xb38] sm:$0xff]
          %v5293 = vld [vmem:[#allocation11 + $0xb40] sm:$0xff]
          %v5294 = vld [vmem:[#allocation11 + $0xb48] sm:$0xff]
          %v5295 = vld [vmem:[#allocation11 + $0xb50] sm:$0xff]
          %v5296 = vld [vmem:[#allocation11 + $0xb58] sm:$0xff]
          %v5297 = vld [vmem:[#allocation11 + $0xb60] sm:$0xff]
          %v5298 = vld [vmem:[#allocation11 + $0xb68] sm:$0xff]
          %v5299 = vld [vmem:[#allocation11 + $0xb70] sm:$0xff]
          %v5300 = vld [vmem:[#allocation11 + $0xb78] sm:$0xff]
          %v5301 = vld [vmem:[#allocation11 + $0xb80] sm:$0xff]
          %v5302 = vld [vmem:[#allocation11 + $0xb88] sm:$0xff]
          %v5303 = vld [vmem:[#allocation11 + $0xb90] sm:$0xff]
          %v5304 = vld [vmem:[#allocation11 + $0xb98] sm:$0xff]
          %v5305 = vld [vmem:[#allocation11 + $0xba0] sm:$0xff]
          %v5306 = vld [vmem:[#allocation11 + $0xba8] sm:$0xff]
          %v5307 = vld [vmem:[#allocation11 + $0xbb0] sm:$0xff]
          %v5308 = vld [vmem:[#allocation11 + $0xbb8] sm:$0xff]
          %v5309 = vld [vmem:[#allocation11 + $0xbc0] sm:$0xff]
          %v5310 = vld [vmem:[#allocation11 + $0xbc8] sm:$0xff]
          %v5311 = vld [vmem:[#allocation11 + $0xbd0] sm:$0xff]
          %v5312 = vld [vmem:[#allocation11 + $0xbd8] sm:$0xff]
          %v5313 = vld [vmem:[#allocation11 + $0xbe0] sm:$0xff]
          %v5314 = vld [vmem:[#allocation11 + $0xbe8] sm:$0xff]
          %v5315 = vld [vmem:[#allocation11 + $0xbf0] sm:$0xff]
          %v5316 = vld [vmem:[#allocation11 + $0xbf8] sm:$0xff]
          %v5317 = vld [vmem:[#allocation11 + $0xc00] sm:$0xff]
          %v5318 = vld [vmem:[#allocation11 + $0xc08] sm:$0xff]
          %v5319 = vld [vmem:[#allocation11 + $0xc10] sm:$0xff]
          %v5320 = vld [vmem:[#allocation11 + $0xc18] sm:$0xff]
          %v5321 = vld [vmem:[#allocation11 + $0xc20] sm:$0xff]
          %v5322 = vld [vmem:[#allocation11 + $0xc28] sm:$0xff]
          %v5323 = vld [vmem:[#allocation11 + $0xc30] sm:$0xff]
          %v5324 = vld [vmem:[#allocation11 + $0xc38] sm:$0xff]
          %v5325 = vld [vmem:[#allocation11 + $0xc40] sm:$0xff]
          %v5326 = vld [vmem:[#allocation11 + $0xc48] sm:$0xff]
          %v5327 = vld [vmem:[#allocation11 + $0xc50] sm:$0xff]
          %v5328 = vld [vmem:[#allocation11 + $0xc58] sm:$0xff]
          %v5329 = vld [vmem:[#allocation11 + $0xc60] sm:$0xff]
          %v5330 = vld [vmem:[#allocation11 + $0xc68] sm:$0xff]
          %v5331 = vld [vmem:[#allocation11 + $0xc70] sm:$0xff]
          %v5332 = vld [vmem:[#allocation11 + $0xc78] sm:$0xff]
          %v5333 = vld [vmem:[#allocation11 + $0xc80] sm:$0xff]
          %v5334 = vld [vmem:[#allocation11 + $0xc88] sm:$0xff]
          %v5335 = vld [vmem:[#allocation11 + $0xc90] sm:$0xff]
          %v5336 = vld [vmem:[#allocation11 + $0xc98] sm:$0xff]
          %v5337 = vld [vmem:[#allocation11 + $0xca0] sm:$0xff]
          %v5338 = vld [vmem:[#allocation11 + $0xca8] sm:$0xff]
          %v5339 = vld [vmem:[#allocation11 + $0xcb0] sm:$0xff]
          %v5340 = vld [vmem:[#allocation11 + $0xcb8] sm:$0xff]
          %v5341 = vld [vmem:[#allocation11 + $0xcc0] sm:$0xff]
          %v5342 = vld [vmem:[#allocation11 + $0xcc8] sm:$0xff]
          %v5343 = vld [vmem:[#allocation11 + $0xcd0] sm:$0xff]
          %v5344 = vld [vmem:[#allocation11 + $0xcd8] sm:$0xff]
          %v5345 = vld [vmem:[#allocation11 + $0xce0] sm:$0xff]
          %v5346 = vld [vmem:[#allocation11 + $0xce8] sm:$0xff]
          %v5347 = vld [vmem:[#allocation11 + $0xcf0] sm:$0xff]
          %v5348 = vld [vmem:[#allocation11 + $0xcf8] sm:$0xff]
          %v5349 = vld [vmem:[#allocation11 + $0xd00] sm:$0xff]
          %v5350 = vld [vmem:[#allocation11 + $0xd08] sm:$0xff]
          %v5351 = vld [vmem:[#allocation11 + $0xd10] sm:$0xff]
          %v5352 = vld [vmem:[#allocation11 + $0xd18] sm:$0xff]
          %v5353 = vld [vmem:[#allocation11 + $0xd20] sm:$0xff]
          %v5354 = vld [vmem:[#allocation11 + $0xd28] sm:$0xff]
          %v5355 = vld [vmem:[#allocation11 + $0xd30] sm:$0xff]
          %v5356 = vld [vmem:[#allocation11 + $0xd38] sm:$0xff]
          %v5357 = vld [vmem:[#allocation11 + $0xd40] sm:$0xff]
          %v5358 = vld [vmem:[#allocation11 + $0xd48] sm:$0xff]
          %v5359 = vld [vmem:[#allocation11 + $0xd50] sm:$0xff]
          %v5360 = vld [vmem:[#allocation11 + $0xd58] sm:$0xff]
          %v5361 = vld [vmem:[#allocation11 + $0xd60] sm:$0xff]
          %v5362 = vld [vmem:[#allocation11 + $0xd68] sm:$0xff]
          %v5363 = vld [vmem:[#allocation11 + $0xd70] sm:$0xff]
          %v5364 = vld [vmem:[#allocation11 + $0xd78] sm:$0xff]
          %v5365 = vld [vmem:[#allocation11 + $0xd80] sm:$0xff]
          %v5366 = vld [vmem:[#allocation11 + $0xd88] sm:$0xff]
          %v5367 = vld [vmem:[#allocation11 + $0xd90] sm:$0xff]
          %v5368 = vld [vmem:[#allocation11 + $0xd98] sm:$0xff]
          %v5369 = vld [vmem:[#allocation11 + $0xda0] sm:$0xff]
          %v5370 = vld [vmem:[#allocation11 + $0xda8] sm:$0xff]
          %v5371 = vld [vmem:[#allocation11 + $0xdb0] sm:$0xff]
          %v5372 = vld [vmem:[#allocation11 + $0xdb8] sm:$0xff]
          %v5373 = vld [vmem:[#allocation11 + $0xdc0] sm:$0xff]
          %v5374 = vld [vmem:[#allocation11 + $0xdc8] sm:$0xff]
          %v5375 = vld [vmem:[#allocation11 + $0xdd0] sm:$0xff]
          %v5376 = vld [vmem:[#allocation11 + $0xdd8] sm:$0xff]
          %v5377 = vld [vmem:[#allocation11 + $0xde0] sm:$0xff]
          %v5378 = vld [vmem:[#allocation11 + $0xde8] sm:$0xff]
          %v5379 = vld [vmem:[#allocation11 + $0xdf0] sm:$0xff]
          %v5380 = vld [vmem:[#allocation11 + $0xdf8] sm:$0xff]
          %v5381 = vld [vmem:[#allocation11 + $0xe00] sm:$0xff]
          %v5382 = vld [vmem:[#allocation11 + $0xe08] sm:$0xff]
          %v5383 = vld [vmem:[#allocation11 + $0xe10] sm:$0xff]
          %v5384 = vld [vmem:[#allocation11 + $0xe18] sm:$0xff]
          %v5385 = vld [vmem:[#allocation11 + $0xe20] sm:$0xff]
          %v5386 = vld [vmem:[#allocation11 + $0xe28] sm:$0xff]
          %v5387 = vld [vmem:[#allocation11 + $0xe30] sm:$0xff]
          %v5388 = vld [vmem:[#allocation11 + $0xe38] sm:$0xff]
          %v5389 = vld [vmem:[#allocation11 + $0xe40] sm:$0xff]
          %v5390 = vld [vmem:[#allocation11 + $0xe48] sm:$0xff]
          %v5391 = vld [vmem:[#allocation11 + $0xe50] sm:$0xff]
          %v5392 = vld [vmem:[#allocation11 + $0xe58] sm:$0xff]
          %v5393 = vld [vmem:[#allocation11 + $0xe60] sm:$0xff]
          %v5394 = vld [vmem:[#allocation11 + $0xe68] sm:$0xff]
          %v5395 = vld [vmem:[#allocation11 + $0xe70] sm:$0xff]
          %v5396 = vld [vmem:[#allocation11 + $0xe78] sm:$0xff]
          %v5397 = vld [vmem:[#allocation11 + $0xe80] sm:$0xff]
          %v5398 = vld [vmem:[#allocation11 + $0xe88] sm:$0xff]
          %v5399 = vld [vmem:[#allocation11 + $0xe90] sm:$0xff]
          %v5400 = vld [vmem:[#allocation11 + $0xe98] sm:$0xff]
          %v5401 = vld [vmem:[#allocation11 + $0xea0] sm:$0xff]
          %v5402 = vld [vmem:[#allocation11 + $0xea8] sm:$0xff]
          %v5403 = vld [vmem:[#allocation11 + $0xeb0] sm:$0xff]
          %v5404 = vld [vmem:[#allocation11 + $0xeb8] sm:$0xff]
          %v5405 = vld [vmem:[#allocation11 + $0xec0] sm:$0xff]
          %v5406 = vld [vmem:[#allocation11 + $0xec8] sm:$0xff]
          %v5407 = vld [vmem:[#allocation11 + $0xed0] sm:$0xff]
          %v5408 = vld [vmem:[#allocation11 + $0xed8] sm:$0xff]
          %v5409 = vld [vmem:[#allocation11 + $0xee0] sm:$0xff]
          %v5410 = vld [vmem:[#allocation11 + $0xee8] sm:$0xff]
          %v5411 = vld [vmem:[#allocation11 + $0xef0] sm:$0xff]
          %v5412 = vld [vmem:[#allocation11 + $0xef8] sm:$0xff]
          %v5413 = vld [vmem:[#allocation11 + $0xf00] sm:$0xff]
          %v5414 = vld [vmem:[#allocation11 + $0xf08] sm:$0xff]
          %v5415 = vld [vmem:[#allocation11 + $0xf10] sm:$0xff]
          %v5416 = vld [vmem:[#allocation11 + $0xf18] sm:$0xff]
          %v5417 = vld [vmem:[#allocation11 + $0xf20] sm:$0xff]
          %v5418 = vld [vmem:[#allocation11 + $0xf28] sm:$0xff]
          %v5419 = vld [vmem:[#allocation11 + $0xf30] sm:$0xff]
          %v5420 = vld [vmem:[#allocation11 + $0xf38] sm:$0xff]
          %v5421 = vld [vmem:[#allocation11 + $0xf40] sm:$0xff]
          %v5422 = vld [vmem:[#allocation11 + $0xf48] sm:$0xff]
          %v5423 = vld [vmem:[#allocation11 + $0xf50] sm:$0xff]
          %v5424 = vld [vmem:[#allocation11 + $0xf58] sm:$0xff]
          %v5425 = vld [vmem:[#allocation11 + $0xf60] sm:$0xff]
          %v5426 = vld [vmem:[#allocation11 + $0xf68] sm:$0xff]
          %v5427 = vld [vmem:[#allocation11 + $0xf70] sm:$0xff]
          %v5428 = vld [vmem:[#allocation11 + $0xf78] sm:$0xff]
          %v5429 = vld [vmem:[#allocation11 + $0xf80] sm:$0xff]
          %v5430 = vld [vmem:[#allocation11 + $0xf88] sm:$0xff]
          %v5431 = vld [vmem:[#allocation11 + $0xf90] sm:$0xff]
          %v5432 = vld [vmem:[#allocation11 + $0xf98] sm:$0xff]
          %v5433 = vld [vmem:[#allocation11 + $0xfa0] sm:$0xff]
          %v5434 = vld [vmem:[#allocation11 + $0xfa8] sm:$0xff]
          %v5435 = vld [vmem:[#allocation11 + $0xfb0] sm:$0xff]
          %v5436 = vld [vmem:[#allocation11 + $0xfb8] sm:$0xff]
          %v5437 = vld [vmem:[#allocation11 + $0xfc0] sm:$0xff]
          %v5438 = vld [vmem:[#allocation11 + $0xfc8] sm:$0xff]
          %v5439 = vld [vmem:[#allocation11 + $0xfd0] sm:$0xff]
          %v5440 = vld [vmem:[#allocation11 + $0xfd8] sm:$0xff]
          %v5441 = vld [vmem:[#allocation11 + $0xfe0] sm:$0xff]
          %v5442 = vld [vmem:[#allocation11 + $0xfe8] sm:$0xff]
          %v5443 = vld [vmem:[#allocation11 + $0xff0] sm:$0xff]
          %v5444 = vld [vmem:[#allocation11 + $0xff8] sm:$0xff]
          %v5445 = vld [vmem:[#allocation12] sm:$0xff]
          %v5447 = vlaneseq
          %v5448 = vshrl.u32 %v5447, 7
          %v5449 = vsub.s32 0, %v5448
          %v5450 = vrot.slane %v5445, %v5449
          %v5451 = vlaneseq
          %v5452 = vshrl.u32 %v5451, 7
          %v5453 = vsub.s32 1, %v5452
          %v5454 = vrot.slane %v5445, %v5453
          %v5455 = vlaneseq
          %v5456 = vshrl.u32 %v5455, 7
          %v5457 = vsub.s32 2, %v5456
          %v5458 = vrot.slane %v5445, %v5457
          %v5459 = vlaneseq
          %v5460 = vshrl.u32 %v5459, 7
          %v5461 = vsub.s32 3, %v5460
          %v5462 = vrot.slane %v5445, %v5461
          %v5463 = vlaneseq
          %v5464 = vshrl.u32 %v5463, 7
          %v5465 = vsub.s32 4, %v5464
          %v5466 = vrot.slane %v5445, %v5465
          %v5467 = vlaneseq
          %v5468 = vshrl.u32 %v5467, 7
          %v5469 = vsub.s32 5, %v5468
          %v5470 = vrot.slane %v5445, %v5469
          %v5471 = vlaneseq
          %v5472 = vshrl.u32 %v5471, 7
          %v5473 = vsub.s32 6, %v5472
          %v5474 = vrot.slane %v5445, %v5473
          %v5475 = vlaneseq
          %v5476 = vshrl.u32 %v5475, 7
          %v5477 = vsub.s32 7, %v5476
          %v5478 = vrot.slane %v5445, %v5477
          %v5999 = vunpack.c.l.b16 %v4933
          %v6000 = vunpack.c.h.b16 %v4933
          %v6001 = vunpack.c.l.b16 %v4934
          %v6002 = vunpack.c.h.b16 %v4934
          %v6003 = vunpack.c.l.b16 %v4935
          %v6004 = vunpack.c.h.b16 %v4935
          %v6005 = vunpack.c.l.b16 %v4936
          %v6006 = vunpack.c.h.b16 %v4936
          %v6007 = vunpack.c.l.b16 %v4937
          %v6008 = vunpack.c.h.b16 %v4937
          %v6009 = vunpack.c.l.b16 %v4938
          %v6010 = vunpack.c.h.b16 %v4938
          %v6011 = vunpack.c.l.b16 %v4939
          %v6012 = vunpack.c.h.b16 %v4939
          %v6013 = vunpack.c.l.b16 %v4940
          %v6014 = vunpack.c.h.b16 %v4940
          %v6015 = vunpack.c.l.b16 %v4941
          %v6016 = vunpack.c.h.b16 %v4941
          %v6017 = vunpack.c.l.b16 %v4942
          %v6018 = vunpack.c.h.b16 %v4942
          %v6019 = vunpack.c.l.b16 %v4943
          %v6020 = vunpack.c.h.b16 %v4943
          %v6021 = vunpack.c.l.b16 %v4944
          %v6022 = vunpack.c.h.b16 %v4944
          %v6023 = vunpack.c.l.b16 %v4945
          %v6024 = vunpack.c.h.b16 %v4945
          %v6025 = vunpack.c.l.b16 %v4946
          %v6026 = vunpack.c.h.b16 %v4946
          %v6027 = vunpack.c.l.b16 %v4947
          %v6028 = vunpack.c.h.b16 %v4947
          %v6029 = vunpack.c.l.b16 %v4948
          %v6030 = vunpack.c.h.b16 %v4948
          %v6031 = vunpack.c.l.b16 %v4949
          %v6032 = vunpack.c.h.b16 %v4949
          %v6033 = vunpack.c.l.b16 %v4950
          %v6034 = vunpack.c.h.b16 %v4950
          %v6035 = vunpack.c.l.b16 %v4951
          %v6036 = vunpack.c.h.b16 %v4951
          %v6037 = vunpack.c.l.b16 %v4952
          %v6038 = vunpack.c.h.b16 %v4952
          %v6039 = vunpack.c.l.b16 %v4953
          %v6040 = vunpack.c.h.b16 %v4953
          %v6041 = vunpack.c.l.b16 %v4954
          %v6042 = vunpack.c.h.b16 %v4954
          %v6043 = vunpack.c.l.b16 %v4955
          %v6044 = vunpack.c.h.b16 %v4955
          %v6045 = vunpack.c.l.b16 %v4956
          %v6046 = vunpack.c.h.b16 %v4956
          %v6047 = vunpack.c.l.b16 %v4957
          %v6048 = vunpack.c.h.b16 %v4957
          %v6049 = vunpack.c.l.b16 %v4958
          %v6050 = vunpack.c.h.b16 %v4958
          %v6051 = vunpack.c.l.b16 %v4959
          %v6052 = vunpack.c.h.b16 %v4959
          %v6053 = vunpack.c.l.b16 %v4960
          %v6054 = vunpack.c.h.b16 %v4960
          %v6055 = vunpack.c.l.b16 %v4961
          %v6056 = vunpack.c.h.b16 %v4961
          %v6057 = vunpack.c.l.b16 %v4962
          %v6058 = vunpack.c.h.b16 %v4962
          %v6059 = vunpack.c.l.b16 %v4963
          %v6060 = vunpack.c.h.b16 %v4963
          %v6061 = vunpack.c.l.b16 %v4964
          %v6062 = vunpack.c.h.b16 %v4964
          %v6063 = vunpack.c.l.b16 %v4965
          %v6064 = vunpack.c.h.b16 %v4965
          %v6065 = vunpack.c.l.b16 %v4966
          %v6066 = vunpack.c.h.b16 %v4966
          %v6067 = vunpack.c.l.b16 %v4967
          %v6068 = vunpack.c.h.b16 %v4967
          %v6069 = vunpack.c.l.b16 %v4968
          %v6070 = vunpack.c.h.b16 %v4968
          %v6071 = vunpack.c.l.b16 %v4969
          %v6072 = vunpack.c.h.b16 %v4969
          %v6073 = vunpack.c.l.b16 %v4970
          %v6074 = vunpack.c.h.b16 %v4970
          %v6075 = vunpack.c.l.b16 %v4971
          %v6076 = vunpack.c.h.b16 %v4971
          %v6077 = vunpack.c.l.b16 %v4972
          %v6078 = vunpack.c.h.b16 %v4972
          %v6079 = vunpack.c.l.b16 %v4973
          %v6080 = vunpack.c.h.b16 %v4973
          %v6081 = vunpack.c.l.b16 %v4974
          %v6082 = vunpack.c.h.b16 %v4974
          %v6083 = vunpack.c.l.b16 %v4975
          %v6084 = vunpack.c.h.b16 %v4975
          %v6085 = vunpack.c.l.b16 %v4976
          %v6086 = vunpack.c.h.b16 %v4976
          %v6087 = vunpack.c.l.b16 %v4977
          %v6088 = vunpack.c.h.b16 %v4977
          %v6089 = vunpack.c.l.b16 %v4978
          %v6090 = vunpack.c.h.b16 %v4978
          %v6091 = vunpack.c.l.b16 %v4979
          %v6092 = vunpack.c.h.b16 %v4979
          %v6093 = vunpack.c.l.b16 %v4980
          %v6094 = vunpack.c.h.b16 %v4980
          %v6095 = vunpack.c.l.b16 %v4981
          %v6096 = vunpack.c.h.b16 %v4981
          %v6097 = vunpack.c.l.b16 %v4982
          %v6098 = vunpack.c.h.b16 %v4982
          %v6099 = vunpack.c.l.b16 %v4983
          %v6100 = vunpack.c.h.b16 %v4983
          %v6101 = vunpack.c.l.b16 %v4984
          %v6102 = vunpack.c.h.b16 %v4984
          %v6103 = vunpack.c.l.b16 %v4985
          %v6104 = vunpack.c.h.b16 %v4985
          %v6105 = vunpack.c.l.b16 %v4986
          %v6106 = vunpack.c.h.b16 %v4986
          %v6107 = vunpack.c.l.b16 %v4987
          %v6108 = vunpack.c.h.b16 %v4987
          %v6109 = vunpack.c.l.b16 %v4988
          %v6110 = vunpack.c.h.b16 %v4988
          %v6111 = vunpack.c.l.b16 %v4989
          %v6112 = vunpack.c.h.b16 %v4989
          %v6113 = vunpack.c.l.b16 %v4990
          %v6114 = vunpack.c.h.b16 %v4990
          %v6115 = vunpack.c.l.b16 %v4991
          %v6116 = vunpack.c.h.b16 %v4991
          %v6117 = vunpack.c.l.b16 %v4992
          %v6118 = vunpack.c.h.b16 %v4992
          %v6119 = vunpack.c.l.b16 %v4993
          %v6120 = vunpack.c.h.b16 %v4993
          %v6121 = vunpack.c.l.b16 %v4994
          %v6122 = vunpack.c.h.b16 %v4994
          %v6123 = vunpack.c.l.b16 %v4995
          %v6124 = vunpack.c.h.b16 %v4995
          %v6125 = vunpack.c.l.b16 %v4996
          %v6126 = vunpack.c.h.b16 %v4996
          %v6127 = vunpack.c.l.b16 %v4997
          %v6128 = vunpack.c.h.b16 %v4997
          %v6129 = vunpack.c.l.b16 %v4998
          %v6130 = vunpack.c.h.b16 %v4998
          %v6131 = vunpack.c.l.b16 %v4999
          %v6132 = vunpack.c.h.b16 %v4999
          %v6133 = vunpack.c.l.b16 %v5000
          %v6134 = vunpack.c.h.b16 %v5000
          %v6135 = vunpack.c.l.b16 %v5001
          %v6136 = vunpack.c.h.b16 %v5001
          %v6137 = vunpack.c.l.b16 %v5002
          %v6138 = vunpack.c.h.b16 %v5002
          %v6139 = vunpack.c.l.b16 %v5003
          %v6140 = vunpack.c.h.b16 %v5003
          %v6141 = vunpack.c.l.b16 %v5004
          %v6142 = vunpack.c.h.b16 %v5004
          %v6143 = vunpack.c.l.b16 %v5005
          %v6144 = vunpack.c.h.b16 %v5005
          %v6145 = vunpack.c.l.b16 %v5006
          %v6146 = vunpack.c.h.b16 %v5006
          %v6147 = vunpack.c.l.b16 %v5007
          %v6148 = vunpack.c.h.b16 %v5007
          %v6149 = vunpack.c.l.b16 %v5008
          %v6150 = vunpack.c.h.b16 %v5008
          %v6151 = vunpack.c.l.b16 %v5009
          %v6152 = vunpack.c.h.b16 %v5009
          %v6153 = vunpack.c.l.b16 %v5010
          %v6154 = vunpack.c.h.b16 %v5010
          %v6155 = vunpack.c.l.b16 %v5011
          %v6156 = vunpack.c.h.b16 %v5011
          %v6157 = vunpack.c.l.b16 %v5012
          %v6158 = vunpack.c.h.b16 %v5012
          %v6159 = vunpack.c.l.b16 %v5013
          %v6160 = vunpack.c.h.b16 %v5013
          %v6161 = vunpack.c.l.b16 %v5014
          %v6162 = vunpack.c.h.b16 %v5014
          %v6163 = vunpack.c.l.b16 %v5015
          %v6164 = vunpack.c.h.b16 %v5015
          %v6165 = vunpack.c.l.b16 %v5016
          %v6166 = vunpack.c.h.b16 %v5016
          %v6167 = vunpack.c.l.b16 %v5017
          %v6168 = vunpack.c.h.b16 %v5017
          %v6169 = vunpack.c.l.b16 %v5018
          %v6170 = vunpack.c.h.b16 %v5018
          %v6171 = vunpack.c.l.b16 %v5019
          %v6172 = vunpack.c.h.b16 %v5019
          %v6173 = vunpack.c.l.b16 %v5020
          %v6174 = vunpack.c.h.b16 %v5020
          %v6175 = vunpack.c.l.b16 %v5021
          %v6176 = vunpack.c.h.b16 %v5021
          %v6177 = vunpack.c.l.b16 %v5022
          %v6178 = vunpack.c.h.b16 %v5022
          %v6179 = vunpack.c.l.b16 %v5023
          %v6180 = vunpack.c.h.b16 %v5023
          %v6181 = vunpack.c.l.b16 %v5024
          %v6182 = vunpack.c.h.b16 %v5024
          %v6183 = vunpack.c.l.b16 %v5025
          %v6184 = vunpack.c.h.b16 %v5025
          %v6185 = vunpack.c.l.b16 %v5026
          %v6186 = vunpack.c.h.b16 %v5026
          %v6187 = vunpack.c.l.b16 %v5027
          %v6188 = vunpack.c.h.b16 %v5027
          %v6189 = vunpack.c.l.b16 %v5028
          %v6190 = vunpack.c.h.b16 %v5028
          %v6191 = vunpack.c.l.b16 %v5029
          %v6192 = vunpack.c.h.b16 %v5029
          %v6193 = vunpack.c.l.b16 %v5030
          %v6194 = vunpack.c.h.b16 %v5030
          %v6195 = vunpack.c.l.b16 %v5031
          %v6196 = vunpack.c.h.b16 %v5031
          %v6197 = vunpack.c.l.b16 %v5032
          %v6198 = vunpack.c.h.b16 %v5032
          %v6199 = vunpack.c.l.b16 %v5033
          %v6200 = vunpack.c.h.b16 %v5033
          %v6201 = vunpack.c.l.b16 %v5034
          %v6202 = vunpack.c.h.b16 %v5034
          %v6203 = vunpack.c.l.b16 %v5035
          %v6204 = vunpack.c.h.b16 %v5035
          %v6205 = vunpack.c.l.b16 %v5036
          %v6206 = vunpack.c.h.b16 %v5036
          %v6207 = vunpack.c.l.b16 %v5037
          %v6208 = vunpack.c.h.b16 %v5037
          %v6209 = vunpack.c.l.b16 %v5038
          %v6210 = vunpack.c.h.b16 %v5038
          %v6211 = vunpack.c.l.b16 %v5039
          %v6212 = vunpack.c.h.b16 %v5039
          %v6213 = vunpack.c.l.b16 %v5040
          %v6214 = vunpack.c.h.b16 %v5040
          %v6215 = vunpack.c.l.b16 %v5041
          %v6216 = vunpack.c.h.b16 %v5041
          %v6217 = vunpack.c.l.b16 %v5042
          %v6218 = vunpack.c.h.b16 %v5042
          %v6219 = vunpack.c.l.b16 %v5043
          %v6220 = vunpack.c.h.b16 %v5043
          %v6221 = vunpack.c.l.b16 %v5044
          %v6222 = vunpack.c.h.b16 %v5044
          %v6223 = vunpack.c.l.b16 %v5045
          %v6224 = vunpack.c.h.b16 %v5045
          %v6225 = vunpack.c.l.b16 %v5046
          %v6226 = vunpack.c.h.b16 %v5046
          %v6227 = vunpack.c.l.b16 %v5047
          %v6228 = vunpack.c.h.b16 %v5047
          %v6229 = vunpack.c.l.b16 %v5048
          %v6230 = vunpack.c.h.b16 %v5048
          %v6231 = vunpack.c.l.b16 %v5049
          %v6232 = vunpack.c.h.b16 %v5049
          %v6233 = vunpack.c.l.b16 %v5050
          %v6234 = vunpack.c.h.b16 %v5050
          %v6235 = vunpack.c.l.b16 %v5051
          %v6236 = vunpack.c.h.b16 %v5051
          %v6237 = vunpack.c.l.b16 %v5052
          %v6238 = vunpack.c.h.b16 %v5052
          %v6239 = vunpack.c.l.b16 %v5053
          %v6240 = vunpack.c.h.b16 %v5053
          %v6241 = vunpack.c.l.b16 %v5054
          %v6242 = vunpack.c.h.b16 %v5054
          %v6243 = vunpack.c.l.b16 %v5055
          %v6244 = vunpack.c.h.b16 %v5055
          %v6245 = vunpack.c.l.b16 %v5056
          %v6246 = vunpack.c.h.b16 %v5056
          %v6247 = vunpack.c.l.b16 %v5057
          %v6248 = vunpack.c.h.b16 %v5057
          %v6249 = vunpack.c.l.b16 %v5058
          %v6250 = vunpack.c.h.b16 %v5058
          %v6251 = vunpack.c.l.b16 %v5059
          %v6252 = vunpack.c.h.b16 %v5059
          %v6253 = vunpack.c.l.b16 %v5060
          %v6254 = vunpack.c.h.b16 %v5060
          %v6255 = vunpack.c.l.b16 %v5061
          %v6256 = vunpack.c.h.b16 %v5061
          %v6257 = vunpack.c.l.b16 %v5062
          %v6258 = vunpack.c.h.b16 %v5062
          %v6259 = vunpack.c.l.b16 %v5063
          %v6260 = vunpack.c.h.b16 %v5063
          %v6261 = vunpack.c.l.b16 %v5064
          %v6262 = vunpack.c.h.b16 %v5064
          %v6263 = vunpack.c.l.b16 %v5065
          %v6264 = vunpack.c.h.b16 %v5065
          %v6265 = vunpack.c.l.b16 %v5066
          %v6266 = vunpack.c.h.b16 %v5066
          %v6267 = vunpack.c.l.b16 %v5067
          %v6268 = vunpack.c.h.b16 %v5067
          %v6269 = vunpack.c.l.b16 %v5068
          %v6270 = vunpack.c.h.b16 %v5068
          %v6271 = vunpack.c.l.b16 %v5069
          %v6272 = vunpack.c.h.b16 %v5069
          %v6273 = vunpack.c.l.b16 %v5070
          %v6274 = vunpack.c.h.b16 %v5070
          %v6275 = vunpack.c.l.b16 %v5071
          %v6276 = vunpack.c.h.b16 %v5071
          %v6277 = vunpack.c.l.b16 %v5072
          %v6278 = vunpack.c.h.b16 %v5072
          %v6279 = vunpack.c.l.b16 %v5073
          %v6280 = vunpack.c.h.b16 %v5073
          %v6281 = vunpack.c.l.b16 %v5074
          %v6282 = vunpack.c.h.b16 %v5074
          %v6283 = vunpack.c.l.b16 %v5075
          %v6284 = vunpack.c.h.b16 %v5075
          %v6285 = vunpack.c.l.b16 %v5076
          %v6286 = vunpack.c.h.b16 %v5076
          %v6287 = vunpack.c.l.b16 %v5077
          %v6288 = vunpack.c.h.b16 %v5077
          %v6289 = vunpack.c.l.b16 %v5078
          %v6290 = vunpack.c.h.b16 %v5078
          %v6291 = vunpack.c.l.b16 %v5079
          %v6292 = vunpack.c.h.b16 %v5079
          %v6293 = vunpack.c.l.b16 %v5080
          %v6294 = vunpack.c.h.b16 %v5080
          %v6295 = vunpack.c.l.b16 %v5081
          %v6296 = vunpack.c.h.b16 %v5081
          %v6297 = vunpack.c.l.b16 %v5082
          %v6298 = vunpack.c.h.b16 %v5082
          %v6299 = vunpack.c.l.b16 %v5083
          %v6300 = vunpack.c.h.b16 %v5083
          %v6301 = vunpack.c.l.b16 %v5084
          %v6302 = vunpack.c.h.b16 %v5084
          %v6303 = vunpack.c.l.b16 %v5085
          %v6304 = vunpack.c.h.b16 %v5085
          %v6305 = vunpack.c.l.b16 %v5086
          %v6306 = vunpack.c.h.b16 %v5086
          %v6307 = vunpack.c.l.b16 %v5087
          %v6308 = vunpack.c.h.b16 %v5087
          %v6309 = vunpack.c.l.b16 %v5088
          %v6310 = vunpack.c.h.b16 %v5088
          %v6311 = vunpack.c.l.b16 %v5089
          %v6312 = vunpack.c.h.b16 %v5089
          %v6313 = vunpack.c.l.b16 %v5090
          %v6314 = vunpack.c.h.b16 %v5090
          %v6315 = vunpack.c.l.b16 %v5091
          %v6316 = vunpack.c.h.b16 %v5091
          %v6317 = vunpack.c.l.b16 %v5092
          %v6318 = vunpack.c.h.b16 %v5092
          %v6319 = vunpack.c.l.b16 %v5093
          %v6320 = vunpack.c.h.b16 %v5093
          %v6321 = vunpack.c.l.b16 %v5094
          %v6322 = vunpack.c.h.b16 %v5094
          %v6323 = vunpack.c.l.b16 %v5095
          %v6324 = vunpack.c.h.b16 %v5095
          %v6325 = vunpack.c.l.b16 %v5096
          %v6326 = vunpack.c.h.b16 %v5096
          %v6327 = vunpack.c.l.b16 %v5097
          %v6328 = vunpack.c.h.b16 %v5097
          %v6329 = vunpack.c.l.b16 %v5098
          %v6330 = vunpack.c.h.b16 %v5098
          %v6331 = vunpack.c.l.b16 %v5099
          %v6332 = vunpack.c.h.b16 %v5099
          %v6333 = vunpack.c.l.b16 %v5100
          %v6334 = vunpack.c.h.b16 %v5100
          %v6335 = vunpack.c.l.b16 %v5101
          %v6336 = vunpack.c.h.b16 %v5101
          %v6337 = vunpack.c.l.b16 %v5102
          %v6338 = vunpack.c.h.b16 %v5102
          %v6339 = vunpack.c.l.b16 %v5103
          %v6340 = vunpack.c.h.b16 %v5103
          %v6341 = vunpack.c.l.b16 %v5104
          %v6342 = vunpack.c.h.b16 %v5104
          %v6343 = vunpack.c.l.b16 %v5105
          %v6344 = vunpack.c.h.b16 %v5105
          %v6345 = vunpack.c.l.b16 %v5106
          %v6346 = vunpack.c.h.b16 %v5106
          %v6347 = vunpack.c.l.b16 %v5107
          %v6348 = vunpack.c.h.b16 %v5107
          %v6349 = vunpack.c.l.b16 %v5108
          %v6350 = vunpack.c.h.b16 %v5108
          %v6351 = vunpack.c.l.b16 %v5109
          %v6352 = vunpack.c.h.b16 %v5109
          %v6353 = vunpack.c.l.b16 %v5110
          %v6354 = vunpack.c.h.b16 %v5110
          %v6355 = vunpack.c.l.b16 %v5111
          %v6356 = vunpack.c.h.b16 %v5111
          %v6357 = vunpack.c.l.b16 %v5112
          %v6358 = vunpack.c.h.b16 %v5112
          %v6359 = vunpack.c.l.b16 %v5113
          %v6360 = vunpack.c.h.b16 %v5113
          %v6361 = vunpack.c.l.b16 %v5114
          %v6362 = vunpack.c.h.b16 %v5114
          %v6363 = vunpack.c.l.b16 %v5115
          %v6364 = vunpack.c.h.b16 %v5115
          %v6365 = vunpack.c.l.b16 %v5116
          %v6366 = vunpack.c.h.b16 %v5116
          %v6367 = vunpack.c.l.b16 %v5117
          %v6368 = vunpack.c.h.b16 %v5117
          %v6369 = vunpack.c.l.b16 %v5118
          %v6370 = vunpack.c.h.b16 %v5118
          %v6371 = vunpack.c.l.b16 %v5119
          %v6372 = vunpack.c.h.b16 %v5119
          %v6373 = vunpack.c.l.b16 %v5120
          %v6374 = vunpack.c.h.b16 %v5120
          %v6375 = vunpack.c.l.b16 %v5121
          %v6376 = vunpack.c.h.b16 %v5121
          %v6377 = vunpack.c.l.b16 %v5122
          %v6378 = vunpack.c.h.b16 %v5122
          %v6379 = vunpack.c.l.b16 %v5123
          %v6380 = vunpack.c.h.b16 %v5123
          %v6381 = vunpack.c.l.b16 %v5124
          %v6382 = vunpack.c.h.b16 %v5124
          %v6383 = vunpack.c.l.b16 %v5125
          %v6384 = vunpack.c.h.b16 %v5125
          %v6385 = vunpack.c.l.b16 %v5126
          %v6386 = vunpack.c.h.b16 %v5126
          %v6387 = vunpack.c.l.b16 %v5127
          %v6388 = vunpack.c.h.b16 %v5127
          %v6389 = vunpack.c.l.b16 %v5128
          %v6390 = vunpack.c.h.b16 %v5128
          %v6391 = vunpack.c.l.b16 %v5129
          %v6392 = vunpack.c.h.b16 %v5129
          %v6393 = vunpack.c.l.b16 %v5130
          %v6394 = vunpack.c.h.b16 %v5130
          %v6395 = vunpack.c.l.b16 %v5131
          %v6396 = vunpack.c.h.b16 %v5131
          %v6397 = vunpack.c.l.b16 %v5132
          %v6398 = vunpack.c.h.b16 %v5132
          %v6399 = vunpack.c.l.b16 %v5133
          %v6400 = vunpack.c.h.b16 %v5133
          %v6401 = vunpack.c.l.b16 %v5134
          %v6402 = vunpack.c.h.b16 %v5134
          %v6403 = vunpack.c.l.b16 %v5135
          %v6404 = vunpack.c.h.b16 %v5135
          %v6405 = vunpack.c.l.b16 %v5136
          %v6406 = vunpack.c.h.b16 %v5136
          %v6407 = vunpack.c.l.b16 %v5137
          %v6408 = vunpack.c.h.b16 %v5137
          %v6409 = vunpack.c.l.b16 %v5138
          %v6410 = vunpack.c.h.b16 %v5138
          %v6411 = vunpack.c.l.b16 %v5139
          %v6412 = vunpack.c.h.b16 %v5139
          %v6413 = vunpack.c.l.b16 %v5140
          %v6414 = vunpack.c.h.b16 %v5140
          %v6415 = vunpack.c.l.b16 %v5141
          %v6416 = vunpack.c.h.b16 %v5141
          %v6417 = vunpack.c.l.b16 %v5142
          %v6418 = vunpack.c.h.b16 %v5142
          %v6419 = vunpack.c.l.b16 %v5143
          %v6420 = vunpack.c.h.b16 %v5143
          %v6421 = vunpack.c.l.b16 %v5144
          %v6422 = vunpack.c.h.b16 %v5144
          %v6423 = vunpack.c.l.b16 %v5145
          %v6424 = vunpack.c.h.b16 %v5145
          %v6425 = vunpack.c.l.b16 %v5146
          %v6426 = vunpack.c.h.b16 %v5146
          %v6427 = vunpack.c.l.b16 %v5147
          %v6428 = vunpack.c.h.b16 %v5147
          %v6429 = vunpack.c.l.b16 %v5148
          %v6430 = vunpack.c.h.b16 %v5148
          %v6431 = vunpack.c.l.b16 %v5149
          %v6432 = vunpack.c.h.b16 %v5149
          %v6433 = vunpack.c.l.b16 %v5150
          %v6434 = vunpack.c.h.b16 %v5150
          %v6435 = vunpack.c.l.b16 %v5151
          %v6436 = vunpack.c.h.b16 %v5151
          %v6437 = vunpack.c.l.b16 %v5152
          %v6438 = vunpack.c.h.b16 %v5152
          %v6439 = vunpack.c.l.b16 %v5153
          %v6440 = vunpack.c.h.b16 %v5153
          %v6441 = vunpack.c.l.b16 %v5154
          %v6442 = vunpack.c.h.b16 %v5154
          %v6443 = vunpack.c.l.b16 %v5155
          %v6444 = vunpack.c.h.b16 %v5155
          %v6445 = vunpack.c.l.b16 %v5156
          %v6446 = vunpack.c.h.b16 %v5156
          %v6447 = vunpack.c.l.b16 %v5157
          %v6448 = vunpack.c.h.b16 %v5157
          %v6449 = vunpack.c.l.b16 %v5158
          %v6450 = vunpack.c.h.b16 %v5158
          %v6451 = vunpack.c.l.b16 %v5159
          %v6452 = vunpack.c.h.b16 %v5159
          %v6453 = vunpack.c.l.b16 %v5160
          %v6454 = vunpack.c.h.b16 %v5160
          %v6455 = vunpack.c.l.b16 %v5161
          %v6456 = vunpack.c.h.b16 %v5161
          %v6457 = vunpack.c.l.b16 %v5162
          %v6458 = vunpack.c.h.b16 %v5162
          %v6459 = vunpack.c.l.b16 %v5163
          %v6460 = vunpack.c.h.b16 %v5163
          %v6461 = vunpack.c.l.b16 %v5164
          %v6462 = vunpack.c.h.b16 %v5164
          %v6463 = vunpack.c.l.b16 %v5165
          %v6464 = vunpack.c.h.b16 %v5165
          %v6465 = vunpack.c.l.b16 %v5166
          %v6466 = vunpack.c.h.b16 %v5166
          %v6467 = vunpack.c.l.b16 %v5167
          %v6468 = vunpack.c.h.b16 %v5167
          %v6469 = vunpack.c.l.b16 %v5168
          %v6470 = vunpack.c.h.b16 %v5168
          %v6471 = vunpack.c.l.b16 %v5169
          %v6472 = vunpack.c.h.b16 %v5169
          %v6473 = vunpack.c.l.b16 %v5170
          %v6474 = vunpack.c.h.b16 %v5170
          %v6475 = vunpack.c.l.b16 %v5171
          %v6476 = vunpack.c.h.b16 %v5171
          %v6477 = vunpack.c.l.b16 %v5172
          %v6478 = vunpack.c.h.b16 %v5172
          %v6479 = vunpack.c.l.b16 %v5173
          %v6480 = vunpack.c.h.b16 %v5173
          %v6481 = vunpack.c.l.b16 %v5174
          %v6482 = vunpack.c.h.b16 %v5174
          %v6483 = vunpack.c.l.b16 %v5175
          %v6484 = vunpack.c.h.b16 %v5175
          %v6485 = vunpack.c.l.b16 %v5176
          %v6486 = vunpack.c.h.b16 %v5176
          %v6487 = vunpack.c.l.b16 %v5177
          %v6488 = vunpack.c.h.b16 %v5177
          %v6489 = vunpack.c.l.b16 %v5178
          %v6490 = vunpack.c.h.b16 %v5178
          %v6491 = vunpack.c.l.b16 %v5179
          %v6492 = vunpack.c.h.b16 %v5179
          %v6493 = vunpack.c.l.b16 %v5180
          %v6494 = vunpack.c.h.b16 %v5180
          %v6495 = vunpack.c.l.b16 %v5181
          %v6496 = vunpack.c.h.b16 %v5181
          %v6497 = vunpack.c.l.b16 %v5182
          %v6498 = vunpack.c.h.b16 %v5182
          %v6499 = vunpack.c.l.b16 %v5183
          %v6500 = vunpack.c.h.b16 %v5183
          %v6501 = vunpack.c.l.b16 %v5184
          %v6502 = vunpack.c.h.b16 %v5184
          %v6503 = vunpack.c.l.b16 %v5185
          %v6504 = vunpack.c.h.b16 %v5185
          %v6505 = vunpack.c.l.b16 %v5186
          %v6506 = vunpack.c.h.b16 %v5186
          %v6507 = vunpack.c.l.b16 %v5187
          %v6508 = vunpack.c.h.b16 %v5187
          %v6509 = vunpack.c.l.b16 %v5188
          %v6510 = vunpack.c.h.b16 %v5188
          %v6511 = vunpack.c.l.b16 %v5189
          %v6512 = vunpack.c.h.b16 %v5189
          %v6513 = vunpack.c.l.b16 %v5190
          %v6514 = vunpack.c.h.b16 %v5190
          %v6515 = vunpack.c.l.b16 %v5191
          %v6516 = vunpack.c.h.b16 %v5191
          %v6517 = vunpack.c.l.b16 %v5192
          %v6518 = vunpack.c.h.b16 %v5192
          %v6519 = vunpack.c.l.b16 %v5193
          %v6520 = vunpack.c.h.b16 %v5193
          %v6521 = vunpack.c.l.b16 %v5194
          %v6522 = vunpack.c.h.b16 %v5194
          %v6523 = vunpack.c.l.b16 %v5195
          %v6524 = vunpack.c.h.b16 %v5195
          %v6525 = vunpack.c.l.b16 %v5196
          %v6526 = vunpack.c.h.b16 %v5196
          %v6527 = vunpack.c.l.b16 %v5197
          %v6528 = vunpack.c.h.b16 %v5197
          %v6529 = vunpack.c.l.b16 %v5198
          %v6530 = vunpack.c.h.b16 %v5198
          %v6531 = vunpack.c.l.b16 %v5199
          %v6532 = vunpack.c.h.b16 %v5199
          %v6533 = vunpack.c.l.b16 %v5200
          %v6534 = vunpack.c.h.b16 %v5200
          %v6535 = vunpack.c.l.b16 %v5201
          %v6536 = vunpack.c.h.b16 %v5201
          %v6537 = vunpack.c.l.b16 %v5202
          %v6538 = vunpack.c.h.b16 %v5202
          %v6539 = vunpack.c.l.b16 %v5203
          %v6540 = vunpack.c.h.b16 %v5203
          %v6541 = vunpack.c.l.b16 %v5204
          %v6542 = vunpack.c.h.b16 %v5204
          %v6543 = vunpack.c.l.b16 %v5205
          %v6544 = vunpack.c.h.b16 %v5205
          %v6545 = vunpack.c.l.b16 %v5206
          %v6546 = vunpack.c.h.b16 %v5206
          %v6547 = vunpack.c.l.b16 %v5207
          %v6548 = vunpack.c.h.b16 %v5207
          %v6549 = vunpack.c.l.b16 %v5208
          %v6550 = vunpack.c.h.b16 %v5208
          %v6551 = vunpack.c.l.b16 %v5209
          %v6552 = vunpack.c.h.b16 %v5209
          %v6553 = vunpack.c.l.b16 %v5210
          %v6554 = vunpack.c.h.b16 %v5210
          %v6555 = vunpack.c.l.b16 %v5211
          %v6556 = vunpack.c.h.b16 %v5211
          %v6557 = vunpack.c.l.b16 %v5212
          %v6558 = vunpack.c.h.b16 %v5212
          %v6559 = vunpack.c.l.b16 %v5213
          %v6560 = vunpack.c.h.b16 %v5213
          %v6561 = vunpack.c.l.b16 %v5214
          %v6562 = vunpack.c.h.b16 %v5214
          %v6563 = vunpack.c.l.b16 %v5215
          %v6564 = vunpack.c.h.b16 %v5215
          %v6565 = vunpack.c.l.b16 %v5216
          %v6566 = vunpack.c.h.b16 %v5216
          %v6567 = vunpack.c.l.b16 %v5217
          %v6568 = vunpack.c.h.b16 %v5217
          %v6569 = vunpack.c.l.b16 %v5218
          %v6570 = vunpack.c.h.b16 %v5218
          %v6571 = vunpack.c.l.b16 %v5219
          %v6572 = vunpack.c.h.b16 %v5219
          %v6573 = vunpack.c.l.b16 %v5220
          %v6574 = vunpack.c.h.b16 %v5220
          %v6575 = vunpack.c.l.b16 %v5221
          %v6576 = vunpack.c.h.b16 %v5221
          %v6577 = vunpack.c.l.b16 %v5222
          %v6578 = vunpack.c.h.b16 %v5222
          %v6579 = vunpack.c.l.b16 %v5223
          %v6580 = vunpack.c.h.b16 %v5223
          %v6581 = vunpack.c.l.b16 %v5224
          %v6582 = vunpack.c.h.b16 %v5224
          %v6583 = vunpack.c.l.b16 %v5225
          %v6584 = vunpack.c.h.b16 %v5225
          %v6585 = vunpack.c.l.b16 %v5226
          %v6586 = vunpack.c.h.b16 %v5226
          %v6587 = vunpack.c.l.b16 %v5227
          %v6588 = vunpack.c.h.b16 %v5227
          %v6589 = vunpack.c.l.b16 %v5228
          %v6590 = vunpack.c.h.b16 %v5228
          %v6591 = vunpack.c.l.b16 %v5229
          %v6592 = vunpack.c.h.b16 %v5229
          %v6593 = vunpack.c.l.b16 %v5230
          %v6594 = vunpack.c.h.b16 %v5230
          %v6595 = vunpack.c.l.b16 %v5231
          %v6596 = vunpack.c.h.b16 %v5231
          %v6597 = vunpack.c.l.b16 %v5232
          %v6598 = vunpack.c.h.b16 %v5232
          %v6599 = vunpack.c.l.b16 %v5233
          %v6600 = vunpack.c.h.b16 %v5233
          %v6601 = vunpack.c.l.b16 %v5234
          %v6602 = vunpack.c.h.b16 %v5234
          %v6603 = vunpack.c.l.b16 %v5235
          %v6604 = vunpack.c.h.b16 %v5235
          %v6605 = vunpack.c.l.b16 %v5236
          %v6606 = vunpack.c.h.b16 %v5236
          %v6607 = vunpack.c.l.b16 %v5237
          %v6608 = vunpack.c.h.b16 %v5237
          %v6609 = vunpack.c.l.b16 %v5238
          %v6610 = vunpack.c.h.b16 %v5238
          %v6611 = vunpack.c.l.b16 %v5239
          %v6612 = vunpack.c.h.b16 %v5239
          %v6613 = vunpack.c.l.b16 %v5240
          %v6614 = vunpack.c.h.b16 %v5240
          %v6615 = vunpack.c.l.b16 %v5241
          %v6616 = vunpack.c.h.b16 %v5241
          %v6617 = vunpack.c.l.b16 %v5242
          %v6618 = vunpack.c.h.b16 %v5242
          %v6619 = vunpack.c.l.b16 %v5243
          %v6620 = vunpack.c.h.b16 %v5243
          %v6621 = vunpack.c.l.b16 %v5244
          %v6622 = vunpack.c.h.b16 %v5244
          %v6623 = vunpack.c.l.b16 %v5245
          %v6624 = vunpack.c.h.b16 %v5245
          %v6625 = vunpack.c.l.b16 %v5246
          %v6626 = vunpack.c.h.b16 %v5246
          %v6627 = vunpack.c.l.b16 %v5247
          %v6628 = vunpack.c.h.b16 %v5247
          %v6629 = vunpack.c.l.b16 %v5248
          %v6630 = vunpack.c.h.b16 %v5248
          %v6631 = vunpack.c.l.b16 %v5249
          %v6632 = vunpack.c.h.b16 %v5249
          %v6633 = vunpack.c.l.b16 %v5250
          %v6634 = vunpack.c.h.b16 %v5250
          %v6635 = vunpack.c.l.b16 %v5251
          %v6636 = vunpack.c.h.b16 %v5251
          %v6637 = vunpack.c.l.b16 %v5252
          %v6638 = vunpack.c.h.b16 %v5252
          %v6639 = vunpack.c.l.b16 %v5253
          %v6640 = vunpack.c.h.b16 %v5253
          %v6641 = vunpack.c.l.b16 %v5254
          %v6642 = vunpack.c.h.b16 %v5254
          %v6643 = vunpack.c.l.b16 %v5255
          %v6644 = vunpack.c.h.b16 %v5255
          %v6645 = vunpack.c.l.b16 %v5256
          %v6646 = vunpack.c.h.b16 %v5256
          %v6647 = vunpack.c.l.b16 %v5257
          %v6648 = vunpack.c.h.b16 %v5257
          %v6649 = vunpack.c.l.b16 %v5258
          %v6650 = vunpack.c.h.b16 %v5258
          %v6651 = vunpack.c.l.b16 %v5259
          %v6652 = vunpack.c.h.b16 %v5259
          %v6653 = vunpack.c.l.b16 %v5260
          %v6654 = vunpack.c.h.b16 %v5260
          %v6655 = vunpack.c.l.b16 %v5261
          %v6656 = vunpack.c.h.b16 %v5261
          %v6657 = vunpack.c.l.b16 %v5262
          %v6658 = vunpack.c.h.b16 %v5262
          %v6659 = vunpack.c.l.b16 %v5263
          %v6660 = vunpack.c.h.b16 %v5263
          %v6661 = vunpack.c.l.b16 %v5264
          %v6662 = vunpack.c.h.b16 %v5264
          %v6663 = vunpack.c.l.b16 %v5265
          %v6664 = vunpack.c.h.b16 %v5265
          %v6665 = vunpack.c.l.b16 %v5266
          %v6666 = vunpack.c.h.b16 %v5266
          %v6667 = vunpack.c.l.b16 %v5267
          %v6668 = vunpack.c.h.b16 %v5267
          %v6669 = vunpack.c.l.b16 %v5268
          %v6670 = vunpack.c.h.b16 %v5268
          %v6671 = vunpack.c.l.b16 %v5269
          %v6672 = vunpack.c.h.b16 %v5269
          %v6673 = vunpack.c.l.b16 %v5270
          %v6674 = vunpack.c.h.b16 %v5270
          %v6675 = vunpack.c.l.b16 %v5271
          %v6676 = vunpack.c.h.b16 %v5271
          %v6677 = vunpack.c.l.b16 %v5272
          %v6678 = vunpack.c.h.b16 %v5272
          %v6679 = vunpack.c.l.b16 %v5273
          %v6680 = vunpack.c.h.b16 %v5273
          %v6681 = vunpack.c.l.b16 %v5274
          %v6682 = vunpack.c.h.b16 %v5274
          %v6683 = vunpack.c.l.b16 %v5275
          %v6684 = vunpack.c.h.b16 %v5275
          %v6685 = vunpack.c.l.b16 %v5276
          %v6686 = vunpack.c.h.b16 %v5276
          %v6687 = vunpack.c.l.b16 %v5277
          %v6688 = vunpack.c.h.b16 %v5277
          %v6689 = vunpack.c.l.b16 %v5278
          %v6690 = vunpack.c.h.b16 %v5278
          %v6691 = vunpack.c.l.b16 %v5279
          %v6692 = vunpack.c.h.b16 %v5279
          %v6693 = vunpack.c.l.b16 %v5280
          %v6694 = vunpack.c.h.b16 %v5280
          %v6695 = vunpack.c.l.b16 %v5281
          %v6696 = vunpack.c.h.b16 %v5281
          %v6697 = vunpack.c.l.b16 %v5282
          %v6698 = vunpack.c.h.b16 %v5282
          %v6699 = vunpack.c.l.b16 %v5283
          %v6700 = vunpack.c.h.b16 %v5283
          %v6701 = vunpack.c.l.b16 %v5284
          %v6702 = vunpack.c.h.b16 %v5284
          %v6703 = vunpack.c.l.b16 %v5285
          %v6704 = vunpack.c.h.b16 %v5285
          %v6705 = vunpack.c.l.b16 %v5286
          %v6706 = vunpack.c.h.b16 %v5286
          %v6707 = vunpack.c.l.b16 %v5287
          %v6708 = vunpack.c.h.b16 %v5287
          %v6709 = vunpack.c.l.b16 %v5288
          %v6710 = vunpack.c.h.b16 %v5288
          %v6711 = vunpack.c.l.b16 %v5289
          %v6712 = vunpack.c.h.b16 %v5289
          %v6713 = vunpack.c.l.b16 %v5290
          %v6714 = vunpack.c.h.b16 %v5290
          %v6715 = vunpack.c.l.b16 %v5291
          %v6716 = vunpack.c.h.b16 %v5291
          %v6717 = vunpack.c.l.b16 %v5292
          %v6718 = vunpack.c.h.b16 %v5292
          %v6719 = vunpack.c.l.b16 %v5293
          %v6720 = vunpack.c.h.b16 %v5293
          %v6721 = vunpack.c.l.b16 %v5294
          %v6722 = vunpack.c.h.b16 %v5294
          %v6723 = vunpack.c.l.b16 %v5295
          %v6724 = vunpack.c.h.b16 %v5295
          %v6725 = vunpack.c.l.b16 %v5296
          %v6726 = vunpack.c.h.b16 %v5296
          %v6727 = vunpack.c.l.b16 %v5297
          %v6728 = vunpack.c.h.b16 %v5297
          %v6729 = vunpack.c.l.b16 %v5298
          %v6730 = vunpack.c.h.b16 %v5298
          %v6731 = vunpack.c.l.b16 %v5299
          %v6732 = vunpack.c.h.b16 %v5299
          %v6733 = vunpack.c.l.b16 %v5300
          %v6734 = vunpack.c.h.b16 %v5300
          %v6735 = vunpack.c.l.b16 %v5301
          %v6736 = vunpack.c.h.b16 %v5301
          %v6737 = vunpack.c.l.b16 %v5302
          %v6738 = vunpack.c.h.b16 %v5302
          %v6739 = vunpack.c.l.b16 %v5303
          %v6740 = vunpack.c.h.b16 %v5303
          %v6741 = vunpack.c.l.b16 %v5304
          %v6742 = vunpack.c.h.b16 %v5304
          %v6743 = vunpack.c.l.b16 %v5305
          %v6744 = vunpack.c.h.b16 %v5305
          %v6745 = vunpack.c.l.b16 %v5306
          %v6746 = vunpack.c.h.b16 %v5306
          %v6747 = vunpack.c.l.b16 %v5307
          %v6748 = vunpack.c.h.b16 %v5307
          %v6749 = vunpack.c.l.b16 %v5308
          %v6750 = vunpack.c.h.b16 %v5308
          %v6751 = vunpack.c.l.b16 %v5309
          %v6752 = vunpack.c.h.b16 %v5309
          %v6753 = vunpack.c.l.b16 %v5310
          %v6754 = vunpack.c.h.b16 %v5310
          %v6755 = vunpack.c.l.b16 %v5311
          %v6756 = vunpack.c.h.b16 %v5311
          %v6757 = vunpack.c.l.b16 %v5312
          %v6758 = vunpack.c.h.b16 %v5312
          %v6759 = vunpack.c.l.b16 %v5313
          %v6760 = vunpack.c.h.b16 %v5313
          %v6761 = vunpack.c.l.b16 %v5314
          %v6762 = vunpack.c.h.b16 %v5314
          %v6763 = vunpack.c.l.b16 %v5315
          %v6764 = vunpack.c.h.b16 %v5315
          %v6765 = vunpack.c.l.b16 %v5316
          %v6766 = vunpack.c.h.b16 %v5316
          %v6767 = vunpack.c.l.b16 %v5317
          %v6768 = vunpack.c.h.b16 %v5317
          %v6769 = vunpack.c.l.b16 %v5318
          %v6770 = vunpack.c.h.b16 %v5318
          %v6771 = vunpack.c.l.b16 %v5319
          %v6772 = vunpack.c.h.b16 %v5319
          %v6773 = vunpack.c.l.b16 %v5320
          %v6774 = vunpack.c.h.b16 %v5320
          %v6775 = vunpack.c.l.b16 %v5321
          %v6776 = vunpack.c.h.b16 %v5321
          %v6777 = vunpack.c.l.b16 %v5322
          %v6778 = vunpack.c.h.b16 %v5322
          %v6779 = vunpack.c.l.b16 %v5323
          %v6780 = vunpack.c.h.b16 %v5323
          %v6781 = vunpack.c.l.b16 %v5324
          %v6782 = vunpack.c.h.b16 %v5324
          %v6783 = vunpack.c.l.b16 %v5325
          %v6784 = vunpack.c.h.b16 %v5325
          %v6785 = vunpack.c.l.b16 %v5326
          %v6786 = vunpack.c.h.b16 %v5326
          %v6787 = vunpack.c.l.b16 %v5327
          %v6788 = vunpack.c.h.b16 %v5327
          %v6789 = vunpack.c.l.b16 %v5328
          %v6790 = vunpack.c.h.b16 %v5328
          %v6791 = vunpack.c.l.b16 %v5329
          %v6792 = vunpack.c.h.b16 %v5329
          %v6793 = vunpack.c.l.b16 %v5330
          %v6794 = vunpack.c.h.b16 %v5330
          %v6795 = vunpack.c.l.b16 %v5331
          %v6796 = vunpack.c.h.b16 %v5331
          %v6797 = vunpack.c.l.b16 %v5332
          %v6798 = vunpack.c.h.b16 %v5332
          %v6799 = vunpack.c.l.b16 %v5333
          %v6800 = vunpack.c.h.b16 %v5333
          %v6801 = vunpack.c.l.b16 %v5334
          %v6802 = vunpack.c.h.b16 %v5334
          %v6803 = vunpack.c.l.b16 %v5335
          %v6804 = vunpack.c.h.b16 %v5335
          %v6805 = vunpack.c.l.b16 %v5336
          %v6806 = vunpack.c.h.b16 %v5336
          %v6807 = vunpack.c.l.b16 %v5337
          %v6808 = vunpack.c.h.b16 %v5337
          %v6809 = vunpack.c.l.b16 %v5338
          %v6810 = vunpack.c.h.b16 %v5338
          %v6811 = vunpack.c.l.b16 %v5339
          %v6812 = vunpack.c.h.b16 %v5339
          %v6813 = vunpack.c.l.b16 %v5340
          %v6814 = vunpack.c.h.b16 %v5340
          %v6815 = vunpack.c.l.b16 %v5341
          %v6816 = vunpack.c.h.b16 %v5341
          %v6817 = vunpack.c.l.b16 %v5342
          %v6818 = vunpack.c.h.b16 %v5342
          %v6819 = vunpack.c.l.b16 %v5343
          %v6820 = vunpack.c.h.b16 %v5343
          %v6821 = vunpack.c.l.b16 %v5344
          %v6822 = vunpack.c.h.b16 %v5344
          %v6823 = vunpack.c.l.b16 %v5345
          %v6824 = vunpack.c.h.b16 %v5345
          %v6825 = vunpack.c.l.b16 %v5346
          %v6826 = vunpack.c.h.b16 %v5346
          %v6827 = vunpack.c.l.b16 %v5347
          %v6828 = vunpack.c.h.b16 %v5347
          %v6829 = vunpack.c.l.b16 %v5348
          %v6830 = vunpack.c.h.b16 %v5348
          %v6831 = vunpack.c.l.b16 %v5349
          %v6832 = vunpack.c.h.b16 %v5349
          %v6833 = vunpack.c.l.b16 %v5350
          %v6834 = vunpack.c.h.b16 %v5350
          %v6835 = vunpack.c.l.b16 %v5351
          %v6836 = vunpack.c.h.b16 %v5351
          %v6837 = vunpack.c.l.b16 %v5352
          %v6838 = vunpack.c.h.b16 %v5352
          %v6839 = vunpack.c.l.b16 %v5353
          %v6840 = vunpack.c.h.b16 %v5353
          %v6841 = vunpack.c.l.b16 %v5354
          %v6842 = vunpack.c.h.b16 %v5354
          %v6843 = vunpack.c.l.b16 %v5355
          %v6844 = vunpack.c.h.b16 %v5355
          %v6845 = vunpack.c.l.b16 %v5356
          %v6846 = vunpack.c.h.b16 %v5356
          %v6847 = vunpack.c.l.b16 %v5357
          %v6848 = vunpack.c.h.b16 %v5357
          %v6849 = vunpack.c.l.b16 %v5358
          %v6850 = vunpack.c.h.b16 %v5358
          %v6851 = vunpack.c.l.b16 %v5359
          %v6852 = vunpack.c.h.b16 %v5359
          %v6853 = vunpack.c.l.b16 %v5360
          %v6854 = vunpack.c.h.b16 %v5360
          %v6855 = vunpack.c.l.b16 %v5361
          %v6856 = vunpack.c.h.b16 %v5361
          %v6857 = vunpack.c.l.b16 %v5362
          %v6858 = vunpack.c.h.b16 %v5362
          %v6859 = vunpack.c.l.b16 %v5363
          %v6860 = vunpack.c.h.b16 %v5363
          %v6861 = vunpack.c.l.b16 %v5364
          %v6862 = vunpack.c.h.b16 %v5364
          %v6863 = vunpack.c.l.b16 %v5365
          %v6864 = vunpack.c.h.b16 %v5365
          %v6865 = vunpack.c.l.b16 %v5366
          %v6866 = vunpack.c.h.b16 %v5366
          %v6867 = vunpack.c.l.b16 %v5367
          %v6868 = vunpack.c.h.b16 %v5367
          %v6869 = vunpack.c.l.b16 %v5368
          %v6870 = vunpack.c.h.b16 %v5368
          %v6871 = vunpack.c.l.b16 %v5369
          %v6872 = vunpack.c.h.b16 %v5369
          %v6873 = vunpack.c.l.b16 %v5370
          %v6874 = vunpack.c.h.b16 %v5370
          %v6875 = vunpack.c.l.b16 %v5371
          %v6876 = vunpack.c.h.b16 %v5371
          %v6877 = vunpack.c.l.b16 %v5372
          %v6878 = vunpack.c.h.b16 %v5372
          %v6879 = vunpack.c.l.b16 %v5373
          %v6880 = vunpack.c.h.b16 %v5373
          %v6881 = vunpack.c.l.b16 %v5374
          %v6882 = vunpack.c.h.b16 %v5374
          %v6883 = vunpack.c.l.b16 %v5375
          %v6884 = vunpack.c.h.b16 %v5375
          %v6885 = vunpack.c.l.b16 %v5376
          %v6886 = vunpack.c.h.b16 %v5376
          %v6887 = vunpack.c.l.b16 %v5377
          %v6888 = vunpack.c.h.b16 %v5377
          %v6889 = vunpack.c.l.b16 %v5378
          %v6890 = vunpack.c.h.b16 %v5378
          %v6891 = vunpack.c.l.b16 %v5379
          %v6892 = vunpack.c.h.b16 %v5379
          %v6893 = vunpack.c.l.b16 %v5380
          %v6894 = vunpack.c.h.b16 %v5380
          %v6895 = vunpack.c.l.b16 %v5381
          %v6896 = vunpack.c.h.b16 %v5381
          %v6897 = vunpack.c.l.b16 %v5382
          %v6898 = vunpack.c.h.b16 %v5382
          %v6899 = vunpack.c.l.b16 %v5383
          %v6900 = vunpack.c.h.b16 %v5383
          %v6901 = vunpack.c.l.b16 %v5384
          %v6902 = vunpack.c.h.b16 %v5384
          %v6903 = vunpack.c.l.b16 %v5385
          %v6904 = vunpack.c.h.b16 %v5385
          %v6905 = vunpack.c.l.b16 %v5386
          %v6906 = vunpack.c.h.b16 %v5386
          %v6907 = vunpack.c.l.b16 %v5387
          %v6908 = vunpack.c.h.b16 %v5387
          %v6909 = vunpack.c.l.b16 %v5388
          %v6910 = vunpack.c.h.b16 %v5388
          %v6911 = vunpack.c.l.b16 %v5389
          %v6912 = vunpack.c.h.b16 %v5389
          %v6913 = vunpack.c.l.b16 %v5390
          %v6914 = vunpack.c.h.b16 %v5390
          %v6915 = vunpack.c.l.b16 %v5391
          %v6916 = vunpack.c.h.b16 %v5391
          %v6917 = vunpack.c.l.b16 %v5392
          %v6918 = vunpack.c.h.b16 %v5392
          %v6919 = vunpack.c.l.b16 %v5393
          %v6920 = vunpack.c.h.b16 %v5393
          %v6921 = vunpack.c.l.b16 %v5394
          %v6922 = vunpack.c.h.b16 %v5394
          %v6923 = vunpack.c.l.b16 %v5395
          %v6924 = vunpack.c.h.b16 %v5395
          %v6925 = vunpack.c.l.b16 %v5396
          %v6926 = vunpack.c.h.b16 %v5396
          %v6927 = vunpack.c.l.b16 %v5397
          %v6928 = vunpack.c.h.b16 %v5397
          %v6929 = vunpack.c.l.b16 %v5398
          %v6930 = vunpack.c.h.b16 %v5398
          %v6931 = vunpack.c.l.b16 %v5399
          %v6932 = vunpack.c.h.b16 %v5399
          %v6933 = vunpack.c.l.b16 %v5400
          %v6934 = vunpack.c.h.b16 %v5400
          %v6935 = vunpack.c.l.b16 %v5401
          %v6936 = vunpack.c.h.b16 %v5401
          %v6937 = vunpack.c.l.b16 %v5402
          %v6938 = vunpack.c.h.b16 %v5402
          %v6939 = vunpack.c.l.b16 %v5403
          %v6940 = vunpack.c.h.b16 %v5403
          %v6941 = vunpack.c.l.b16 %v5404
          %v6942 = vunpack.c.h.b16 %v5404
          %v6943 = vunpack.c.l.b16 %v5405
          %v6944 = vunpack.c.h.b16 %v5405
          %v6945 = vunpack.c.l.b16 %v5406
          %v6946 = vunpack.c.h.b16 %v5406
          %v6947 = vunpack.c.l.b16 %v5407
          %v6948 = vunpack.c.h.b16 %v5407
          %v6949 = vunpack.c.l.b16 %v5408
          %v6950 = vunpack.c.h.b16 %v5408
          %v6951 = vunpack.c.l.b16 %v5409
          %v6952 = vunpack.c.h.b16 %v5409
          %v6953 = vunpack.c.l.b16 %v5410
          %v6954 = vunpack.c.h.b16 %v5410
          %v6955 = vunpack.c.l.b16 %v5411
          %v6956 = vunpack.c.h.b16 %v5411
          %v6957 = vunpack.c.l.b16 %v5412
          %v6958 = vunpack.c.h.b16 %v5412
          %v6959 = vunpack.c.l.b16 %v5413
          %v6960 = vunpack.c.h.b16 %v5413
          %v6961 = vunpack.c.l.b16 %v5414
          %v6962 = vunpack.c.h.b16 %v5414
          %v6963 = vunpack.c.l.b16 %v5415
          %v6964 = vunpack.c.h.b16 %v5415
          %v6965 = vunpack.c.l.b16 %v5416
          %v6966 = vunpack.c.h.b16 %v5416
          %v6967 = vunpack.c.l.b16 %v5417
          %v6968 = vunpack.c.h.b16 %v5417
          %v6969 = vunpack.c.l.b16 %v5418
          %v6970 = vunpack.c.h.b16 %v5418
          %v6971 = vunpack.c.l.b16 %v5419
          %v6972 = vunpack.c.h.b16 %v5419
          %v6973 = vunpack.c.l.b16 %v5420
          %v6974 = vunpack.c.h.b16 %v5420
          %v6975 = vunpack.c.l.b16 %v5421
          %v6976 = vunpack.c.h.b16 %v5421
          %v6977 = vunpack.c.l.b16 %v5422
          %v6978 = vunpack.c.h.b16 %v5422
          %v6979 = vunpack.c.l.b16 %v5423
          %v6980 = vunpack.c.h.b16 %v5423
          %v6981 = vunpack.c.l.b16 %v5424
          %v6982 = vunpack.c.h.b16 %v5424
          %v6983 = vunpack.c.l.b16 %v5425
          %v6984 = vunpack.c.h.b16 %v5425
          %v6985 = vunpack.c.l.b16 %v5426
          %v6986 = vunpack.c.h.b16 %v5426
          %v6987 = vunpack.c.l.b16 %v5427
          %v6988 = vunpack.c.h.b16 %v5427
          %v6989 = vunpack.c.l.b16 %v5428
          %v6990 = vunpack.c.h.b16 %v5428
          %v6991 = vunpack.c.l.b16 %v5429
          %v6992 = vunpack.c.h.b16 %v5429
          %v6993 = vunpack.c.l.b16 %v5430
          %v6994 = vunpack.c.h.b16 %v5430
          %v6995 = vunpack.c.l.b16 %v5431
          %v6996 = vunpack.c.h.b16 %v5431
          %v6997 = vunpack.c.l.b16 %v5432
          %v6998 = vunpack.c.h.b16 %v5432
          %v6999 = vunpack.c.l.b16 %v5433
          %v7000 = vunpack.c.h.b16 %v5433
          %v7001 = vunpack.c.l.b16 %v5434
          %v7002 = vunpack.c.h.b16 %v5434
          %v7003 = vunpack.c.l.b16 %v5435
          %v7004 = vunpack.c.h.b16 %v5435
          %v7005 = vunpack.c.l.b16 %v5436
          %v7006 = vunpack.c.h.b16 %v5436
          %v7007 = vunpack.c.l.b16 %v5437
          %v7008 = vunpack.c.h.b16 %v5437
          %v7009 = vunpack.c.l.b16 %v5438
          %v7010 = vunpack.c.h.b16 %v5438
          %v7011 = vunpack.c.l.b16 %v5439
          %v7012 = vunpack.c.h.b16 %v5439
          %v7013 = vunpack.c.l.b16 %v5440
          %v7014 = vunpack.c.h.b16 %v5440
          %v7015 = vunpack.c.l.b16 %v5441
          %v7016 = vunpack.c.h.b16 %v5441
          %v7017 = vunpack.c.l.b16 %v5442
          %v7018 = vunpack.c.h.b16 %v5442
          %v7019 = vunpack.c.l.b16 %v5443
          %v7020 = vunpack.c.h.b16 %v5443
          %v7021 = vunpack.c.l.b16 %v5444
          %v7022 = vunpack.c.h.b16 %v5444
          %v7023 = vpack.c.b16 %v6007, %v5999
          %v7024 = vpack.c.b16 %v6008, %v6000
          %v7025 = vpack.c.b16 %v6009, %v6001
          %v7026 = vpack.c.b16 %v6010, %v6002
          %v7027 = vpack.c.b16 %v6011, %v6003
          %v7028 = vpack.c.b16 %v6012, %v6004
          %v7029 = vpack.c.b16 %v6013, %v6005
          %v7030 = vpack.c.b16 %v6014, %v6006
          %v7031 = vpack.c.b16 %v6023, %v6015
          %v7032 = vpack.c.b16 %v6024, %v6016
          %v7033 = vpack.c.b16 %v6025, %v6017
          %v7034 = vpack.c.b16 %v6026, %v6018
          %v7035 = vpack.c.b16 %v6027, %v6019
          %v7036 = vpack.c.b16 %v6028, %v6020
          %v7037 = vpack.c.b16 %v6029, %v6021
          %v7038 = vpack.c.b16 %v6030, %v6022
          %v7039 = vpack.c.b16 %v6039, %v6031
          %v7040 = vpack.c.b16 %v6040, %v6032
          %v7041 = vpack.c.b16 %v6041, %v6033
          %v7042 = vpack.c.b16 %v6042, %v6034
          %v7043 = vpack.c.b16 %v6043, %v6035
          %v7044 = vpack.c.b16 %v6044, %v6036
          %v7045 = vpack.c.b16 %v6045, %v6037
          %v7046 = vpack.c.b16 %v6046, %v6038
          %v7047 = vpack.c.b16 %v6055, %v6047
          %v7048 = vpack.c.b16 %v6056, %v6048
          %v7049 = vpack.c.b16 %v6057, %v6049
          %v7050 = vpack.c.b16 %v6058, %v6050
          %v7051 = vpack.c.b16 %v6059, %v6051
          %v7052 = vpack.c.b16 %v6060, %v6052
          %v7053 = vpack.c.b16 %v6061, %v6053
          %v7054 = vpack.c.b16 %v6062, %v6054
          %v7055 = vpack.c.b16 %v6071, %v6063
          %v7056 = vpack.c.b16 %v6072, %v6064
          %v7057 = vpack.c.b16 %v6073, %v6065
          %v7058 = vpack.c.b16 %v6074, %v6066
          %v7059 = vpack.c.b16 %v6075, %v6067
          %v7060 = vpack.c.b16 %v6076, %v6068
          %v7061 = vpack.c.b16 %v6077, %v6069
          %v7062 = vpack.c.b16 %v6078, %v6070
          %v7063 = vpack.c.b16 %v6087, %v6079
          %v7064 = vpack.c.b16 %v6088, %v6080
          %v7065 = vpack.c.b16 %v6089, %v6081
          %v7066 = vpack.c.b16 %v6090, %v6082
          %v7067 = vpack.c.b16 %v6091, %v6083
          %v7068 = vpack.c.b16 %v6092, %v6084
          %v7069 = vpack.c.b16 %v6093, %v6085
          %v7070 = vpack.c.b16 %v6094, %v6086
          %v7071 = vpack.c.b16 %v6103, %v6095
          %v7072 = vpack.c.b16 %v6104, %v6096
          %v7073 = vpack.c.b16 %v6105, %v6097
          %v7074 = vpack.c.b16 %v6106, %v6098
          %v7075 = vpack.c.b16 %v6107, %v6099
          %v7076 = vpack.c.b16 %v6108, %v6100
          %v7077 = vpack.c.b16 %v6109, %v6101
          %v7078 = vpack.c.b16 %v6110, %v6102
          %v7079 = vpack.c.b16 %v6119, %v6111
          %v7080 = vpack.c.b16 %v6120, %v6112
          %v7081 = vpack.c.b16 %v6121, %v6113
          %v7082 = vpack.c.b16 %v6122, %v6114
          %v7083 = vpack.c.b16 %v6123, %v6115
          %v7084 = vpack.c.b16 %v6124, %v6116
          %v7085 = vpack.c.b16 %v6125, %v6117
          %v7086 = vpack.c.b16 %v6126, %v6118
          %v7087 = vpack.c.b16 %v6135, %v6127
          %v7088 = vpack.c.b16 %v6136, %v6128
          %v7089 = vpack.c.b16 %v6137, %v6129
          %v7090 = vpack.c.b16 %v6138, %v6130
          %v7091 = vpack.c.b16 %v6139, %v6131
          %v7092 = vpack.c.b16 %v6140, %v6132
          %v7093 = vpack.c.b16 %v6141, %v6133
          %v7094 = vpack.c.b16 %v6142, %v6134
          %v7095 = vpack.c.b16 %v6151, %v6143
          %v7096 = vpack.c.b16 %v6152, %v6144
          %v7097 = vpack.c.b16 %v6153, %v6145
          %v7098 = vpack.c.b16 %v6154, %v6146
          %v7099 = vpack.c.b16 %v6155, %v6147
          %v7100 = vpack.c.b16 %v6156, %v6148
          %v7101 = vpack.c.b16 %v6157, %v6149
          %v7102 = vpack.c.b16 %v6158, %v6150
          %v7103 = vpack.c.b16 %v6167, %v6159
          %v7104 = vpack.c.b16 %v6168, %v6160
          %v7105 = vpack.c.b16 %v6169, %v6161
          %v7106 = vpack.c.b16 %v6170, %v6162
          %v7107 = vpack.c.b16 %v6171, %v6163
          %v7108 = vpack.c.b16 %v6172, %v6164
          %v7109 = vpack.c.b16 %v6173, %v6165
          %v7110 = vpack.c.b16 %v6174, %v6166
          %v7111 = vpack.c.b16 %v6183, %v6175
          %v7112 = vpack.c.b16 %v6184, %v6176
          %v7113 = vpack.c.b16 %v6185, %v6177
          %v7114 = vpack.c.b16 %v6186, %v6178
          %v7115 = vpack.c.b16 %v6187, %v6179
          %v7116 = vpack.c.b16 %v6188, %v6180
          %v7117 = vpack.c.b16 %v6189, %v6181
          %v7118 = vpack.c.b16 %v6190, %v6182
          %v7119 = vpack.c.b16 %v6199, %v6191
          %v7120 = vpack.c.b16 %v6200, %v6192
          %v7121 = vpack.c.b16 %v6201, %v6193
          %v7122 = vpack.c.b16 %v6202, %v6194
          %v7123 = vpack.c.b16 %v6203, %v6195
          %v7124 = vpack.c.b16 %v6204, %v6196
          %v7125 = vpack.c.b16 %v6205, %v6197
          %v7126 = vpack.c.b16 %v6206, %v6198
          %v7127 = vpack.c.b16 %v6215, %v6207
          %v7128 = vpack.c.b16 %v6216, %v6208
          %v7129 = vpack.c.b16 %v6217, %v6209
          %v7130 = vpack.c.b16 %v6218, %v6210
          %v7131 = vpack.c.b16 %v6219, %v6211
          %v7132 = vpack.c.b16 %v6220, %v6212
          %v7133 = vpack.c.b16 %v6221, %v6213
          %v7134 = vpack.c.b16 %v6222, %v6214
          %v7135 = vpack.c.b16 %v6231, %v6223
          %v7136 = vpack.c.b16 %v6232, %v6224
          %v7137 = vpack.c.b16 %v6233, %v6225
          %v7138 = vpack.c.b16 %v6234, %v6226
          %v7139 = vpack.c.b16 %v6235, %v6227
          %v7140 = vpack.c.b16 %v6236, %v6228
          %v7141 = vpack.c.b16 %v6237, %v6229
          %v7142 = vpack.c.b16 %v6238, %v6230
          %v7143 = vpack.c.b16 %v6247, %v6239
          %v7144 = vpack.c.b16 %v6248, %v6240
          %v7145 = vpack.c.b16 %v6249, %v6241
          %v7146 = vpack.c.b16 %v6250, %v6242
          %v7147 = vpack.c.b16 %v6251, %v6243
          %v7148 = vpack.c.b16 %v6252, %v6244
          %v7149 = vpack.c.b16 %v6253, %v6245
          %v7150 = vpack.c.b16 %v6254, %v6246
          %v7151 = vpack.c.b16 %v6263, %v6255
          %v7152 = vpack.c.b16 %v6264, %v6256
          %v7153 = vpack.c.b16 %v6265, %v6257
          %v7154 = vpack.c.b16 %v6266, %v6258
          %v7155 = vpack.c.b16 %v6267, %v6259
          %v7156 = vpack.c.b16 %v6268, %v6260
          %v7157 = vpack.c.b16 %v6269, %v6261
          %v7158 = vpack.c.b16 %v6270, %v6262
          %v7159 = vpack.c.b16 %v6279, %v6271
          %v7160 = vpack.c.b16 %v6280, %v6272
          %v7161 = vpack.c.b16 %v6281, %v6273
          %v7162 = vpack.c.b16 %v6282, %v6274
          %v7163 = vpack.c.b16 %v6283, %v6275
          %v7164 = vpack.c.b16 %v6284, %v6276
          %v7165 = vpack.c.b16 %v6285, %v6277
          %v7166 = vpack.c.b16 %v6286, %v6278
          %v7167 = vpack.c.b16 %v6295, %v6287
          %v7168 = vpack.c.b16 %v6296, %v6288
          %v7169 = vpack.c.b16 %v6297, %v6289
          %v7170 = vpack.c.b16 %v6298, %v6290
          %v7171 = vpack.c.b16 %v6299, %v6291
          %v7172 = vpack.c.b16 %v6300, %v6292
          %v7173 = vpack.c.b16 %v6301, %v6293
          %v7174 = vpack.c.b16 %v6302, %v6294
          %v7175 = vpack.c.b16 %v6311, %v6303
          %v7176 = vpack.c.b16 %v6312, %v6304
          %v7177 = vpack.c.b16 %v6313, %v6305
          %v7178 = vpack.c.b16 %v6314, %v6306
          %v7179 = vpack.c.b16 %v6315, %v6307
          %v7180 = vpack.c.b16 %v6316, %v6308
          %v7181 = vpack.c.b16 %v6317, %v6309
          %v7182 = vpack.c.b16 %v6318, %v6310
          %v7183 = vpack.c.b16 %v6327, %v6319
          %v7184 = vpack.c.b16 %v6328, %v6320
          %v7185 = vpack.c.b16 %v6329, %v6321
          %v7186 = vpack.c.b16 %v6330, %v6322
          %v7187 = vpack.c.b16 %v6331, %v6323
          %v7188 = vpack.c.b16 %v6332, %v6324
          %v7189 = vpack.c.b16 %v6333, %v6325
          %v7190 = vpack.c.b16 %v6334, %v6326
          %v7191 = vpack.c.b16 %v6343, %v6335
          %v7192 = vpack.c.b16 %v6344, %v6336
          %v7193 = vpack.c.b16 %v6345, %v6337
          %v7194 = vpack.c.b16 %v6346, %v6338
          %v7195 = vpack.c.b16 %v6347, %v6339
          %v7196 = vpack.c.b16 %v6348, %v6340
          %v7197 = vpack.c.b16 %v6349, %v6341
          %v7198 = vpack.c.b16 %v6350, %v6342
          %v7199 = vpack.c.b16 %v6359, %v6351
          %v7200 = vpack.c.b16 %v6360, %v6352
          %v7201 = vpack.c.b16 %v6361, %v6353
          %v7202 = vpack.c.b16 %v6362, %v6354
          %v7203 = vpack.c.b16 %v6363, %v6355
          %v7204 = vpack.c.b16 %v6364, %v6356
          %v7205 = vpack.c.b16 %v6365, %v6357
          %v7206 = vpack.c.b16 %v6366, %v6358
          %v7207 = vpack.c.b16 %v6375, %v6367
          %v7208 = vpack.c.b16 %v6376, %v6368
          %v7209 = vpack.c.b16 %v6377, %v6369
          %v7210 = vpack.c.b16 %v6378, %v6370
          %v7211 = vpack.c.b16 %v6379, %v6371
          %v7212 = vpack.c.b16 %v6380, %v6372
          %v7213 = vpack.c.b16 %v6381, %v6373
          %v7214 = vpack.c.b16 %v6382, %v6374
          %v7215 = vpack.c.b16 %v6391, %v6383
          %v7216 = vpack.c.b16 %v6392, %v6384
          %v7217 = vpack.c.b16 %v6393, %v6385
          %v7218 = vpack.c.b16 %v6394, %v6386
          %v7219 = vpack.c.b16 %v6395, %v6387
          %v7220 = vpack.c.b16 %v6396, %v6388
          %v7221 = vpack.c.b16 %v6397, %v6389
          %v7222 = vpack.c.b16 %v6398, %v6390
          %v7223 = vpack.c.b16 %v6407, %v6399
          %v7224 = vpack.c.b16 %v6408, %v6400
          %v7225 = vpack.c.b16 %v6409, %v6401
          %v7226 = vpack.c.b16 %v6410, %v6402
          %v7227 = vpack.c.b16 %v6411, %v6403
          %v7228 = vpack.c.b16 %v6412, %v6404
          %v7229 = vpack.c.b16 %v6413, %v6405
          %v7230 = vpack.c.b16 %v6414, %v6406
          %v7231 = vpack.c.b16 %v6423, %v6415
          %v7232 = vpack.c.b16 %v6424, %v6416
          %v7233 = vpack.c.b16 %v6425, %v6417
          %v7234 = vpack.c.b16 %v6426, %v6418
          %v7235 = vpack.c.b16 %v6427, %v6419
          %v7236 = vpack.c.b16 %v6428, %v6420
          %v7237 = vpack.c.b16 %v6429, %v6421
          %v7238 = vpack.c.b16 %v6430, %v6422
          %v7239 = vpack.c.b16 %v6439, %v6431
          %v7240 = vpack.c.b16 %v6440, %v6432
          %v7241 = vpack.c.b16 %v6441, %v6433
          %v7242 = vpack.c.b16 %v6442, %v6434
          %v7243 = vpack.c.b16 %v6443, %v6435
          %v7244 = vpack.c.b16 %v6444, %v6436
          %v7245 = vpack.c.b16 %v6445, %v6437
          %v7246 = vpack.c.b16 %v6446, %v6438
          %v7247 = vpack.c.b16 %v6455, %v6447
          %v7248 = vpack.c.b16 %v6456, %v6448
          %v7249 = vpack.c.b16 %v6457, %v6449
          %v7250 = vpack.c.b16 %v6458, %v6450
          %v7251 = vpack.c.b16 %v6459, %v6451
          %v7252 = vpack.c.b16 %v6460, %v6452
          %v7253 = vpack.c.b16 %v6461, %v6453
          %v7254 = vpack.c.b16 %v6462, %v6454
          %v7255 = vpack.c.b16 %v6471, %v6463
          %v7256 = vpack.c.b16 %v6472, %v6464
          %v7257 = vpack.c.b16 %v6473, %v6465
          %v7258 = vpack.c.b16 %v6474, %v6466
          %v7259 = vpack.c.b16 %v6475, %v6467
          %v7260 = vpack.c.b16 %v6476, %v6468
          %v7261 = vpack.c.b16 %v6477, %v6469
          %v7262 = vpack.c.b16 %v6478, %v6470
          %v7263 = vpack.c.b16 %v6487, %v6479
          %v7264 = vpack.c.b16 %v6488, %v6480
          %v7265 = vpack.c.b16 %v6489, %v6481
          %v7266 = vpack.c.b16 %v6490, %v6482
          %v7267 = vpack.c.b16 %v6491, %v6483
          %v7268 = vpack.c.b16 %v6492, %v6484
          %v7269 = vpack.c.b16 %v6493, %v6485
          %v7270 = vpack.c.b16 %v6494, %v6486
          %v7271 = vpack.c.b16 %v6503, %v6495
          %v7272 = vpack.c.b16 %v6504, %v6496
          %v7273 = vpack.c.b16 %v6505, %v6497
          %v7274 = vpack.c.b16 %v6506, %v6498
          %v7275 = vpack.c.b16 %v6507, %v6499
          %v7276 = vpack.c.b16 %v6508, %v6500
          %v7277 = vpack.c.b16 %v6509, %v6501
          %v7278 = vpack.c.b16 %v6510, %v6502
          %v7279 = vpack.c.b16 %v6519, %v6511
          %v7280 = vpack.c.b16 %v6520, %v6512
          %v7281 = vpack.c.b16 %v6521, %v6513
          %v7282 = vpack.c.b16 %v6522, %v6514
          %v7283 = vpack.c.b16 %v6523, %v6515
          %v7284 = vpack.c.b16 %v6524, %v6516
          %v7285 = vpack.c.b16 %v6525, %v6517
          %v7286 = vpack.c.b16 %v6526, %v6518
          %v7287 = vpack.c.b16 %v6535, %v6527
          %v7288 = vpack.c.b16 %v6536, %v6528
          %v7289 = vpack.c.b16 %v6537, %v6529
          %v7290 = vpack.c.b16 %v6538, %v6530
          %v7291 = vpack.c.b16 %v6539, %v6531
          %v7292 = vpack.c.b16 %v6540, %v6532
          %v7293 = vpack.c.b16 %v6541, %v6533
          %v7294 = vpack.c.b16 %v6542, %v6534
          %v7295 = vpack.c.b16 %v6551, %v6543
          %v7296 = vpack.c.b16 %v6552, %v6544
          %v7297 = vpack.c.b16 %v6553, %v6545
          %v7298 = vpack.c.b16 %v6554, %v6546
          %v7299 = vpack.c.b16 %v6555, %v6547
          %v7300 = vpack.c.b16 %v6556, %v6548
          %v7301 = vpack.c.b16 %v6557, %v6549
          %v7302 = vpack.c.b16 %v6558, %v6550
          %v7303 = vpack.c.b16 %v6567, %v6559
          %v7304 = vpack.c.b16 %v6568, %v6560
          %v7305 = vpack.c.b16 %v6569, %v6561
          %v7306 = vpack.c.b16 %v6570, %v6562
          %v7307 = vpack.c.b16 %v6571, %v6563
          %v7308 = vpack.c.b16 %v6572, %v6564
          %v7309 = vpack.c.b16 %v6573, %v6565
          %v7310 = vpack.c.b16 %v6574, %v6566
          %v7311 = vpack.c.b16 %v6583, %v6575
          %v7312 = vpack.c.b16 %v6584, %v6576
          %v7313 = vpack.c.b16 %v6585, %v6577
          %v7314 = vpack.c.b16 %v6586, %v6578
          %v7315 = vpack.c.b16 %v6587, %v6579
          %v7316 = vpack.c.b16 %v6588, %v6580
          %v7317 = vpack.c.b16 %v6589, %v6581
          %v7318 = vpack.c.b16 %v6590, %v6582
          %v7319 = vpack.c.b16 %v6599, %v6591
          %v7320 = vpack.c.b16 %v6600, %v6592
          %v7321 = vpack.c.b16 %v6601, %v6593
          %v7322 = vpack.c.b16 %v6602, %v6594
          %v7323 = vpack.c.b16 %v6603, %v6595
          %v7324 = vpack.c.b16 %v6604, %v6596
          %v7325 = vpack.c.b16 %v6605, %v6597
          %v7326 = vpack.c.b16 %v6606, %v6598
          %v7327 = vpack.c.b16 %v6615, %v6607
          %v7328 = vpack.c.b16 %v6616, %v6608
          %v7329 = vpack.c.b16 %v6617, %v6609
          %v7330 = vpack.c.b16 %v6618, %v6610
          %v7331 = vpack.c.b16 %v6619, %v6611
          %v7332 = vpack.c.b16 %v6620, %v6612
          %v7333 = vpack.c.b16 %v6621, %v6613
          %v7334 = vpack.c.b16 %v6622, %v6614
          %v7335 = vpack.c.b16 %v6631, %v6623
          %v7336 = vpack.c.b16 %v6632, %v6624
          %v7337 = vpack.c.b16 %v6633, %v6625
          %v7338 = vpack.c.b16 %v6634, %v6626
          %v7339 = vpack.c.b16 %v6635, %v6627
          %v7340 = vpack.c.b16 %v6636, %v6628
          %v7341 = vpack.c.b16 %v6637, %v6629
          %v7342 = vpack.c.b16 %v6638, %v6630
          %v7343 = vpack.c.b16 %v6647, %v6639
          %v7344 = vpack.c.b16 %v6648, %v6640
          %v7345 = vpack.c.b16 %v6649, %v6641
          %v7346 = vpack.c.b16 %v6650, %v6642
          %v7347 = vpack.c.b16 %v6651, %v6643
          %v7348 = vpack.c.b16 %v6652, %v6644
          %v7349 = vpack.c.b16 %v6653, %v6645
          %v7350 = vpack.c.b16 %v6654, %v6646
          %v7351 = vpack.c.b16 %v6663, %v6655
          %v7352 = vpack.c.b16 %v6664, %v6656
          %v7353 = vpack.c.b16 %v6665, %v6657
          %v7354 = vpack.c.b16 %v6666, %v6658
          %v7355 = vpack.c.b16 %v6667, %v6659
          %v7356 = vpack.c.b16 %v6668, %v6660
          %v7357 = vpack.c.b16 %v6669, %v6661
          %v7358 = vpack.c.b16 %v6670, %v6662
          %v7359 = vpack.c.b16 %v6679, %v6671
          %v7360 = vpack.c.b16 %v6680, %v6672
          %v7361 = vpack.c.b16 %v6681, %v6673
          %v7362 = vpack.c.b16 %v6682, %v6674
          %v7363 = vpack.c.b16 %v6683, %v6675
          %v7364 = vpack.c.b16 %v6684, %v6676
          %v7365 = vpack.c.b16 %v6685, %v6677
          %v7366 = vpack.c.b16 %v6686, %v6678
          %v7367 = vpack.c.b16 %v6695, %v6687
          %v7368 = vpack.c.b16 %v6696, %v6688
          %v7369 = vpack.c.b16 %v6697, %v6689
          %v7370 = vpack.c.b16 %v6698, %v6690
          %v7371 = vpack.c.b16 %v6699, %v6691
          %v7372 = vpack.c.b16 %v6700, %v6692
          %v7373 = vpack.c.b16 %v6701, %v6693
          %v7374 = vpack.c.b16 %v6702, %v6694
          %v7375 = vpack.c.b16 %v6711, %v6703
          %v7376 = vpack.c.b16 %v6712, %v6704
          %v7377 = vpack.c.b16 %v6713, %v6705
          %v7378 = vpack.c.b16 %v6714, %v6706
          %v7379 = vpack.c.b16 %v6715, %v6707
          %v7380 = vpack.c.b16 %v6716, %v6708
          %v7381 = vpack.c.b16 %v6717, %v6709
          %v7382 = vpack.c.b16 %v6718, %v6710
          %v7383 = vpack.c.b16 %v6727, %v6719
          %v7384 = vpack.c.b16 %v6728, %v6720
          %v7385 = vpack.c.b16 %v6729, %v6721
          %v7386 = vpack.c.b16 %v6730, %v6722
          %v7387 = vpack.c.b16 %v6731, %v6723
          %v7388 = vpack.c.b16 %v6732, %v6724
          %v7389 = vpack.c.b16 %v6733, %v6725
          %v7390 = vpack.c.b16 %v6734, %v6726
          %v7391 = vpack.c.b16 %v6743, %v6735
          %v7392 = vpack.c.b16 %v6744, %v6736
          %v7393 = vpack.c.b16 %v6745, %v6737
          %v7394 = vpack.c.b16 %v6746, %v6738
          %v7395 = vpack.c.b16 %v6747, %v6739
          %v7396 = vpack.c.b16 %v6748, %v6740
          %v7397 = vpack.c.b16 %v6749, %v6741
          %v7398 = vpack.c.b16 %v6750, %v6742
          %v7399 = vpack.c.b16 %v6759, %v6751
          %v7400 = vpack.c.b16 %v6760, %v6752
          %v7401 = vpack.c.b16 %v6761, %v6753
          %v7402 = vpack.c.b16 %v6762, %v6754
          %v7403 = vpack.c.b16 %v6763, %v6755
          %v7404 = vpack.c.b16 %v6764, %v6756
          %v7405 = vpack.c.b16 %v6765, %v6757
          %v7406 = vpack.c.b16 %v6766, %v6758
          %v7407 = vpack.c.b16 %v6775, %v6767
          %v7408 = vpack.c.b16 %v6776, %v6768
          %v7409 = vpack.c.b16 %v6777, %v6769
          %v7410 = vpack.c.b16 %v6778, %v6770
          %v7411 = vpack.c.b16 %v6779, %v6771
          %v7412 = vpack.c.b16 %v6780, %v6772
          %v7413 = vpack.c.b16 %v6781, %v6773
          %v7414 = vpack.c.b16 %v6782, %v6774
          %v7415 = vpack.c.b16 %v6791, %v6783
          %v7416 = vpack.c.b16 %v6792, %v6784
          %v7417 = vpack.c.b16 %v6793, %v6785
          %v7418 = vpack.c.b16 %v6794, %v6786
          %v7419 = vpack.c.b16 %v6795, %v6787
          %v7420 = vpack.c.b16 %v6796, %v6788
          %v7421 = vpack.c.b16 %v6797, %v6789
          %v7422 = vpack.c.b16 %v6798, %v6790
          %v7423 = vpack.c.b16 %v6807, %v6799
          %v7424 = vpack.c.b16 %v6808, %v6800
          %v7425 = vpack.c.b16 %v6809, %v6801
          %v7426 = vpack.c.b16 %v6810, %v6802
          %v7427 = vpack.c.b16 %v6811, %v6803
          %v7428 = vpack.c.b16 %v6812, %v6804
          %v7429 = vpack.c.b16 %v6813, %v6805
          %v7430 = vpack.c.b16 %v6814, %v6806
          %v7431 = vpack.c.b16 %v6823, %v6815
          %v7432 = vpack.c.b16 %v6824, %v6816
          %v7433 = vpack.c.b16 %v6825, %v6817
          %v7434 = vpack.c.b16 %v6826, %v6818
          %v7435 = vpack.c.b16 %v6827, %v6819
          %v7436 = vpack.c.b16 %v6828, %v6820
          %v7437 = vpack.c.b16 %v6829, %v6821
          %v7438 = vpack.c.b16 %v6830, %v6822
          %v7439 = vpack.c.b16 %v6839, %v6831
          %v7440 = vpack.c.b16 %v6840, %v6832
          %v7441 = vpack.c.b16 %v6841, %v6833
          %v7442 = vpack.c.b16 %v6842, %v6834
          %v7443 = vpack.c.b16 %v6843, %v6835
          %v7444 = vpack.c.b16 %v6844, %v6836
          %v7445 = vpack.c.b16 %v6845, %v6837
          %v7446 = vpack.c.b16 %v6846, %v6838
          %v7447 = vpack.c.b16 %v6855, %v6847
          %v7448 = vpack.c.b16 %v6856, %v6848
          %v7449 = vpack.c.b16 %v6857, %v6849
          %v7450 = vpack.c.b16 %v6858, %v6850
          %v7451 = vpack.c.b16 %v6859, %v6851
          %v7452 = vpack.c.b16 %v6860, %v6852
          %v7453 = vpack.c.b16 %v6861, %v6853
          %v7454 = vpack.c.b16 %v6862, %v6854
          %v7455 = vpack.c.b16 %v6871, %v6863
          %v7456 = vpack.c.b16 %v6872, %v6864
          %v7457 = vpack.c.b16 %v6873, %v6865
          %v7458 = vpack.c.b16 %v6874, %v6866
          %v7459 = vpack.c.b16 %v6875, %v6867
          %v7460 = vpack.c.b16 %v6876, %v6868
          %v7461 = vpack.c.b16 %v6877, %v6869
          %v7462 = vpack.c.b16 %v6878, %v6870
          %v7463 = vpack.c.b16 %v6887, %v6879
          %v7464 = vpack.c.b16 %v6888, %v6880
          %v7465 = vpack.c.b16 %v6889, %v6881
          %v7466 = vpack.c.b16 %v6890, %v6882
          %v7467 = vpack.c.b16 %v6891, %v6883
          %v7468 = vpack.c.b16 %v6892, %v6884
          %v7469 = vpack.c.b16 %v6893, %v6885
          %v7470 = vpack.c.b16 %v6894, %v6886
          %v7471 = vpack.c.b16 %v6903, %v6895
          %v7472 = vpack.c.b16 %v6904, %v6896
          %v7473 = vpack.c.b16 %v6905, %v6897
          %v7474 = vpack.c.b16 %v6906, %v6898
          %v7475 = vpack.c.b16 %v6907, %v6899
          %v7476 = vpack.c.b16 %v6908, %v6900
          %v7477 = vpack.c.b16 %v6909, %v6901
          %v7478 = vpack.c.b16 %v6910, %v6902
          %v7479 = vpack.c.b16 %v6919, %v6911
          %v7480 = vpack.c.b16 %v6920, %v6912
          %v7481 = vpack.c.b16 %v6921, %v6913
          %v7482 = vpack.c.b16 %v6922, %v6914
          %v7483 = vpack.c.b16 %v6923, %v6915
          %v7484 = vpack.c.b16 %v6924, %v6916
          %v7485 = vpack.c.b16 %v6925, %v6917
          %v7486 = vpack.c.b16 %v6926, %v6918
          %v7487 = vpack.c.b16 %v6935, %v6927
          %v7488 = vpack.c.b16 %v6936, %v6928
          %v7489 = vpack.c.b16 %v6937, %v6929
          %v7490 = vpack.c.b16 %v6938, %v6930
          %v7491 = vpack.c.b16 %v6939, %v6931
          %v7492 = vpack.c.b16 %v6940, %v6932
          %v7493 = vpack.c.b16 %v6941, %v6933
          %v7494 = vpack.c.b16 %v6942, %v6934
          %v7495 = vpack.c.b16 %v6951, %v6943
          %v7496 = vpack.c.b16 %v6952, %v6944
          %v7497 = vpack.c.b16 %v6953, %v6945
          %v7498 = vpack.c.b16 %v6954, %v6946
          %v7499 = vpack.c.b16 %v6955, %v6947
          %v7500 = vpack.c.b16 %v6956, %v6948
          %v7501 = vpack.c.b16 %v6957, %v6949
          %v7502 = vpack.c.b16 %v6958, %v6950
          %v7503 = vpack.c.b16 %v6967, %v6959
          %v7504 = vpack.c.b16 %v6968, %v6960
          %v7505 = vpack.c.b16 %v6969, %v6961
          %v7506 = vpack.c.b16 %v6970, %v6962
          %v7507 = vpack.c.b16 %v6971, %v6963
          %v7508 = vpack.c.b16 %v6972, %v6964
          %v7509 = vpack.c.b16 %v6973, %v6965
          %v7510 = vpack.c.b16 %v6974, %v6966
          %v7511 = vpack.c.b16 %v6983, %v6975
          %v7512 = vpack.c.b16 %v6984, %v6976
          %v7513 = vpack.c.b16 %v6985, %v6977
          %v7514 = vpack.c.b16 %v6986, %v6978
          %v7515 = vpack.c.b16 %v6987, %v6979
          %v7516 = vpack.c.b16 %v6988, %v6980
          %v7517 = vpack.c.b16 %v6989, %v6981
          %v7518 = vpack.c.b16 %v6990, %v6982
          %v7519 = vpack.c.b16 %v6999, %v6991
          %v7520 = vpack.c.b16 %v7000, %v6992
          %v7521 = vpack.c.b16 %v7001, %v6993
          %v7522 = vpack.c.b16 %v7002, %v6994
          %v7523 = vpack.c.b16 %v7003, %v6995
          %v7524 = vpack.c.b16 %v7004, %v6996
          %v7525 = vpack.c.b16 %v7005, %v6997
          %v7526 = vpack.c.b16 %v7006, %v6998
          %v7527 = vpack.c.b16 %v7015, %v7007
          %v7528 = vpack.c.b16 %v7016, %v7008
          %v7529 = vpack.c.b16 %v7017, %v7009
          %v7530 = vpack.c.b16 %v7018, %v7010
          %v7531 = vpack.c.b16 %v7019, %v7011
          %v7532 = vpack.c.b16 %v7020, %v7012
          %v7533 = vpack.c.b16 %v7021, %v7013
          %v7534 = vpack.c.b16 %v7022, %v7014
          %8047 = vmatprep.subr.bf16.mxu0 %v7080
          %8048 = vmatpush1.bf16.msra.mxu0 %v7079
          %8049 = vmatprep.subr.bf16.mxu0 %v7072
          %8050 = vmatpush1.bf16.msra.mxu0 %v7071
          %8051 = vmatprep.subr.bf16.mxu0 %v7064
          %8052 = vmatpush1.bf16.msra.mxu0 %v7063
          %8053 = vmatprep.subr.bf16.mxu0 %v7056
          %8054 = vmatpush1.bf16.msra.mxu0 %v7055
          %8055 = vmatprep.subr.bf16.mxu0 %v7048
          %8056 = vmatpush1.bf16.msra.mxu0 %v7047
          %8057 = vmatprep.subr.bf16.mxu0 %v7040
          %8058 = vmatpush1.bf16.msra.mxu0 %v7039
          %8059 = vmatprep.subr.bf16.mxu0 %v7032
          %8060 = vmatpush1.bf16.msra.mxu0 %v7031
          %8061 = vmatprep.subr.bf16.mxu0 %v7024
          %8062 = vmatpush1.bf16.msra.mxu0 %v7023
          %8063 = vmatprep.subr.bf16.mxu0 %v7144
          %8064 = vmatpush2.bf16.msra.mxu0 %v7143
          %8065 = vmatprep.subr.bf16.mxu0 %v7136
          %8066 = vmatpush2.bf16.msra.mxu0 %v7135
          %8067 = vmatprep.subr.bf16.mxu0 %v7128
          %8068 = vmatpush2.bf16.msra.mxu0 %v7127
          %8069 = vmatprep.subr.bf16.mxu0 %v7120
          %8070 = vmatpush2.bf16.msra.mxu0 %v7119
          %8071 = vmatprep.subr.bf16.mxu0 %v7112
          %8072 = vmatpush2.bf16.msra.mxu0 %v7111
          %8073 = vmatprep.subr.bf16.mxu0 %v7104
          %8074 = vmatpush2.bf16.msra.mxu0 %v7103
          %8075 = vmatprep.subr.bf16.mxu0 %v7096
          %8076 = vmatpush2.bf16.msra.mxu0 %v7095
          %8077 = vmatprep.subr.bf16.mxu0 %v7088
          %8078 = vmatpush2.bf16.msra.mxu0 %v7087
          %8079 = vmatprep.mubr.bf16.mxu0 %v4926
          %8080 = vmatmul.mubr.bf16.gmra.mxu0 %v4925
          %v8081 = vpop.f32.mrf.mxu0
          %v8082 = vadd.f32 %v5450, %v8081
          %v8083 = vpop.f32.mrf.mxu0
          %v8084 = vadd.f32 %v5454, %v8083
          %v8085 = vpop.f32.mrf.mxu0
          %v8086 = vpop.f32.mrf.mxu0
          %8087 = vdwg.mxu0
          %8088 = vmatprep.subr.bf16.mxu0 %v7208
          %8089 = vmatpush1.bf16.msra.mxu0 %v7207
          %8090 = vmatprep.subr.bf16.mxu0 %v7200
          %8091 = vmatpush1.bf16.msra.mxu0 %v7199
          %8092 = vmatprep.subr.bf16.mxu0 %v7192
          %8093 = vmatpush1.bf16.msra.mxu0 %v7191
          %8094 = vmatprep.subr.bf16.mxu0 %v7184
          %8095 = vmatpush1.bf16.msra.mxu0 %v7183
          %8096 = vmatprep.subr.bf16.mxu0 %v7176
          %8097 = vmatpush1.bf16.msra.mxu0 %v7175
          %8098 = vmatprep.subr.bf16.mxu0 %v7168
          %8099 = vmatpush1.bf16.msra.mxu0 %v7167
          %8100 = vmatprep.subr.bf16.mxu0 %v7160
          %8101 = vmatpush1.bf16.msra.mxu0 %v7159
          %8102 = vmatprep.subr.bf16.mxu0 %v7152
          %8103 = vmatpush1.bf16.msra.mxu0 %v7151
          %8104 = vmatprep.subr.bf16.mxu0 %v7272
          %8105 = vmatpush2.bf16.msra.mxu0 %v7271
          %8106 = vmatprep.subr.bf16.mxu0 %v7264
          %8107 = vmatpush2.bf16.msra.mxu0 %v7263
          %8108 = vmatprep.subr.bf16.mxu0 %v7256
          %8109 = vmatpush2.bf16.msra.mxu0 %v7255
          %8110 = vmatprep.subr.bf16.mxu0 %v7248
          %8111 = vmatpush2.bf16.msra.mxu0 %v7247
          %8112 = vmatprep.subr.bf16.mxu0 %v7240
          %8113 = vmatpush2.bf16.msra.mxu0 %v7239
          %8114 = vmatprep.subr.bf16.mxu0 %v7232
          %8115 = vmatpush2.bf16.msra.mxu0 %v7231
          %8116 = vmatprep.subr.bf16.mxu0 %v7224
          %8117 = vmatpush2.bf16.msra.mxu0 %v7223
          %8118 = vmatprep.subr.bf16.mxu0 %v7216
          %8119 = vmatpush2.bf16.msra.mxu0 %v7215
          %8120 = vmatprep.mubr.bf16.mxu0 %v4928
          %8121 = vmatmul.mubr.bf16.gmra.mxu0 %v4927
          %v8122 = vpop.f32.mrf.mxu0
          %v8123 = vadd.f32 %v8082, %v8122
          %v8124 = vpop.f32.mrf.mxu0
          %v8125 = vadd.f32 %v8084, %v8124
          %v8126 = vpop.f32.mrf.mxu0
          %v8127 = vpop.f32.mrf.mxu0
          %8128 = vdwg.mxu0
          %8129 = vmatprep.subr.bf16.mxu0 %v7336
          %8130 = vmatpush1.bf16.msra.mxu0 %v7335
          %8131 = vmatprep.subr.bf16.mxu0 %v7328
          %8132 = vmatpush1.bf16.msra.mxu0 %v7327
          %8133 = vmatprep.subr.bf16.mxu0 %v7320
          %8134 = vmatpush1.bf16.msra.mxu0 %v7319
          %8135 = vmatprep.subr.bf16.mxu0 %v7312
          %8136 = vmatpush1.bf16.msra.mxu0 %v7311
          %8137 = vmatprep.subr.bf16.mxu0 %v7304
          %8138 = vmatpush1.bf16.msra.mxu0 %v7303
          %8139 = vmatprep.subr.bf16.mxu0 %v7296
          %8140 = vmatpush1.bf16.msra.mxu0 %v7295
          %8141 = vmatprep.subr.bf16.mxu0 %v7288
          %8142 = vmatpush1.bf16.msra.mxu0 %v7287
          %8143 = vmatprep.subr.bf16.mxu0 %v7280
          %8144 = vmatpush1.bf16.msra.mxu0 %v7279
          %8145 = vmatprep.subr.bf16.mxu0 %v7400
          %8146 = vmatpush2.bf16.msra.mxu0 %v7399
          %8147 = vmatprep.subr.bf16.mxu0 %v7392
          %8148 = vmatpush2.bf16.msra.mxu0 %v7391
          %8149 = vmatprep.subr.bf16.mxu0 %v7384
          %8150 = vmatpush2.bf16.msra.mxu0 %v7383
          %8151 = vmatprep.subr.bf16.mxu0 %v7376
          %8152 = vmatpush2.bf16.msra.mxu0 %v7375
          %8153 = vmatprep.subr.bf16.mxu0 %v7368
          %8154 = vmatpush2.bf16.msra.mxu0 %v7367
          %8155 = vmatprep.subr.bf16.mxu0 %v7360
          %8156 = vmatpush2.bf16.msra.mxu0 %v7359
          %8157 = vmatprep.subr.bf16.mxu0 %v7352
          %8158 = vmatpush2.bf16.msra.mxu0 %v7351
          %8159 = vmatprep.subr.bf16.mxu0 %v7344
          %8160 = vmatpush2.bf16.msra.mxu0 %v7343
          %8161 = vmatprep.mubr.bf16.mxu0 %v4930
          %8162 = vmatmul.mubr.bf16.gmra.mxu0 %v4929
          %v8163 = vpop.f32.mrf.mxu0
          %v8164 = vadd.f32 %v8123, %v8163
          %v8165 = vpop.f32.mrf.mxu0
          %v8166 = vadd.f32 %v8125, %v8165
          %v8167 = vpop.f32.mrf.mxu0
          %v8168 = vpop.f32.mrf.mxu0
          %8169 = vdwg.mxu0
          %8170 = vmatprep.subr.bf16.mxu0 %v7464
          %8171 = vmatpush1.bf16.msra.mxu0 %v7463
          %8172 = vmatprep.subr.bf16.mxu0 %v7456
          %8173 = vmatpush1.bf16.msra.mxu0 %v7455
          %8174 = vmatprep.subr.bf16.mxu0 %v7448
          %8175 = vmatpush1.bf16.msra.mxu0 %v7447
          %8176 = vmatprep.subr.bf16.mxu0 %v7440
          %8177 = vmatpush1.bf16.msra.mxu0 %v7439
          %8178 = vmatprep.subr.bf16.mxu0 %v7432
          %8179 = vmatpush1.bf16.msra.mxu0 %v7431
          %8180 = vmatprep.subr.bf16.mxu0 %v7424
          %8181 = vmatpush1.bf16.msra.mxu0 %v7423
          %8182 = vmatprep.subr.bf16.mxu0 %v7416
          %8183 = vmatpush1.bf16.msra.mxu0 %v7415
          %8184 = vmatprep.subr.bf16.mxu0 %v7408
          %8185 = vmatpush1.bf16.msra.mxu0 %v7407
          %8186 = vmatprep.subr.bf16.mxu0 %v7528
          %8187 = vmatpush2.bf16.msra.mxu0 %v7527
          %8188 = vmatprep.subr.bf16.mxu0 %v7520
          %8189 = vmatpush2.bf16.msra.mxu0 %v7519
          %8190 = vmatprep.subr.bf16.mxu0 %v7512
          %8191 = vmatpush2.bf16.msra.mxu0 %v7511
          %8192 = vmatprep.subr.bf16.mxu0 %v7504
          %8193 = vmatpush2.bf16.msra.mxu0 %v7503
          %8194 = vmatprep.subr.bf16.mxu0 %v7496
          %8195 = vmatpush2.bf16.msra.mxu0 %v7495
          %8196 = vmatprep.subr.bf16.mxu0 %v7488
          %8197 = vmatpush2.bf16.msra.mxu0 %v7487
          %8198 = vmatprep.subr.bf16.mxu0 %v7480
          %8199 = vmatpush2.bf16.msra.mxu0 %v7479
          %8200 = vmatprep.subr.bf16.mxu0 %v7472
          %8201 = vmatpush2.bf16.msra.mxu0 %v7471
          %8202 = vmatprep.mubr.bf16.mxu0 %v4932
          %8203 = vmatmul.mubr.bf16.gmra.mxu0 %v4931
          %v8204 = vpop.f32.mrf.mxu0
          %v8205 = vadd.f32 %v8164, %v8204
          %v8206 = vpop.f32.mrf.mxu0
          %v8207 = vadd.f32 %v8166, %v8206
          %v8208 = vpop.f32.mrf.mxu0
          %v8209 = vpop.f32.mrf.mxu0
          %8210 = vdwg.mxu0
          %8211 = vmatprep.subr.bf16.mxu0 %v7082
          %8212 = vmatpush1.bf16.msra.mxu0 %v7081
          %8213 = vmatprep.subr.bf16.mxu0 %v7074
          %8214 = vmatpush1.bf16.msra.mxu0 %v7073
          %8215 = vmatprep.subr.bf16.mxu0 %v7066
          %8216 = vmatpush1.bf16.msra.mxu0 %v7065
          %8217 = vmatprep.subr.bf16.mxu0 %v7058
          %8218 = vmatpush1.bf16.msra.mxu0 %v7057
          %8219 = vmatprep.subr.bf16.mxu0 %v7050
          %8220 = vmatpush1.bf16.msra.mxu0 %v7049
          %8221 = vmatprep.subr.bf16.mxu0 %v7042
          %8222 = vmatpush1.bf16.msra.mxu0 %v7041
          %8223 = vmatprep.subr.bf16.mxu0 %v7034
          %8224 = vmatpush1.bf16.msra.mxu0 %v7033
          %8225 = vmatprep.subr.bf16.mxu0 %v7026
          %8226 = vmatpush1.bf16.msra.mxu0 %v7025
          %8227 = vmatprep.subr.bf16.mxu0 %v7146
          %8228 = vmatpush2.bf16.msra.mxu0 %v7145
          %8229 = vmatprep.subr.bf16.mxu0 %v7138
          %8230 = vmatpush2.bf16.msra.mxu0 %v7137
          %8231 = vmatprep.subr.bf16.mxu0 %v7130
          %8232 = vmatpush2.bf16.msra.mxu0 %v7129
          %8233 = vmatprep.subr.bf16.mxu0 %v7122
          %8234 = vmatpush2.bf16.msra.mxu0 %v7121
          %8235 = vmatprep.subr.bf16.mxu0 %v7114
          %8236 = vmatpush2.bf16.msra.mxu0 %v7113
          %8237 = vmatprep.subr.bf16.mxu0 %v7106
          %8238 = vmatpush2.bf16.msra.mxu0 %v7105
          %8239 = vmatprep.subr.bf16.mxu0 %v7098
          %8240 = vmatpush2.bf16.msra.mxu0 %v7097
          %8241 = vmatprep.subr.bf16.mxu0 %v7090
          %8242 = vmatpush2.bf16.msra.mxu0 %v7089
          %8243 = vmatprep.mubr.bf16.mxu0 %v4926
          %8244 = vmatmul.mubr.bf16.gmra.mxu0 %v4925
          %v8245 = vpop.f32.mrf.mxu0
          %v8246 = vadd.f32 %v5458, %v8245
          %v8247 = vpop.f32.mrf.mxu0
          %v8248 = vadd.f32 %v5462, %v8247
          %v8249 = vpop.f32.mrf.mxu0
          %v8250 = vpop.f32.mrf.mxu0
          %8251 = vdwg.mxu0
          %8252 = vmatprep.subr.bf16.mxu0 %v7210
          %8253 = vmatpush1.bf16.msra.mxu0 %v7209
          %8254 = vmatprep.subr.bf16.mxu0 %v7202
          %8255 = vmatpush1.bf16.msra.mxu0 %v7201
          %8256 = vmatprep.subr.bf16.mxu0 %v7194
          %8257 = vmatpush1.bf16.msra.mxu0 %v7193
          %8258 = vmatprep.subr.bf16.mxu0 %v7186
          %8259 = vmatpush1.bf16.msra.mxu0 %v7185
          %8260 = vmatprep.subr.bf16.mxu0 %v7178
          %8261 = vmatpush1.bf16.msra.mxu0 %v7177
          %8262 = vmatprep.subr.bf16.mxu0 %v7170
          %8263 = vmatpush1.bf16.msra.mxu0 %v7169
          %8264 = vmatprep.subr.bf16.mxu0 %v7162
          %8265 = vmatpush1.bf16.msra.mxu0 %v7161
          %8266 = vmatprep.subr.bf16.mxu0 %v7154
          %8267 = vmatpush1.bf16.msra.mxu0 %v7153
          %8268 = vmatprep.subr.bf16.mxu0 %v7274
          %8269 = vmatpush2.bf16.msra.mxu0 %v7273
          %8270 = vmatprep.subr.bf16.mxu0 %v7266
          %8271 = vmatpush2.bf16.msra.mxu0 %v7265
          %8272 = vmatprep.subr.bf16.mxu0 %v7258
          %8273 = vmatpush2.bf16.msra.mxu0 %v7257
          %8274 = vmatprep.subr.bf16.mxu0 %v7250
          %8275 = vmatpush2.bf16.msra.mxu0 %v7249
          %8276 = vmatprep.subr.bf16.mxu0 %v7242
          %8277 = vmatpush2.bf16.msra.mxu0 %v7241
          %8278 = vmatprep.subr.bf16.mxu0 %v7234
          %8279 = vmatpush2.bf16.msra.mxu0 %v7233
          %8280 = vmatprep.subr.bf16.mxu0 %v7226
          %8281 = vmatpush2.bf16.msra.mxu0 %v7225
          %8282 = vmatprep.subr.bf16.mxu0 %v7218
          %8283 = vmatpush2.bf16.msra.mxu0 %v7217
          %8284 = vmatprep.mubr.bf16.mxu0 %v4928
          %8285 = vmatmul.mubr.bf16.gmra.mxu0 %v4927
          %v8286 = vpop.f32.mrf.mxu0
          %v8287 = vadd.f32 %v8246, %v8286
          %v8288 = vpop.f32.mrf.mxu0
          %v8289 = vadd.f32 %v8248, %v8288
          %v8290 = vpop.f32.mrf.mxu0
          %v8291 = vpop.f32.mrf.mxu0
          %8292 = vdwg.mxu0
          %8293 = vmatprep.subr.bf16.mxu0 %v7338
          %8294 = vmatpush1.bf16.msra.mxu0 %v7337
          %8295 = vmatprep.subr.bf16.mxu0 %v7330
          %8296 = vmatpush1.bf16.msra.mxu0 %v7329
          %8297 = vmatprep.subr.bf16.mxu0 %v7322
          %8298 = vmatpush1.bf16.msra.mxu0 %v7321
          %8299 = vmatprep.subr.bf16.mxu0 %v7314
          %8300 = vmatpush1.bf16.msra.mxu0 %v7313
          %8301 = vmatprep.subr.bf16.mxu0 %v7306
          %8302 = vmatpush1.bf16.msra.mxu0 %v7305
          %8303 = vmatprep.subr.bf16.mxu0 %v7298
          %8304 = vmatpush1.bf16.msra.mxu0 %v7297
          %8305 = vmatprep.subr.bf16.mxu0 %v7290
          %8306 = vmatpush1.bf16.msra.mxu0 %v7289
          %8307 = vmatprep.subr.bf16.mxu0 %v7282
          %8308 = vmatpush1.bf16.msra.mxu0 %v7281
          %8309 = vmatprep.subr.bf16.mxu0 %v7402
          %8310 = vmatpush2.bf16.msra.mxu0 %v7401
          %8311 = vmatprep.subr.bf16.mxu0 %v7394
          %8312 = vmatpush2.bf16.msra.mxu0 %v7393
          %8313 = vmatprep.subr.bf16.mxu0 %v7386
          %8314 = vmatpush2.bf16.msra.mxu0 %v7385
          %8315 = vmatprep.subr.bf16.mxu0 %v7378
          %8316 = vmatpush2.bf16.msra.mxu0 %v7377
          %8317 = vmatprep.subr.bf16.mxu0 %v7370
          %8318 = vmatpush2.bf16.msra.mxu0 %v7369
          %8319 = vmatprep.subr.bf16.mxu0 %v7362
          %8320 = vmatpush2.bf16.msra.mxu0 %v7361
          %8321 = vmatprep.subr.bf16.mxu0 %v7354
          %8322 = vmatpush2.bf16.msra.mxu0 %v7353
          %8323 = vmatprep.subr.bf16.mxu0 %v7346
          %8324 = vmatpush2.bf16.msra.mxu0 %v7345
          %8325 = vmatprep.mubr.bf16.mxu0 %v4930
          %8326 = vmatmul.mubr.bf16.gmra.mxu0 %v4929
          %v8327 = vpop.f32.mrf.mxu0
          %v8328 = vadd.f32 %v8287, %v8327
          %v8329 = vpop.f32.mrf.mxu0
          %v8330 = vadd.f32 %v8289, %v8329
          %v8331 = vpop.f32.mrf.mxu0
          %v8332 = vpop.f32.mrf.mxu0
          %8333 = vdwg.mxu0
          %8334 = vmatprep.subr.bf16.mxu0 %v7466
          %8335 = vmatpush1.bf16.msra.mxu0 %v7465
          %8336 = vmatprep.subr.bf16.mxu0 %v7458
          %8337 = vmatpush1.bf16.msra.mxu0 %v7457
          %8338 = vmatprep.subr.bf16.mxu0 %v7450
          %8339 = vmatpush1.bf16.msra.mxu0 %v7449
          %8340 = vmatprep.subr.bf16.mxu0 %v7442
          %8341 = vmatpush1.bf16.msra.mxu0 %v7441
          %8342 = vmatprep.subr.bf16.mxu0 %v7434
          %8343 = vmatpush1.bf16.msra.mxu0 %v7433
          %8344 = vmatprep.subr.bf16.mxu0 %v7426
          %8345 = vmatpush1.bf16.msra.mxu0 %v7425
          %8346 = vmatprep.subr.bf16.mxu0 %v7418
          %8347 = vmatpush1.bf16.msra.mxu0 %v7417
          %8348 = vmatprep.subr.bf16.mxu0 %v7410
          %8349 = vmatpush1.bf16.msra.mxu0 %v7409
          %8350 = vmatprep.subr.bf16.mxu0 %v7530
          %8351 = vmatpush2.bf16.msra.mxu0 %v7529
          %8352 = vmatprep.subr.bf16.mxu0 %v7522
          %8353 = vmatpush2.bf16.msra.mxu0 %v7521
          %8354 = vmatprep.subr.bf16.mxu0 %v7514
          %8355 = vmatpush2.bf16.msra.mxu0 %v7513
          %8356 = vmatprep.subr.bf16.mxu0 %v7506
          %8357 = vmatpush2.bf16.msra.mxu0 %v7505
          %8358 = vmatprep.subr.bf16.mxu0 %v7498
          %8359 = vmatpush2.bf16.msra.mxu0 %v7497
          %8360 = vmatprep.subr.bf16.mxu0 %v7490
          %8361 = vmatpush2.bf16.msra.mxu0 %v7489
          %8362 = vmatprep.subr.bf16.mxu0 %v7482
          %8363 = vmatpush2.bf16.msra.mxu0 %v7481
          %8364 = vmatprep.subr.bf16.mxu0 %v7474
          %8365 = vmatpush2.bf16.msra.mxu0 %v7473
          %8366 = vmatprep.mubr.bf16.mxu0 %v4932
          %8367 = vmatmul.mubr.bf16.gmra.mxu0 %v4931
          %v8368 = vpop.f32.mrf.mxu0
          %v8369 = vadd.f32 %v8328, %v8368
          %v8370 = vpop.f32.mrf.mxu0
          %v8371 = vadd.f32 %v8330, %v8370
          %v8372 = vpop.f32.mrf.mxu0
          %v8373 = vpop.f32.mrf.mxu0
          %8374 = vdwg.mxu0
          %8375 = vmatprep.subr.bf16.mxu0 %v7084
          %8376 = vmatpush1.bf16.msra.mxu0 %v7083
          %8377 = vmatprep.subr.bf16.mxu0 %v7076
          %8378 = vmatpush1.bf16.msra.mxu0 %v7075
          %8379 = vmatprep.subr.bf16.mxu0 %v7068
          %8380 = vmatpush1.bf16.msra.mxu0 %v7067
          %8381 = vmatprep.subr.bf16.mxu0 %v7060
          %8382 = vmatpush1.bf16.msra.mxu0 %v7059
          %8383 = vmatprep.subr.bf16.mxu0 %v7052
          %8384 = vmatpush1.bf16.msra.mxu0 %v7051
          %8385 = vmatprep.subr.bf16.mxu0 %v7044
          %8386 = vmatpush1.bf16.msra.mxu0 %v7043
          %8387 = vmatprep.subr.bf16.mxu0 %v7036
          %8388 = vmatpush1.bf16.msra.mxu0 %v7035
          %8389 = vmatprep.subr.bf16.mxu0 %v7028
          %8390 = vmatpush1.bf16.msra.mxu0 %v7027
          %8391 = vmatprep.subr.bf16.mxu0 %v7148
          %8392 = vmatpush2.bf16.msra.mxu0 %v7147
          %8393 = vmatprep.subr.bf16.mxu0 %v7140
          %8394 = vmatpush2.bf16.msra.mxu0 %v7139
          %8395 = vmatprep.subr.bf16.mxu0 %v7132
          %8396 = vmatpush2.bf16.msra.mxu0 %v7131
          %8397 = vmatprep.subr.bf16.mxu0 %v7124
          %8398 = vmatpush2.bf16.msra.mxu0 %v7123
          %8399 = vmatprep.subr.bf16.mxu0 %v7116
          %8400 = vmatpush2.bf16.msra.mxu0 %v7115
          %8401 = vmatprep.subr.bf16.mxu0 %v7108
          %8402 = vmatpush2.bf16.msra.mxu0 %v7107
          %8403 = vmatprep.subr.bf16.mxu0 %v7100
          %8404 = vmatpush2.bf16.msra.mxu0 %v7099
          %8405 = vmatprep.subr.bf16.mxu0 %v7092
          %8406 = vmatpush2.bf16.msra.mxu0 %v7091
          %8407 = vmatprep.mubr.bf16.mxu0 %v4926
          %8408 = vmatmul.mubr.bf16.gmra.mxu0 %v4925
          %v8409 = vpop.f32.mrf.mxu0
          %v8410 = vadd.f32 %v5466, %v8409
          %v8411 = vpop.f32.mrf.mxu0
          %v8412 = vadd.f32 %v5470, %v8411
          %v8413 = vpop.f32.mrf.mxu0
          %v8414 = vpop.f32.mrf.mxu0
          %8415 = vdwg.mxu0
          %8416 = vmatprep.subr.bf16.mxu0 %v7212
          %8417 = vmatpush1.bf16.msra.mxu0 %v7211
          %8418 = vmatprep.subr.bf16.mxu0 %v7204
          %8419 = vmatpush1.bf16.msra.mxu0 %v7203
          %8420 = vmatprep.subr.bf16.mxu0 %v7196
          %8421 = vmatpush1.bf16.msra.mxu0 %v7195
          %8422 = vmatprep.subr.bf16.mxu0 %v7188
          %8423 = vmatpush1.bf16.msra.mxu0 %v7187
          %8424 = vmatprep.subr.bf16.mxu0 %v7180
          %8425 = vmatpush1.bf16.msra.mxu0 %v7179
          %8426 = vmatprep.subr.bf16.mxu0 %v7172
          %8427 = vmatpush1.bf16.msra.mxu0 %v7171
          %8428 = vmatprep.subr.bf16.mxu0 %v7164
          %8429 = vmatpush1.bf16.msra.mxu0 %v7163
          %8430 = vmatprep.subr.bf16.mxu0 %v7156
          %8431 = vmatpush1.bf16.msra.mxu0 %v7155
          %8432 = vmatprep.subr.bf16.mxu0 %v7276
          %8433 = vmatpush2.bf16.msra.mxu0 %v7275
          %8434 = vmatprep.subr.bf16.mxu0 %v7268
          %8435 = vmatpush2.bf16.msra.mxu0 %v7267
          %8436 = vmatprep.subr.bf16.mxu0 %v7260
          %8437 = vmatpush2.bf16.msra.mxu0 %v7259
          %8438 = vmatprep.subr.bf16.mxu0 %v7252
          %8439 = vmatpush2.bf16.msra.mxu0 %v7251
          %8440 = vmatprep.subr.bf16.mxu0 %v7244
          %8441 = vmatpush2.bf16.msra.mxu0 %v7243
          %8442 = vmatprep.subr.bf16.mxu0 %v7236
          %8443 = vmatpush2.bf16.msra.mxu0 %v7235
          %8444 = vmatprep.subr.bf16.mxu0 %v7228
          %8445 = vmatpush2.bf16.msra.mxu0 %v7227
          %8446 = vmatprep.subr.bf16.mxu0 %v7220
          %8447 = vmatpush2.bf16.msra.mxu0 %v7219
          %8448 = vmatprep.mubr.bf16.mxu0 %v4928
          %8449 = vmatmul.mubr.bf16.gmra.mxu0 %v4927
          %v8450 = vpop.f32.mrf.mxu0
          %v8451 = vadd.f32 %v8410, %v8450
          %v8452 = vpop.f32.mrf.mxu0
          %v8453 = vadd.f32 %v8412, %v8452
          %v8454 = vpop.f32.mrf.mxu0
          %v8455 = vpop.f32.mrf.mxu0
          %8456 = vdwg.mxu0
          %8457 = vmatprep.subr.bf16.mxu0 %v7340
          %8458 = vmatpush1.bf16.msra.mxu0 %v7339
          %8459 = vmatprep.subr.bf16.mxu0 %v7332
          %8460 = vmatpush1.bf16.msra.mxu0 %v7331
          %8461 = vmatprep.subr.bf16.mxu0 %v7324
          %8462 = vmatpush1.bf16.msra.mxu0 %v7323
          %8463 = vmatprep.subr.bf16.mxu0 %v7316
          %8464 = vmatpush1.bf16.msra.mxu0 %v7315
          %8465 = vmatprep.subr.bf16.mxu0 %v7308
          %8466 = vmatpush1.bf16.msra.mxu0 %v7307
          %8467 = vmatprep.subr.bf16.mxu0 %v7300
          %8468 = vmatpush1.bf16.msra.mxu0 %v7299
          %8469 = vmatprep.subr.bf16.mxu0 %v7292
          %8470 = vmatpush1.bf16.msra.mxu0 %v7291
          %8471 = vmatprep.subr.bf16.mxu0 %v7284
          %8472 = vmatpush1.bf16.msra.mxu0 %v7283
          %8473 = vmatprep.subr.bf16.mxu0 %v7404
          %8474 = vmatpush2.bf16.msra.mxu0 %v7403
          %8475 = vmatprep.subr.bf16.mxu0 %v7396
          %8476 = vmatpush2.bf16.msra.mxu0 %v7395
          %8477 = vmatprep.subr.bf16.mxu0 %v7388
          %8478 = vmatpush2.bf16.msra.mxu0 %v7387
          %8479 = vmatprep.subr.bf16.mxu0 %v7380
          %8480 = vmatpush2.bf16.msra.mxu0 %v7379
          %8481 = vmatprep.subr.bf16.mxu0 %v7372
          %8482 = vmatpush2.bf16.msra.mxu0 %v7371
          %8483 = vmatprep.subr.bf16.mxu0 %v7364
          %8484 = vmatpush2.bf16.msra.mxu0 %v7363
          %8485 = vmatprep.subr.bf16.mxu0 %v7356
          %8486 = vmatpush2.bf16.msra.mxu0 %v7355
          %8487 = vmatprep.subr.bf16.mxu0 %v7348
          %8488 = vmatpush2.bf16.msra.mxu0 %v7347
          %8489 = vmatprep.mubr.bf16.mxu0 %v4930
          %8490 = vmatmul.mubr.bf16.gmra.mxu0 %v4929
          %v8491 = vpop.f32.mrf.mxu0
          %v8492 = vadd.f32 %v8451, %v8491
          %v8493 = vpop.f32.mrf.mxu0
          %v8494 = vadd.f32 %v8453, %v8493
          %v8495 = vpop.f32.mrf.mxu0
          %v8496 = vpop.f32.mrf.mxu0
          %8497 = vdwg.mxu0
          %8498 = vmatprep.subr.bf16.mxu0 %v7468
          %8499 = vmatpush1.bf16.msra.mxu0 %v7467
          %8500 = vmatprep.subr.bf16.mxu0 %v7460
          %8501 = vmatpush1.bf16.msra.mxu0 %v7459
          %8502 = vmatprep.subr.bf16.mxu0 %v7452
          %8503 = vmatpush1.bf16.msra.mxu0 %v7451
          %8504 = vmatprep.subr.bf16.mxu0 %v7444
          %8505 = vmatpush1.bf16.msra.mxu0 %v7443
          %8506 = vmatprep.subr.bf16.mxu0 %v7436
          %8507 = vmatpush1.bf16.msra.mxu0 %v7435
          %8508 = vmatprep.subr.bf16.mxu0 %v7428
          %8509 = vmatpush1.bf16.msra.mxu0 %v7427
          %8510 = vmatprep.subr.bf16.mxu0 %v7420
          %8511 = vmatpush1.bf16.msra.mxu0 %v7419
          %8512 = vmatprep.subr.bf16.mxu0 %v7412
          %8513 = vmatpush1.bf16.msra.mxu0 %v7411
          %8514 = vmatprep.subr.bf16.mxu0 %v7532
          %8515 = vmatpush2.bf16.msra.mxu0 %v7531
          %8516 = vmatprep.subr.bf16.mxu0 %v7524
          %8517 = vmatpush2.bf16.msra.mxu0 %v7523
          %8518 = vmatprep.subr.bf16.mxu0 %v7516
          %8519 = vmatpush2.bf16.msra.mxu0 %v7515
          %8520 = vmatprep.subr.bf16.mxu0 %v7508
          %8521 = vmatpush2.bf16.msra.mxu0 %v7507
          %8522 = vmatprep.subr.bf16.mxu0 %v7500
          %8523 = vmatpush2.bf16.msra.mxu0 %v7499
          %8524 = vmatprep.subr.bf16.mxu0 %v7492
          %8525 = vmatpush2.bf16.msra.mxu0 %v7491
          %8526 = vmatprep.subr.bf16.mxu0 %v7484
          %8527 = vmatpush2.bf16.msra.mxu0 %v7483
          %8528 = vmatprep.subr.bf16.mxu0 %v7476
          %8529 = vmatpush2.bf16.msra.mxu0 %v7475
          %8530 = vmatprep.mubr.bf16.mxu0 %v4932
          %8531 = vmatmul.mubr.bf16.gmra.mxu0 %v4931
          %v8532 = vpop.f32.mrf.mxu0
          %v8533 = vadd.f32 %v8492, %v8532
          %v8534 = vpop.f32.mrf.mxu0
          %v8535 = vadd.f32 %v8494, %v8534
          %v8536 = vpop.f32.mrf.mxu0
          %v8537 = vpop.f32.mrf.mxu0
          %8538 = vdwg.mxu0
          %8539 = vmatprep.subr.bf16.mxu0 %v7086
          %8540 = vmatpush1.bf16.msra.mxu0 %v7085
          %8541 = vmatprep.subr.bf16.mxu0 %v7078
          %8542 = vmatpush1.bf16.msra.mxu0 %v7077
          %8543 = vmatprep.subr.bf16.mxu0 %v7070
          %8544 = vmatpush1.bf16.msra.mxu0 %v7069
          %8545 = vmatprep.subr.bf16.mxu0 %v7062
          %8546 = vmatpush1.bf16.msra.mxu0 %v7061
          %8547 = vmatprep.subr.bf16.mxu0 %v7054
          %8548 = vmatpush1.bf16.msra.mxu0 %v7053
          %8549 = vmatprep.subr.bf16.mxu0 %v7046
          %8550 = vmatpush1.bf16.msra.mxu0 %v7045
          %8551 = vmatprep.subr.bf16.mxu0 %v7038
          %8552 = vmatpush1.bf16.msra.mxu0 %v7037
          %8553 = vmatprep.subr.bf16.mxu0 %v7030
          %8554 = vmatpush1.bf16.msra.mxu0 %v7029
          %8555 = vmatprep.subr.bf16.mxu0 %v7150
          %8556 = vmatpush2.bf16.msra.mxu0 %v7149
          %8557 = vmatprep.subr.bf16.mxu0 %v7142
          %8558 = vmatpush2.bf16.msra.mxu0 %v7141
          %8559 = vmatprep.subr.bf16.mxu0 %v7134
          %8560 = vmatpush2.bf16.msra.mxu0 %v7133
          %8561 = vmatprep.subr.bf16.mxu0 %v7126
          %8562 = vmatpush2.bf16.msra.mxu0 %v7125
          %8563 = vmatprep.subr.bf16.mxu0 %v7118
          %8564 = vmatpush2.bf16.msra.mxu0 %v7117
          %8565 = vmatprep.subr.bf16.mxu0 %v7110
          %8566 = vmatpush2.bf16.msra.mxu0 %v7109
          %8567 = vmatprep.subr.bf16.mxu0 %v7102
          %8568 = vmatpush2.bf16.msra.mxu0 %v7101
          %8569 = vmatprep.subr.bf16.mxu0 %v7094
          %8570 = vmatpush2.bf16.msra.mxu0 %v7093
          %8571 = vmatprep.mubr.bf16.mxu0 %v4926
          %8572 = vmatmul.mubr.bf16.gmra.mxu0 %v4925
          %v8573 = vpop.f32.mrf.mxu0
          %v8574 = vadd.f32 %v5474, %v8573
          %v8575 = vpop.f32.mrf.mxu0
          %v8576 = vadd.f32 %v5478, %v8575
          %v8577 = vpop.f32.mrf.mxu0
          %v8578 = vpop.f32.mrf.mxu0
          %8579 = vdwg.mxu0
          %8580 = vmatprep.subr.bf16.mxu0 %v7214
          %8581 = vmatpush1.bf16.msra.mxu0 %v7213
          %8582 = vmatprep.subr.bf16.mxu0 %v7206
          %8583 = vmatpush1.bf16.msra.mxu0 %v7205
          %8584 = vmatprep.subr.bf16.mxu0 %v7198
          %8585 = vmatpush1.bf16.msra.mxu0 %v7197
          %8586 = vmatprep.subr.bf16.mxu0 %v7190
          %8587 = vmatpush1.bf16.msra.mxu0 %v7189
          %8588 = vmatprep.subr.bf16.mxu0 %v7182
          %8589 = vmatpush1.bf16.msra.mxu0 %v7181
          %8590 = vmatprep.subr.bf16.mxu0 %v7174
          %8591 = vmatpush1.bf16.msra.mxu0 %v7173
          %8592 = vmatprep.subr.bf16.mxu0 %v7166
          %8593 = vmatpush1.bf16.msra.mxu0 %v7165
          %8594 = vmatprep.subr.bf16.mxu0 %v7158
          %8595 = vmatpush1.bf16.msra.mxu0 %v7157
          %8596 = vmatprep.subr.bf16.mxu0 %v7278
          %8597 = vmatpush2.bf16.msra.mxu0 %v7277
          %8598 = vmatprep.subr.bf16.mxu0 %v7270
          %8599 = vmatpush2.bf16.msra.mxu0 %v7269
          %8600 = vmatprep.subr.bf16.mxu0 %v7262
          %8601 = vmatpush2.bf16.msra.mxu0 %v7261
          %8602 = vmatprep.subr.bf16.mxu0 %v7254
          %8603 = vmatpush2.bf16.msra.mxu0 %v7253
          %8604 = vmatprep.subr.bf16.mxu0 %v7246
          %8605 = vmatpush2.bf16.msra.mxu0 %v7245
          %8606 = vmatprep.subr.bf16.mxu0 %v7238
          %8607 = vmatpush2.bf16.msra.mxu0 %v7237
          %8608 = vmatprep.subr.bf16.mxu0 %v7230
          %8609 = vmatpush2.bf16.msra.mxu0 %v7229
          %8610 = vmatprep.subr.bf16.mxu0 %v7222
          %8611 = vmatpush2.bf16.msra.mxu0 %v7221
          %8612 = vmatprep.mubr.bf16.mxu0 %v4928
          %8613 = vmatmul.mubr.bf16.gmra.mxu0 %v4927
          %v8614 = vpop.f32.mrf.mxu0
          %v8615 = vadd.f32 %v8574, %v8614
          %v8616 = vpop.f32.mrf.mxu0
          %v8617 = vadd.f32 %v8576, %v8616
          %v8618 = vpop.f32.mrf.mxu0
          %v8619 = vpop.f32.mrf.mxu0
          %8620 = vdwg.mxu0
          %8621 = vmatprep.subr.bf16.mxu0 %v7342
          %8622 = vmatpush1.bf16.msra.mxu0 %v7341
          %8623 = vmatprep.subr.bf16.mxu0 %v7334
          %8624 = vmatpush1.bf16.msra.mxu0 %v7333
          %8625 = vmatprep.subr.bf16.mxu0 %v7326
          %8626 = vmatpush1.bf16.msra.mxu0 %v7325
          %8627 = vmatprep.subr.bf16.mxu0 %v7318
          %8628 = vmatpush1.bf16.msra.mxu0 %v7317
          %8629 = vmatprep.subr.bf16.mxu0 %v7310
          %8630 = vmatpush1.bf16.msra.mxu0 %v7309
          %8631 = vmatprep.subr.bf16.mxu0 %v7302
          %8632 = vmatpush1.bf16.msra.mxu0 %v7301
          %8633 = vmatprep.subr.bf16.mxu0 %v7294
          %8634 = vmatpush1.bf16.msra.mxu0 %v7293
          %8635 = vmatprep.subr.bf16.mxu0 %v7286
          %8636 = vmatpush1.bf16.msra.mxu0 %v7285
          %8637 = vmatprep.subr.bf16.mxu0 %v7406
          %8638 = vmatpush2.bf16.msra.mxu0 %v7405
          %8639 = vmatprep.subr.bf16.mxu0 %v7398
          %8640 = vmatpush2.bf16.msra.mxu0 %v7397
          %8641 = vmatprep.subr.bf16.mxu0 %v7390
          %8642 = vmatpush2.bf16.msra.mxu0 %v7389
          %8643 = vmatprep.subr.bf16.mxu0 %v7382
          %8644 = vmatpush2.bf16.msra.mxu0 %v7381
          %8645 = vmatprep.subr.bf16.mxu0 %v7374
          %8646 = vmatpush2.bf16.msra.mxu0 %v7373
          %8647 = vmatprep.subr.bf16.mxu0 %v7366
          %8648 = vmatpush2.bf16.msra.mxu0 %v7365
          %8649 = vmatprep.subr.bf16.mxu0 %v7358
          %8650 = vmatpush2.bf16.msra.mxu0 %v7357
          %8651 = vmatprep.subr.bf16.mxu0 %v7350
          %8652 = vmatpush2.bf16.msra.mxu0 %v7349
          %8653 = vmatprep.mubr.bf16.mxu0 %v4930
          %8654 = vmatmul.mubr.bf16.gmra.mxu0 %v4929
          %v8655 = vpop.f32.mrf.mxu0
          %v8656 = vadd.f32 %v8615, %v8655
          %v8657 = vpop.f32.mrf.mxu0
          %v8658 = vadd.f32 %v8617, %v8657
          %v8659 = vpop.f32.mrf.mxu0
          %v8660 = vpop.f32.mrf.mxu0
          %8661 = vdwg.mxu0
          %8662 = vmatprep.subr.bf16.mxu0 %v7470
          %8663 = vmatpush1.bf16.msra.mxu0 %v7469
          %8664 = vmatprep.subr.bf16.mxu0 %v7462
          %8665 = vmatpush1.bf16.msra.mxu0 %v7461
          %8666 = vmatprep.subr.bf16.mxu0 %v7454
          %8667 = vmatpush1.bf16.msra.mxu0 %v7453
          %8668 = vmatprep.subr.bf16.mxu0 %v7446
          %8669 = vmatpush1.bf16.msra.mxu0 %v7445
          %8670 = vmatprep.subr.bf16.mxu0 %v7438
          %8671 = vmatpush1.bf16.msra.mxu0 %v7437
          %8672 = vmatprep.subr.bf16.mxu0 %v7430
          %8673 = vmatpush1.bf16.msra.mxu0 %v7429
          %8674 = vmatprep.subr.bf16.mxu0 %v7422
          %8675 = vmatpush1.bf16.msra.mxu0 %v7421
          %8676 = vmatprep.subr.bf16.mxu0 %v7414
          %8677 = vmatpush1.bf16.msra.mxu0 %v7413
          %8678 = vmatprep.subr.bf16.mxu0 %v7534
          %8679 = vmatpush2.bf16.msra.mxu0 %v7533
          %8680 = vmatprep.subr.bf16.mxu0 %v7526
          %8681 = vmatpush2.bf16.msra.mxu0 %v7525
          %8682 = vmatprep.subr.bf16.mxu0 %v7518
          %8683 = vmatpush2.bf16.msra.mxu0 %v7517
          %8684 = vmatprep.subr.bf16.mxu0 %v7510
          %8685 = vmatpush2.bf16.msra.mxu0 %v7509
          %8686 = vmatprep.subr.bf16.mxu0 %v7502
          %8687 = vmatpush2.bf16.msra.mxu0 %v7501
          %8688 = vmatprep.subr.bf16.mxu0 %v7494
          %8689 = vmatpush2.bf16.msra.mxu0 %v7493
          %8690 = vmatprep.subr.bf16.mxu0 %v7486
          %8691 = vmatpush2.bf16.msra.mxu0 %v7485
          %8692 = vmatprep.subr.bf16.mxu0 %v7478
          %8693 = vmatpush2.bf16.msra.mxu0 %v7477
          %8694 = vmatprep.mubr.bf16.mxu0 %v4932
          %8695 = vmatmul.mubr.bf16.gmra.mxu0 %v4931
          %v8696 = vpop.f32.mrf.mxu0
          %v8697 = vadd.f32 %v8656, %v8696
          %v8698 = vpop.f32.mrf.mxu0
          %v8699 = vadd.f32 %v8658, %v8698
          %v8700 = vpop.f32.mrf.mxu0
          %v8701 = vpop.f32.mrf.mxu0
          %8702 = vdwg.mxu0
          %vm8703 = vcmp.ge.f32.partialorder %v8205, 0.0
          %vm8704 = vcmp.ge.f32.partialorder %v8207, 0.0
          %vm8705 = vcmp.ge.f32.partialorder %v8369, 0.0
          %vm8706 = vcmp.ge.f32.partialorder %v8371, 0.0
          %vm8707 = vcmp.ge.f32.partialorder %v8533, 0.0
          %vm8708 = vcmp.ge.f32.partialorder %v8535, 0.0
          %vm8709 = vcmp.ge.f32.partialorder %v8697, 0.0
          %vm8710 = vcmp.ge.f32.partialorder %v8699, 0.0
          %v8711 = vmul.f32 %v8205, 0.01
          %v8712 = vmul.f32 %v8207, 0.01
          %v8713 = vmul.f32 %v8369, 0.01
          %v8714 = vmul.f32 %v8371, 0.01
          %v8715 = vmul.f32 %v8533, 0.01
          %v8716 = vmul.f32 %v8535, 0.01
          %v8717 = vmul.f32 %v8697, 0.01
          %v8718 = vmul.f32 %v8699, 0.01
          %v8719 = vsel %vm8703, %v8205, %v8711
          %v8720 = vsel %vm8704, %v8207, %v8712
          %v8721 = vsel %vm8705, %v8369, %v8713
          %v8722 = vsel %vm8706, %v8371, %v8714
          %v8723 = vsel %vm8707, %v8533, %v8715
          %v8724 = vsel %vm8708, %v8535, %v8716
          %v8725 = vsel %vm8709, %v8697, %v8717
          %v8726 = vsel %vm8710, %v8699, %v8718
          %v8727 = vpack.c.bf16 %v8719, %v8719
          %v8728 = vpack.c.bf16 %v8720, %v8720
          %v8729 = vpack.c.bf16 %v8721, %v8721
          %v8730 = vpack.c.bf16 %v8722, %v8722
          %v8731 = vpack.c.bf16 %v8723, %v8723
          %v8732 = vpack.c.bf16 %v8724, %v8724
          %v8733 = vpack.c.bf16 %v8725, %v8725
          %v8734 = vpack.c.bf16 %v8726, %v8726
          %v8735 = vld [vmem:[#allocation14] sm:$0xf]
          %v8736 = vld [vmem:[#allocation14 + $0x4] sm:$0xf]
          %v8737 = vld [vmem:[#allocation14 + $0x8] sm:$0xf]
          %v8738 = vld [vmem:[#allocation14 + $0xc] sm:$0xf]
          %v8739 = vld [vmem:[#allocation14 + $0x10] sm:$0xf]
          %v8740 = vld [vmem:[#allocation14 + $0x14] sm:$0xf]
          %v8741 = vld [vmem:[#allocation14 + $0x18] sm:$0xf]
          %v8742 = vld [vmem:[#allocation14 + $0x1c] sm:$0xf]
          %v8743 = vld [vmem:[#allocation14 + $0x20] sm:$0xf]
          %v8744 = vld [vmem:[#allocation14 + $0x24] sm:$0xf]
          %v8745 = vld [vmem:[#allocation14 + $0x28] sm:$0xf]
          %v8746 = vld [vmem:[#allocation14 + $0x2c] sm:$0xf]
          %v8747 = vld [vmem:[#allocation14 + $0x30] sm:$0xf]
          %v8748 = vld [vmem:[#allocation14 + $0x34] sm:$0xf]
          %v8749 = vld [vmem:[#allocation14 + $0x38] sm:$0xf]
          %v8750 = vld [vmem:[#allocation14 + $0x3c] sm:$0xf]
          %v8751 = vld [vmem:[#allocation14 + $0x40] sm:$0xf]
          %v8752 = vld [vmem:[#allocation14 + $0x44] sm:$0xf]
          %v8753 = vld [vmem:[#allocation14 + $0x48] sm:$0xf]
          %v8754 = vld [vmem:[#allocation14 + $0x4c] sm:$0xf]
          %v8755 = vld [vmem:[#allocation14 + $0x50] sm:$0xf]
          %v8756 = vld [vmem:[#allocation14 + $0x54] sm:$0xf]
          %v8757 = vld [vmem:[#allocation14 + $0x58] sm:$0xf]
          %v8758 = vld [vmem:[#allocation14 + $0x5c] sm:$0xf]
          %v8759 = vld [vmem:[#allocation14 + $0x60] sm:$0xf]
          %v8760 = vld [vmem:[#allocation14 + $0x64] sm:$0xf]
          %v8761 = vld [vmem:[#allocation14 + $0x68] sm:$0xf]
          %v8762 = vld [vmem:[#allocation14 + $0x6c] sm:$0xf]
          %v8763 = vld [vmem:[#allocation14 + $0x70] sm:$0xf]
          %v8764 = vld [vmem:[#allocation14 + $0x74] sm:$0xf]
          %v8765 = vld [vmem:[#allocation14 + $0x78] sm:$0xf]
          %v8766 = vld [vmem:[#allocation14 + $0x7c] sm:$0xf]
          %v8767 = vld [vmem:[#allocation14 + $0x80] sm:$0xf]
          %v8768 = vld [vmem:[#allocation14 + $0x84] sm:$0xf]
          %v8769 = vld [vmem:[#allocation14 + $0x88] sm:$0xf]
          %v8770 = vld [vmem:[#allocation14 + $0x8c] sm:$0xf]
          %v8771 = vld [vmem:[#allocation14 + $0x90] sm:$0xf]
          %v8772 = vld [vmem:[#allocation14 + $0x94] sm:$0xf]
          %v8773 = vld [vmem:[#allocation14 + $0x98] sm:$0xf]
          %v8774 = vld [vmem:[#allocation14 + $0x9c] sm:$0xf]
          %v8775 = vld [vmem:[#allocation14 + $0xa0] sm:$0xf]
          %v8776 = vld [vmem:[#allocation14 + $0xa4] sm:$0xf]
          %v8777 = vld [vmem:[#allocation14 + $0xa8] sm:$0xf]
          %v8778 = vld [vmem:[#allocation14 + $0xac] sm:$0xf]
          %v8779 = vld [vmem:[#allocation14 + $0xb0] sm:$0xf]
          %v8780 = vld [vmem:[#allocation14 + $0xb4] sm:$0xf]
          %v8781 = vld [vmem:[#allocation14 + $0xb8] sm:$0xf]
          %v8782 = vld [vmem:[#allocation14 + $0xbc] sm:$0xf]
          %v8783 = vld [vmem:[#allocation14 + $0xc0] sm:$0xf]
          %v8784 = vld [vmem:[#allocation14 + $0xc4] sm:$0xf]
          %v8785 = vld [vmem:[#allocation14 + $0xc8] sm:$0xf]
          %v8786 = vld [vmem:[#allocation14 + $0xcc] sm:$0xf]
          %v8787 = vld [vmem:[#allocation14 + $0xd0] sm:$0xf]
          %v8788 = vld [vmem:[#allocation14 + $0xd4] sm:$0xf]
          %v8789 = vld [vmem:[#allocation14 + $0xd8] sm:$0xf]
          %v8790 = vld [vmem:[#allocation14 + $0xdc] sm:$0xf]
          %v8791 = vld [vmem:[#allocation14 + $0xe0] sm:$0xf]
          %v8792 = vld [vmem:[#allocation14 + $0xe4] sm:$0xf]
          %v8793 = vld [vmem:[#allocation14 + $0xe8] sm:$0xf]
          %v8794 = vld [vmem:[#allocation14 + $0xec] sm:$0xf]
          %v8795 = vld [vmem:[#allocation14 + $0xf0] sm:$0xf]
          %v8796 = vld [vmem:[#allocation14 + $0xf4] sm:$0xf]
          %v8797 = vld [vmem:[#allocation14 + $0xf8] sm:$0xf]
          %v8798 = vld [vmem:[#allocation14 + $0xfc] sm:$0xf]
          %v8799 = vld [vmem:[#allocation14 + $0x100] sm:$0xf]
          %v8800 = vld [vmem:[#allocation14 + $0x104] sm:$0xf]
          %v8801 = vld [vmem:[#allocation14 + $0x108] sm:$0xf]
          %v8802 = vld [vmem:[#allocation14 + $0x10c] sm:$0xf]
          %v8803 = vld [vmem:[#allocation14 + $0x110] sm:$0xf]
          %v8804 = vld [vmem:[#allocation14 + $0x114] sm:$0xf]
          %v8805 = vld [vmem:[#allocation14 + $0x118] sm:$0xf]
          %v8806 = vld [vmem:[#allocation14 + $0x11c] sm:$0xf]
          %v8807 = vld [vmem:[#allocation14 + $0x120] sm:$0xf]
          %v8808 = vld [vmem:[#allocation14 + $0x124] sm:$0xf]
          %v8809 = vld [vmem:[#allocation14 + $0x128] sm:$0xf]
          %v8810 = vld [vmem:[#allocation14 + $0x12c] sm:$0xf]
          %v8811 = vld [vmem:[#allocation14 + $0x130] sm:$0xf]
          %v8812 = vld [vmem:[#allocation14 + $0x134] sm:$0xf]
          %v8813 = vld [vmem:[#allocation14 + $0x138] sm:$0xf]
          %v8814 = vld [vmem:[#allocation14 + $0x13c] sm:$0xf]
          %v8815 = vld [vmem:[#allocation14 + $0x140] sm:$0xf]
          %v8816 = vld [vmem:[#allocation14 + $0x144] sm:$0xf]
          %v8817 = vld [vmem:[#allocation14 + $0x148] sm:$0xf]
          %v8818 = vld [vmem:[#allocation14 + $0x14c] sm:$0xf]
          %v8819 = vld [vmem:[#allocation14 + $0x150] sm:$0xf]
          %v8820 = vld [vmem:[#allocation14 + $0x154] sm:$0xf]
          %v8821 = vld [vmem:[#allocation14 + $0x158] sm:$0xf]
          %v8822 = vld [vmem:[#allocation14 + $0x15c] sm:$0xf]
          %v8823 = vld [vmem:[#allocation14 + $0x160] sm:$0xf]
          %v8824 = vld [vmem:[#allocation14 + $0x164] sm:$0xf]
          %v8825 = vld [vmem:[#allocation14 + $0x168] sm:$0xf]
          %v8826 = vld [vmem:[#allocation14 + $0x16c] sm:$0xf]
          %v8827 = vld [vmem:[#allocation14 + $0x170] sm:$0xf]
          %v8828 = vld [vmem:[#allocation14 + $0x174] sm:$0xf]
          %v8829 = vld [vmem:[#allocation14 + $0x178] sm:$0xf]
          %v8830 = vld [vmem:[#allocation14 + $0x17c] sm:$0xf]
          %v8831 = vld [vmem:[#allocation14 + $0x180] sm:$0xf]
          %v8832 = vld [vmem:[#allocation14 + $0x184] sm:$0xf]
          %v8833 = vld [vmem:[#allocation14 + $0x188] sm:$0xf]
          %v8834 = vld [vmem:[#allocation14 + $0x18c] sm:$0xf]
          %v8835 = vld [vmem:[#allocation14 + $0x190] sm:$0xf]
          %v8836 = vld [vmem:[#allocation14 + $0x194] sm:$0xf]
          %v8837 = vld [vmem:[#allocation14 + $0x198] sm:$0xf]
          %v8838 = vld [vmem:[#allocation14 + $0x19c] sm:$0xf]
          %v8839 = vld [vmem:[#allocation14 + $0x1a0] sm:$0xf]
          %v8840 = vld [vmem:[#allocation14 + $0x1a4] sm:$0xf]
          %v8841 = vld [vmem:[#allocation14 + $0x1a8] sm:$0xf]
          %v8842 = vld [vmem:[#allocation14 + $0x1ac] sm:$0xf]
          %v8843 = vld [vmem:[#allocation14 + $0x1b0] sm:$0xf]
          %v8844 = vld [vmem:[#allocation14 + $0x1b4] sm:$0xf]
          %v8845 = vld [vmem:[#allocation14 + $0x1b8] sm:$0xf]
          %v8846 = vld [vmem:[#allocation14 + $0x1bc] sm:$0xf]
          %v8847 = vld [vmem:[#allocation14 + $0x1c0] sm:$0xf]
          %v8848 = vld [vmem:[#allocation14 + $0x1c4] sm:$0xf]
          %v8849 = vld [vmem:[#allocation14 + $0x1c8] sm:$0xf]
          %v8850 = vld [vmem:[#allocation14 + $0x1cc] sm:$0xf]
          %v8851 = vld [vmem:[#allocation14 + $0x1d0] sm:$0xf]
          %v8852 = vld [vmem:[#allocation14 + $0x1d4] sm:$0xf]
          %v8853 = vld [vmem:[#allocation14 + $0x1d8] sm:$0xf]
          %v8854 = vld [vmem:[#allocation14 + $0x1dc] sm:$0xf]
          %v8855 = vld [vmem:[#allocation14 + $0x1e0] sm:$0xf]
          %v8856 = vld [vmem:[#allocation14 + $0x1e4] sm:$0xf]
          %v8857 = vld [vmem:[#allocation14 + $0x1e8] sm:$0xf]
          %v8858 = vld [vmem:[#allocation14 + $0x1ec] sm:$0xf]
          %v8859 = vld [vmem:[#allocation14 + $0x1f0] sm:$0xf]
          %v8860 = vld [vmem:[#allocation14 + $0x1f4] sm:$0xf]
          %v8861 = vld [vmem:[#allocation14 + $0x1f8] sm:$0xf]
          %v8862 = vld [vmem:[#allocation14 + $0x1fc] sm:$0xf]
          %v8863 = vld [vmem:[#allocation15] sm:$0x1]
          %v8865 = vlaneseq
          %v8866 = vshrl.u32 %v8865, 7
          %v8867 = vsub.s32 0, %v8866
          %v8868 = vrot.slane %v8863, %v8867
          %v8998 = vunpack.c.l.b16 %v8735
          %v8999 = vunpack.c.l.b16 %v8736
          %v9000 = vunpack.c.l.b16 %v8737
          %v9001 = vunpack.c.l.b16 %v8738
          %v9002 = vunpack.c.l.b16 %v8739
          %v9003 = vunpack.c.l.b16 %v8740
          %v9004 = vunpack.c.l.b16 %v8741
          %v9005 = vunpack.c.l.b16 %v8742
          %v9006 = vunpack.c.l.b16 %v8743
          %v9007 = vunpack.c.l.b16 %v8744
          %v9008 = vunpack.c.l.b16 %v8745
          %v9009 = vunpack.c.l.b16 %v8746
          %v9010 = vunpack.c.l.b16 %v8747
          %v9011 = vunpack.c.l.b16 %v8748
          %v9012 = vunpack.c.l.b16 %v8749
          %v9013 = vunpack.c.l.b16 %v8750
          %v9014 = vunpack.c.l.b16 %v8751
          %v9015 = vunpack.c.l.b16 %v8752
          %v9016 = vunpack.c.l.b16 %v8753
          %v9017 = vunpack.c.l.b16 %v8754
          %v9018 = vunpack.c.l.b16 %v8755
          %v9019 = vunpack.c.l.b16 %v8756
          %v9020 = vunpack.c.l.b16 %v8757
          %v9021 = vunpack.c.l.b16 %v8758
          %v9022 = vunpack.c.l.b16 %v8759
          %v9023 = vunpack.c.l.b16 %v8760
          %v9024 = vunpack.c.l.b16 %v8761
          %v9025 = vunpack.c.l.b16 %v8762
          %v9026 = vunpack.c.l.b16 %v8763
          %v9027 = vunpack.c.l.b16 %v8764
          %v9028 = vunpack.c.l.b16 %v8765
          %v9029 = vunpack.c.l.b16 %v8766
          %v9030 = vunpack.c.l.b16 %v8767
          %v9031 = vunpack.c.l.b16 %v8768
          %v9032 = vunpack.c.l.b16 %v8769
          %v9033 = vunpack.c.l.b16 %v8770
          %v9034 = vunpack.c.l.b16 %v8771
          %v9035 = vunpack.c.l.b16 %v8772
          %v9036 = vunpack.c.l.b16 %v8773
          %v9037 = vunpack.c.l.b16 %v8774
          %v9038 = vunpack.c.l.b16 %v8775
          %v9039 = vunpack.c.l.b16 %v8776
          %v9040 = vunpack.c.l.b16 %v8777
          %v9041 = vunpack.c.l.b16 %v8778
          %v9042 = vunpack.c.l.b16 %v8779
          %v9043 = vunpack.c.l.b16 %v8780
          %v9044 = vunpack.c.l.b16 %v8781
          %v9045 = vunpack.c.l.b16 %v8782
          %v9046 = vunpack.c.l.b16 %v8783
          %v9047 = vunpack.c.l.b16 %v8784
          %v9048 = vunpack.c.l.b16 %v8785
          %v9049 = vunpack.c.l.b16 %v8786
          %v9050 = vunpack.c.l.b16 %v8787
          %v9051 = vunpack.c.l.b16 %v8788
          %v9052 = vunpack.c.l.b16 %v8789
          %v9053 = vunpack.c.l.b16 %v8790
          %v9054 = vunpack.c.l.b16 %v8791
          %v9055 = vunpack.c.l.b16 %v8792
          %v9056 = vunpack.c.l.b16 %v8793
          %v9057 = vunpack.c.l.b16 %v8794
          %v9058 = vunpack.c.l.b16 %v8795
          %v9059 = vunpack.c.l.b16 %v8796
          %v9060 = vunpack.c.l.b16 %v8797
          %v9061 = vunpack.c.l.b16 %v8798
          %v9062 = vunpack.c.l.b16 %v8799
          %v9063 = vunpack.c.l.b16 %v8800
          %v9064 = vunpack.c.l.b16 %v8801
          %v9065 = vunpack.c.l.b16 %v8802
          %v9066 = vunpack.c.l.b16 %v8803
          %v9067 = vunpack.c.l.b16 %v8804
          %v9068 = vunpack.c.l.b16 %v8805
          %v9069 = vunpack.c.l.b16 %v8806
          %v9070 = vunpack.c.l.b16 %v8807
          %v9071 = vunpack.c.l.b16 %v8808
          %v9072 = vunpack.c.l.b16 %v8809
          %v9073 = vunpack.c.l.b16 %v8810
          %v9074 = vunpack.c.l.b16 %v8811
          %v9075 = vunpack.c.l.b16 %v8812
          %v9076 = vunpack.c.l.b16 %v8813
          %v9077 = vunpack.c.l.b16 %v8814
          %v9078 = vunpack.c.l.b16 %v8815
          %v9079 = vunpack.c.l.b16 %v8816
          %v9080 = vunpack.c.l.b16 %v8817
          %v9081 = vunpack.c.l.b16 %v8818
          %v9082 = vunpack.c.l.b16 %v8819
          %v9083 = vunpack.c.l.b16 %v8820
          %v9084 = vunpack.c.l.b16 %v8821
          %v9085 = vunpack.c.l.b16 %v8822
          %v9086 = vunpack.c.l.b16 %v8823
          %v9087 = vunpack.c.l.b16 %v8824
          %v9088 = vunpack.c.l.b16 %v8825
          %v9089 = vunpack.c.l.b16 %v8826
          %v9090 = vunpack.c.l.b16 %v8827
          %v9091 = vunpack.c.l.b16 %v8828
          %v9092 = vunpack.c.l.b16 %v8829
          %v9093 = vunpack.c.l.b16 %v8830
          %v9094 = vunpack.c.l.b16 %v8831
          %v9095 = vunpack.c.l.b16 %v8832
          %v9096 = vunpack.c.l.b16 %v8833
          %v9097 = vunpack.c.l.b16 %v8834
          %v9098 = vunpack.c.l.b16 %v8835
          %v9099 = vunpack.c.l.b16 %v8836
          %v9100 = vunpack.c.l.b16 %v8837
          %v9101 = vunpack.c.l.b16 %v8838
          %v9102 = vunpack.c.l.b16 %v8839
          %v9103 = vunpack.c.l.b16 %v8840
          %v9104 = vunpack.c.l.b16 %v8841
          %v9105 = vunpack.c.l.b16 %v8842
          %v9106 = vunpack.c.l.b16 %v8843
          %v9107 = vunpack.c.l.b16 %v8844
          %v9108 = vunpack.c.l.b16 %v8845
          %v9109 = vunpack.c.l.b16 %v8846
          %v9110 = vunpack.c.l.b16 %v8847
          %v9111 = vunpack.c.l.b16 %v8848
          %v9112 = vunpack.c.l.b16 %v8849
          %v9113 = vunpack.c.l.b16 %v8850
          %v9114 = vunpack.c.l.b16 %v8851
          %v9115 = vunpack.c.l.b16 %v8852
          %v9116 = vunpack.c.l.b16 %v8853
          %v9117 = vunpack.c.l.b16 %v8854
          %v9118 = vunpack.c.l.b16 %v8855
          %v9119 = vunpack.c.l.b16 %v8856
          %v9120 = vunpack.c.l.b16 %v8857
          %v9121 = vunpack.c.l.b16 %v8858
          %v9122 = vunpack.c.l.b16 %v8859
          %v9123 = vunpack.c.l.b16 %v8860
          %v9124 = vunpack.c.l.b16 %v8861
          %v9125 = vunpack.c.l.b16 %v8862
          %v9126 = vpack.c.b16 %v8999, %v8998
          %v9127 = vpack.c.b16 %v9001, %v9000
          %v9128 = vpack.c.b16 %v9003, %v9002
          %v9129 = vpack.c.b16 %v9005, %v9004
          %v9130 = vpack.c.b16 %v9007, %v9006
          %v9131 = vpack.c.b16 %v9009, %v9008
          %v9132 = vpack.c.b16 %v9011, %v9010
          %v9133 = vpack.c.b16 %v9013, %v9012
          %v9134 = vpack.c.b16 %v9015, %v9014
          %v9135 = vpack.c.b16 %v9017, %v9016
          %v9136 = vpack.c.b16 %v9019, %v9018
          %v9137 = vpack.c.b16 %v9021, %v9020
          %v9138 = vpack.c.b16 %v9023, %v9022
          %v9139 = vpack.c.b16 %v9025, %v9024
          %v9140 = vpack.c.b16 %v9027, %v9026
          %v9141 = vpack.c.b16 %v9029, %v9028
          %v9142 = vpack.c.b16 %v9031, %v9030
          %v9143 = vpack.c.b16 %v9033, %v9032
          %v9144 = vpack.c.b16 %v9035, %v9034
          %v9145 = vpack.c.b16 %v9037, %v9036
          %v9146 = vpack.c.b16 %v9039, %v9038
          %v9147 = vpack.c.b16 %v9041, %v9040
          %v9148 = vpack.c.b16 %v9043, %v9042
          %v9149 = vpack.c.b16 %v9045, %v9044
          %v9150 = vpack.c.b16 %v9047, %v9046
          %v9151 = vpack.c.b16 %v9049, %v9048
          %v9152 = vpack.c.b16 %v9051, %v9050
          %v9153 = vpack.c.b16 %v9053, %v9052
          %v9154 = vpack.c.b16 %v9055, %v9054
          %v9155 = vpack.c.b16 %v9057, %v9056
          %v9156 = vpack.c.b16 %v9059, %v9058
          %v9157 = vpack.c.b16 %v9061, %v9060
          %v9158 = vpack.c.b16 %v9063, %v9062
          %v9159 = vpack.c.b16 %v9065, %v9064
          %v9160 = vpack.c.b16 %v9067, %v9066
          %v9161 = vpack.c.b16 %v9069, %v9068
          %v9162 = vpack.c.b16 %v9071, %v9070
          %v9163 = vpack.c.b16 %v9073, %v9072
          %v9164 = vpack.c.b16 %v9075, %v9074
          %v9165 = vpack.c.b16 %v9077, %v9076
          %v9166 = vpack.c.b16 %v9079, %v9078
          %v9167 = vpack.c.b16 %v9081, %v9080
          %v9168 = vpack.c.b16 %v9083, %v9082
          %v9169 = vpack.c.b16 %v9085, %v9084
          %v9170 = vpack.c.b16 %v9087, %v9086
          %v9171 = vpack.c.b16 %v9089, %v9088
          %v9172 = vpack.c.b16 %v9091, %v9090
          %v9173 = vpack.c.b16 %v9093, %v9092
          %v9174 = vpack.c.b16 %v9095, %v9094
          %v9175 = vpack.c.b16 %v9097, %v9096
          %v9176 = vpack.c.b16 %v9099, %v9098
          %v9177 = vpack.c.b16 %v9101, %v9100
          %v9178 = vpack.c.b16 %v9103, %v9102
          %v9179 = vpack.c.b16 %v9105, %v9104
          %v9180 = vpack.c.b16 %v9107, %v9106
          %v9181 = vpack.c.b16 %v9109, %v9108
          %v9182 = vpack.c.b16 %v9111, %v9110
          %v9183 = vpack.c.b16 %v9113, %v9112
          %v9184 = vpack.c.b16 %v9115, %v9114
          %v9185 = vpack.c.b16 %v9117, %v9116
          %v9186 = vpack.c.b16 %v9119, %v9118
          %v9187 = vpack.c.b16 %v9121, %v9120
          %v9188 = vpack.c.b16 %v9123, %v9122
          %v9189 = vpack.c.b16 %v9125, %v9124
          %9254 = vmatprep.subr.bf16.mxu0 0
          %9255 = vmatpush1.bf16.msra.mxu0 %v9133
          %9256 = vmatprep.subr.bf16.mxu0 0
          %9257 = vmatpush1.bf16.msra.mxu0 %v9132
          %9258 = vmatprep.subr.bf16.mxu0 0
          %9259 = vmatpush1.bf16.msra.mxu0 %v9131
          %9260 = vmatprep.subr.bf16.mxu0 0
          %9261 = vmatpush1.bf16.msra.mxu0 %v9130
          %9262 = vmatprep.subr.bf16.mxu0 0
          %9263 = vmatpush1.bf16.msra.mxu0 %v9129
          %9264 = vmatprep.subr.bf16.mxu0 0
          %9265 = vmatpush1.bf16.msra.mxu0 %v9128
          %9266 = vmatprep.subr.bf16.mxu0 0
          %9267 = vmatpush1.bf16.msra.mxu0 %v9127
          %9268 = vmatprep.subr.bf16.mxu0 0
          %9269 = vmatpush1.bf16.msra.mxu0 %v9126
          %9270 = vmatprep.subr.bf16.mxu0 0
          %9271 = vmatpush2.bf16.msra.mxu0 %v9141
          %9272 = vmatprep.subr.bf16.mxu0 0
          %9273 = vmatpush2.bf16.msra.mxu0 %v9140
          %9274 = vmatprep.subr.bf16.mxu0 0
          %9275 = vmatpush2.bf16.msra.mxu0 %v9139
          %9276 = vmatprep.subr.bf16.mxu0 0
          %9277 = vmatpush2.bf16.msra.mxu0 %v9138
          %9278 = vmatprep.subr.bf16.mxu0 0
          %9279 = vmatpush2.bf16.msra.mxu0 %v9137
          %9280 = vmatprep.subr.bf16.mxu0 0
          %9281 = vmatpush2.bf16.msra.mxu0 %v9136
          %9282 = vmatprep.subr.bf16.mxu0 0
          %9283 = vmatpush2.bf16.msra.mxu0 %v9135
          %9284 = vmatprep.subr.bf16.mxu0 0
          %9285 = vmatpush2.bf16.msra.mxu0 %v9134
          %9286 = vmatprep.mubr.bf16.mxu0 %v8728
          %9287 = vmatmul.mubr.bf16.gmra.mxu0 %v8727
          %v9288 = vpop.f32.mrf.mxu0
          %v9289 = vadd.f32 %v8868, %v9288
          %v9290 = vpop.f32.mrf.mxu0
          %v9291 = vpop.f32.mrf.mxu0
          %v9292 = vpop.f32.mrf.mxu0
          %9293 = vdwg.mxu0
          %9294 = vmatprep.subr.bf16.mxu0 0
          %9295 = vmatpush1.bf16.msra.mxu0 %v9149
          %9296 = vmatprep.subr.bf16.mxu0 0
          %9297 = vmatpush1.bf16.msra.mxu0 %v9148
          %9298 = vmatprep.subr.bf16.mxu0 0
          %9299 = vmatpush1.bf16.msra.mxu0 %v9147
          %9300 = vmatprep.subr.bf16.mxu0 0
          %9301 = vmatpush1.bf16.msra.mxu0 %v9146
          %9302 = vmatprep.subr.bf16.mxu0 0
          %9303 = vmatpush1.bf16.msra.mxu0 %v9145
          %9304 = vmatprep.subr.bf16.mxu0 0
          %9305 = vmatpush1.bf16.msra.mxu0 %v9144
          %9306 = vmatprep.subr.bf16.mxu0 0
          %9307 = vmatpush1.bf16.msra.mxu0 %v9143
          %9308 = vmatprep.subr.bf16.mxu0 0
          %9309 = vmatpush1.bf16.msra.mxu0 %v9142
          %9310 = vmatprep.subr.bf16.mxu0 0
          %9311 = vmatpush2.bf16.msra.mxu0 %v9157
          %9312 = vmatprep.subr.bf16.mxu0 0
          %9313 = vmatpush2.bf16.msra.mxu0 %v9156
          %9314 = vmatprep.subr.bf16.mxu0 0
          %9315 = vmatpush2.bf16.msra.mxu0 %v9155
          %9316 = vmatprep.subr.bf16.mxu0 0
          %9317 = vmatpush2.bf16.msra.mxu0 %v9154
          %9318 = vmatprep.subr.bf16.mxu0 0
          %9319 = vmatpush2.bf16.msra.mxu0 %v9153
          %9320 = vmatprep.subr.bf16.mxu0 0
          %9321 = vmatpush2.bf16.msra.mxu0 %v9152
          %9322 = vmatprep.subr.bf16.mxu0 0
          %9323 = vmatpush2.bf16.msra.mxu0 %v9151
          %9324 = vmatprep.subr.bf16.mxu0 0
          %9325 = vmatpush2.bf16.msra.mxu0 %v9150
          %9326 = vmatprep.mubr.bf16.mxu0 %v8730
          %9327 = vmatmul.mubr.bf16.gmra.mxu0 %v8729
          %v9328 = vpop.f32.mrf.mxu0
          %v9329 = vadd.f32 %v9289, %v9328
          %v9330 = vpop.f32.mrf.mxu0
          %v9331 = vpop.f32.mrf.mxu0
          %v9332 = vpop.f32.mrf.mxu0
          %9333 = vdwg.mxu0
          %9334 = vmatprep.subr.bf16.mxu0 0
          %9335 = vmatpush1.bf16.msra.mxu0 %v9165
          %9336 = vmatprep.subr.bf16.mxu0 0
          %9337 = vmatpush1.bf16.msra.mxu0 %v9164
          %9338 = vmatprep.subr.bf16.mxu0 0
          %9339 = vmatpush1.bf16.msra.mxu0 %v9163
          %9340 = vmatprep.subr.bf16.mxu0 0
          %9341 = vmatpush1.bf16.msra.mxu0 %v9162
          %9342 = vmatprep.subr.bf16.mxu0 0
          %9343 = vmatpush1.bf16.msra.mxu0 %v9161
          %9344 = vmatprep.subr.bf16.mxu0 0
          %9345 = vmatpush1.bf16.msra.mxu0 %v9160
          %9346 = vmatprep.subr.bf16.mxu0 0
          %9347 = vmatpush1.bf16.msra.mxu0 %v9159
          %9348 = vmatprep.subr.bf16.mxu0 0
          %9349 = vmatpush1.bf16.msra.mxu0 %v9158
          %9350 = vmatprep.subr.bf16.mxu0 0
          %9351 = vmatpush2.bf16.msra.mxu0 %v9173
          %9352 = vmatprep.subr.bf16.mxu0 0
          %9353 = vmatpush2.bf16.msra.mxu0 %v9172
          %9354 = vmatprep.subr.bf16.mxu0 0
          %9355 = vmatpush2.bf16.msra.mxu0 %v9171
          %9356 = vmatprep.subr.bf16.mxu0 0
          %9357 = vmatpush2.bf16.msra.mxu0 %v9170
          %9358 = vmatprep.subr.bf16.mxu0 0
          %9359 = vmatpush2.bf16.msra.mxu0 %v9169
          %9360 = vmatprep.subr.bf16.mxu0 0
          %9361 = vmatpush2.bf16.msra.mxu0 %v9168
          %9362 = vmatprep.subr.bf16.mxu0 0
          %9363 = vmatpush2.bf16.msra.mxu0 %v9167
          %9364 = vmatprep.subr.bf16.mxu0 0
          %9365 = vmatpush2.bf16.msra.mxu0 %v9166
          %9366 = vmatprep.mubr.bf16.mxu0 %v8732
          %9367 = vmatmul.mubr.bf16.gmra.mxu0 %v8731
          %v9368 = vpop.f32.mrf.mxu0
          %v9369 = vadd.f32 %v9329, %v9368
          %v9370 = vpop.f32.mrf.mxu0
          %v9371 = vpop.f32.mrf.mxu0
          %v9372 = vpop.f32.mrf.mxu0
          %9373 = vdwg.mxu0
          %9374 = vmatprep.subr.bf16.mxu0 0
          %9375 = vmatpush1.bf16.msra.mxu0 %v9181
          %9376 = vmatprep.subr.bf16.mxu0 0
          %9377 = vmatpush1.bf16.msra.mxu0 %v9180
          %9378 = vmatprep.subr.bf16.mxu0 0
          %9379 = vmatpush1.bf16.msra.mxu0 %v9179
          %9380 = vmatprep.subr.bf16.mxu0 0
          %9381 = vmatpush1.bf16.msra.mxu0 %v9178
          %9382 = vmatprep.subr.bf16.mxu0 0
          %9383 = vmatpush1.bf16.msra.mxu0 %v9177
          %9384 = vmatprep.subr.bf16.mxu0 0
          %9385 = vmatpush1.bf16.msra.mxu0 %v9176
          %9386 = vmatprep.subr.bf16.mxu0 0
          %9387 = vmatpush1.bf16.msra.mxu0 %v9175
          %9388 = vmatprep.subr.bf16.mxu0 0
          %9389 = vmatpush1.bf16.msra.mxu0 %v9174
          %9390 = vmatprep.subr.bf16.mxu0 0
          %9391 = vmatpush2.bf16.msra.mxu0 %v9189
          %9392 = vmatprep.subr.bf16.mxu0 0
          %9393 = vmatpush2.bf16.msra.mxu0 %v9188
          %9394 = vmatprep.subr.bf16.mxu0 0
          %9395 = vmatpush2.bf16.msra.mxu0 %v9187
          %9396 = vmatprep.subr.bf16.mxu0 0
          %9397 = vmatpush2.bf16.msra.mxu0 %v9186
          %9398 = vmatprep.subr.bf16.mxu0 0
          %9399 = vmatpush2.bf16.msra.mxu0 %v9185
          %9400 = vmatprep.subr.bf16.mxu0 0
          %9401 = vmatpush2.bf16.msra.mxu0 %v9184
          %9402 = vmatprep.subr.bf16.mxu0 0
          %9403 = vmatpush2.bf16.msra.mxu0 %v9183
          %9404 = vmatprep.subr.bf16.mxu0 0
          %9405 = vmatpush2.bf16.msra.mxu0 %v9182
          %9406 = vmatprep.mubr.bf16.mxu0 %v8734
          %9407 = vmatmul.mubr.bf16.gmra.mxu0 %v8733
          %v9408 = vpop.f32.mrf.mxu0
          %v9409 = vadd.f32 %v9369, %v9408
          %v9410 = vpop.f32.mrf.mxu0
          %v9411 = vpop.f32.mrf.mxu0
          %v9412 = vpop.f32.mrf.mxu0
          %9413 = vdwg.mxu0
          %v9414 = vsub.f32 0.0, %v9409
          %v9415 = vmul.f32 %v9414, 1.442695
          %v9416 = vpow.pop %v9415
          %v9417 = vadd.f32 %v9416, 1.0
          %v9418 = vrcp.pop %v9417
          %v9419 = vmul.f32 1.0, %v9418
          %9420 = vst [vmem:[#allocation17] sm:$0xff] %v9419
        $region92: #{tpu_custom_call.1} parent=51 // pred_fallthru
          _
        // Predicated region
        $region93: #{tpu_custom_call.1} parent=51 // pred_check
          %p9421 = pneg %p220
        $region94: #{tpu_custom_call.1} parent=51 // pred_check_branch
          %9423 = sbr.rel (%p9421) target = $region96
        $region95: #{tpu_custom_call.1} parent=51 // pred_region
          %s9425 = ssub.s32 128, 128
          %9426 = vsyncadd [#allocation5], %s9425
          %s9428 = sshll.u32 [#allocation17], 4
          %s9429 = int_to_ptr.vmem [resolvable:$true] %s9428
          %9431 = dma.vmem_to_hbm [thread:$0]  %s9429, 128, %s8, [#allocation5]
        $region96: #{tpu_custom_call.1} parent=51 // pred_fallthru
          _
        // Predicated region
        $region97: #{tpu_custom_call.1} parent=51 // pred_check
          %p9432 = pneg %p220
        $region98: #{tpu_custom_call.1} parent=51 // pred_check_branch
          %9434 = sbr.rel (%p9432) target = $region100
        $region99: #{tpu_custom_call.1} parent=51 // pred_region
          %9435 = dma.done [#allocation5], 128
        $region100: #{tpu_custom_call.1} parent=51 // pred_fallthru
          _
      $region52: #{tpu_custom_call.1} parent=5 // pred_fallthru
        _
      %p9436 = scmp.le.s32.totalorder 2, %s24
      // Predicated region
      $region101: #{tpu_custom_call.1} parent=5 // pred_check
        %p9437 = pneg %p9436
      $region102: #{tpu_custom_call.1} parent=5 // pred_check_branch
        %9439 = sbr.rel (%p9437) target = $region104
      $region103: #{tpu_custom_call.1} parent=5 // pred_region
        %s9440 = ssub.s32 %s24, 2
      $region104: #{tpu_custom_call.1} parent=5 // pred_fallthru
        _
    $region6: #{tpu_custom_call.1} parent=1 // loop_footer
      %s28 = sadd.s32 1, %s24
    $region7: #{tpu_custom_call.1} parent=1 // loop_footer_branch
      %23 = sbr.rel target = $region3
    $region8: #{tpu_custom_call.1} parent=1 // loop_exit
      _
    %9441 = vsyncpa [#allocation4], 1
    %s9442 = scalar_lea.sflag [#allocation4], 1
    %9443 = vsyncpa %s9442, 1
    %9444 = vsyncpa [#allocation7], 1
    %s9445 = scalar_lea.sflag [#allocation7], 1
    %9446 = vsyncpa %s9445, 1
    %9447 = vsyncpa [#allocation10], 1
    %9448 = vsyncpa [#allocation13], 1
    %9449 = vsyncpa [#allocation16], 1
    %9450 = vsyncpa [#allocation5], 1
    %s9451 = scalar_lea.sflag [#allocation5], 1
    %9452 = vsyncpa %s9451, 1

</llo_original>
